<compile_context>
chip_gen: v6e
topology: v6e:2x2x1
jax: 0.10.0
libtpu: 0.0.40
codegen_flags: <defaults>
</compile_context>

<pallas_src>
import functools
import math

import jax
import jax.numpy as jnp
from jax.experimental import pallas as pl
from jax.experimental.pallas import tpu as pltpu


# ----------------------------- Pallas kernel -------------------------------

def _write_taps(slab_ref, src, masks, row_stride, n_rows, W, HW):
    """Write the 9 shifted+masked 3x3-conv taps of a channels-first (C, HW)
    map into the im2col slab: rows [t*row_stride, t*row_stride+n_rows) hold the
    map shifted by ((dy-1)*W + (dx-1)) flat pixels, zeroed where the window
    falls outside the image.  Circularly-wrapped columns are always
    out-of-bounds samples, so they are written as plain zeros.  All writes are
    dense, statically-sliced VMEM stores (no padded-image scratch)."""
    dt = slab_ref.dtype
    for t in range(9):
        dy, dx = divmod(t, 3)
        off = (dy - 1) * W + (dx - 1)
        r0 = t * row_stride
        m = masks[t:t + 1, :]
        if off == 0:                                   # center tap: no shift, all valid
            slab_ref[r0:r0 + n_rows, :] = src.astype(dt)
        elif off > 0:
            slab_ref[r0:r0 + n_rows, 0:HW - off] = (
                src[:, off:] * m[:, 0:HW - off]).astype(dt)
            slab_ref[r0:r0 + n_rows, HW - off:HW] = jnp.zeros((n_rows, off), dt)
        else:
            a = -off
            slab_ref[r0:r0 + n_rows, 0:a] = jnp.zeros((n_rows, a), dt)
            slab_ref[r0:r0 + n_rows, a:HW] = (
                src[:, 0:HW - a] * m[:, a:]).astype(dt)


def _edsr_fused_kernel(x_ref, pos_ref, msk_ref, hw_ref, hb_ref, w1_ref, b1_ref,
                       w2_ref, b2_ref, mtw_ref, mtb_ref, mhw_ref, mhb_ref,
                       mbw_ref, mbb_ref, o_ref,
                       hslab, slab, feat_ref, xfeat_ref, mm_ref,
                       *, H, W, n_colors, cpad, n_feats, n_resblocks, res_scale):
    HW = H * W
    f32 = jnp.float32
    hi = jax.lax.Precision.HIGHEST
    masks = msk_ref[...]                                   # (9, HW) {0,1} f32

    # ---- mm = mhead(pos): 1x1 conv on the coordinate map as two broadcast FMAs.
    mm_ref[...] = (mhw_ref[:, 0:1] * pos_ref[0:1, :]
                   + mhw_ref[:, 1:2] * pos_ref[1:2, :]
                   + mhb_ref[...])

    # ---- head: 3x3 conv (n_colors -> n_feats) as one bf16 im2col dot.
    hslab[...] = jnp.zeros_like(hslab)                     # zero K-padding rows (tiny)
    _write_taps(hslab, x_ref[...], masks, cpad, n_colors, W, HW)
    head = (jnp.dot(hw_ref[...], hslab[...], preferred_element_type=f32)
            + hb_ref[...])
    xfeat_ref[...] = head                                  # head output (final residual)
    feat_ref[...] = head                                   # running residual stream mf

    # ---- ResBlocks with sine modulation:
    #      mf = (conv2(relu(conv1(mf))) * res_scale + mf) * sin(2*pi*mbody_i(mm))
    for i in range(n_resblocks):
        _write_taps(slab, feat_ref[...], masks, n_feats, n_feats, W, HW)
        h1 = jnp.dot(w1_ref[i], slab[...], preferred_element_type=f32) + b1_ref[i]
        h1 = jnp.maximum(h1, 0.0)

        _write_taps(slab, h1, masks, n_feats, n_feats, W, HW)
        r = jnp.dot(w2_ref[i], slab[...], preferred_element_type=f32) + b2_ref[i]
        if res_scale != 1.0:
            r = r * res_scale

        mod = jnp.sin((2.0 * math.pi) * (
            jnp.dot(mbw_ref[i], mm_ref[...], preferred_element_type=f32,
                    precision=hi) + mbb_ref[i]))
        feat_ref[...] = (r + feat_ref[...]) * mod

    # ---- mtail (1x1 conv) + residual with the head output.
    res = (jnp.dot(mtw_ref[...], feat_ref[...], preferred_element_type=f32,
                   precision=hi)
           + mtb_ref[...] + xfeat_ref[...])
    o_ref[...] = res.astype(o_ref.dtype)


# ------------------------------ pallas_call wrapper -------------------------

def make_coord_hw(H, W):
    # LIIF make_coord(shape, flatten=False): cell centers in [-1, 1], 'ij' grid.
    seq_h = -1.0 + 1.0 / H + (2.0 / H) * jnp.arange(H, dtype=jnp.float32)
    seq_w = -1.0 + 1.0 / W + (2.0 / W) * jnp.arange(W, dtype=jnp.float32)
    gh, gw = jnp.meshgrid(seq_h, seq_w, indexing="ij")
    return jnp.stack([gh, gw], axis=-1)                    # (H, W, 2); ch 0 = h-coord


def edsr_forward(x_nchw, params, *, n_resblocks, res_scale):
    N, n_colors, H, W = x_nchw.shape
    n_feats = params["head_w"].shape[-1]
    HW = H * W
    cpad = ((n_colors + 7) // 8) * 8                       # 8-aligned tap stride for head slab

    # NCHW in, (N, C, HW) flat channels-first for the kernel (contiguous reshape).
    x = x_nchw.reshape(N, n_colors, HW).astype(jnp.float32)

    # Coordinate map (2, HW) and the 9 tap-validity masks (9, HW); depend only
    # on static (H, W) so XLA constant-folds them.
    pos = jnp.transpose(make_coord_hw(H, W), (2, 0, 1)).reshape(2, HW)
    row = jnp.repeat(jnp.arange(H, dtype=jnp.int32), W)
    col = jnp.tile(jnp.arange(W, dtype=jnp.int32), H)
    mlist = []
    for dy in range(3):
        for dx in range(3):
            oy, ox = dy - 1, dx - 1
            m = ((row + oy >= 0) & (row + oy < H) & (col + ox >= 0) & (col + ox < W))
            mlist.append(m.astype(jnp.float32))
    masks = jnp.stack(mlist)                               # (9, HW)

    def pack3x3(w_hwio):   # (3,3,Cin,Cout) -> (Cout, 9*Cin) bf16, row = (ky*3+kx)*Cin+ci
        cout = w_hwio.shape[-1]
        return jnp.transpose(w_hwio, (3, 0, 1, 2)).reshape(cout, -1).astype(jnp.bfloat16)

    # Head weight padded so each tap occupies `cpad` K-rows (zeros past n_colors).
    hw = jnp.transpose(params["head_w"], (3, 0, 1, 2)).reshape(n_feats, 9, n_colors)
    hw = jnp.pad(hw, ((0, 0), (0, 0), (0, cpad - n_colors)))
    hw = hw.reshape(n_feats, 9 * cpad).astype(jnp.bfloat16)

    w1 = jnp.stack([pack3x3(w) for w in params["body_w1"]])     # (R, C, 9C) bf16
    w2 = jnp.stack([pack3x3(w) for w in params["body_w2"]])
    b1 = jnp.stack(params["body_b1"])                           # (R, C, 1) f32
    b2 = jnp.stack(params["body_b2"])
    mbw = jnp.stack(params["mbody_w"])                          # (R, C, C) f32
    mbb = jnp.stack(params["mbody_b"])                          # (R, C, 1) f32

    kernel = functools.partial(
        _edsr_fused_kernel, H=H, W=W, n_colors=n_colors, cpad=cpad,
        n_feats=n_feats, n_resblocks=n_resblocks, res_scale=res_scale)

    out = pl.pallas_call(
        kernel,
        out_shape=jax.ShapeDtypeStruct((N, n_feats, HW), jnp.float32),
        grid=(N,),
        in_specs=[
            pl.BlockSpec((None, n_colors, HW), lambda n: (n, 0, 0)),          # x (C, HW)
            pl.BlockSpec((2, HW), lambda n: (0, 0)),                          # pos
            pl.BlockSpec((9, HW), lambda n: (0, 0)),                          # tap masks
            pl.BlockSpec((n_feats, 9 * cpad), lambda n: (0, 0)),              # head_w (bf16)
            pl.BlockSpec((n_feats, 1), lambda n: (0, 0)),                     # head_b
            pl.BlockSpec((n_resblocks, n_feats, 9 * n_feats), lambda n: (0, 0, 0)),  # w1
            pl.BlockSpec((n_resblocks, n_feats, 1), lambda n: (0, 0, 0)),     # b1
            pl.BlockSpec((n_resblocks, n_feats, 9 * n_feats), lambda n: (0, 0, 0)),  # w2
            pl.BlockSpec((n_resblocks, n_feats, 1), lambda n: (0, 0, 0)),     # b2
            pl.BlockSpec((n_feats, n_feats), lambda n: (0, 0)),               # mtail_w
            pl.BlockSpec((n_feats, 1), lambda n: (0, 0)),                     # mtail_b
            pl.BlockSpec((n_feats, 2), lambda n: (0, 0)),                     # mhead_w
            pl.BlockSpec((n_feats, 1), lambda n: (0, 0)),                     # mhead_b
            pl.BlockSpec((n_resblocks, n_feats, n_feats), lambda n: (0, 0, 0)),  # mbody_w
            pl.BlockSpec((n_resblocks, n_feats, 1), lambda n: (0, 0, 0)),     # mbody_b
        ],
        out_specs=pl.BlockSpec((None, n_feats, HW), lambda n: (n, 0, 0)),     # (C, HW) = NCHW
        scratch_shapes=[
            pltpu.VMEM((9 * cpad, HW), jnp.bfloat16),     # head im2col slab (zero-padded taps)
            pltpu.VMEM((9 * n_feats, HW), jnp.bfloat16),  # body im2col slab
            pltpu.VMEM((n_feats, HW), jnp.float32),       # running residual stream mf
            pltpu.VMEM((n_feats, HW), jnp.float32),       # head output (final residual)
            pltpu.VMEM((n_feats, HW), jnp.float32),       # mm = mhead(pos)
        ],
        compiler_params=pltpu.CompilerParams(
            dimension_semantics=("parallel",)),           # both TCs on v7x when N >= 2
    )(x, pos, masks, hw, params["head_b"], w1, b1, w2, b2,
      params["mtail_w"], params["mtail_b"], params["mhead_w"], params["mhead_b"],
      mbw, mbb)

    # args.no_upsampling=True -> no Upsampler/tail branch. Output already NCHW.
    return out.reshape(N, n_feats, H, W)


# ------------------------------ pure-XLA reference --------------------------

def edsr_reference(x_nchw, params, *, n_resblocks, res_scale):
    hi = jax.lax.Precision.HIGHEST
    x = x_nchw.astype(jnp.float32)
    N, _, H, W = x.shape

    def conv3(v, w_hwio, b):
        w_oihw = jnp.transpose(w_hwio, (3, 2, 0, 1))
        y = jax.lax.conv_general_dilated(
            v, w_oihw, window_strides=(1, 1), padding="SAME",
            dimension_numbers=("NCHW", "OIHW", "NCHW"), precision=hi)
        return y + b.reshape(1, -1, 1, 1)

    def conv1(v, w_oi, b):
        return (jnp.einsum("oi,nihw->nohw", w_oi, v, precision=hi)
                + b.reshape(1, -1, 1, 1))

    xh = conv3(x, params["head_w"], params["head_b"])
    pos = jnp.transpose(make_coord_hw(H, W), (2, 0, 1))[None]
    pos = jnp.broadcast_to(pos, (N, 2, H, W))
    mm = conv1(pos, params["mhead_w"], params["mhead_b"])
    mf = xh
    for i in range(n_resblocks):
        r = conv3(mf, params["body_w1"][i], params["body_b1"][i])
        r = jnp.maximum(r, 0.0)
        r = conv3(r, params["body_w2"][i], params["body_b2"][i])
        mf = (r * res_scale + mf) * jnp.sin(
            2.0 * math.pi * conv1(mm, params["mbody_w"][i], params["mbody_b"][i]))
    return conv1(mf, params["mtail_w"], params["mtail_b"]) + xh


# ------------------------------ parameter init ------------------------------

def _kaiming_hwio(key, kh, kw, cin, cout):
    fan_out = cout * kh * kw
    std = math.sqrt(2.0 / fan_out)
    return std * jax.random.normal(key, (kh, kw, cin, cout), jnp.float32)


def _kaiming_oi(key, cin, cout):
    std = math.sqrt(2.0 / cout)                      # 1x1 conv, fan_out = cout
    return std * jax.random.normal(key, (cout, cin), jnp.float32)


def _conv_bias(key, fan_in, cout):
    bound = 1.0 / math.sqrt(fan_in)
    return jax.random.uniform(key, (cout, 1), jnp.float32, -bound, bound)


def init_params(key, *, n_colors, n_feats, n_resblocks):
    keys = iter(jax.random.split(key, 6 + 6 * n_resblocks))
    p = {
        "head_w": _kaiming_hwio(next(keys), 3, 3, n_colors, n_feats),
        "head_b": _conv_bias(next(keys), n_colors * 9, n_feats),
        "mhead_w": _kaiming_oi(next(keys), 2, n_feats),
        "mhead_b": _conv_bias(next(keys), 2, n_feats),
        "mtail_w": _kaiming_oi(next(keys), n_feats, n_feats),
        "mtail_b": _conv_bias(next(keys), n_feats, n_feats),
        "body_w1": [], "body_b1": [], "body_w2": [], "body_b2": [],
        "mbody_w": [], "mbody_b": [],
    }
    sine_bound = math.sqrt(6.0 / 1.0) / (2.0 * math.pi)   # weight.size(-1) == 1 for 1x1 conv
    for _ in range(n_resblocks):
        p["body_w1"].append(_kaiming_hwio(next(keys), 3, 3, n_feats, n_feats))
        p["body_b1"].append(_conv_bias(next(keys), n_feats * 9, n_feats))
        p["body_w2"].append(_kaiming_hwio(next(keys), 3, 3, n_feats, n_feats))
        p["body_b2"].append(_conv_bias(next(keys), n_feats * 9, n_feats))
        p["mbody_w"].append(jax.random.uniform(
            next(keys), (n_feats, n_feats), jnp.float32, -sine_bound, sine_bound))
        p["mbody_b"].append(_conv_bias(next(keys), n_feats, n_feats))
    # The trailing 3x3 conv in self.body is never executed by forward -> not created.
    return p


# ----------------------------------- main ------------------------------------

if __name__ == "__main__":
    N, n_colors, H, W = 2, 3, 16, 16
    n_feats, n_resblocks, res_scale = 32, 2, 1.0

    root = jax.random.PRNGKey(0)
    k_params, k_x = jax.random.split(root)
    params = init_params(k_params, n_colors=n_colors, n_feats=n_feats,
                         n_resblocks=n_resblocks)
    x = jax.random.normal(k_x, (N, n_colors, H, W), jnp.float32)

    fwd = jax.jit(functools.partial(edsr_forward, n_resblocks=n_resblocks,
                                    res_scale=res_scale))
    out = jax.block_until_ready(fwd(x, params))

    assert out.shape == (N, n_feats, H, W), out.shape
    assert bool(jnp.all(jnp.isfinite(out)))

    ref = edsr_reference(x, params, n_resblocks=n_resblocks, res_scale=res_scale)
    max_err = float(jnp.max(jnp.abs(out - ref)))
    assert bool(jnp.allclose(out, ref, rtol=5e-2, atol=5e-2)), f"max abs err {max_err}"

    print("KERNEL_OK")
</pallas_src>

<mosaic_0001>
module attributes {stable_mosaic.version = 11 : i64} {
  func.func @_edsr_fused_kernel(%arg0: i32, %arg1: memref<1x3x256xf32, #tpu.memory_space<vmem>>, %arg2: memref<2x256xf32, #tpu.memory_space<vmem>>, %arg3: memref<9x256xf32, #tpu.memory_space<vmem>>, %arg4: memref<32x72xbf16, #tpu.memory_space<vmem>>, %arg5: memref<32x1xf32, #tpu.memory_space<vmem>>, %arg6: memref<2x32x288xbf16, #tpu.memory_space<vmem>>, %arg7: memref<2x32x1xf32, #tpu.memory_space<vmem>>, %arg8: memref<2x32x288xbf16, #tpu.memory_space<vmem>>, %arg9: memref<2x32x1xf32, #tpu.memory_space<vmem>>, %arg10: memref<32x32xf32, #tpu.memory_space<vmem>>, %arg11: memref<32x1xf32, #tpu.memory_space<vmem>>, %arg12: memref<32x2xf32, #tpu.memory_space<vmem>>, %arg13: memref<32x1xf32, #tpu.memory_space<vmem>>, %arg14: memref<2x32x32xf32, #tpu.memory_space<vmem>>, %arg15: memref<2x32x1xf32, #tpu.memory_space<vmem>>, %arg16: memref<1x32x256xf32, #tpu.memory_space<vmem>>, %arg17: memref<72x256xbf16, #tpu.memory_space<vmem>>, %arg18: memref<288x256xbf16, #tpu.memory_space<vmem>>, %arg19: memref<32x256xf32, #tpu.memory_space<vmem>>, %arg20: memref<32x256xf32, #tpu.memory_space<vmem>>, %arg21: memref<32x256xf32, #tpu.memory_space<vmem>>) attributes {dimension_semantics = [#tpu.dimension_semantics<parallel>], iteration_bounds = array<i64: 2>, scalar_prefetch = 0 : i64, scratch_operands = 5 : i64, tpu.core_type = #tpu.core_type<tc>, window_params = [{transform_indices = @transform_0, window_bounds = array<i64: 1, 3, 256>}, {pipeline_mode = #tpu.pipeline_mode<synchronous>, transform_indices = @transform_1, window_bounds = array<i64: 2, 256>}, {pipeline_mode = #tpu.pipeline_mode<synchronous>, transform_indices = @transform_2, window_bounds = array<i64: 9, 256>}, {pipeline_mode = #tpu.pipeline_mode<synchronous>, transform_indices = @transform_3, window_bounds = array<i64: 32, 72>}, {pipeline_mode = #tpu.pipeline_mode<synchronous>, transform_indices = @transform_4, window_bounds = array<i64: 32, 1>}, {pipeline_mode = #tpu.pipeline_mode<synchronous>, transform_indices = @transform_5, window_bounds = array<i64: 2, 32, 288>}, {pipeline_mode = #tpu.pipeline_mode<synchronous>, transform_indices = @transform_6, window_bounds = array<i64: 2, 32, 1>}, {pipeline_mode = #tpu.pipeline_mode<synchronous>, transform_indices = @transform_7, window_bounds = array<i64: 2, 32, 288>}, {pipeline_mode = #tpu.pipeline_mode<synchronous>, transform_indices = @transform_8, window_bounds = array<i64: 2, 32, 1>}, {pipeline_mode = #tpu.pipeline_mode<synchronous>, transform_indices = @transform_9, window_bounds = array<i64: 32, 32>}, {pipeline_mode = #tpu.pipeline_mode<synchronous>, transform_indices = @transform_10, window_bounds = array<i64: 32, 1>}, {pipeline_mode = #tpu.pipeline_mode<synchronous>, transform_indices = @transform_11, window_bounds = array<i64: 32, 2>}, {pipeline_mode = #tpu.pipeline_mode<synchronous>, transform_indices = @transform_12, window_bounds = array<i64: 32, 1>}, {pipeline_mode = #tpu.pipeline_mode<synchronous>, transform_indices = @transform_13, window_bounds = array<i64: 2, 32, 32>}, {pipeline_mode = #tpu.pipeline_mode<synchronous>, transform_indices = @transform_14, window_bounds = array<i64: 2, 32, 1>}, {transform_indices = @transform_15, window_bounds = array<i64: 1, 32, 256>}]} {
    %c0 = arith.constant 0 : index
    %c0_0 = arith.constant 0 : index
    %0 = vector.load %arg3[%c0, %c0_0] : memref<9x256xf32, #tpu.memory_space<vmem>>, vector<9x256xf32>
    %c0_1 = arith.constant 0 : index
    %c0_2 = arith.constant 0 : index
    %1 = vector.load %arg12[%c0_1, %c0_2] : memref<32x2xf32, #tpu.memory_space<vmem>>, vector<32x1xf32>
    %c0_3 = arith.constant 0 : index
    %c0_4 = arith.constant 0 : index
    %2 = vector.load %arg2[%c0_3, %c0_4] : memref<2x256xf32, #tpu.memory_space<vmem>>, vector<1x256xf32>
    %3 = vector.broadcast %1 : vector<32x1xf32> to vector<32x256xf32>
    %4 = vector.broadcast %2 : vector<1x256xf32> to vector<32x256xf32>
    %5 = arith.mulf %3, %4 : vector<32x256xf32>
    %c0_5 = arith.constant 0 : index
    %c1 = arith.constant 1 : index
    %6 = vector.load %arg12[%c0_5, %c1] : memref<32x2xf32, #tpu.memory_space<vmem>>, vector<32x1xf32>
    %c1_6 = arith.constant 1 : index
    %c0_7 = arith.constant 0 : index
    %7 = vector.load %arg2[%c1_6, %c0_7] : memref<2x256xf32, #tpu.memory_space<vmem>>, vector<1x256xf32>
    %8 = vector.broadcast %6 : vector<32x1xf32> to vector<32x256xf32>
    %9 = vector.broadcast %7 : vector<1x256xf32> to vector<32x256xf32>
    %10 = arith.mulf %8, %9 : vector<32x256xf32>
    %11 = arith.addf %5, %10 : vector<32x256xf32>
    %c0_8 = arith.constant 0 : index
    %c0_9 = arith.constant 0 : index
    %12 = vector.load %arg13[%c0_8, %c0_9] : memref<32x1xf32, #tpu.memory_space<vmem>>, vector<32x1xf32>
    %13 = vector.broadcast %12 : vector<32x1xf32> to vector<32x256xf32>
    %14 = arith.addf %11, %13 : vector<32x256xf32>
    %c0_10 = arith.constant 0 : index
    %c0_11 = arith.constant 0 : index
    %15 = vector.load %arg21[%c0_10, %c0_11] : memref<32x256xf32, #tpu.memory_space<vmem>>, vector<32x256xf32>
    tpu.vector_store %arg21[%c0_10, %c0_11], %14 {strides = array<i32>} : memref<32x256xf32, #tpu.memory_space<vmem>>, vector<32x256xf32>,
    %cst = arith.constant 0.000000e+00 : bf16
    %16 = vector.broadcast %cst : bf16 to vector<72x256xbf16>
    %c0_12 = arith.constant 0 : index
    %c0_13 = arith.constant 0 : index
    %17 = vector.load %arg17[%c0_12, %c0_13] : memref<72x256xbf16, #tpu.memory_space<vmem>>, vector<72x256xbf16>
    tpu.vector_store %arg17[%c0_12, %c0_13], %16 {strides = array<i32>} : memref<72x256xbf16, #tpu.memory_space<vmem>>, vector<72x256xbf16>,
    %c0_14 = arith.constant 0 : index
    %c0_15 = arith.constant 0 : index
    %c0_16 = arith.constant 0 : index
    %18 = vector.load %arg1[%c0_14, %c0_15, %c0_16] : memref<1x3x256xf32, #tpu.memory_space<vmem>>, vector<1x3x256xf32>
    %19 = vector.shape_cast %18 : vector<1x3x256xf32> to vector<3x256xf32>
    %20 = vector.extract_strided_slice %0 {offsets = [0, 0], sizes = [1, 256], strides = [1, 1]} : vector<9x256xf32> to vector<1x256xf32>
    %cst_17 = arith.constant 0.000000e+00 : bf16
    %21 = vector.broadcast %cst_17 : bf16 to vector<3x17xbf16>
    %c0_18 = arith.constant 0 : index
    %c0_19 = arith.constant 0 : index
    %22 = vector.load %arg17[%c0_18, %c0_19] : memref<72x256xbf16, #tpu.memory_space<vmem>>, vector<3x17xbf16>
    tpu.vector_store %arg17[%c0_18, %c0_19], %21 {strides = array<i32>} : memref<72x256xbf16, #tpu.memory_space<vmem>>, vector<3x17xbf16>,
    %23 = vector.extract_strided_slice %19 {offsets = [0, 0], sizes = [3, 239], strides = [1, 1]} : vector<3x256xf32> to vector<3x239xf32>
    %24 = vector.extract_strided_slice %20 {offsets = [0, 17], sizes = [1, 239], strides = [1, 1]} : vector<1x256xf32> to vector<1x239xf32>
    %25 = vector.broadcast %24 : vector<1x239xf32> to vector<3x239xf32>
    %26 = arith.mulf %23, %25 : vector<3x239xf32>
    %27 = arith.truncf %26 : vector<3x239xf32> to vector<3x239xbf16>
    %c0_20 = arith.constant 0 : index
    %c17 = arith.constant 17 : index
    %28 = vector.load %arg17[%c0_20, %c17] : memref<72x256xbf16, #tpu.memory_space<vmem>>, vector<3x239xbf16>
    tpu.vector_store %arg17[%c0_20, %c17], %27 {strides = array<i32>} : memref<72x256xbf16, #tpu.memory_space<vmem>>, vector<3x239xbf16>,
    %29 = vector.extract_strided_slice %0 {offsets = [1, 0], sizes = [1, 256], strides = [1, 1]} : vector<9x256xf32> to vector<1x256xf32>
    %cst_21 = arith.constant 0.000000e+00 : bf16
    %30 = vector.broadcast %cst_21 : bf16 to vector<3x16xbf16>
    %c8 = arith.constant 8 : index
    %c0_22 = arith.constant 0 : index
    %31 = vector.load %arg17[%c8, %c0_22] : memref<72x256xbf16, #tpu.memory_space<vmem>>, vector<3x16xbf16>
    tpu.vector_store %arg17[%c8, %c0_22], %30 {strides = array<i32>} : memref<72x256xbf16, #tpu.memory_space<vmem>>, vector<3x16xbf16>,
    %32 = vector.extract_strided_slice %19 {offsets = [0, 0], sizes = [3, 240], strides = [1, 1]} : vector<3x256xf32> to vector<3x240xf32>
    %33 = vector.extract_strided_slice %29 {offsets = [0, 16], sizes = [1, 240], strides = [1, 1]} : vector<1x256xf32> to vector<1x240xf32>
    %34 = vector.broadcast %33 : vector<1x240xf32> to vector<3x240xf32>
    %35 = arith.mulf %32, %34 : vector<3x240xf32>
    %36 = arith.truncf %35 : vector<3x240xf32> to vector<3x240xbf16>
    %c8_23 = arith.constant 8 : index
    %c16 = arith.constant 16 : index
    %37 = vector.load %arg17[%c8_23, %c16] : memref<72x256xbf16, #tpu.memory_space<vmem>>, vector<3x240xbf16>
    tpu.vector_store %arg17[%c8_23, %c16], %36 {strides = array<i32>} : memref<72x256xbf16, #tpu.memory_space<vmem>>, vector<3x240xbf16>,
    %38 = vector.extract_strided_slice %0 {offsets = [2, 0], sizes = [1, 256], strides = [1, 1]} : vector<9x256xf32> to vector<1x256xf32>
    %cst_24 = arith.constant 0.000000e+00 : bf16
    %39 = vector.broadcast %cst_24 : bf16 to vector<3x15xbf16>
    %c16_25 = arith.constant 16 : index
    %c0_26 = arith.constant 0 : index
    %40 = vector.load %arg17[%c16_25, %c0_26] : memref<72x256xbf16, #tpu.memory_space<vmem>>, vector<3x15xbf16>
    tpu.vector_store %arg17[%c16_25, %c0_26], %39 {strides = array<i32>} : memref<72x256xbf16, #tpu.memory_space<vmem>>, vector<3x15xbf16>,
    %41 = vector.extract_strided_slice %19 {offsets = [0, 0], sizes = [3, 241], strides = [1, 1]} : vector<3x256xf32> to vector<3x241xf32>
    %42 = vector.extract_strided_slice %38 {offsets = [0, 15], sizes = [1, 241], strides = [1, 1]} : vector<1x256xf32> to vector<1x241xf32>
    %43 = vector.broadcast %42 : vector<1x241xf32> to vector<3x241xf32>
    %44 = arith.mulf %41, %43 : vector<3x241xf32>
    %45 = arith.truncf %44 : vector<3x241xf32> to vector<3x241xbf16>
    %c16_27 = arith.constant 16 : index
    %c15 = arith.constant 15 : index
    %46 = vector.load %arg17[%c16_27, %c15] : memref<72x256xbf16, #tpu.memory_space<vmem>>, vector<3x241xbf16>
    tpu.vector_store %arg17[%c16_27, %c15], %45 {strides = array<i32>} : memref<72x256xbf16, #tpu.memory_space<vmem>>, vector<3x241xbf16>,
    %47 = vector.extract_strided_slice %0 {offsets = [3, 0], sizes = [1, 256], strides = [1, 1]} : vector<9x256xf32> to vector<1x256xf32>
    %cst_28 = arith.constant 0.000000e+00 : bf16
    %48 = vector.broadcast %cst_28 : bf16 to vector<3x1xbf16>
    %c24 = arith.constant 24 : index
    %c0_29 = arith.constant 0 : index
    %49 = vector.load %arg17[%c24, %c0_29] : memref<72x256xbf16, #tpu.memory_space<vmem>>, vector<3x1xbf16>
    tpu.vector_store %arg17[%c24, %c0_29], %48 {strides = array<i32>} : memref<72x256xbf16, #tpu.memory_space<vmem>>, vector<3x1xbf16>,
    %50 = vector.extract_strided_slice %19 {offsets = [0, 0], sizes = [3, 255], strides = [1, 1]} : vector<3x256xf32> to vector<3x255xf32>
    %51 = vector.extract_strided_slice %47 {offsets = [0, 1], sizes = [1, 255], strides = [1, 1]} : vector<1x256xf32> to vector<1x255xf32>
    %52 = vector.broadcast %51 : vector<1x255xf32> to vector<3x255xf32>
    %53 = arith.mulf %50, %52 : vector<3x255xf32>
    %54 = arith.truncf %53 : vector<3x255xf32> to vector<3x255xbf16>
    %c24_30 = arith.constant 24 : index
    %c1_31 = arith.constant 1 : index
    %55 = vector.load %arg17[%c24_30, %c1_31] : memref<72x256xbf16, #tpu.memory_space<vmem>>, vector<3x255xbf16>
    tpu.vector_store %arg17[%c24_30, %c1_31], %54 {strides = array<i32>} : memref<72x256xbf16, #tpu.memory_space<vmem>>, vector<3x255xbf16>,
    %56 = arith.truncf %19 : vector<3x256xf32> to vector<3x256xbf16>
    %c32 = arith.constant 32 : index
    %c0_32 = arith.constant 0 : index
    %57 = vector.load %arg17[%c32, %c0_32] : memref<72x256xbf16, #tpu.memory_space<vmem>>, vector<3x256xbf16>
    tpu.vector_store %arg17[%c32, %c0_32], %56 {strides = array<i32>} : memref<72x256xbf16, #tpu.memory_space<vmem>>, vector<3x256xbf16>,
    %58 = vector.extract_strided_slice %0 {offsets = [5, 0], sizes = [1, 256], strides = [1, 1]} : vector<9x256xf32> to vector<1x256xf32>
    %59 = vector.extract_strided_slice %19 {offsets = [0, 1], sizes = [3, 255], strides = [1, 1]} : vector<3x256xf32> to vector<3x255xf32>
    %60 = vector.extract_strided_slice %58 {offsets = [0, 0], sizes = [1, 255], strides = [1, 1]} : vector<1x256xf32> to vector<1x255xf32>
    %61 = vector.broadcast %60 : vector<1x255xf32> to vector<3x255xf32>
    %62 = arith.mulf %59, %61 : vector<3x255xf32>
    %63 = arith.truncf %62 : vector<3x255xf32> to vector<3x255xbf16>
    %c40 = arith.constant 40 : index
    %c0_33 = arith.constant 0 : index
    %64 = vector.load %arg17[%c40, %c0_33] : memref<72x256xbf16, #tpu.memory_space<vmem>>, vector<3x255xbf16>
    tpu.vector_store %arg17[%c40, %c0_33], %63 {strides = array<i32>} : memref<72x256xbf16, #tpu.memory_space<vmem>>, vector<3x255xbf16>,
    %cst_34 = arith.constant 0.000000e+00 : bf16
    %65 = vector.broadcast %cst_34 : bf16 to vector<3x1xbf16>
    %c40_35 = arith.constant 40 : index
    %c255 = arith.constant 255 : index
    %66 = vector.load %arg17[%c40_35, %c255] : memref<72x256xbf16, #tpu.memory_space<vmem>>, vector<3x1xbf16>
    tpu.vector_store %arg17[%c40_35, %c255], %65 {strides = array<i32>} : memref<72x256xbf16, #tpu.memory_space<vmem>>, vector<3x1xbf16>,
    %67 = vector.extract_strided_slice %0 {offsets = [6, 0], sizes = [1, 256], strides = [1, 1]} : vector<9x256xf32> to vector<1x256xf32>
    %68 = vector.extract_strided_slice %19 {offsets = [0, 15], sizes = [3, 241], strides = [1, 1]} : vector<3x256xf32> to vector<3x241xf32>
    %69 = vector.extract_strided_slice %67 {offsets = [0, 0], sizes = [1, 241], strides = [1, 1]} : vector<1x256xf32> to vector<1x241xf32>
    %70 = vector.broadcast %69 : vector<1x241xf32> to vector<3x241xf32>
    %71 = arith.mulf %68, %70 : vector<3x241xf32>
    %72 = arith.truncf %71 : vector<3x241xf32> to vector<3x241xbf16>
    %c48 = arith.constant 48 : index
    %c0_36 = arith.constant 0 : index
    %73 = vector.load %arg17[%c48, %c0_36] : memref<72x256xbf16, #tpu.memory_space<vmem>>, vector<3x241xbf16>
    tpu.vector_store %arg17[%c48, %c0_36], %72 {strides = array<i32>} : memref<72x256xbf16, #tpu.memory_space<vmem>>, vector<3x241xbf16>,
    %cst_37 = arith.constant 0.000000e+00 : bf16
    %74 = vector.broadcast %cst_37 : bf16 to vector<3x15xbf16>
    %c48_38 = arith.constant 48 : index
    %c241 = arith.constant 241 : index
    %75 = vector.load %arg17[%c48_38, %c241] : memref<72x256xbf16, #tpu.memory_space<vmem>>, vector<3x15xbf16>
    tpu.vector_store %arg17[%c48_38, %c241], %74 {strides = array<i32>} : memref<72x256xbf16, #tpu.memory_space<vmem>>, vector<3x15xbf16>,
    %76 = vector.extract_strided_slice %0 {offsets = [7, 0], sizes = [1, 256], strides = [1, 1]} : vector<9x256xf32> to vector<1x256xf32>
    %77 = vector.extract_strided_slice %19 {offsets = [0, 16], sizes = [3, 240], strides = [1, 1]} : vector<3x256xf32> to vector<3x240xf32>
    %78 = vector.extract_strided_slice %76 {offsets = [0, 0], sizes = [1, 240], strides = [1, 1]} : vector<1x256xf32> to vector<1x240xf32>
    %79 = vector.broadcast %78 : vector<1x240xf32> to vector<3x240xf32>
    %80 = arith.mulf %77, %79 : vector<3x240xf32>
    %81 = arith.truncf %80 : vector<3x240xf32> to vector<3x240xbf16>
    %c56 = arith.constant 56 : index
    %c0_39 = arith.constant 0 : index
    %82 = vector.load %arg17[%c56, %c0_39] : memref<72x256xbf16, #tpu.memory_space<vmem>>, vector<3x240xbf16>
    tpu.vector_store %arg17[%c56, %c0_39], %81 {strides = array<i32>} : memref<72x256xbf16, #tpu.memory_space<vmem>>, vector<3x240xbf16>,
    %cst_40 = arith.constant 0.000000e+00 : bf16
    %83 = vector.broadcast %cst_40 : bf16 to vector<3x16xbf16>
    %c56_41 = arith.constant 56 : index
    %c240 = arith.constant 240 : index
    %84 = vector.load %arg17[%c56_41, %c240] : memref<72x256xbf16, #tpu.memory_space<vmem>>, vector<3x16xbf16>
    tpu.vector_store %arg17[%c56_41, %c240], %83 {strides = array<i32>} : memref<72x256xbf16, #tpu.memory_space<vmem>>, vector<3x16xbf16>,
    %85 = vector.extract_strided_slice %0 {offsets = [8, 0], sizes = [1, 256], strides = [1, 1]} : vector<9x256xf32> to vector<1x256xf32>
    %86 = vector.extract_strided_slice %19 {offsets = [0, 17], sizes = [3, 239], strides = [1, 1]} : vector<3x256xf32> to vector<3x239xf32>
    %87 = vector.extract_strided_slice %85 {offsets = [0, 0], sizes = [1, 239], strides = [1, 1]} : vector<1x256xf32> to vector<1x239xf32>
    %88 = vector.broadcast %87 : vector<1x239xf32> to vector<3x239xf32>
    %89 = arith.mulf %86, %88 : vector<3x239xf32>
    %90 = arith.truncf %89 : vector<3x239xf32> to vector<3x239xbf16>
    %c64 = arith.constant 64 : index
    %c0_42 = arith.constant 0 : index
    %91 = vector.load %arg17[%c64, %c0_42] : memref<72x256xbf16, #tpu.memory_space<vmem>>, vector<3x239xbf16>
    tpu.vector_store %arg17[%c64, %c0_42], %90 {strides = array<i32>} : memref<72x256xbf16, #tpu.memory_space<vmem>>, vector<3x239xbf16>,
    %cst_43 = arith.constant 0.000000e+00 : bf16
    %92 = vector.broadcast %cst_43 : bf16 to vector<3x17xbf16>
    %c64_44 = arith.constant 64 : index
    %c239 = arith.constant 239 : index
    %93 = vector.load %arg17[%c64_44, %c239] : memref<72x256xbf16, #tpu.memory_space<vmem>>, vector<3x17xbf16>
    tpu.vector_store %arg17[%c64_44, %c239], %92 {strides = array<i32>} : memref<72x256xbf16, #tpu.memory_space<vmem>>, vector<3x17xbf16>,
    %c0_45 = arith.constant 0 : index
    %c0_46 = arith.constant 0 : index
    %94 = vector.load %arg4[%c0_45, %c0_46] : memref<32x72xbf16, #tpu.memory_space<vmem>>, vector<32x72xbf16>
    %c0_47 = arith.constant 0 : index
    %c0_48 = arith.constant 0 : index
    %95 = vector.load %arg17[%c0_47, %c0_48] : memref<72x256xbf16, #tpu.memory_space<vmem>>, vector<72x256xbf16>
    %cst_49 = arith.constant dense<0.000000e+00> : vector<32x256xf32>
    %96 = tpu.matmul %94, %95, %cst_49 {dimension_numbers = #tpu.dot_dimension_numbers<[1], [0], [0], [1], [0, 0, 1, 1], [], []>} : vector<32x72xbf16>, vector<72x256xbf16>, vector<32x256xf32> -> vector<32x256xf32>
    %c0_50 = arith.constant 0 : index
    %c0_51 = arith.constant 0 : index
    %97 = vector.load %arg5[%c0_50, %c0_51] : memref<32x1xf32, #tpu.memory_space<vmem>>, vector<32x1xf32>
    %98 = vector.broadcast %97 : vector<32x1xf32> to vector<32x256xf32>
    %99 = arith.addf %96, %98 : vector<32x256xf32>
    %c0_52 = arith.constant 0 : index
    %c0_53 = arith.constant 0 : index
    %100 = vector.load %arg20[%c0_52, %c0_53] : memref<32x256xf32, #tpu.memory_space<vmem>>, vector<32x256xf32>
    tpu.vector_store %arg20[%c0_52, %c0_53], %99 {strides = array<i32>} : memref<32x256xf32, #tpu.memory_space<vmem>>, vector<32x256xf32>,
    %c0_54 = arith.constant 0 : index
    %c0_55 = arith.constant 0 : index
    %101 = vector.load %arg19[%c0_54, %c0_55] : memref<32x256xf32, #tpu.memory_space<vmem>>, vector<32x256xf32>
    tpu.vector_store %arg19[%c0_54, %c0_55], %99 {strides = array<i32>} : memref<32x256xf32, #tpu.memory_space<vmem>>, vector<32x256xf32>,
    %c0_56 = arith.constant 0 : index
    %c0_57 = arith.constant 0 : index
    %102 = vector.load %arg19[%c0_56, %c0_57] : memref<32x256xf32, #tpu.memory_space<vmem>>, vector<32x256xf32>
    %103 = vector.extract_strided_slice %0 {offsets = [0, 0], sizes = [1, 256], strides = [1, 1]} : vector<9x256xf32> to vector<1x256xf32>
    %cst_58 = arith.constant 0.000000e+00 : bf16
    %104 = vector.broadcast %cst_58 : bf16 to vector<32x17xbf16>
    %c0_59 = arith.constant 0 : index
    %c0_60 = arith.constant 0 : index
    %105 = vector.load %arg18[%c0_59, %c0_60] : memref<288x256xbf16, #tpu.memory_space<vmem>>, vector<32x17xbf16>
    tpu.vector_store %arg18[%c0_59, %c0_60], %104 {strides = array<i32>} : memref<288x256xbf16, #tpu.memory_space<vmem>>, vector<32x17xbf16>,
    %106 = vector.extract_strided_slice %102 {offsets = [0, 0], sizes = [32, 239], strides = [1, 1]} : vector<32x256xf32> to vector<32x239xf32>
    %107 = vector.extract_strided_slice %103 {offsets = [0, 17], sizes = [1, 239], strides = [1, 1]} : vector<1x256xf32> to vector<1x239xf32>
    %108 = vector.broadcast %107 : vector<1x239xf32> to vector<32x239xf32>
    %109 = arith.mulf %106, %108 : vector<32x239xf32>
    %110 = arith.truncf %109 : vector<32x239xf32> to vector<32x239xbf16>
    %c0_61 = arith.constant 0 : index
    %c17_62 = arith.constant 17 : index
    %111 = vector.load %arg18[%c0_61, %c17_62] : memref<288x256xbf16, #tpu.memory_space<vmem>>, vector<32x239xbf16>
    tpu.vector_store %arg18[%c0_61, %c17_62], %110 {strides = array<i32>} : memref<288x256xbf16, #tpu.memory_space<vmem>>, vector<32x239xbf16>,
    %112 = vector.extract_strided_slice %0 {offsets = [1, 0], sizes = [1, 256], strides = [1, 1]} : vector<9x256xf32> to vector<1x256xf32>
    %cst_63 = arith.constant 0.000000e+00 : bf16
    %113 = vector.broadcast %cst_63 : bf16 to vector<32x16xbf16>
    %c32_64 = arith.constant 32 : index
    %c0_65 = arith.constant 0 : index
    %114 = vector.load %arg18[%c32_64, %c0_65] : memref<288x256xbf16, #tpu.memory_space<vmem>>, vector<32x16xbf16>
    tpu.vector_store %arg18[%c32_64, %c0_65], %113 {strides = array<i32>} : memref<288x256xbf16, #tpu.memory_space<vmem>>, vector<32x16xbf16>,
    %115 = vector.extract_strided_slice %102 {offsets = [0, 0], sizes = [32, 240], strides = [1, 1]} : vector<32x256xf32> to vector<32x240xf32>
    %116 = vector.extract_strided_slice %112 {offsets = [0, 16], sizes = [1, 240], strides = [1, 1]} : vector<1x256xf32> to vector<1x240xf32>
    %117 = vector.broadcast %116 : vector<1x240xf32> to vector<32x240xf32>
    %118 = arith.mulf %115, %117 : vector<32x240xf32>
    %119 = arith.truncf %118 : vector<32x240xf32> to vector<32x240xbf16>
    %c32_66 = arith.constant 32 : index
    %c16_67 = arith.constant 16 : index
    %120 = vector.load %arg18[%c32_66, %c16_67] : memref<288x256xbf16, #tpu.memory_space<vmem>>, vector<32x240xbf16>
    tpu.vector_store %arg18[%c32_66, %c16_67], %119 {strides = array<i32>} : memref<288x256xbf16, #tpu.memory_space<vmem>>, vector<32x240xbf16>,
    %121 = vector.extract_strided_slice %0 {offsets = [2, 0], sizes = [1, 256], strides = [1, 1]} : vector<9x256xf32> to vector<1x256xf32>
    %cst_68 = arith.constant 0.000000e+00 : bf16
    %122 = vector.broadcast %cst_68 : bf16 to vector<32x15xbf16>
    %c64_69 = arith.constant 64 : index
    %c0_70 = arith.constant 0 : index
    %123 = vector.load %arg18[%c64_69, %c0_70] : memref<288x256xbf16, #tpu.memory_space<vmem>>, vector<32x15xbf16>
    tpu.vector_store %arg18[%c64_69, %c0_70], %122 {strides = array<i32>} : memref<288x256xbf16, #tpu.memory_space<vmem>>, vector<32x15xbf16>,
    %124 = vector.extract_strided_slice %102 {offsets = [0, 0], sizes = [32, 241], strides = [1, 1]} : vector<32x256xf32> to vector<32x241xf32>
    %125 = vector.extract_strided_slice %121 {offsets = [0, 15], sizes = [1, 241], strides = [1, 1]} : vector<1x256xf32> to vector<1x241xf32>
    %126 = vector.broadcast %125 : vector<1x241xf32> to vector<32x241xf32>
    %127 = arith.mulf %124, %126 : vector<32x241xf32>
    %128 = arith.truncf %127 : vector<32x241xf32> to vector<32x241xbf16>
    %c64_71 = arith.constant 64 : index
    %c15_72 = arith.constant 15 : index
    %129 = vector.load %arg18[%c64_71, %c15_72] : memref<288x256xbf16, #tpu.memory_space<vmem>>, vector<32x241xbf16>
    tpu.vector_store %arg18[%c64_71, %c15_72], %128 {strides = array<i32>} : memref<288x256xbf16, #tpu.memory_space<vmem>>, vector<32x241xbf16>,
    %130 = vector.extract_strided_slice %0 {offsets = [3, 0], sizes = [1, 256], strides = [1, 1]} : vector<9x256xf32> to vector<1x256xf32>
    %cst_73 = arith.constant 0.000000e+00 : bf16
    %131 = vector.broadcast %cst_73 : bf16 to vector<32x1xbf16>
    %c96 = arith.constant 96 : index
    %c0_74 = arith.constant 0 : index
    %132 = vector.load %arg18[%c96, %c0_74] : memref<288x256xbf16, #tpu.memory_space<vmem>>, vector<32x1xbf16>
    tpu.vector_store %arg18[%c96, %c0_74], %131 {strides = array<i32>} : memref<288x256xbf16, #tpu.memory_space<vmem>>, vector<32x1xbf16>,
    %133 = vector.extract_strided_slice %102 {offsets = [0, 0], sizes = [32, 255], strides = [1, 1]} : vector<32x256xf32> to vector<32x255xf32>
    %134 = vector.extract_strided_slice %130 {offsets = [0, 1], sizes = [1, 255], strides = [1, 1]} : vector<1x256xf32> to vector<1x255xf32>
    %135 = vector.broadcast %134 : vector<1x255xf32> to vector<32x255xf32>
    %136 = arith.mulf %133, %135 : vector<32x255xf32>
    %137 = arith.truncf %136 : vector<32x255xf32> to vector<32x255xbf16>
    %c96_75 = arith.constant 96 : index
    %c1_76 = arith.constant 1 : index
    %138 = vector.load %arg18[%c96_75, %c1_76] : memref<288x256xbf16, #tpu.memory_space<vmem>>, vector<32x255xbf16>
    tpu.vector_store %arg18[%c96_75, %c1_76], %137 {strides = array<i32>} : memref<288x256xbf16, #tpu.memory_space<vmem>>, vector<32x255xbf16>,
    %139 = arith.truncf %102 : vector<32x256xf32> to vector<32x256xbf16>
    %c128 = arith.constant 128 : index
    %c0_77 = arith.constant 0 : index
    %140 = vector.load %arg18[%c128, %c0_77] : memref<288x256xbf16, #tpu.memory_space<vmem>>, vector<32x256xbf16>
    tpu.vector_store %arg18[%c128, %c0_77], %139 {strides = array<i32>} : memref<288x256xbf16, #tpu.memory_space<vmem>>, vector<32x256xbf16>,
    %141 = vector.extract_strided_slice %0 {offsets = [5, 0], sizes = [1, 256], strides = [1, 1]} : vector<9x256xf32> to vector<1x256xf32>
    %142 = vector.extract_strided_slice %102 {offsets = [0, 1], sizes = [32, 255], strides = [1, 1]} : vector<32x256xf32> to vector<32x255xf32>
    %143 = vector.extract_strided_slice %141 {offsets = [0, 0], sizes = [1, 255], strides = [1, 1]} : vector<1x256xf32> to vector<1x255xf32>
    %144 = vector.broadcast %143 : vector<1x255xf32> to vector<32x255xf32>
    %145 = arith.mulf %142, %144 : vector<32x255xf32>
    %146 = arith.truncf %145 : vector<32x255xf32> to vector<32x255xbf16>
    %c160 = arith.constant 160 : index
    %c0_78 = arith.constant 0 : index
    %147 = vector.load %arg18[%c160, %c0_78] : memref<288x256xbf16, #tpu.memory_space<vmem>>, vector<32x255xbf16>
    tpu.vector_store %arg18[%c160, %c0_78], %146 {strides = array<i32>} : memref<288x256xbf16, #tpu.memory_space<vmem>>, vector<32x255xbf16>,
    %cst_79 = arith.constant 0.000000e+00 : bf16
    %148 = vector.broadcast %cst_79 : bf16 to vector<32x1xbf16>
    %c160_80 = arith.constant 160 : index
    %c255_81 = arith.constant 255 : index
    %149 = vector.load %arg18[%c160_80, %c255_81] : memref<288x256xbf16, #tpu.memory_space<vmem>>, vector<32x1xbf16>
    tpu.vector_store %arg18[%c160_80, %c255_81], %148 {strides = array<i32>} : memref<288x256xbf16, #tpu.memory_space<vmem>>, vector<32x1xbf16>,
    %150 = vector.extract_strided_slice %0 {offsets = [6, 0], sizes = [1, 256], strides = [1, 1]} : vector<9x256xf32> to vector<1x256xf32>
    %151 = vector.extract_strided_slice %102 {offsets = [0, 15], sizes = [32, 241], strides = [1, 1]} : vector<32x256xf32> to vector<32x241xf32>
    %152 = vector.extract_strided_slice %150 {offsets = [0, 0], sizes = [1, 241], strides = [1, 1]} : vector<1x256xf32> to vector<1x241xf32>
    %153 = vector.broadcast %152 : vector<1x241xf32> to vector<32x241xf32>
    %154 = arith.mulf %151, %153 : vector<32x241xf32>
    %155 = arith.truncf %154 : vector<32x241xf32> to vector<32x241xbf16>
    %c192 = arith.constant 192 : index
    %c0_82 = arith.constant 0 : index
    %156 = vector.load %arg18[%c192, %c0_82] : memref<288x256xbf16, #tpu.memory_space<vmem>>, vector<32x241xbf16>
    tpu.vector_store %arg18[%c192, %c0_82], %155 {strides = array<i32>} : memref<288x256xbf16, #tpu.memory_space<vmem>>, vector<32x241xbf16>,
    %cst_83 = arith.constant 0.000000e+00 : bf16
    %157 = vector.broadcast %cst_83 : bf16 to vector<32x15xbf16>
    %c192_84 = arith.constant 192 : index
    %c241_85 = arith.constant 241 : index
    %158 = vector.load %arg18[%c192_84, %c241_85] : memref<288x256xbf16, #tpu.memory_space<vmem>>, vector<32x15xbf16>
    tpu.vector_store %arg18[%c192_84, %c241_85], %157 {strides = array<i32>} : memref<288x256xbf16, #tpu.memory_space<vmem>>, vector<32x15xbf16>,
    %159 = vector.extract_strided_slice %0 {offsets = [7, 0], sizes = [1, 256], strides = [1, 1]} : vector<9x256xf32> to vector<1x256xf32>
    %160 = vector.extract_strided_slice %102 {offsets = [0, 16], sizes = [32, 240], strides = [1, 1]} : vector<32x256xf32> to vector<32x240xf32>
    %161 = vector.extract_strided_slice %159 {offsets = [0, 0], sizes = [1, 240], strides = [1, 1]} : vector<1x256xf32> to vector<1x240xf32>
    %162 = vector.broadcast %161 : vector<1x240xf32> to vector<32x240xf32>
    %163 = arith.mulf %160, %162 : vector<32x240xf32>
    %164 = arith.truncf %163 : vector<32x240xf32> to vector<32x240xbf16>
    %c224 = arith.constant 224 : index
    %c0_86 = arith.constant 0 : index
    %165 = vector.load %arg18[%c224, %c0_86] : memref<288x256xbf16, #tpu.memory_space<vmem>>, vector<32x240xbf16>
    tpu.vector_store %arg18[%c224, %c0_86], %164 {strides = array<i32>} : memref<288x256xbf16, #tpu.memory_space<vmem>>, vector<32x240xbf16>,
    %cst_87 = arith.constant 0.000000e+00 : bf16
    %166 = vector.broadcast %cst_87 : bf16 to vector<32x16xbf16>
    %c224_88 = arith.constant 224 : index
    %c240_89 = arith.constant 240 : index
    %167 = vector.load %arg18[%c224_88, %c240_89] : memref<288x256xbf16, #tpu.memory_space<vmem>>, vector<32x16xbf16>
    tpu.vector_store %arg18[%c224_88, %c240_89], %166 {strides = array<i32>} : memref<288x256xbf16, #tpu.memory_space<vmem>>, vector<32x16xbf16>,
    %168 = vector.extract_strided_slice %0 {offsets = [8, 0], sizes = [1, 256], strides = [1, 1]} : vector<9x256xf32> to vector<1x256xf32>
    %169 = vector.extract_strided_slice %102 {offsets = [0, 17], sizes = [32, 239], strides = [1, 1]} : vector<32x256xf32> to vector<32x239xf32>
    %170 = vector.extract_strided_slice %168 {offsets = [0, 0], sizes = [1, 239], strides = [1, 1]} : vector<1x256xf32> to vector<1x239xf32>
    %171 = vector.broadcast %170 : vector<1x239xf32> to vector<32x239xf32>
    %172 = arith.mulf %169, %171 : vector<32x239xf32>
    %173 = arith.truncf %172 : vector<32x239xf32> to vector<32x239xbf16>
    %c256 = arith.constant 256 : index
    %c0_90 = arith.constant 0 : index
    %174 = vector.load %arg18[%c256, %c0_90] : memref<288x256xbf16, #tpu.memory_space<vmem>>, vector<32x239xbf16>
    tpu.vector_store %arg18[%c256, %c0_90], %173 {strides = array<i32>} : memref<288x256xbf16, #tpu.memory_space<vmem>>, vector<32x239xbf16>,
    %cst_91 = arith.constant 0.000000e+00 : bf16
    %175 = vector.broadcast %cst_91 : bf16 to vector<32x17xbf16>
    %c256_92 = arith.constant 256 : index
    %c239_93 = arith.constant 239 : index
    %176 = vector.load %arg18[%c256_92, %c239_93] : memref<288x256xbf16, #tpu.memory_space<vmem>>, vector<32x17xbf16>
    tpu.vector_store %arg18[%c256_92, %c239_93], %175 {strides = array<i32>} : memref<288x256xbf16, #tpu.memory_space<vmem>>, vector<32x17xbf16>,
    %c0_94 = arith.constant 0 : index
    %c0_95 = arith.constant 0 : index
    %c0_96 = arith.constant 0 : index
    %177 = vector.load %arg6[%c0_94, %c0_95, %c0_96] : memref<2x32x288xbf16, #tpu.memory_space<vmem>>, vector<1x32x288xbf16>
    %178 = vector.shape_cast %177 : vector<1x32x288xbf16> to vector<32x288xbf16>
    %c0_97 = arith.constant 0 : index
    %c0_98 = arith.constant 0 : index
    %179 = vector.load %arg18[%c0_97, %c0_98] : memref<288x256xbf16, #tpu.memory_space<vmem>>, vector<288x256xbf16>
    %cst_99 = arith.constant dense<0.000000e+00> : vector<32x256xf32>
    %180 = tpu.matmul %178, %179, %cst_99 {dimension_numbers = #tpu.dot_dimension_numbers<[1], [0], [0], [1], [0, 0, 1, 1], [], []>} : vector<32x288xbf16>, vector<288x256xbf16>, vector<32x256xf32> -> vector<32x256xf32>
    %c0_100 = arith.constant 0 : index
    %c0_101 = arith.constant 0 : index
    %c0_102 = arith.constant 0 : index
    %181 = vector.load %arg7[%c0_100, %c0_101, %c0_102] : memref<2x32x1xf32, #tpu.memory_space<vmem>>, vector<1x32x1xf32>
    %182 = vector.shape_cast %181 : vector<1x32x1xf32> to vector<32x1xf32>
    %183 = vector.broadcast %182 : vector<32x1xf32> to vector<32x256xf32>
    %184 = arith.addf %180, %183 : vector<32x256xf32>
    %cst_103 = arith.constant 0.000000e+00 : f32
    %185 = vector.broadcast %cst_103 : f32 to vector<32x256xf32>
    %186 = arith.maximumf %184, %185 : vector<32x256xf32>
    %187 = vector.extract_strided_slice %0 {offsets = [0, 0], sizes = [1, 256], strides = [1, 1]} : vector<9x256xf32> to vector<1x256xf32>
    %cst_104 = arith.constant 0.000000e+00 : bf16
    %188 = vector.broadcast %cst_104 : bf16 to vector<32x17xbf16>
    %c0_105 = arith.constant 0 : index
    %c0_106 = arith.constant 0 : index
    %189 = vector.load %arg18[%c0_105, %c0_106] : memref<288x256xbf16, #tpu.memory_space<vmem>>, vector<32x17xbf16>
    tpu.vector_store %arg18[%c0_105, %c0_106], %188 {strides = array<i32>} : memref<288x256xbf16, #tpu.memory_space<vmem>>, vector<32x17xbf16>,
    %190 = vector.extract_strided_slice %186 {offsets = [0, 0], sizes = [32, 239], strides = [1, 1]} : vector<32x256xf32> to vector<32x239xf32>
    %191 = vector.extract_strided_slice %187 {offsets = [0, 17], sizes = [1, 239], strides = [1, 1]} : vector<1x256xf32> to vector<1x239xf32>
    %192 = vector.broadcast %191 : vector<1x239xf32> to vector<32x239xf32>
    %193 = arith.mulf %190, %192 : vector<32x239xf32>
    %194 = arith.truncf %193 : vector<32x239xf32> to vector<32x239xbf16>
    %c0_107 = arith.constant 0 : index
    %c17_108 = arith.constant 17 : index
    %195 = vector.load %arg18[%c0_107, %c17_108] : memref<288x256xbf16, #tpu.memory_space<vmem>>, vector<32x239xbf16>
    tpu.vector_store %arg18[%c0_107, %c17_108], %194 {strides = array<i32>} : memref<288x256xbf16, #tpu.memory_space<vmem>>, vector<32x239xbf16>,
    %196 = vector.extract_strided_slice %0 {offsets = [1, 0], sizes = [1, 256], strides = [1, 1]} : vector<9x256xf32> to vector<1x256xf32>
    %cst_109 = arith.constant 0.000000e+00 : bf16
    %197 = vector.broadcast %cst_109 : bf16 to vector<32x16xbf16>
    %c32_110 = arith.constant 32 : index
    %c0_111 = arith.constant 0 : index
    %198 = vector.load %arg18[%c32_110, %c0_111] : memref<288x256xbf16, #tpu.memory_space<vmem>>, vector<32x16xbf16>
    tpu.vector_store %arg18[%c32_110, %c0_111], %197 {strides = array<i32>} : memref<288x256xbf16, #tpu.memory_space<vmem>>, vector<32x16xbf16>,
    %199 = vector.extract_strided_slice %186 {offsets = [0, 0], sizes = [32, 240], strides = [1, 1]} : vector<32x256xf32> to vector<32x240xf32>
    %200 = vector.extract_strided_slice %196 {offsets = [0, 16], sizes = [1, 240], strides = [1, 1]} : vector<1x256xf32> to vector<1x240xf32>
    %201 = vector.broadcast %200 : vector<1x240xf32> to vector<32x240xf32>
    %202 = arith.mulf %199, %201 : vector<32x240xf32>
    %203 = arith.truncf %202 : vector<32x240xf32> to vector<32x240xbf16>
    %c32_112 = arith.constant 32 : index
    %c16_113 = arith.constant 16 : index
    %204 = vector.load %arg18[%c32_112, %c16_113] : memref<288x256xbf16, #tpu.memory_space<vmem>>, vector<32x240xbf16>
    tpu.vector_store %arg18[%c32_112, %c16_113], %203 {strides = array<i32>} : memref<288x256xbf16, #tpu.memory_space<vmem>>, vector<32x240xbf16>,
    %205 = vector.extract_strided_slice %0 {offsets = [2, 0], sizes = [1, 256], strides = [1, 1]} : vector<9x256xf32> to vector<1x256xf32>
    %cst_114 = arith.constant 0.000000e+00 : bf16
    %206 = vector.broadcast %cst_114 : bf16 to vector<32x15xbf16>
    %c64_115 = arith.constant 64 : index
    %c0_116 = arith.constant 0 : index
    %207 = vector.load %arg18[%c64_115, %c0_116] : memref<288x256xbf16, #tpu.memory_space<vmem>>, vector<32x15xbf16>
    tpu.vector_store %arg18[%c64_115, %c0_116], %206 {strides = array<i32>} : memref<288x256xbf16, #tpu.memory_space<vmem>>, vector<32x15xbf16>,
    %208 = vector.extract_strided_slice %186 {offsets = [0, 0], sizes = [32, 241], strides = [1, 1]} : vector<32x256xf32> to vector<32x241xf32>
    %209 = vector.extract_strided_slice %205 {offsets = [0, 15], sizes = [1, 241], strides = [1, 1]} : vector<1x256xf32> to vector<1x241xf32>
    %210 = vector.broadcast %209 : vector<1x241xf32> to vector<32x241xf32>
    %211 = arith.mulf %208, %210 : vector<32x241xf32>
    %212 = arith.truncf %211 : vector<32x241xf32> to vector<32x241xbf16>
    %c64_117 = arith.constant 64 : index
    %c15_118 = arith.constant 15 : index
    %213 = vector.load %arg18[%c64_117, %c15_118] : memref<288x256xbf16, #tpu.memory_space<vmem>>, vector<32x241xbf16>
    tpu.vector_store %arg18[%c64_117, %c15_118], %212 {strides = array<i32>} : memref<288x256xbf16, #tpu.memory_space<vmem>>, vector<32x241xbf16>,
    %214 = vector.extract_strided_slice %0 {offsets = [3, 0], sizes = [1, 256], strides = [1, 1]} : vector<9x256xf32> to vector<1x256xf32>
    %cst_119 = arith.constant 0.000000e+00 : bf16
    %215 = vector.broadcast %cst_119 : bf16 to vector<32x1xbf16>
    %c96_120 = arith.constant 96 : index
    %c0_121 = arith.constant 0 : index
    %216 = vector.load %arg18[%c96_120, %c0_121] : memref<288x256xbf16, #tpu.memory_space<vmem>>, vector<32x1xbf16>
    tpu.vector_store %arg18[%c96_120, %c0_121], %215 {strides = array<i32>} : memref<288x256xbf16, #tpu.memory_space<vmem>>, vector<32x1xbf16>,
    %217 = vector.extract_strided_slice %186 {offsets = [0, 0], sizes = [32, 255], strides = [1, 1]} : vector<32x256xf32> to vector<32x255xf32>
    %218 = vector.extract_strided_slice %214 {offsets = [0, 1], sizes = [1, 255], strides = [1, 1]} : vector<1x256xf32> to vector<1x255xf32>
    %219 = vector.broadcast %218 : vector<1x255xf32> to vector<32x255xf32>
    %220 = arith.mulf %217, %219 : vector<32x255xf32>
    %221 = arith.truncf %220 : vector<32x255xf32> to vector<32x255xbf16>
    %c96_122 = arith.constant 96 : index
    %c1_123 = arith.constant 1 : index
    %222 = vector.load %arg18[%c96_122, %c1_123] : memref<288x256xbf16, #tpu.memory_space<vmem>>, vector<32x255xbf16>
    tpu.vector_store %arg18[%c96_122, %c1_123], %221 {strides = array<i32>} : memref<288x256xbf16, #tpu.memory_space<vmem>>, vector<32x255xbf16>,
    %223 = arith.truncf %186 : vector<32x256xf32> to vector<32x256xbf16>
    %c128_124 = arith.constant 128 : index
    %c0_125 = arith.constant 0 : index
    %224 = vector.load %arg18[%c128_124, %c0_125] : memref<288x256xbf16, #tpu.memory_space<vmem>>, vector<32x256xbf16>
    tpu.vector_store %arg18[%c128_124, %c0_125], %223 {strides = array<i32>} : memref<288x256xbf16, #tpu.memory_space<vmem>>, vector<32x256xbf16>,
    %225 = vector.extract_strided_slice %0 {offsets = [5, 0], sizes = [1, 256], strides = [1, 1]} : vector<9x256xf32> to vector<1x256xf32>
    %226 = vector.extract_strided_slice %186 {offsets = [0, 1], sizes = [32, 255], strides = [1, 1]} : vector<32x256xf32> to vector<32x255xf32>
    %227 = vector.extract_strided_slice %225 {offsets = [0, 0], sizes = [1, 255], strides = [1, 1]} : vector<1x256xf32> to vector<1x255xf32>
    %228 = vector.broadcast %227 : vector<1x255xf32> to vector<32x255xf32>
    %229 = arith.mulf %226, %228 : vector<32x255xf32>
    %230 = arith.truncf %229 : vector<32x255xf32> to vector<32x255xbf16>
    %c160_126 = arith.constant 160 : index
    %c0_127 = arith.constant 0 : index
    %231 = vector.load %arg18[%c160_126, %c0_127] : memref<288x256xbf16, #tpu.memory_space<vmem>>, vector<32x255xbf16>
    tpu.vector_store %arg18[%c160_126, %c0_127], %230 {strides = array<i32>} : memref<288x256xbf16, #tpu.memory_space<vmem>>, vector<32x255xbf16>,
    %cst_128 = arith.constant 0.000000e+00 : bf16
    %232 = vector.broadcast %cst_128 : bf16 to vector<32x1xbf16>
    %c160_129 = arith.constant 160 : index
    %c255_130 = arith.constant 255 : index
    %233 = vector.load %arg18[%c160_129, %c255_130] : memref<288x256xbf16, #tpu.memory_space<vmem>>, vector<32x1xbf16>
    tpu.vector_store %arg18[%c160_129, %c255_130], %232 {strides = array<i32>} : memref<288x256xbf16, #tpu.memory_space<vmem>>, vector<32x1xbf16>,
    %234 = vector.extract_strided_slice %0 {offsets = [6, 0], sizes = [1, 256], strides = [1, 1]} : vector<9x256xf32> to vector<1x256xf32>
    %235 = vector.extract_strided_slice %186 {offsets = [0, 15], sizes = [32, 241], strides = [1, 1]} : vector<32x256xf32> to vector<32x241xf32>
    %236 = vector.extract_strided_slice %234 {offsets = [0, 0], sizes = [1, 241], strides = [1, 1]} : vector<1x256xf32> to vector<1x241xf32>
    %237 = vector.broadcast %236 : vector<1x241xf32> to vector<32x241xf32>
    %238 = arith.mulf %235, %237 : vector<32x241xf32>
    %239 = arith.truncf %238 : vector<32x241xf32> to vector<32x241xbf16>
    %c192_131 = arith.constant 192 : index
    %c0_132 = arith.constant 0 : index
    %240 = vector.load %arg18[%c192_131, %c0_132] : memref<288x256xbf16, #tpu.memory_space<vmem>>, vector<32x241xbf16>
    tpu.vector_store %arg18[%c192_131, %c0_132], %239 {strides = array<i32>} : memref<288x256xbf16, #tpu.memory_space<vmem>>, vector<32x241xbf16>,
    %cst_133 = arith.constant 0.000000e+00 : bf16
    %241 = vector.broadcast %cst_133 : bf16 to vector<32x15xbf16>
    %c192_134 = arith.constant 192 : index
    %c241_135 = arith.constant 241 : index
    %242 = vector.load %arg18[%c192_134, %c241_135] : memref<288x256xbf16, #tpu.memory_space<vmem>>, vector<32x15xbf16>
    tpu.vector_store %arg18[%c192_134, %c241_135], %241 {strides = array<i32>} : memref<288x256xbf16, #tpu.memory_space<vmem>>, vector<32x15xbf16>,
    %243 = vector.extract_strided_slice %0 {offsets = [7, 0], sizes = [1, 256], strides = [1, 1]} : vector<9x256xf32> to vector<1x256xf32>
    %244 = vector.extract_strided_slice %186 {offsets = [0, 16], sizes = [32, 240], strides = [1, 1]} : vector<32x256xf32> to vector<32x240xf32>
    %245 = vector.extract_strided_slice %243 {offsets = [0, 0], sizes = [1, 240], strides = [1, 1]} : vector<1x256xf32> to vector<1x240xf32>
    %246 = vector.broadcast %245 : vector<1x240xf32> to vector<32x240xf32>
    %247 = arith.mulf %244, %246 : vector<32x240xf32>
    %248 = arith.truncf %247 : vector<32x240xf32> to vector<32x240xbf16>
    %c224_136 = arith.constant 224 : index
    %c0_137 = arith.constant 0 : index
    %249 = vector.load %arg18[%c224_136, %c0_137] : memref<288x256xbf16, #tpu.memory_space<vmem>>, vector<32x240xbf16>
    tpu.vector_store %arg18[%c224_136, %c0_137], %248 {strides = array<i32>} : memref<288x256xbf16, #tpu.memory_space<vmem>>, vector<32x240xbf16>,
    %cst_138 = arith.constant 0.000000e+00 : bf16
    %250 = vector.broadcast %cst_138 : bf16 to vector<32x16xbf16>
    %c224_139 = arith.constant 224 : index
    %c240_140 = arith.constant 240 : index
    %251 = vector.load %arg18[%c224_139, %c240_140] : memref<288x256xbf16, #tpu.memory_space<vmem>>, vector<32x16xbf16>
    tpu.vector_store %arg18[%c224_139, %c240_140], %250 {strides = array<i32>} : memref<288x256xbf16, #tpu.memory_space<vmem>>, vector<32x16xbf16>,
    %252 = vector.extract_strided_slice %0 {offsets = [8, 0], sizes = [1, 256], strides = [1, 1]} : vector<9x256xf32> to vector<1x256xf32>
    %253 = vector.extract_strided_slice %186 {offsets = [0, 17], sizes = [32, 239], strides = [1, 1]} : vector<32x256xf32> to vector<32x239xf32>
    %254 = vector.extract_strided_slice %252 {offsets = [0, 0], sizes = [1, 239], strides = [1, 1]} : vector<1x256xf32> to vector<1x239xf32>
    %255 = vector.broadcast %254 : vector<1x239xf32> to vector<32x239xf32>
    %256 = arith.mulf %253, %255 : vector<32x239xf32>
    %257 = arith.truncf %256 : vector<32x239xf32> to vector<32x239xbf16>
    %c256_141 = arith.constant 256 : index
    %c0_142 = arith.constant 0 : index
    %258 = vector.load %arg18[%c256_141, %c0_142] : memref<288x256xbf16, #tpu.memory_space<vmem>>, vector<32x239xbf16>
    tpu.vector_store %arg18[%c256_141, %c0_142], %257 {strides = array<i32>} : memref<288x256xbf16, #tpu.memory_space<vmem>>, vector<32x239xbf16>,
    %cst_143 = arith.constant 0.000000e+00 : bf16
    %259 = vector.broadcast %cst_143 : bf16 to vector<32x17xbf16>
    %c256_144 = arith.constant 256 : index
    %c239_145 = arith.constant 239 : index
    %260 = vector.load %arg18[%c256_144, %c239_145] : memref<288x256xbf16, #tpu.memory_space<vmem>>, vector<32x17xbf16>
    tpu.vector_store %arg18[%c256_144, %c239_145], %259 {strides = array<i32>} : memref<288x256xbf16, #tpu.memory_space<vmem>>, vector<32x17xbf16>,
    %c0_146 = arith.constant 0 : index
    %c0_147 = arith.constant 0 : index
    %c0_148 = arith.constant 0 : index
    %261 = vector.load %arg8[%c0_146, %c0_147, %c0_148] : memref<2x32x288xbf16, #tpu.memory_space<vmem>>, vector<1x32x288xbf16>
    %262 = vector.shape_cast %261 : vector<1x32x288xbf16> to vector<32x288xbf16>
    %c0_149 = arith.constant 0 : index
    %c0_150 = arith.constant 0 : index
    %263 = vector.load %arg18[%c0_149, %c0_150] : memref<288x256xbf16, #tpu.memory_space<vmem>>, vector<288x256xbf16>
    %cst_151 = arith.constant dense<0.000000e+00> : vector<32x256xf32>
    %264 = tpu.matmul %262, %263, %cst_151 {dimension_numbers = #tpu.dot_dimension_numbers<[1], [0], [0], [1], [0, 0, 1, 1], [], []>} : vector<32x288xbf16>, vector<288x256xbf16>, vector<32x256xf32> -> vector<32x256xf32>
    %c0_152 = arith.constant 0 : index
    %c0_153 = arith.constant 0 : index
    %c0_154 = arith.constant 0 : index
    %265 = vector.load %arg9[%c0_152, %c0_153, %c0_154] : memref<2x32x1xf32, #tpu.memory_space<vmem>>, vector<1x32x1xf32>
    %266 = vector.shape_cast %265 : vector<1x32x1xf32> to vector<32x1xf32>
    %267 = vector.broadcast %266 : vector<32x1xf32> to vector<32x256xf32>
    %268 = arith.addf %264, %267 : vector<32x256xf32>
    %c0_155 = arith.constant 0 : index
    %c0_156 = arith.constant 0 : index
    %c0_157 = arith.constant 0 : index
    %269 = vector.load %arg14[%c0_155, %c0_156, %c0_157] : memref<2x32x32xf32, #tpu.memory_space<vmem>>, vector<1x32x32xf32>
    %270 = vector.shape_cast %269 : vector<1x32x32xf32> to vector<32x32xf32>
    %c0_158 = arith.constant 0 : index
    %c0_159 = arith.constant 0 : index
    %271 = vector.load %arg21[%c0_158, %c0_159] : memref<32x256xf32, #tpu.memory_space<vmem>>, vector<32x256xf32>
    %cst_160 = arith.constant dense<0.000000e+00> : vector<32x256xf32>
    %272 = tpu.matmul %270, %271, %cst_160 {dimension_numbers = #tpu.dot_dimension_numbers<[1], [0], [0], [1], [0, 0, 1, 1], [], []>, precision = #tpu.contract_precision<fp32>} : vector<32x32xf32>, vector<32x256xf32>, vector<32x256xf32> -> vector<32x256xf32>
    %c0_161 = arith.constant 0 : index
    %c0_162 = arith.constant 0 : index
    %c0_163 = arith.constant 0 : index
    %273 = vector.load %arg15[%c0_161, %c0_162, %c0_163] : memref<2x32x1xf32, #tpu.memory_space<vmem>>, vector<1x32x1xf32>
    %274 = vector.shape_cast %273 : vector<1x32x1xf32> to vector<32x1xf32>
    %275 = vector.broadcast %274 : vector<32x1xf32> to vector<32x256xf32>
    %276 = arith.addf %272, %275 : vector<32x256xf32>
    %cst_164 = arith.constant 6.28318548 : f32
    %277 = vector.broadcast %cst_164 : f32 to vector<32x256xf32>
    %278 = arith.mulf %277, %276 : vector<32x256xf32>
    %279 = math.sin %278 : vector<32x256xf32>
    %c0_165 = arith.constant 0 : index
    %c0_166 = arith.constant 0 : index
    %280 = vector.load %arg19[%c0_165, %c0_166] : memref<32x256xf32, #tpu.memory_space<vmem>>, vector<32x256xf32>
    %281 = arith.addf %268, %280 : vector<32x256xf32>
    %282 = arith.mulf %281, %279 : vector<32x256xf32>
    %c0_167 = arith.constant 0 : index
    %c0_168 = arith.constant 0 : index
    %283 = vector.load %arg19[%c0_167, %c0_168] : memref<32x256xf32, #tpu.memory_space<vmem>>, vector<32x256xf32>
    tpu.vector_store %arg19[%c0_167, %c0_168], %282 {strides = array<i32>} : memref<32x256xf32, #tpu.memory_space<vmem>>, vector<32x256xf32>,
    %c0_169 = arith.constant 0 : index
    %c0_170 = arith.constant 0 : index
    %284 = vector.load %arg19[%c0_169, %c0_170] : memref<32x256xf32, #tpu.memory_space<vmem>>, vector<32x256xf32>
    %285 = vector.extract_strided_slice %0 {offsets = [0, 0], sizes = [1, 256], strides = [1, 1]} : vector<9x256xf32> to vector<1x256xf32>
    %cst_171 = arith.constant 0.000000e+00 : bf16
    %286 = vector.broadcast %cst_171 : bf16 to vector<32x17xbf16>
    %c0_172 = arith.constant 0 : index
    %c0_173 = arith.constant 0 : index
    %287 = vector.load %arg18[%c0_172, %c0_173] : memref<288x256xbf16, #tpu.memory_space<vmem>>, vector<32x17xbf16>
    tpu.vector_store %arg18[%c0_172, %c0_173], %286 {strides = array<i32>} : memref<288x256xbf16, #tpu.memory_space<vmem>>, vector<32x17xbf16>,
    %288 = vector.extract_strided_slice %284 {offsets = [0, 0], sizes = [32, 239], strides = [1, 1]} : vector<32x256xf32> to vector<32x239xf32>
    %289 = vector.extract_strided_slice %285 {offsets = [0, 17], sizes = [1, 239], strides = [1, 1]} : vector<1x256xf32> to vector<1x239xf32>
    %290 = vector.broadcast %289 : vector<1x239xf32> to vector<32x239xf32>
    %291 = arith.mulf %288, %290 : vector<32x239xf32>
    %292 = arith.truncf %291 : vector<32x239xf32> to vector<32x239xbf16>
    %c0_174 = arith.constant 0 : index
    %c17_175 = arith.constant 17 : index
    %293 = vector.load %arg18[%c0_174, %c17_175] : memref<288x256xbf16, #tpu.memory_space<vmem>>, vector<32x239xbf16>
    tpu.vector_store %arg18[%c0_174, %c17_175], %292 {strides = array<i32>} : memref<288x256xbf16, #tpu.memory_space<vmem>>, vector<32x239xbf16>,
    %294 = vector.extract_strided_slice %0 {offsets = [1, 0], sizes = [1, 256], strides = [1, 1]} : vector<9x256xf32> to vector<1x256xf32>
    %cst_176 = arith.constant 0.000000e+00 : bf16
    %295 = vector.broadcast %cst_176 : bf16 to vector<32x16xbf16>
    %c32_177 = arith.constant 32 : index
    %c0_178 = arith.constant 0 : index
    %296 = vector.load %arg18[%c32_177, %c0_178] : memref<288x256xbf16, #tpu.memory_space<vmem>>, vector<32x16xbf16>
    tpu.vector_store %arg18[%c32_177, %c0_178], %295 {strides = array<i32>} : memref<288x256xbf16, #tpu.memory_space<vmem>>, vector<32x16xbf16>,
    %297 = vector.extract_strided_slice %284 {offsets = [0, 0], sizes = [32, 240], strides = [1, 1]} : vector<32x256xf32> to vector<32x240xf32>
    %298 = vector.extract_strided_slice %294 {offsets = [0, 16], sizes = [1, 240], strides = [1, 1]} : vector<1x256xf32> to vector<1x240xf32>
    %299 = vector.broadcast %298 : vector<1x240xf32> to vector<32x240xf32>
    %300 = arith.mulf %297, %299 : vector<32x240xf32>
    %301 = arith.truncf %300 : vector<32x240xf32> to vector<32x240xbf16>
    %c32_179 = arith.constant 32 : index
    %c16_180 = arith.constant 16 : index
    %302 = vector.load %arg18[%c32_179, %c16_180] : memref<288x256xbf16, #tpu.memory_space<vmem>>, vector<32x240xbf16>
    tpu.vector_store %arg18[%c32_179, %c16_180], %301 {strides = array<i32>} : memref<288x256xbf16, #tpu.memory_space<vmem>>, vector<32x240xbf16>,
    %303 = vector.extract_strided_slice %0 {offsets = [2, 0], sizes = [1, 256], strides = [1, 1]} : vector<9x256xf32> to vector<1x256xf32>
    %cst_181 = arith.constant 0.000000e+00 : bf16
    %304 = vector.broadcast %cst_181 : bf16 to vector<32x15xbf16>
    %c64_182 = arith.constant 64 : index
    %c0_183 = arith.constant 0 : index
    %305 = vector.load %arg18[%c64_182, %c0_183] : memref<288x256xbf16, #tpu.memory_space<vmem>>, vector<32x15xbf16>
    tpu.vector_store %arg18[%c64_182, %c0_183], %304 {strides = array<i32>} : memref<288x256xbf16, #tpu.memory_space<vmem>>, vector<32x15xbf16>,
    %306 = vector.extract_strided_slice %284 {offsets = [0, 0], sizes = [32, 241], strides = [1, 1]} : vector<32x256xf32> to vector<32x241xf32>
    %307 = vector.extract_strided_slice %303 {offsets = [0, 15], sizes = [1, 241], strides = [1, 1]} : vector<1x256xf32> to vector<1x241xf32>
    %308 = vector.broadcast %307 : vector<1x241xf32> to vector<32x241xf32>
    %309 = arith.mulf %306, %308 : vector<32x241xf32>
    %310 = arith.truncf %309 : vector<32x241xf32> to vector<32x241xbf16>
    %c64_184 = arith.constant 64 : index
    %c15_185 = arith.constant 15 : index
    %311 = vector.load %arg18[%c64_184, %c15_185] : memref<288x256xbf16, #tpu.memory_space<vmem>>, vector<32x241xbf16>
    tpu.vector_store %arg18[%c64_184, %c15_185], %310 {strides = array<i32>} : memref<288x256xbf16, #tpu.memory_space<vmem>>, vector<32x241xbf16>,
    %312 = vector.extract_strided_slice %0 {offsets = [3, 0], sizes = [1, 256], strides = [1, 1]} : vector<9x256xf32> to vector<1x256xf32>
    %cst_186 = arith.constant 0.000000e+00 : bf16
    %313 = vector.broadcast %cst_186 : bf16 to vector<32x1xbf16>
    %c96_187 = arith.constant 96 : index
    %c0_188 = arith.constant 0 : index
    %314 = vector.load %arg18[%c96_187, %c0_188] : memref<288x256xbf16, #tpu.memory_space<vmem>>, vector<32x1xbf16>
    tpu.vector_store %arg18[%c96_187, %c0_188], %313 {strides = array<i32>} : memref<288x256xbf16, #tpu.memory_space<vmem>>, vector<32x1xbf16>,
    %315 = vector.extract_strided_slice %284 {offsets = [0, 0], sizes = [32, 255], strides = [1, 1]} : vector<32x256xf32> to vector<32x255xf32>
    %316 = vector.extract_strided_slice %312 {offsets = [0, 1], sizes = [1, 255], strides = [1, 1]} : vector<1x256xf32> to vector<1x255xf32>
    %317 = vector.broadcast %316 : vector<1x255xf32> to vector<32x255xf32>
    %318 = arith.mulf %315, %317 : vector<32x255xf32>
    %319 = arith.truncf %318 : vector<32x255xf32> to vector<32x255xbf16>
    %c96_189 = arith.constant 96 : index
    %c1_190 = arith.constant 1 : index
    %320 = vector.load %arg18[%c96_189, %c1_190] : memref<288x256xbf16, #tpu.memory_space<vmem>>, vector<32x255xbf16>
    tpu.vector_store %arg18[%c96_189, %c1_190], %319 {strides = array<i32>} : memref<288x256xbf16, #tpu.memory_space<vmem>>, vector<32x255xbf16>,
    %321 = arith.truncf %284 : vector<32x256xf32> to vector<32x256xbf16>
    %c128_191 = arith.constant 128 : index
    %c0_192 = arith.constant 0 : index
    %322 = vector.load %arg18[%c128_191, %c0_192] : memref<288x256xbf16, #tpu.memory_space<vmem>>, vector<32x256xbf16>
    tpu.vector_store %arg18[%c128_191, %c0_192], %321 {strides = array<i32>} : memref<288x256xbf16, #tpu.memory_space<vmem>>, vector<32x256xbf16>,
    %323 = vector.extract_strided_slice %0 {offsets = [5, 0], sizes = [1, 256], strides = [1, 1]} : vector<9x256xf32> to vector<1x256xf32>
    %324 = vector.extract_strided_slice %284 {offsets = [0, 1], sizes = [32, 255], strides = [1, 1]} : vector<32x256xf32> to vector<32x255xf32>
    %325 = vector.extract_strided_slice %323 {offsets = [0, 0], sizes = [1, 255], strides = [1, 1]} : vector<1x256xf32> to vector<1x255xf32>
    %326 = vector.broadcast %325 : vector<1x255xf32> to vector<32x255xf32>
    %327 = arith.mulf %324, %326 : vector<32x255xf32>
    %328 = arith.truncf %327 : vector<32x255xf32> to vector<32x255xbf16>
    %c160_193 = arith.constant 160 : index
    %c0_194 = arith.constant 0 : index
    %329 = vector.load %arg18[%c160_193, %c0_194] : memref<288x256xbf16, #tpu.memory_space<vmem>>, vector<32x255xbf16>
    tpu.vector_store %arg18[%c160_193, %c0_194], %328 {strides = array<i32>} : memref<288x256xbf16, #tpu.memory_space<vmem>>, vector<32x255xbf16>,
    %cst_195 = arith.constant 0.000000e+00 : bf16
    %330 = vector.broadcast %cst_195 : bf16 to vector<32x1xbf16>
    %c160_196 = arith.constant 160 : index
    %c255_197 = arith.constant 255 : index
    %331 = vector.load %arg18[%c160_196, %c255_197] : memref<288x256xbf16, #tpu.memory_space<vmem>>, vector<32x1xbf16>
    tpu.vector_store %arg18[%c160_196, %c255_197], %330 {strides = array<i32>} : memref<288x256xbf16, #tpu.memory_space<vmem>>, vector<32x1xbf16>,
    %332 = vector.extract_strided_slice %0 {offsets = [6, 0], sizes = [1, 256], strides = [1, 1]} : vector<9x256xf32> to vector<1x256xf32>
    %333 = vector.extract_strided_slice %284 {offsets = [0, 15], sizes = [32, 241], strides = [1, 1]} : vector<32x256xf32> to vector<32x241xf32>
    %334 = vector.extract_strided_slice %332 {offsets = [0, 0], sizes = [1, 241], strides = [1, 1]} : vector<1x256xf32> to vector<1x241xf32>
    %335 = vector.broadcast %334 : vector<1x241xf32> to vector<32x241xf32>
    %336 = arith.mulf %333, %335 : vector<32x241xf32>
    %337 = arith.truncf %336 : vector<32x241xf32> to vector<32x241xbf16>
    %c192_198 = arith.constant 192 : index
    %c0_199 = arith.constant 0 : index
    %338 = vector.load %arg18[%c192_198, %c0_199] : memref<288x256xbf16, #tpu.memory_space<vmem>>, vector<32x241xbf16>
    tpu.vector_store %arg18[%c192_198, %c0_199], %337 {strides = array<i32>} : memref<288x256xbf16, #tpu.memory_space<vmem>>, vector<32x241xbf16>,
    %cst_200 = arith.constant 0.000000e+00 : bf16
    %339 = vector.broadcast %cst_200 : bf16 to vector<32x15xbf16>
    %c192_201 = arith.constant 192 : index
    %c241_202 = arith.constant 241 : index
    %340 = vector.load %arg18[%c192_201, %c241_202] : memref<288x256xbf16, #tpu.memory_space<vmem>>, vector<32x15xbf16>
    tpu.vector_store %arg18[%c192_201, %c241_202], %339 {strides = array<i32>} : memref<288x256xbf16, #tpu.memory_space<vmem>>, vector<32x15xbf16>,
    %341 = vector.extract_strided_slice %0 {offsets = [7, 0], sizes = [1, 256], strides = [1, 1]} : vector<9x256xf32> to vector<1x256xf32>
    %342 = vector.extract_strided_slice %284 {offsets = [0, 16], sizes = [32, 240], strides = [1, 1]} : vector<32x256xf32> to vector<32x240xf32>
    %343 = vector.extract_strided_slice %341 {offsets = [0, 0], sizes = [1, 240], strides = [1, 1]} : vector<1x256xf32> to vector<1x240xf32>
    %344 = vector.broadcast %343 : vector<1x240xf32> to vector<32x240xf32>
    %345 = arith.mulf %342, %344 : vector<32x240xf32>
    %346 = arith.truncf %345 : vector<32x240xf32> to vector<32x240xbf16>
    %c224_203 = arith.constant 224 : index
    %c0_204 = arith.constant 0 : index
    %347 = vector.load %arg18[%c224_203, %c0_204] : memref<288x256xbf16, #tpu.memory_space<vmem>>, vector<32x240xbf16>
    tpu.vector_store %arg18[%c224_203, %c0_204], %346 {strides = array<i32>} : memref<288x256xbf16, #tpu.memory_space<vmem>>, vector<32x240xbf16>,
    %cst_205 = arith.constant 0.000000e+00 : bf16
    %348 = vector.broadcast %cst_205 : bf16 to vector<32x16xbf16>
    %c224_206 = arith.constant 224 : index
    %c240_207 = arith.constant 240 : index
    %349 = vector.load %arg18[%c224_206, %c240_207] : memref<288x256xbf16, #tpu.memory_space<vmem>>, vector<32x16xbf16>
    tpu.vector_store %arg18[%c224_206, %c240_207], %348 {strides = array<i32>} : memref<288x256xbf16, #tpu.memory_space<vmem>>, vector<32x16xbf16>,
    %350 = vector.extract_strided_slice %0 {offsets = [8, 0], sizes = [1, 256], strides = [1, 1]} : vector<9x256xf32> to vector<1x256xf32>
    %351 = vector.extract_strided_slice %284 {offsets = [0, 17], sizes = [32, 239], strides = [1, 1]} : vector<32x256xf32> to vector<32x239xf32>
    %352 = vector.extract_strided_slice %350 {offsets = [0, 0], sizes = [1, 239], strides = [1, 1]} : vector<1x256xf32> to vector<1x239xf32>
    %353 = vector.broadcast %352 : vector<1x239xf32> to vector<32x239xf32>
    %354 = arith.mulf %351, %353 : vector<32x239xf32>
    %355 = arith.truncf %354 : vector<32x239xf32> to vector<32x239xbf16>
    %c256_208 = arith.constant 256 : index
    %c0_209 = arith.constant 0 : index
    %356 = vector.load %arg18[%c256_208, %c0_209] : memref<288x256xbf16, #tpu.memory_space<vmem>>, vector<32x239xbf16>
    tpu.vector_store %arg18[%c256_208, %c0_209], %355 {strides = array<i32>} : memref<288x256xbf16, #tpu.memory_space<vmem>>, vector<32x239xbf16>,
    %cst_210 = arith.constant 0.000000e+00 : bf16
    %357 = vector.broadcast %cst_210 : bf16 to vector<32x17xbf16>
    %c256_211 = arith.constant 256 : index
    %c239_212 = arith.constant 239 : index
    %358 = vector.load %arg18[%c256_211, %c239_212] : memref<288x256xbf16, #tpu.memory_space<vmem>>, vector<32x17xbf16>
    tpu.vector_store %arg18[%c256_211, %c239_212], %357 {strides = array<i32>} : memref<288x256xbf16, #tpu.memory_space<vmem>>, vector<32x17xbf16>,
    %c1_213 = arith.constant 1 : index
    %c0_214 = arith.constant 0 : index
    %c0_215 = arith.constant 0 : index
    %359 = vector.load %arg6[%c1_213, %c0_214, %c0_215] : memref<2x32x288xbf16, #tpu.memory_space<vmem>>, vector<1x32x288xbf16>
    %360 = vector.shape_cast %359 : vector<1x32x288xbf16> to vector<32x288xbf16>
    %c0_216 = arith.constant 0 : index
    %c0_217 = arith.constant 0 : index
    %361 = vector.load %arg18[%c0_216, %c0_217] : memref<288x256xbf16, #tpu.memory_space<vmem>>, vector<288x256xbf16>
    %cst_218 = arith.constant dense<0.000000e+00> : vector<32x256xf32>
    %362 = tpu.matmul %360, %361, %cst_218 {dimension_numbers = #tpu.dot_dimension_numbers<[1], [0], [0], [1], [0, 0, 1, 1], [], []>} : vector<32x288xbf16>, vector<288x256xbf16>, vector<32x256xf32> -> vector<32x256xf32>
    %c1_219 = arith.constant 1 : index
    %c0_220 = arith.constant 0 : index
    %c0_221 = arith.constant 0 : index
    %363 = vector.load %arg7[%c1_219, %c0_220, %c0_221] : memref<2x32x1xf32, #tpu.memory_space<vmem>>, vector<1x32x1xf32>
    %364 = vector.shape_cast %363 : vector<1x32x1xf32> to vector<32x1xf32>
    %365 = vector.broadcast %364 : vector<32x1xf32> to vector<32x256xf32>
    %366 = arith.addf %362, %365 : vector<32x256xf32>
    %cst_222 = arith.constant 0.000000e+00 : f32
    %367 = vector.broadcast %cst_222 : f32 to vector<32x256xf32>
    %368 = arith.maximumf %366, %367 : vector<32x256xf32>
    %369 = vector.extract_strided_slice %0 {offsets = [0, 0], sizes = [1, 256], strides = [1, 1]} : vector<9x256xf32> to vector<1x256xf32>
    %cst_223 = arith.constant 0.000000e+00 : bf16
    %370 = vector.broadcast %cst_223 : bf16 to vector<32x17xbf16>
    %c0_224 = arith.constant 0 : index
    %c0_225 = arith.constant 0 : index
    %371 = vector.load %arg18[%c0_224, %c0_225] : memref<288x256xbf16, #tpu.memory_space<vmem>>, vector<32x17xbf16>
    tpu.vector_store %arg18[%c0_224, %c0_225], %370 {strides = array<i32>} : memref<288x256xbf16, #tpu.memory_space<vmem>>, vector<32x17xbf16>,
    %372 = vector.extract_strided_slice %368 {offsets = [0, 0], sizes = [32, 239], strides = [1, 1]} : vector<32x256xf32> to vector<32x239xf32>
    %373 = vector.extract_strided_slice %369 {offsets = [0, 17], sizes = [1, 239], strides = [1, 1]} : vector<1x256xf32> to vector<1x239xf32>
    %374 = vector.broadcast %373 : vector<1x239xf32> to vector<32x239xf32>
    %375 = arith.mulf %372, %374 : vector<32x239xf32>
    %376 = arith.truncf %375 : vector<32x239xf32> to vector<32x239xbf16>
    %c0_226 = arith.constant 0 : index
    %c17_227 = arith.constant 17 : index
    %377 = vector.load %arg18[%c0_226, %c17_227] : memref<288x256xbf16, #tpu.memory_space<vmem>>, vector<32x239xbf16>
    tpu.vector_store %arg18[%c0_226, %c17_227], %376 {strides = array<i32>} : memref<288x256xbf16, #tpu.memory_space<vmem>>, vector<32x239xbf16>,
    %378 = vector.extract_strided_slice %0 {offsets = [1, 0], sizes = [1, 256], strides = [1, 1]} : vector<9x256xf32> to vector<1x256xf32>
    %cst_228 = arith.constant 0.000000e+00 : bf16
    %379 = vector.broadcast %cst_228 : bf16 to vector<32x16xbf16>
    %c32_229 = arith.constant 32 : index
    %c0_230 = arith.constant 0 : index
    %380 = vector.load %arg18[%c32_229, %c0_230] : memref<288x256xbf16, #tpu.memory_space<vmem>>, vector<32x16xbf16>
    tpu.vector_store %arg18[%c32_229, %c0_230], %379 {strides = array<i32>} : memref<288x256xbf16, #tpu.memory_space<vmem>>, vector<32x16xbf16>,
    %381 = vector.extract_strided_slice %368 {offsets = [0, 0], sizes = [32, 240], strides = [1, 1]} : vector<32x256xf32> to vector<32x240xf32>
    %382 = vector.extract_strided_slice %378 {offsets = [0, 16], sizes = [1, 240], strides = [1, 1]} : vector<1x256xf32> to vector<1x240xf32>
    %383 = vector.broadcast %382 : vector<1x240xf32> to vector<32x240xf32>
    %384 = arith.mulf %381, %383 : vector<32x240xf32>
    %385 = arith.truncf %384 : vector<32x240xf32> to vector<32x240xbf16>
    %c32_231 = arith.constant 32 : index
    %c16_232 = arith.constant 16 : index
    %386 = vector.load %arg18[%c32_231, %c16_232] : memref<288x256xbf16, #tpu.memory_space<vmem>>, vector<32x240xbf16>
    tpu.vector_store %arg18[%c32_231, %c16_232], %385 {strides = array<i32>} : memref<288x256xbf16, #tpu.memory_space<vmem>>, vector<32x240xbf16>,
    %387 = vector.extract_strided_slice %0 {offsets = [2, 0], sizes = [1, 256], strides = [1, 1]} : vector<9x256xf32> to vector<1x256xf32>
    %cst_233 = arith.constant 0.000000e+00 : bf16
    %388 = vector.broadcast %cst_233 : bf16 to vector<32x15xbf16>
    %c64_234 = arith.constant 64 : index
    %c0_235 = arith.constant 0 : index
    %389 = vector.load %arg18[%c64_234, %c0_235] : memref<288x256xbf16, #tpu.memory_space<vmem>>, vector<32x15xbf16>
    tpu.vector_store %arg18[%c64_234, %c0_235], %388 {strides = array<i32>} : memref<288x256xbf16, #tpu.memory_space<vmem>>, vector<32x15xbf16>,
    %390 = vector.extract_strided_slice %368 {offsets = [0, 0], sizes = [32, 241], strides = [1, 1]} : vector<32x256xf32> to vector<32x241xf32>
    %391 = vector.extract_strided_slice %387 {offsets = [0, 15], sizes = [1, 241], strides = [1, 1]} : vector<1x256xf32> to vector<1x241xf32>
    %392 = vector.broadcast %391 : vector<1x241xf32> to vector<32x241xf32>
    %393 = arith.mulf %390, %392 : vector<32x241xf32>
    %394 = arith.truncf %393 : vector<32x241xf32> to vector<32x241xbf16>
    %c64_236 = arith.constant 64 : index
    %c15_237 = arith.constant 15 : index
    %395 = vector.load %arg18[%c64_236, %c15_237] : memref<288x256xbf16, #tpu.memory_space<vmem>>, vector<32x241xbf16>
    tpu.vector_store %arg18[%c64_236, %c15_237], %394 {strides = array<i32>} : memref<288x256xbf16, #tpu.memory_space<vmem>>, vector<32x241xbf16>,
    %396 = vector.extract_strided_slice %0 {offsets = [3, 0], sizes = [1, 256], strides = [1, 1]} : vector<9x256xf32> to vector<1x256xf32>
    %cst_238 = arith.constant 0.000000e+00 : bf16
    %397 = vector.broadcast %cst_238 : bf16 to vector<32x1xbf16>
    %c96_239 = arith.constant 96 : index
    %c0_240 = arith.constant 0 : index
    %398 = vector.load %arg18[%c96_239, %c0_240] : memref<288x256xbf16, #tpu.memory_space<vmem>>, vector<32x1xbf16>
    tpu.vector_store %arg18[%c96_239, %c0_240], %397 {strides = array<i32>} : memref<288x256xbf16, #tpu.memory_space<vmem>>, vector<32x1xbf16>,
    %399 = vector.extract_strided_slice %368 {offsets = [0, 0], sizes = [32, 255], strides = [1, 1]} : vector<32x256xf32> to vector<32x255xf32>
    %400 = vector.extract_strided_slice %396 {offsets = [0, 1], sizes = [1, 255], strides = [1, 1]} : vector<1x256xf32> to vector<1x255xf32>
    %401 = vector.broadcast %400 : vector<1x255xf32> to vector<32x255xf32>
    %402 = arith.mulf %399, %401 : vector<32x255xf32>
    %403 = arith.truncf %402 : vector<32x255xf32> to vector<32x255xbf16>
    %c96_241 = arith.constant 96 : index
    %c1_242 = arith.constant 1 : index
    %404 = vector.load %arg18[%c96_241, %c1_242] : memref<288x256xbf16, #tpu.memory_space<vmem>>, vector<32x255xbf16>
    tpu.vector_store %arg18[%c96_241, %c1_242], %403 {strides = array<i32>} : memref<288x256xbf16, #tpu.memory_space<vmem>>, vector<32x255xbf16>,
    %405 = arith.truncf %368 : vector<32x256xf32> to vector<32x256xbf16>
    %c128_243 = arith.constant 128 : index
    %c0_244 = arith.constant 0 : index
    %406 = vector.load %arg18[%c128_243, %c0_244] : memref<288x256xbf16, #tpu.memory_space<vmem>>, vector<32x256xbf16>
    tpu.vector_store %arg18[%c128_243, %c0_244], %405 {strides = array<i32>} : memref<288x256xbf16, #tpu.memory_space<vmem>>, vector<32x256xbf16>,
    %407 = vector.extract_strided_slice %0 {offsets = [5, 0], sizes = [1, 256], strides = [1, 1]} : vector<9x256xf32> to vector<1x256xf32>
    %408 = vector.extract_strided_slice %368 {offsets = [0, 1], sizes = [32, 255], strides = [1, 1]} : vector<32x256xf32> to vector<32x255xf32>
    %409 = vector.extract_strided_slice %407 {offsets = [0, 0], sizes = [1, 255], strides = [1, 1]} : vector<1x256xf32> to vector<1x255xf32>
    %410 = vector.broadcast %409 : vector<1x255xf32> to vector<32x255xf32>
    %411 = arith.mulf %408, %410 : vector<32x255xf32>
    %412 = arith.truncf %411 : vector<32x255xf32> to vector<32x255xbf16>
    %c160_245 = arith.constant 160 : index
    %c0_246 = arith.constant 0 : index
    %413 = vector.load %arg18[%c160_245, %c0_246] : memref<288x256xbf16, #tpu.memory_space<vmem>>, vector<32x255xbf16>
    tpu.vector_store %arg18[%c160_245, %c0_246], %412 {strides = array<i32>} : memref<288x256xbf16, #tpu.memory_space<vmem>>, vector<32x255xbf16>,
    %cst_247 = arith.constant 0.000000e+00 : bf16
    %414 = vector.broadcast %cst_247 : bf16 to vector<32x1xbf16>
    %c160_248 = arith.constant 160 : index
    %c255_249 = arith.constant 255 : index
    %415 = vector.load %arg18[%c160_248, %c255_249] : memref<288x256xbf16, #tpu.memory_space<vmem>>, vector<32x1xbf16>
    tpu.vector_store %arg18[%c160_248, %c255_249], %414 {strides = array<i32>} : memref<288x256xbf16, #tpu.memory_space<vmem>>, vector<32x1xbf16>,
    %416 = vector.extract_strided_slice %0 {offsets = [6, 0], sizes = [1, 256], strides = [1, 1]} : vector<9x256xf32> to vector<1x256xf32>
    %417 = vector.extract_strided_slice %368 {offsets = [0, 15], sizes = [32, 241], strides = [1, 1]} : vector<32x256xf32> to vector<32x241xf32>
    %418 = vector.extract_strided_slice %416 {offsets = [0, 0], sizes = [1, 241], strides = [1, 1]} : vector<1x256xf32> to vector<1x241xf32>
    %419 = vector.broadcast %418 : vector<1x241xf32> to vector<32x241xf32>
    %420 = arith.mulf %417, %419 : vector<32x241xf32>
    %421 = arith.truncf %420 : vector<32x241xf32> to vector<32x241xbf16>
    %c192_250 = arith.constant 192 : index
    %c0_251 = arith.constant 0 : index
    %422 = vector.load %arg18[%c192_250, %c0_251] : memref<288x256xbf16, #tpu.memory_space<vmem>>, vector<32x241xbf16>
    tpu.vector_store %arg18[%c192_250, %c0_251], %421 {strides = array<i32>} : memref<288x256xbf16, #tpu.memory_space<vmem>>, vector<32x241xbf16>,
    %cst_252 = arith.constant 0.000000e+00 : bf16
    %423 = vector.broadcast %cst_252 : bf16 to vector<32x15xbf16>
    %c192_253 = arith.constant 192 : index
    %c241_254 = arith.constant 241 : index
    %424 = vector.load %arg18[%c192_253, %c241_254] : memref<288x256xbf16, #tpu.memory_space<vmem>>, vector<32x15xbf16>
    tpu.vector_store %arg18[%c192_253, %c241_254], %423 {strides = array<i32>} : memref<288x256xbf16, #tpu.memory_space<vmem>>, vector<32x15xbf16>,
    %425 = vector.extract_strided_slice %0 {offsets = [7, 0], sizes = [1, 256], strides = [1, 1]} : vector<9x256xf32> to vector<1x256xf32>
    %426 = vector.extract_strided_slice %368 {offsets = [0, 16], sizes = [32, 240], strides = [1, 1]} : vector<32x256xf32> to vector<32x240xf32>
    %427 = vector.extract_strided_slice %425 {offsets = [0, 0], sizes = [1, 240], strides = [1, 1]} : vector<1x256xf32> to vector<1x240xf32>
    %428 = vector.broadcast %427 : vector<1x240xf32> to vector<32x240xf32>
    %429 = arith.mulf %426, %428 : vector<32x240xf32>
    %430 = arith.truncf %429 : vector<32x240xf32> to vector<32x240xbf16>
    %c224_255 = arith.constant 224 : index
    %c0_256 = arith.constant 0 : index
    %431 = vector.load %arg18[%c224_255, %c0_256] : memref<288x256xbf16, #tpu.memory_space<vmem>>, vector<32x240xbf16>
    tpu.vector_store %arg18[%c224_255, %c0_256], %430 {strides = array<i32>} : memref<288x256xbf16, #tpu.memory_space<vmem>>, vector<32x240xbf16>,
    %cst_257 = arith.constant 0.000000e+00 : bf16
    %432 = vector.broadcast %cst_257 : bf16 to vector<32x16xbf16>
    %c224_258 = arith.constant 224 : index
    %c240_259 = arith.constant 240 : index
    %433 = vector.load %arg18[%c224_258, %c240_259] : memref<288x256xbf16, #tpu.memory_space<vmem>>, vector<32x16xbf16>
    tpu.vector_store %arg18[%c224_258, %c240_259], %432 {strides = array<i32>} : memref<288x256xbf16, #tpu.memory_space<vmem>>, vector<32x16xbf16>,
    %434 = vector.extract_strided_slice %0 {offsets = [8, 0], sizes = [1, 256], strides = [1, 1]} : vector<9x256xf32> to vector<1x256xf32>
    %435 = vector.extract_strided_slice %368 {offsets = [0, 17], sizes = [32, 239], strides = [1, 1]} : vector<32x256xf32> to vector<32x239xf32>
    %436 = vector.extract_strided_slice %434 {offsets = [0, 0], sizes = [1, 239], strides = [1, 1]} : vector<1x256xf32> to vector<1x239xf32>
    %437 = vector.broadcast %436 : vector<1x239xf32> to vector<32x239xf32>
    %438 = arith.mulf %435, %437 : vector<32x239xf32>
    %439 = arith.truncf %438 : vector<32x239xf32> to vector<32x239xbf16>
    %c256_260 = arith.constant 256 : index
    %c0_261 = arith.constant 0 : index
    %440 = vector.load %arg18[%c256_260, %c0_261] : memref<288x256xbf16, #tpu.memory_space<vmem>>, vector<32x239xbf16>
    tpu.vector_store %arg18[%c256_260, %c0_261], %439 {strides = array<i32>} : memref<288x256xbf16, #tpu.memory_space<vmem>>, vector<32x239xbf16>,
    %cst_262 = arith.constant 0.000000e+00 : bf16
    %441 = vector.broadcast %cst_262 : bf16 to vector<32x17xbf16>
    %c256_263 = arith.constant 256 : index
    %c239_264 = arith.constant 239 : index
    %442 = vector.load %arg18[%c256_263, %c239_264] : memref<288x256xbf16, #tpu.memory_space<vmem>>, vector<32x17xbf16>
    tpu.vector_store %arg18[%c256_263, %c239_264], %441 {strides = array<i32>} : memref<288x256xbf16, #tpu.memory_space<vmem>>, vector<32x17xbf16>,
    %c1_265 = arith.constant 1 : index
    %c0_266 = arith.constant 0 : index
    %c0_267 = arith.constant 0 : index
    %443 = vector.load %arg8[%c1_265, %c0_266, %c0_267] : memref<2x32x288xbf16, #tpu.memory_space<vmem>>, vector<1x32x288xbf16>
    %444 = vector.shape_cast %443 : vector<1x32x288xbf16> to vector<32x288xbf16>
    %c0_268 = arith.constant 0 : index
    %c0_269 = arith.constant 0 : index
    %445 = vector.load %arg18[%c0_268, %c0_269] : memref<288x256xbf16, #tpu.memory_space<vmem>>, vector<288x256xbf16>
    %cst_270 = arith.constant dense<0.000000e+00> : vector<32x256xf32>
    %446 = tpu.matmul %444, %445, %cst_270 {dimension_numbers = #tpu.dot_dimension_numbers<[1], [0], [0], [1], [0, 0, 1, 1], [], []>} : vector<32x288xbf16>, vector<288x256xbf16>, vector<32x256xf32> -> vector<32x256xf32>
    %c1_271 = arith.constant 1 : index
    %c0_272 = arith.constant 0 : index
    %c0_273 = arith.constant 0 : index
    %447 = vector.load %arg9[%c1_271, %c0_272, %c0_273] : memref<2x32x1xf32, #tpu.memory_space<vmem>>, vector<1x32x1xf32>
    %448 = vector.shape_cast %447 : vector<1x32x1xf32> to vector<32x1xf32>
    %449 = vector.broadcast %448 : vector<32x1xf32> to vector<32x256xf32>
    %450 = arith.addf %446, %449 : vector<32x256xf32>
    %c1_274 = arith.constant 1 : index
    %c0_275 = arith.constant 0 : index
    %c0_276 = arith.constant 0 : index
    %451 = vector.load %arg14[%c1_274, %c0_275, %c0_276] : memref<2x32x32xf32, #tpu.memory_space<vmem>>, vector<1x32x32xf32>
    %452 = vector.shape_cast %451 : vector<1x32x32xf32> to vector<32x32xf32>
    %c0_277 = arith.constant 0 : index
    %c0_278 = arith.constant 0 : index
    %453 = vector.load %arg21[%c0_277, %c0_278] : memref<32x256xf32, #tpu.memory_space<vmem>>, vector<32x256xf32>
    %cst_279 = arith.constant dense<0.000000e+00> : vector<32x256xf32>
    %454 = tpu.matmul %452, %453, %cst_279 {dimension_numbers = #tpu.dot_dimension_numbers<[1], [0], [0], [1], [0, 0, 1, 1], [], []>, precision = #tpu.contract_precision<fp32>} : vector<32x32xf32>, vector<32x256xf32>, vector<32x256xf32> -> vector<32x256xf32>
    %c1_280 = arith.constant 1 : index
    %c0_281 = arith.constant 0 : index
    %c0_282 = arith.constant 0 : index
    %455 = vector.load %arg15[%c1_280, %c0_281, %c0_282] : memref<2x32x1xf32, #tpu.memory_space<vmem>>, vector<1x32x1xf32>
    %456 = vector.shape_cast %455 : vector<1x32x1xf32> to vector<32x1xf32>
    %457 = vector.broadcast %456 : vector<32x1xf32> to vector<32x256xf32>
    %458 = arith.addf %454, %457 : vector<32x256xf32>
    %cst_283 = arith.constant 6.28318548 : f32
    %459 = vector.broadcast %cst_283 : f32 to vector<32x256xf32>
    %460 = arith.mulf %459, %458 : vector<32x256xf32>
    %461 = math.sin %460 : vector<32x256xf32>
    %c0_284 = arith.constant 0 : index
    %c0_285 = arith.constant 0 : index
    %462 = vector.load %arg19[%c0_284, %c0_285] : memref<32x256xf32, #tpu.memory_space<vmem>>, vector<32x256xf32>
    %463 = arith.addf %450, %462 : vector<32x256xf32>
    %464 = arith.mulf %463, %461 : vector<32x256xf32>
    %c0_286 = arith.constant 0 : index
    %c0_287 = arith.constant 0 : index
    %465 = vector.load %arg19[%c0_286, %c0_287] : memref<32x256xf32, #tpu.memory_space<vmem>>, vector<32x256xf32>
    tpu.vector_store %arg19[%c0_286, %c0_287], %464 {strides = array<i32>} : memref<32x256xf32, #tpu.memory_space<vmem>>, vector<32x256xf32>,
    %c0_288 = arith.constant 0 : index
    %c0_289 = arith.constant 0 : index
    %466 = vector.load %arg10[%c0_288, %c0_289] : memref<32x32xf32, #tpu.memory_space<vmem>>, vector<32x32xf32>
    %c0_290 = arith.constant 0 : index
    %c0_291 = arith.constant 0 : index
    %467 = vector.load %arg19[%c0_290, %c0_291] : memref<32x256xf32, #tpu.memory_space<vmem>>, vector<32x256xf32>
    %cst_292 = arith.constant dense<0.000000e+00> : vector<32x256xf32>
    %468 = tpu.matmul %466, %467, %cst_292 {dimension_numbers = #tpu.dot_dimension_numbers<[1], [0], [0], [1], [0, 0, 1, 1], [], []>, precision = #tpu.contract_precision<fp32>} : vector<32x32xf32>, vector<32x256xf32>, vector<32x256xf32> -> vector<32x256xf32>
    %c0_293 = arith.constant 0 : index
    %c0_294 = arith.constant 0 : index
    %469 = vector.load %arg11[%c0_293, %c0_294] : memref<32x1xf32, #tpu.memory_space<vmem>>, vector<32x1xf32>
    %470 = vector.broadcast %469 : vector<32x1xf32> to vector<32x256xf32>
    %471 = arith.addf %468, %470 : vector<32x256xf32>
    %c0_295 = arith.constant 0 : index
    %c0_296 = arith.constant 0 : index
    %472 = vector.load %arg20[%c0_295, %c0_296] : memref<32x256xf32, #tpu.memory_space<vmem>>, vector<32x256xf32>
    %473 = arith.addf %471, %472 : vector<32x256xf32>
    %c0_297 = arith.constant 0 : index
    %c0_298 = arith.constant 0 : index
    %c0_299 = arith.constant 0 : index
    %474 = vector.load %arg16[%c0_297, %c0_298, %c0_299] : memref<1x32x256xf32, #tpu.memory_space<vmem>>, vector<1x32x256xf32>
    %475 = vector.shape_cast %474 : vector<1x32x256xf32> to vector<32x256xf32>
    %476 = vector.shape_cast %473 : vector<32x256xf32> to vector<1x32x256xf32>
    tpu.vector_store %arg16[%c0_297, %c0_298, %c0_299], %476 {strides = array<i32>} : memref<1x32x256xf32, #tpu.memory_space<vmem>>, vector<1x32x256xf32>,
    return
  }
  func.func @transform_0(%arg0: i32) -> (i32, i32, i32) {
    %c0_i32 = arith.constant 0 : i32
    %c0_i32_0 = arith.constant 0 : i32
    %c0_i32_1 = arith.constant 0 : i32
    return %arg0, %c0_i32, %c0_i32_0 : i32, i32, i32
  }
  func.func @transform_1(%arg0: i32) -> (i32, i32) {
    %c0_i32 = arith.constant 0 : i32
    %c0_i32_0 = arith.constant 0 : i32
    %c0_i32_1 = arith.constant 0 : i32
    return %c0_i32, %c0_i32_0 : i32, i32
  }
  func.func @transform_2(%arg0: i32) -> (i32, i32) {
    %c0_i32 = arith.constant 0 : i32
    %c0_i32_0 = arith.constant 0 : i32
    %c0_i32_1 = arith.constant 0 : i32
    return %c0_i32, %c0_i32_0 : i32, i32
  }
  func.func @transform_3(%arg0: i32) -> (i32, i32) {
    %c0_i32 = arith.constant 0 : i32
    %c0_i32_0 = arith.constant 0 : i32
    %c0_i32_1 = arith.constant 0 : i32
    return %c0_i32, %c0_i32_0 : i32, i32
  }
  func.func @transform_4(%arg0: i32) -> (i32, i32) {
    %c0_i32 = arith.constant 0 : i32
    %c0_i32_0 = arith.constant 0 : i32
    %c0_i32_1 = arith.constant 0 : i32
    return %c0_i32, %c0_i32_0 : i32, i32
  }
  func.func @transform_5(%arg0: i32) -> (i32, i32, i32) {
    %c0_i32 = arith.constant 0 : i32
    %c0_i32_0 = arith.constant 0 : i32
    %c0_i32_1 = arith.constant 0 : i32
    %c0_i32_2 = arith.constant 0 : i32
    return %c0_i32, %c0_i32_0, %c0_i32_1 : i32, i32, i32
  }
  func.func @transform_6(%arg0: i32) -> (i32, i32, i32) {
    %c0_i32 = arith.constant 0 : i32
    %c0_i32_0 = arith.constant 0 : i32
    %c0_i32_1 = arith.constant 0 : i32
    %c0_i32_2 = arith.constant 0 : i32
    return %c0_i32, %c0_i32_0, %c0_i32_1 : i32, i32, i32
  }
  func.func @transform_7(%arg0: i32) -> (i32, i32, i32) {
    %c0_i32 = arith.constant 0 : i32
    %c0_i32_0 = arith.constant 0 : i32
    %c0_i32_1 = arith.constant 0 : i32
    %c0_i32_2 = arith.constant 0 : i32
    return %c0_i32, %c0_i32_0, %c0_i32_1 : i32, i32, i32
  }
  func.func @transform_8(%arg0: i32) -> (i32, i32, i32) {
    %c0_i32 = arith.constant 0 : i32
    %c0_i32_0 = arith.constant 0 : i32
    %c0_i32_1 = arith.constant 0 : i32
    %c0_i32_2 = arith.constant 0 : i32
    return %c0_i32, %c0_i32_0, %c0_i32_1 : i32, i32, i32
  }
  func.func @transform_9(%arg0: i32) -> (i32, i32) {
    %c0_i32 = arith.constant 0 : i32
    %c0_i32_0 = arith.constant 0 : i32
    %c0_i32_1 = arith.constant 0 : i32
    return %c0_i32, %c0_i32_0 : i32, i32
  }
  func.func @transform_10(%arg0: i32) -> (i32, i32) {
    %c0_i32 = arith.constant 0 : i32
    %c0_i32_0 = arith.constant 0 : i32
    %c0_i32_1 = arith.constant 0 : i32
    return %c0_i32, %c0_i32_0 : i32, i32
  }
  func.func @transform_11(%arg0: i32) -> (i32, i32) {
    %c0_i32 = arith.constant 0 : i32
    %c0_i32_0 = arith.constant 0 : i32
    %c0_i32_1 = arith.constant 0 : i32
    return %c0_i32, %c0_i32_0 : i32, i32
  }
  func.func @transform_12(%arg0: i32) -> (i32, i32) {
    %c0_i32 = arith.constant 0 : i32
    %c0_i32_0 = arith.constant 0 : i32
    %c0_i32_1 = arith.constant 0 : i32
    return %c0_i32, %c0_i32_0 : i32, i32
  }
  func.func @transform_13(%arg0: i32) -> (i32, i32, i32) {
    %c0_i32 = arith.constant 0 : i32
    %c0_i32_0 = arith.constant 0 : i32
    %c0_i32_1 = arith.constant 0 : i32
    %c0_i32_2 = arith.constant 0 : i32
    return %c0_i32, %c0_i32_0, %c0_i32_1 : i32, i32, i32
  }
  func.func @transform_14(%arg0: i32) -> (i32, i32, i32) {
    %c0_i32 = arith.constant 0 : i32
    %c0_i32_0 = arith.constant 0 : i32
    %c0_i32_1 = arith.constant 0 : i32
    %c0_i32_2 = arith.constant 0 : i32
    return %c0_i32, %c0_i32_0, %c0_i32_1 : i32, i32, i32
  }
  func.func @transform_15(%arg0: i32) -> (i32, i32, i32) {
    %c0_i32 = arith.constant 0 : i32
    %c0_i32_0 = arith.constant 0 : i32
    %c0_i32_1 = arith.constant 0 : i32
    return %arg0, %c0_i32, %c0_i32_0 : i32, i32, i32
  }
}

</mosaic_0001>

<llo_original>
// kernel: edsr_forward.1
$region0: #{edsr_forward.1}
  #allocation0 [shape = 'u32[]', space=smem, size = 0x4, offset = 0x4, fixed_abs, tag = 'smem constant byte address 0x4 - core index']
  #allocation1 [shape = 'u32[144,128]{1,0:T(1,128)}', space=vmem, size = 0x12000, scoped, tag = 'internal scratch']
  #allocation2 [shape = 'bf16[72,256]{1,0:T(8,128)(2,1)}', space=vmem, size = 0x9000, scoped, tag = 'scratch operand']
  #allocation3 [shape = 'bf16[288,256]{1,0:T(8,128)(2,1)}', space=vmem, size = 0x24000, scoped, tag = 'scratch operand']
  #allocation4 [shape = 'f32[32,256]{1,0:T(8,128)}', space=vmem, size = 0x8000, scoped, tag = 'scratch operand']
  #allocation5 [shape = 'f32[32,256]{1,0:T(8,128)}', space=vmem, size = 0x8000, scoped, tag = 'scratch operand']
  #allocation6 [shape = 'f32[32,256]{1,0:T(8,128)}', space=vmem, size = 0x8000, scoped, tag = 'scratch operand']
  %s0 = inlined_call_operand.vmem [shape: f32[2,3,256], index: 0, kind: input, shape index: {}]
  %s1 = inlined_call_operand.vmem [shape: f32[2,256], index: 1, kind: input, shape index: {}]
  %s2 = inlined_call_operand.vmem [shape: f32[9,256], index: 2, kind: input, shape index: {}]
  %s3 = inlined_call_operand.vmem [shape: bf16[32,72], index: 3, kind: input, shape index: {}]
  %s4 = inlined_call_operand.vmem [shape: f32[32,1], index: 4, kind: input, shape index: {}]
  %s5 = inlined_call_operand.vmem [shape: bf16[2,32,288], index: 5, kind: input, shape index: {}]
  %s6 = inlined_call_operand.vmem [shape: f32[2,32,1], index: 6, kind: input, shape index: {}]
  %s7 = inlined_call_operand.vmem [shape: bf16[2,32,288], index: 7, kind: input, shape index: {}]
  %s8 = inlined_call_operand.vmem [shape: f32[2,32,1], index: 8, kind: input, shape index: {}]
  %s9 = inlined_call_operand.vmem [shape: f32[32,32], index: 9, kind: input, shape index: {}]
  %s10 = inlined_call_operand.vmem [shape: f32[32,1], index: 10, kind: input, shape index: {}]
  %s11 = inlined_call_operand.vmem [shape: f32[32,2], index: 11, kind: input, shape index: {}]
  %s12 = inlined_call_operand.vmem [shape: f32[32,1], index: 12, kind: input, shape index: {}]
  %s13 = inlined_call_operand.vmem [shape: f32[2,32,32], index: 13, kind: input, shape index: {}]
  %s14 = inlined_call_operand.vmem [shape: f32[2,32,1], index: 14, kind: input, shape index: {}]
  %s15 = inlined_call_operand.vmem [shape: f32[2,32,256], index: 15, kind: output, shape index: {}]
  %s16 = sld [smem:[#allocation0]]
  $region93: #{edsr_forward.1} parent=0
    _
  %s18 = ssub.s32 1, %s16
  %s19 = scalar_select 0, %s18, %s16
  loop: start=0, step=1, limit=4
  $region2: #{edsr_forward.1} parent=0 // loop_pre_header
    _
  $region3: #{edsr_forward.1} parent=0 // loop_header
    %s21 = sphi 0, %s25
    %p22 = scmp.ge.s32.totalorder %s21, 4
    %s31 = sphi 0, %s33
    %s34 = sphi 0, %s31
    %s35 = sphi 0, %s34
    %s51 = sphi 0, %s35
    %s55 = sphi 0, %s55
    %s57 = sphi 0, %s55
    %s58 = sphi 0, %s57
    %s72 = sphi 0, %s58
    %s76 = sphi 0, %s76
    %s78 = sphi 0, %s76
    %s79 = sphi 0, %s78
    %s93 = sphi 0, %s79
    %s97 = sphi 0, %s97
    %s99 = sphi 0, %s97
    %s100 = sphi 0, %s99
    %s114 = sphi 0, %s100
    %s118 = sphi 0, %s118
    %s120 = sphi 0, %s118
    %s121 = sphi 0, %s120
    %s135 = sphi 0, %s121
    %s139 = sphi 0, %s139
    %s141 = sphi 0, %s139
    %s142 = sphi 0, %s141
    %s156 = sphi 0, %s142
    %s160 = sphi 0, %s160
    %s162 = sphi 0, %s160
    %s163 = sphi 0, %s162
    %s177 = sphi 0, %s163
    %s181 = sphi 0, %s181
    %s183 = sphi 0, %s181
    %s184 = sphi 0, %s183
    %s198 = sphi 0, %s184
    %s202 = sphi 0, %s202
    %s204 = sphi 0, %s202
    %s205 = sphi 0, %s204
    %s219 = sphi 0, %s205
    %s223 = sphi 0, %s223
    %s225 = sphi 0, %s223
    %s226 = sphi 0, %s225
    %s240 = sphi 0, %s226
    %s244 = sphi 0, %s244
    %s246 = sphi 0, %s244
    %s247 = sphi 0, %s246
    %s261 = sphi 0, %s247
    %s265 = sphi 0, %s265
    %s267 = sphi 0, %s265
    %s268 = sphi 0, %s267
    %s282 = sphi 0, %s268
    %s286 = sphi 0, %s286
    %s288 = sphi 0, %s286
    %s289 = sphi 0, %s288
    %s303 = sphi 0, %s289
    %s307 = sphi 0, %s307
    %s309 = sphi 0, %s307
    %s310 = sphi 0, %s309
    %s324 = sphi 0, %s310
    %s328 = sphi 0, %s328
    %s330 = sphi 0, %s328
    %s331 = sphi 0, %s330
    %s345 = sphi 0, %s331
    %s351 = sphi 0, %s353
    %s354 = sphi 0, %s351
    %s355 = sphi 0, %s354
    %s371 = sphi 0, %s355
  $region4: #{edsr_forward.1} parent=0 // loop_header_branch
    %24 = sbr.rel (%p22) target = $region8
  $region5: #{edsr_forward.1} parent=0 // loop_body
    %s26 = ssub.s32 %s21, 1
    %s27 = ssub.s32 %s21, 2
    %s28 = sadd.s32 %s21, 1
    %s29 = ssub.s32 %s21, %s28
    %p30 = scmp.eq.s32.totalorder %s29, 0
    %s32 = sadd.s32 %s31, 1
    %s33 = scalar_select %p30, %s31, %s32
    %p36 = pneg %p30
    %p37 = scmp.eq.s32.totalorder %s21, 1
    %p38 = por %p36, %p37
    %p39 = scmp.ne.s32.totalorder %s31, %s34
    %p40 = scmp.eq.s32.totalorder %s21, 0
    %p41 = por %p39, %p40
    %p42 = scmp.ne.s32.totalorder %s31, %s34
    %p43 = scmp.eq.s32.totalorder %s26, 1
    %p44 = por %p42, %p43
    %p45 = scmp.ne.s32.totalorder %s34, %s35
    %p46 = scmp.eq.s32.totalorder %s26, 0
    %p47 = por %p45, %p46
    %p48 = scmp.ne.s32.totalorder %s34, %s35
    %p49 = scmp.eq.s32.totalorder %s27, 1
    %p50 = por %p48, %p49
    %p52 = scmp.ne.s32.totalorder %s35, %s51
    %p53 = scmp.eq.s32.totalorder %s27, 0
    %p54 = por %p52, %p53
    %s56 = sadd.s32 %s55, 1
    %p59 = scmp.eq.s32.totalorder %s21, 1
    %p60 = scmp.ne.s32.totalorder %s55, %s57
    %p61 = scmp.eq.s32.totalorder %s21, 0
    %p62 = por %p60, %p61
    %p63 = scmp.ne.s32.totalorder %s55, %s57
    %p64 = scmp.eq.s32.totalorder %s26, 1
    %p65 = por %p63, %p64
    %p66 = scmp.ne.s32.totalorder %s57, %s58
    %p67 = scmp.eq.s32.totalorder %s26, 0
    %p68 = por %p66, %p67
    %p69 = scmp.ne.s32.totalorder %s57, %s58
    %p70 = scmp.eq.s32.totalorder %s27, 1
    %p71 = por %p69, %p70
    %p73 = scmp.ne.s32.totalorder %s58, %s72
    %p74 = scmp.eq.s32.totalorder %s27, 0
    %p75 = por %p73, %p74
    %s77 = sadd.s32 %s76, 1
    %p80 = scmp.eq.s32.totalorder %s21, 1
    %p81 = scmp.ne.s32.totalorder %s76, %s78
    %p82 = scmp.eq.s32.totalorder %s21, 0
    %p83 = por %p81, %p82
    %p84 = scmp.ne.s32.totalorder %s76, %s78
    %p85 = scmp.eq.s32.totalorder %s26, 1
    %p86 = por %p84, %p85
    %p87 = scmp.ne.s32.totalorder %s78, %s79
    %p88 = scmp.eq.s32.totalorder %s26, 0
    %p89 = por %p87, %p88
    %p90 = scmp.ne.s32.totalorder %s78, %s79
    %p91 = scmp.eq.s32.totalorder %s27, 1
    %p92 = por %p90, %p91
    %p94 = scmp.ne.s32.totalorder %s79, %s93
    %p95 = scmp.eq.s32.totalorder %s27, 0
    %p96 = por %p94, %p95
    %s98 = sadd.s32 %s97, 1
    %p101 = scmp.eq.s32.totalorder %s21, 1
    %p102 = scmp.ne.s32.totalorder %s97, %s99
    %p103 = scmp.eq.s32.totalorder %s21, 0
    %p104 = por %p102, %p103
    %p105 = scmp.ne.s32.totalorder %s97, %s99
    %p106 = scmp.eq.s32.totalorder %s26, 1
    %p107 = por %p105, %p106
    %p108 = scmp.ne.s32.totalorder %s99, %s100
    %p109 = scmp.eq.s32.totalorder %s26, 0
    %p110 = por %p108, %p109
    %p111 = scmp.ne.s32.totalorder %s99, %s100
    %p112 = scmp.eq.s32.totalorder %s27, 1
    %p113 = por %p111, %p112
    %p115 = scmp.ne.s32.totalorder %s100, %s114
    %p116 = scmp.eq.s32.totalorder %s27, 0
    %p117 = por %p115, %p116
    %s119 = sadd.s32 %s118, 1
    %p122 = scmp.eq.s32.totalorder %s21, 1
    %p123 = scmp.ne.s32.totalorder %s118, %s120
    %p124 = scmp.eq.s32.totalorder %s21, 0
    %p125 = por %p123, %p124
    %p126 = scmp.ne.s32.totalorder %s118, %s120
    %p127 = scmp.eq.s32.totalorder %s26, 1
    %p128 = por %p126, %p127
    %p129 = scmp.ne.s32.totalorder %s120, %s121
    %p130 = scmp.eq.s32.totalorder %s26, 0
    %p131 = por %p129, %p130
    %p132 = scmp.ne.s32.totalorder %s120, %s121
    %p133 = scmp.eq.s32.totalorder %s27, 1
    %p134 = por %p132, %p133
    %p136 = scmp.ne.s32.totalorder %s121, %s135
    %p137 = scmp.eq.s32.totalorder %s27, 0
    %p138 = por %p136, %p137
    %s140 = sadd.s32 %s139, 1
    %p143 = scmp.eq.s32.totalorder %s21, 1
    %p144 = scmp.ne.s32.totalorder %s139, %s141
    %p145 = scmp.eq.s32.totalorder %s21, 0
    %p146 = por %p144, %p145
    %p147 = scmp.ne.s32.totalorder %s139, %s141
    %p148 = scmp.eq.s32.totalorder %s26, 1
    %p149 = por %p147, %p148
    %p150 = scmp.ne.s32.totalorder %s141, %s142
    %p151 = scmp.eq.s32.totalorder %s26, 0
    %p152 = por %p150, %p151
    %p153 = scmp.ne.s32.totalorder %s141, %s142
    %p154 = scmp.eq.s32.totalorder %s27, 1
    %p155 = por %p153, %p154
    %p157 = scmp.ne.s32.totalorder %s142, %s156
    %p158 = scmp.eq.s32.totalorder %s27, 0
    %p159 = por %p157, %p158
    %s161 = sadd.s32 %s160, 1
    %p164 = scmp.eq.s32.totalorder %s21, 1
    %p165 = scmp.ne.s32.totalorder %s160, %s162
    %p166 = scmp.eq.s32.totalorder %s21, 0
    %p167 = por %p165, %p166
    %p168 = scmp.ne.s32.totalorder %s160, %s162
    %p169 = scmp.eq.s32.totalorder %s26, 1
    %p170 = por %p168, %p169
    %p171 = scmp.ne.s32.totalorder %s162, %s163
    %p172 = scmp.eq.s32.totalorder %s26, 0
    %p173 = por %p171, %p172
    %p174 = scmp.ne.s32.totalorder %s162, %s163
    %p175 = scmp.eq.s32.totalorder %s27, 1
    %p176 = por %p174, %p175
    %p178 = scmp.ne.s32.totalorder %s163, %s177
    %p179 = scmp.eq.s32.totalorder %s27, 0
    %p180 = por %p178, %p179
    %s182 = sadd.s32 %s181, 1
    %p185 = scmp.eq.s32.totalorder %s21, 1
    %p186 = scmp.ne.s32.totalorder %s181, %s183
    %p187 = scmp.eq.s32.totalorder %s21, 0
    %p188 = por %p186, %p187
    %p189 = scmp.ne.s32.totalorder %s181, %s183
    %p190 = scmp.eq.s32.totalorder %s26, 1
    %p191 = por %p189, %p190
    %p192 = scmp.ne.s32.totalorder %s183, %s184
    %p193 = scmp.eq.s32.totalorder %s26, 0
    %p194 = por %p192, %p193
    %p195 = scmp.ne.s32.totalorder %s183, %s184
    %p196 = scmp.eq.s32.totalorder %s27, 1
    %p197 = por %p195, %p196
    %p199 = scmp.ne.s32.totalorder %s184, %s198
    %p200 = scmp.eq.s32.totalorder %s27, 0
    %p201 = por %p199, %p200
    %s203 = sadd.s32 %s202, 1
    %p206 = scmp.eq.s32.totalorder %s21, 1
    %p207 = scmp.ne.s32.totalorder %s202, %s204
    %p208 = scmp.eq.s32.totalorder %s21, 0
    %p209 = por %p207, %p208
    %p210 = scmp.ne.s32.totalorder %s202, %s204
    %p211 = scmp.eq.s32.totalorder %s26, 1
    %p212 = por %p210, %p211
    %p213 = scmp.ne.s32.totalorder %s204, %s205
    %p214 = scmp.eq.s32.totalorder %s26, 0
    %p215 = por %p213, %p214
    %p216 = scmp.ne.s32.totalorder %s204, %s205
    %p217 = scmp.eq.s32.totalorder %s27, 1
    %p218 = por %p216, %p217
    %p220 = scmp.ne.s32.totalorder %s205, %s219
    %p221 = scmp.eq.s32.totalorder %s27, 0
    %p222 = por %p220, %p221
    %s224 = sadd.s32 %s223, 1
    %p227 = scmp.eq.s32.totalorder %s21, 1
    %p228 = scmp.ne.s32.totalorder %s223, %s225
    %p229 = scmp.eq.s32.totalorder %s21, 0
    %p230 = por %p228, %p229
    %p231 = scmp.ne.s32.totalorder %s223, %s225
    %p232 = scmp.eq.s32.totalorder %s26, 1
    %p233 = por %p231, %p232
    %p234 = scmp.ne.s32.totalorder %s225, %s226
    %p235 = scmp.eq.s32.totalorder %s26, 0
    %p236 = por %p234, %p235
    %p237 = scmp.ne.s32.totalorder %s225, %s226
    %p238 = scmp.eq.s32.totalorder %s27, 1
    %p239 = por %p237, %p238
    %p241 = scmp.ne.s32.totalorder %s226, %s240
    %p242 = scmp.eq.s32.totalorder %s27, 0
    %p243 = por %p241, %p242
    %s245 = sadd.s32 %s244, 1
    %p248 = scmp.eq.s32.totalorder %s21, 1
    %p249 = scmp.ne.s32.totalorder %s244, %s246
    %p250 = scmp.eq.s32.totalorder %s21, 0
    %p251 = por %p249, %p250
    %p252 = scmp.ne.s32.totalorder %s244, %s246
    %p253 = scmp.eq.s32.totalorder %s26, 1
    %p254 = por %p252, %p253
    %p255 = scmp.ne.s32.totalorder %s246, %s247
    %p256 = scmp.eq.s32.totalorder %s26, 0
    %p257 = por %p255, %p256
    %p258 = scmp.ne.s32.totalorder %s246, %s247
    %p259 = scmp.eq.s32.totalorder %s27, 1
    %p260 = por %p258, %p259
    %p262 = scmp.ne.s32.totalorder %s247, %s261
    %p263 = scmp.eq.s32.totalorder %s27, 0
    %p264 = por %p262, %p263
    %s266 = sadd.s32 %s265, 1
    %p269 = scmp.eq.s32.totalorder %s21, 1
    %p270 = scmp.ne.s32.totalorder %s265, %s267
    %p271 = scmp.eq.s32.totalorder %s21, 0
    %p272 = por %p270, %p271
    %p273 = scmp.ne.s32.totalorder %s265, %s267
    %p274 = scmp.eq.s32.totalorder %s26, 1
    %p275 = por %p273, %p274
    %p276 = scmp.ne.s32.totalorder %s267, %s268
    %p277 = scmp.eq.s32.totalorder %s26, 0
    %p278 = por %p276, %p277
    %p279 = scmp.ne.s32.totalorder %s267, %s268
    %p280 = scmp.eq.s32.totalorder %s27, 1
    %p281 = por %p279, %p280
    %p283 = scmp.ne.s32.totalorder %s268, %s282
    %p284 = scmp.eq.s32.totalorder %s27, 0
    %p285 = por %p283, %p284
    %s287 = sadd.s32 %s286, 1
    %p290 = scmp.eq.s32.totalorder %s21, 1
    %p291 = scmp.ne.s32.totalorder %s286, %s288
    %p292 = scmp.eq.s32.totalorder %s21, 0
    %p293 = por %p291, %p292
    %p294 = scmp.ne.s32.totalorder %s286, %s288
    %p295 = scmp.eq.s32.totalorder %s26, 1
    %p296 = por %p294, %p295
    %p297 = scmp.ne.s32.totalorder %s288, %s289
    %p298 = scmp.eq.s32.totalorder %s26, 0
    %p299 = por %p297, %p298
    %p300 = scmp.ne.s32.totalorder %s288, %s289
    %p301 = scmp.eq.s32.totalorder %s27, 1
    %p302 = por %p300, %p301
    %p304 = scmp.ne.s32.totalorder %s289, %s303
    %p305 = scmp.eq.s32.totalorder %s27, 0
    %p306 = por %p304, %p305
    %s308 = sadd.s32 %s307, 1
    %p311 = scmp.eq.s32.totalorder %s21, 1
    %p312 = scmp.ne.s32.totalorder %s307, %s309
    %p313 = scmp.eq.s32.totalorder %s21, 0
    %p314 = por %p312, %p313
    %p315 = scmp.ne.s32.totalorder %s307, %s309
    %p316 = scmp.eq.s32.totalorder %s26, 1
    %p317 = por %p315, %p316
    %p318 = scmp.ne.s32.totalorder %s309, %s310
    %p319 = scmp.eq.s32.totalorder %s26, 0
    %p320 = por %p318, %p319
    %p321 = scmp.ne.s32.totalorder %s309, %s310
    %p322 = scmp.eq.s32.totalorder %s27, 1
    %p323 = por %p321, %p322
    %p325 = scmp.ne.s32.totalorder %s310, %s324
    %p326 = scmp.eq.s32.totalorder %s27, 0
    %p327 = por %p325, %p326
    %s329 = sadd.s32 %s328, 1
    %p332 = scmp.eq.s32.totalorder %s21, 1
    %p333 = scmp.ne.s32.totalorder %s328, %s330
    %p334 = scmp.eq.s32.totalorder %s21, 0
    %p335 = por %p333, %p334
    %p336 = scmp.ne.s32.totalorder %s328, %s330
    %p337 = scmp.eq.s32.totalorder %s26, 1
    %p338 = por %p336, %p337
    %p339 = scmp.ne.s32.totalorder %s330, %s331
    %p340 = scmp.eq.s32.totalorder %s26, 0
    %p341 = por %p339, %p340
    %p342 = scmp.ne.s32.totalorder %s330, %s331
    %p343 = scmp.eq.s32.totalorder %s27, 1
    %p344 = por %p342, %p343
    %p346 = scmp.ne.s32.totalorder %s331, %s345
    %p347 = scmp.eq.s32.totalorder %s27, 0
    %p348 = por %p346, %p347
    %s349 = ssub.s32 %s21, %s28
    %p350 = scmp.eq.s32.totalorder %s349, 0
    %s352 = sadd.s32 %s351, 1
    %s353 = scalar_select %p350, %s351, %s352
    %p356 = pneg %p350
    %p357 = scmp.eq.s32.totalorder %s21, 1
    %p358 = por %p356, %p357
    %p359 = scmp.ne.s32.totalorder %s351, %s354
    %p360 = scmp.eq.s32.totalorder %s21, 0
    %p361 = por %p359, %p360
    %p362 = scmp.ne.s32.totalorder %s351, %s354
    %p363 = scmp.eq.s32.totalorder %s26, 1
    %p364 = por %p362, %p363
    %p365 = scmp.ne.s32.totalorder %s354, %s355
    %p366 = scmp.eq.s32.totalorder %s26, 0
    %p367 = por %p365, %p366
    %p368 = scmp.ne.s32.totalorder %s354, %s355
    %p369 = scmp.eq.s32.totalorder %s27, 1
    %p370 = por %p368, %p369
    %p372 = scmp.ne.s32.totalorder %s355, %s371
    %p373 = scmp.eq.s32.totalorder %s27, 0
    %p374 = por %p372, %p373
    %p375 = scmp.le.s32.totalorder 1, %s21
    %p376 = scmp.lt.s32.totalorder %s21, 3
    %p377 = pnand %p375, %p376
    %p378 = pneg %p377
    // Predicated region
    $region9: #{edsr_forward.1} parent=5 // pred_check
      _
    $region10: #{edsr_forward.1} parent=5 // pred_check_branch
      %380 = sbr.rel (%p377) target = $region12
    $region11: #{edsr_forward.1} parent=5 // pred_region
      %s381 = ssub.s32 %s21, 1
      // Predicated region
      $region13: #{edsr_forward.1} parent=11 // pred_check
        %p382 = pneg %p68
      $region14: #{edsr_forward.1} parent=11 // pred_check_branch
        %384 = sbr.rel (%p382) target = $region16
      $region15: #{edsr_forward.1} parent=11 // pred_region
        _
      $region16: #{edsr_forward.1} parent=11 // pred_fallthru
        _
      // Predicated region
      $region17: #{edsr_forward.1} parent=11 // pred_check
        %p385 = pneg %p89
      $region18: #{edsr_forward.1} parent=11 // pred_check_branch
        %387 = sbr.rel (%p385) target = $region20
      $region19: #{edsr_forward.1} parent=11 // pred_region
        _
      $region20: #{edsr_forward.1} parent=11 // pred_fallthru
        _
      // Predicated region
      $region21: #{edsr_forward.1} parent=11 // pred_check
        %p388 = pneg %p110
      $region22: #{edsr_forward.1} parent=11 // pred_check_branch
        %390 = sbr.rel (%p388) target = $region24
      $region23: #{edsr_forward.1} parent=11 // pred_region
        _
      $region24: #{edsr_forward.1} parent=11 // pred_fallthru
        _
      // Predicated region
      $region25: #{edsr_forward.1} parent=11 // pred_check
        %p391 = pneg %p131
      $region26: #{edsr_forward.1} parent=11 // pred_check_branch
        %393 = sbr.rel (%p391) target = $region28
      $region27: #{edsr_forward.1} parent=11 // pred_region
        _
      $region28: #{edsr_forward.1} parent=11 // pred_fallthru
        _
      // Predicated region
      $region29: #{edsr_forward.1} parent=11 // pred_check
        %p394 = pneg %p152
      $region30: #{edsr_forward.1} parent=11 // pred_check_branch
        %396 = sbr.rel (%p394) target = $region32
      $region31: #{edsr_forward.1} parent=11 // pred_region
        _
      $region32: #{edsr_forward.1} parent=11 // pred_fallthru
        _
      // Predicated region
      $region33: #{edsr_forward.1} parent=11 // pred_check
        %p397 = pneg %p173
      $region34: #{edsr_forward.1} parent=11 // pred_check_branch
        %399 = sbr.rel (%p397) target = $region36
      $region35: #{edsr_forward.1} parent=11 // pred_region
        _
      $region36: #{edsr_forward.1} parent=11 // pred_fallthru
        _
      // Predicated region
      $region37: #{edsr_forward.1} parent=11 // pred_check
        %p400 = pneg %p194
      $region38: #{edsr_forward.1} parent=11 // pred_check_branch
        %402 = sbr.rel (%p400) target = $region40
      $region39: #{edsr_forward.1} parent=11 // pred_region
        _
      $region40: #{edsr_forward.1} parent=11 // pred_fallthru
        _
      // Predicated region
      $region41: #{edsr_forward.1} parent=11 // pred_check
        %p403 = pneg %p215
      $region42: #{edsr_forward.1} parent=11 // pred_check_branch
        %405 = sbr.rel (%p403) target = $region44
      $region43: #{edsr_forward.1} parent=11 // pred_region
        _
      $region44: #{edsr_forward.1} parent=11 // pred_fallthru
        _
      // Predicated region
      $region45: #{edsr_forward.1} parent=11 // pred_check
        %p406 = pneg %p236
      $region46: #{edsr_forward.1} parent=11 // pred_check_branch
        %408 = sbr.rel (%p406) target = $region48
      $region47: #{edsr_forward.1} parent=11 // pred_region
        _
      $region48: #{edsr_forward.1} parent=11 // pred_fallthru
        _
      // Predicated region
      $region49: #{edsr_forward.1} parent=11 // pred_check
        %p409 = pneg %p257
      $region50: #{edsr_forward.1} parent=11 // pred_check_branch
        %411 = sbr.rel (%p409) target = $region52
      $region51: #{edsr_forward.1} parent=11 // pred_region
        _
      $region52: #{edsr_forward.1} parent=11 // pred_fallthru
        _
      // Predicated region
      $region53: #{edsr_forward.1} parent=11 // pred_check
        %p412 = pneg %p278
      $region54: #{edsr_forward.1} parent=11 // pred_check_branch
        %414 = sbr.rel (%p412) target = $region56
      $region55: #{edsr_forward.1} parent=11 // pred_region
        _
      $region56: #{edsr_forward.1} parent=11 // pred_fallthru
        _
      // Predicated region
      $region57: #{edsr_forward.1} parent=11 // pred_check
        %p415 = pneg %p299
      $region58: #{edsr_forward.1} parent=11 // pred_check_branch
        %417 = sbr.rel (%p415) target = $region60
      $region59: #{edsr_forward.1} parent=11 // pred_region
        _
      $region60: #{edsr_forward.1} parent=11 // pred_fallthru
        _
      // Predicated region
      $region61: #{edsr_forward.1} parent=11 // pred_check
        %p418 = pneg %p320
      $region62: #{edsr_forward.1} parent=11 // pred_check_branch
        %420 = sbr.rel (%p418) target = $region64
      $region63: #{edsr_forward.1} parent=11 // pred_region
        _
      $region64: #{edsr_forward.1} parent=11 // pred_fallthru
        _
      // Predicated region
      $region65: #{edsr_forward.1} parent=11 // pred_check
        %p421 = pneg %p341
      $region66: #{edsr_forward.1} parent=11 // pred_check_branch
        %423 = sbr.rel (%p421) target = $region68
      $region67: #{edsr_forward.1} parent=11 // pred_region
        _
      $region68: #{edsr_forward.1} parent=11 // pred_fallthru
        _
    $region12: #{edsr_forward.1} parent=5 // pred_fallthru
      _
    %p424 = scmp.lt.s32.totalorder %s21, 2
    // Predicated region
    $region69: #{edsr_forward.1} parent=5 // pred_check
      %p425 = pneg %p424
    $region70: #{edsr_forward.1} parent=5 // pred_check_branch
      %427 = sbr.rel (%p425) target = $region72
    $region71: #{edsr_forward.1} parent=5 // pred_region
      // Predicated region
      $region73: #{edsr_forward.1} parent=71 // pred_check
        %p428 = pneg %p41
      $region74: #{edsr_forward.1} parent=71 // pred_check_branch
        %430 = sbr.rel (%p428) target = $region76
      $region75: #{edsr_forward.1} parent=71 // pred_region
        %p431 = scmp.lt.s32.totalorder %s21, 1
        %s432 = scalar_select %p431, %s21, 1
        %s433 = smul.addr %s432, 2
        %s434 = smul.addr %s433, 4
        %s435 = scalar_lea.vmem %s0, %s434
      $region76: #{edsr_forward.1} parent=71 // pred_fallthru
        _
    $region72: #{edsr_forward.1} parent=5 // pred_fallthru
      _
    %p436 = scmp.le.s32.totalorder 1, %s21
    %p437 = scmp.lt.s32.totalorder %s21, 3
    %p438 = pnand %p436, %p437
    %p439 = pneg %p438
    // Predicated region
    $region77: #{edsr_forward.1} parent=5 // pred_check
      _
    $region78: #{edsr_forward.1} parent=5 // pred_check_branch
      %441 = sbr.rel (%p438) target = $region80
    $region79: #{edsr_forward.1} parent=5 // pred_region
      %s442 = ssub.s32 %s21, 1
      %p443 = scmp.lt.s32.totalorder %s26, 1
      %s444 = scalar_select %p443, %s26, 1
      %s445 = smul.addr %s444, 2
      %s446 = smul.addr %s445, 4
      %s447 = scalar_lea.vmem %s0, %s446
      %p448 = pneg %p47
      %p449 = pneg %p44
      %p450 = pneg %p68
      %p451 = pneg %p65
      %p452 = pneg %p89
      %p453 = pneg %p86
      %p454 = pneg %p110
      %p455 = pneg %p107
      %p456 = pneg %p131
      %p457 = pneg %p128
      %p458 = pneg %p152
      %p459 = pneg %p149
      %p460 = pneg %p173
      %p461 = pneg %p170
      %p462 = pneg %p194
      %p463 = pneg %p191
      %p464 = pneg %p215
      %p465 = pneg %p212
      %p466 = pneg %p236
      %p467 = pneg %p233
      %p468 = pneg %p257
      %p469 = pneg %p254
      %p470 = pneg %p278
      %p471 = pneg %p275
      %p472 = pneg %p299
      %p473 = pneg %p296
      %p474 = pneg %p320
      %p475 = pneg %p317
      %p476 = pneg %p341
      %p477 = pneg %p338
      %p478 = pneg %p367
      %p479 = pneg %p364
      %p480 = scmp.lt.s32.totalorder %s26, 1
      %s481 = scalar_select %p480, %s26, 1
      %s482 = smul.addr %s481, 8
      %s483 = smul.addr %s482, 8
      %s484 = scalar_lea.vmem %s15, %s483
      %p485 = scmp.lt.s32.totalorder %s26, 1
      %s486 = scalar_select %p485, %s26, 1
      %s487 = smul.addr %s486, 2
      %s488 = smul.addr %s487, 4
      %s489 = scalar_lea.vmem %s0, %s488
      %p490 = scmp.lt.s32.totalorder %s26, 1
      %s491 = scalar_select %p490, %s26, 1
      %s492 = smul.addr %s491, 8
      %s493 = smul.addr %s492, 8
      %s494 = scalar_lea.vmem %s15, %s493
      %v496 = vld [vmem:[%s2] sm:$0xff]
      %v497 = vld [vmem:[%s2 + $0x8] sm:$0xff]
      %v498 = vld [vmem:[%s2 + $0x10] sm:$0x1]
      %v499 = vld [vmem:[%s2 + $0x18] sm:$0x1]
      %v500 = vld [vmem:[%s11] sm:$0xff]
      %v501 = vld [vmem:[%s11 + $0x8] sm:$0xff]
      %v502 = vld [vmem:[%s11 + $0x10] sm:$0xff]
      %v503 = vld [vmem:[%s11 + $0x18] sm:$0xff]
      %v504 = vld [vmem:[%s1] ss:$2 sm:$0x3]
      %506 = vset.pattern.permute.xlu0 0
      %507 = vperm.xlu0 %506, %v500
      %v508 = vpop.permute.xlu0 %507
      %511 = vset.pattern.permute.xlu0 0
      %512 = vperm.xlu0 %511, %v501
      %v513 = vpop.permute.xlu0 %512
      %516 = vset.pattern.permute.xlu0 0
      %517 = vperm.xlu0 %516, %v502
      %v518 = vpop.permute.xlu0 %517
      %521 = vset.pattern.permute.xlu0 0
      %522 = vperm.xlu0 %521, %v503
      %v523 = vpop.permute.xlu0 %522
      %v526 = vlaneseq
      %v527 = vshrl.u32 %v526, 7
      %v528 = vsub.s32 0, %v527
      %v529 = vrot.slane %v504, %v528
      %v530 = vlaneseq
      %v531 = vshrl.u32 %v530, 7
      %v532 = vsub.s32 1, %v531
      %v533 = vrot.slane %v504, %v532
      %v536 = vmul.f32 %v508, %v529
      %v537 = vmul.f32 %v508, %v533
      %v538 = vmul.f32 %v513, %v529
      %v539 = vmul.f32 %v513, %v533
      %v540 = vmul.f32 %v518, %v529
      %v541 = vmul.f32 %v518, %v533
      %v542 = vmul.f32 %v523, %v529
      %v543 = vmul.f32 %v523, %v533
      %s544 = scalar_lea.vmem %s1, 1
      %v545 = vld [vmem:[%s544] ss:$2 sm:$0x3]
      %546 = vset.pattern.permute.xlu0 1
      %547 = vperm.xlu0 %546, %v500
      %v548 = vpop.permute.xlu0 %547
      %550 = vset.pattern.permute.xlu0 1
      %551 = vperm.xlu0 %550, %v501
      %v552 = vpop.permute.xlu0 %551
      %554 = vset.pattern.permute.xlu0 1
      %555 = vperm.xlu0 %554, %v502
      %v556 = vpop.permute.xlu0 %555
      %558 = vset.pattern.permute.xlu0 1
      %559 = vperm.xlu0 %558, %v503
      %v560 = vpop.permute.xlu0 %559
      %v563 = vlaneseq
      %v564 = vshrl.u32 %v563, 7
      %v565 = vsub.s32 0, %v564
      %v566 = vrot.slane %v545, %v565
      %v567 = vlaneseq
      %v568 = vshrl.u32 %v567, 7
      %v569 = vsub.s32 1, %v568
      %v570 = vrot.slane %v545, %v569
      %v573 = vmul.f32 %v548, %v566
      %v574 = vmul.f32 %v548, %v570
      %v575 = vmul.f32 %v552, %v566
      %v576 = vmul.f32 %v552, %v570
      %v577 = vmul.f32 %v556, %v566
      %v578 = vmul.f32 %v556, %v570
      %v579 = vmul.f32 %v560, %v566
      %v580 = vmul.f32 %v560, %v570
      %v581 = vadd.f32 %v536, %v573
      %v582 = vadd.f32 %v537, %v574
      %v583 = vadd.f32 %v538, %v575
      %v584 = vadd.f32 %v539, %v576
      %v585 = vadd.f32 %v540, %v577
      %v586 = vadd.f32 %v541, %v578
      %v587 = vadd.f32 %v542, %v579
      %v588 = vadd.f32 %v543, %v580
      %v589 = vld [vmem:[%s12] sm:$0xff]
      %v590 = vld [vmem:[%s12 + $0x8] sm:$0xff]
      %v591 = vld [vmem:[%s12 + $0x10] sm:$0xff]
      %v592 = vld [vmem:[%s12 + $0x18] sm:$0xff]
      %594 = vset.pattern.permute.xlu0 0
      %595 = vperm.xlu0 %594, %v589
      %v596 = vpop.permute.xlu0 %595
      %599 = vset.pattern.permute.xlu0 0
      %600 = vperm.xlu0 %599, %v590
      %v601 = vpop.permute.xlu0 %600
      %604 = vset.pattern.permute.xlu0 0
      %605 = vperm.xlu0 %604, %v591
      %v606 = vpop.permute.xlu0 %605
      %609 = vset.pattern.permute.xlu0 0
      %610 = vperm.xlu0 %609, %v592
      %v611 = vpop.permute.xlu0 %610
      %v613 = vadd.f32 %v581, %v596
      %v614 = vadd.f32 %v582, %v596
      %v615 = vadd.f32 %v583, %v601
      %v616 = vadd.f32 %v584, %v601
      %v617 = vadd.f32 %v585, %v606
      %v618 = vadd.f32 %v586, %v606
      %v619 = vadd.f32 %v587, %v611
      %v620 = vadd.f32 %v588, %v611
      %621 = vst [vmem:[#allocation6] sm:$0xff] %v613
      %622 = vst [vmem:[#allocation6 + $0x8] sm:$0xff] %v614
      %623 = vst [vmem:[#allocation6 + $0x10] sm:$0xff] %v615
      %624 = vst [vmem:[#allocation6 + $0x18] sm:$0xff] %v616
      %625 = vst [vmem:[#allocation6 + $0x20] sm:$0xff] %v617
      %626 = vst [vmem:[#allocation6 + $0x28] sm:$0xff] %v618
      %627 = vst [vmem:[#allocation6 + $0x30] sm:$0xff] %v619
      %628 = vst [vmem:[#allocation6 + $0x38] sm:$0xff] %v620
      %629 = vst [vmem:[#allocation2] sm:$0xff] 0
      %630 = vst [vmem:[#allocation2 + $0x8] sm:$0xff] 0
      %631 = vst [vmem:[#allocation2 + $0x10] sm:$0xff] 0
      %632 = vst [vmem:[#allocation2 + $0x18] sm:$0xff] 0
      %633 = vst [vmem:[#allocation2 + $0x20] sm:$0xff] 0
      %634 = vst [vmem:[#allocation2 + $0x28] sm:$0xff] 0
      %635 = vst [vmem:[#allocation2 + $0x30] sm:$0xff] 0
      %636 = vst [vmem:[#allocation2 + $0x38] sm:$0xff] 0
      %637 = vst [vmem:[#allocation2 + $0x40] sm:$0xff] 0
      %v638 = vld [vmem:[%s489] sm:$0x77]
      %vm639 = vcmask 132096
      %vm640 = vsmask.f32 1280
      %vm641 = vmand %vm639, %vm640
      %v642 = vld [vmem:[#allocation2] sm:$0x3]
      %v643 = vsel %vm641, 0, %v642
      %644 = vst [vmem:[#allocation2] sm:$0x3] %v643
      %v645 = vlaneseq
      %v646 = vshrl.u32 %v645, 7
      %v647 = vsub.s32 0, %v646
      %v648 = vrot.slane %v496, %v647
      %v649 = vlaneseq
      %v650 = vshrl.u32 %v649, 7
      %v651 = vsub.s32 0, %v650
      %v652 = vrot.slane %v497, %v651
      %v655 = vcombine.low %v648, %v652
      %656 = vrot.lane.b32.xlu0 %v655, 111
      %v657 = vpop.permute.xlu0 %656
      %v658 = vrot.slane %v657, 4
      %vm659 = vcmask 908288
      %v660 = vsel %vm659, %v657, %v658
      %v662 = vmul.f32 %v638, %v660
      %v664 = vcombine.high %v662, %v662
      %v666 = vpack.c.bf16 %v662, %v662
      %v667 = vpack.c.bf16 %v664, %v664
      %v670 = vunpack.c.l.b16 %v666
      %v671 = vunpack.c.l.b16 %v667
      %v672 = vpack.c.b16 %v671, %v670
      %673 = vrot.lane.b32.xlu0 %v672, 17
      %v674 = vpop.permute.xlu0 %673
      %v675 = vrot.slane %v674, 4
      %vm676 = vcmask 138240
      %v677 = vsel %vm676, %v675, %v674
      %vm679 = vcmask 1041544
      %vm680 = vmand %vm679, %vm640
      %vm681 = vcmask 1045508
      %vm682 = vsmask.f32 5376
      %vm683 = vmand %vm681, %vm682
      %vm684 = vmor %vm683, %vm680
      %v685 = vld [vmem:[#allocation2] sm:$0x33]
      %v686 = vsel %vm684, %v677, %v685
      %687 = vst [vmem:[#allocation2] sm:$0x33] %v686
      %vm688 = vcmask 123904
      %vm689 = vmand %vm688, %vm640
      %v690 = vld [vmem:[#allocation2 + $0x8] sm:$0x3]
      %v691 = vsel %vm689, 0, %v690
      %692 = vst [vmem:[#allocation2 + $0x8] sm:$0x3] %v691
      %v693 = vlaneseq
      %v694 = vshrl.u32 %v693, 7
      %v695 = vsub.s32 1, %v694
      %v696 = vrot.slane %v496, %v695
      %v697 = vlaneseq
      %v698 = vshrl.u32 %v697, 7
      %v699 = vsub.s32 1, %v698
      %v700 = vrot.slane %v497, %v699
      %v703 = vcombine.low %v696, %v700
      %704 = vrot.lane.b32.xlu0 %v703, 112
      %v705 = vpop.permute.xlu0 %704
      %v706 = vrot.slane %v705, 4
      %vm707 = vcmask 916480
      %v708 = vsel %vm707, %v705, %v706
      %v710 = vmul.f32 %v638, %v708
      %v712 = vcombine.high %v710, %v710
      %v714 = vpack.c.bf16 %v710, %v710
      %v715 = vpack.c.bf16 %v712, %v712
      %v718 = vunpack.c.l.b16 %v714
      %v719 = vunpack.c.l.b16 %v715
      %v720 = vpack.c.b16 %v719, %v718
      %721 = vrot.lane.b32.xlu0 %v720, 16
      %v722 = vpop.permute.xlu0 %721
      %v723 = vrot.slane %v722, 4
      %vm724 = vcmask 130048
      %v725 = vsel %vm724, %v723, %v722
      %vm727 = vcmask 1041536
      %vm728 = vmand %vm727, %vm640
      %vm729 = vmor %vm683, %vm728
      %v730 = vld [vmem:[#allocation2 + $0x8] sm:$0x33]
      %v731 = vsel %vm729, %v725, %v730
      %732 = vst [vmem:[#allocation2 + $0x8] sm:$0x33] %v731
      %vm733 = vcmask 115712
      %vm734 = vmand %vm733, %vm640
      %v735 = vld [vmem:[#allocation2 + $0x10] sm:$0x3]
      %v736 = vsel %vm734, 0, %v735
      %737 = vst [vmem:[#allocation2 + $0x10] sm:$0x3] %v736
      %v738 = vlaneseq
      %v739 = vshrl.u32 %v738, 7
      %v740 = vsub.s32 2, %v739
      %v741 = vrot.slane %v496, %v740
      %v742 = vlaneseq
      %v743 = vshrl.u32 %v742, 7
      %v744 = vsub.s32 2, %v743
      %v745 = vrot.slane %v497, %v744
      %v748 = vcombine.low %v741, %v745
      %749 = vrot.lane.b32.xlu0 %v748, 113
      %v750 = vpop.permute.xlu0 %749
      %v751 = vrot.slane %v750, 4
      %vm752 = vcmask 924672
      %v753 = vsel %vm752, %v750, %v751
      %v755 = vmul.f32 %v638, %v753
      %v757 = vcombine.high %v755, %v755
      %v759 = vpack.c.bf16 %v755, %v755
      %v760 = vpack.c.bf16 %v757, %v757
      %v763 = vunpack.c.l.b16 %v759
      %v764 = vunpack.c.l.b16 %v760
      %v765 = vpack.c.b16 %v764, %v763
      %766 = vrot.lane.b32.xlu0 %v765, 15
      %v767 = vpop.permute.xlu0 %766
      %v768 = vrot.slane %v767, 4
      %vm769 = vcmask 121856
      %v770 = vsel %vm769, %v768, %v767
      %vm772 = vcmask 1041528
      %vm773 = vmand %vm772, %vm640
      %vm774 = vmor %vm683, %vm773
      %v775 = vld [vmem:[#allocation2 + $0x10] sm:$0x33]
      %v776 = vsel %vm774, %v770, %v775
      %777 = vst [vmem:[#allocation2 + $0x10] sm:$0x33] %v776
      %vm778 = vcmask 1024
      %vm779 = vmand %vm778, %vm640
      %v780 = vld [vmem:[#allocation2 + $0x18] sm:$0x3]
      %v781 = vsel %vm779, 0, %v780
      %782 = vst [vmem:[#allocation2 + $0x18] sm:$0x3] %v781
      %v783 = vlaneseq
      %v784 = vshrl.u32 %v783, 7
      %v785 = vsub.s32 3, %v784
      %v786 = vrot.slane %v496, %v785
      %v787 = vlaneseq
      %v788 = vshrl.u32 %v787, 7
      %v789 = vsub.s32 3, %v788
      %v790 = vrot.slane %v497, %v789
      %v793 = vcombine.low %v786, %v790
      %794 = vrot.lane.b32.xlu0 %v793, 127
      %v795 = vpop.permute.xlu0 %794
      %v796 = vrot.slane %v795, 4
      %vm797 = vcmask 1039360
      %v798 = vsel %vm797, %v795, %v796
      %v800 = vmul.f32 %v638, %v798
      %v802 = vcombine.high %v800, %v800
      %v804 = vpack.c.bf16 %v800, %v800
      %v805 = vpack.c.bf16 %v802, %v802
      %v808 = vunpack.c.l.b16 %v804
      %v809 = vunpack.c.l.b16 %v805
      %v810 = vpack.c.b16 %v809, %v808
      %811 = vrot.lane.b32.xlu0 %v810, 1
      %v812 = vpop.permute.xlu0 %811
      %v813 = vrot.slane %v812, 4
      %vm814 = vcmask 7168
      %v815 = vsel %vm814, %v813, %v812
      %vm817 = vcmask 1041416
      %vm818 = vmand %vm817, %vm640
      %vm819 = vmor %vm683, %vm818
      %v820 = vld [vmem:[#allocation2 + $0x18] sm:$0x33]
      %v821 = vsel %vm819, %v815, %v820
      %822 = vst [vmem:[#allocation2 + $0x18] sm:$0x33] %v821
      %v824 = vcombine.high %v638, %v638
      %v826 = vpack.c.bf16 %v638, %v638
      %v827 = vpack.c.bf16 %v824, %v824
      %v830 = vunpack.c.l.b16 %v826
      %v831 = vunpack.c.l.b16 %v827
      %v832 = vpack.c.b16 %v831, %v830
      %vm834 = vcmask 1041408
      %vm835 = vmand %vm834, %vm640
      %vm836 = vmor %vm683, %vm835
      %v837 = vld [vmem:[#allocation2 + $0x20] sm:$0x33]
      %v838 = vsel %vm836, %v832, %v837
      %839 = vst [vmem:[#allocation2 + $0x20] sm:$0x33] %v838
      %v840 = vlaneseq
      %v841 = vshrl.u32 %v840, 7
      %v842 = vsub.s32 5, %v841
      %v843 = vrot.slane %v496, %v842
      %v844 = vlaneseq
      %v845 = vshrl.u32 %v844, 7
      %v846 = vsub.s32 5, %v845
      %v847 = vrot.slane %v497, %v846
      %v850 = vcombine.low %v843, %v847
      %851 = vrot.lane.b32.xlu0 %v850, 1
      %v852 = vpop.permute.xlu0 %851
      %v853 = vrot.slane %v852, 4
      %vm854 = vcmask 7168
      %v855 = vsel %vm854, %v853, %v852
      %v857 = vmul.f32 %v638, %v855
      %v859 = vcombine.high %v857, %v857
      %v861 = vpack.c.bf16 %v857, %v857
      %v862 = vpack.c.bf16 %v859, %v859
      %v865 = vunpack.c.l.b16 %v861
      %v866 = vunpack.c.l.b16 %v862
      %v867 = vpack.c.b16 %v866, %v865
      %868 = vrot.lane.b32.xlu0 %v867, 127
      %v869 = vpop.permute.xlu0 %868
      %v870 = vrot.slane %v869, 4
      %vm871 = vcmask 1039360
      %v872 = vsel %vm871, %v869, %v870
      %vm874 = vcmask 1037316
      %vm875 = vmand %vm874, %vm682
      %vm876 = vmor %vm875, %vm835
      %v877 = vld [vmem:[#allocation2 + $0x28] sm:$0x33]
      %v878 = vsel %vm876, %v872, %v877
      %879 = vst [vmem:[#allocation2 + $0x28] sm:$0x33] %v878
      %vm880 = vcmask 1042424
      %vm881 = vmand %vm880, %vm640
      %v882 = vld [vmem:[#allocation2 + $0x2c] sm:$0x3]
      %v883 = vsel %vm881, 0, %v882
      %884 = vst [vmem:[#allocation2 + $0x2c] sm:$0x3] %v883
      %v885 = vlaneseq
      %v886 = vshrl.u32 %v885, 7
      %v887 = vsub.s32 6, %v886
      %v888 = vrot.slane %v496, %v887
      %v889 = vlaneseq
      %v890 = vshrl.u32 %v889, 7
      %v891 = vsub.s32 6, %v890
      %v892 = vrot.slane %v497, %v891
      %v895 = vcombine.low %v888, %v892
      %896 = vrot.lane.b32.xlu0 %v895, 15
      %v897 = vpop.permute.xlu0 %896
      %v898 = vrot.slane %v897, 4
      %vm899 = vcmask 121856
      %v900 = vsel %vm899, %v898, %v897
      %v902 = vmul.f32 %v638, %v900
      %v904 = vcombine.high %v902, %v902
      %v906 = vpack.c.bf16 %v902, %v902
      %v907 = vpack.c.bf16 %v904, %v904
      %v910 = vunpack.c.l.b16 %v906
      %v911 = vunpack.c.l.b16 %v907
      %v912 = vpack.c.b16 %v911, %v910
      %913 = vrot.lane.b32.xlu0 %v912, 113
      %v914 = vpop.permute.xlu0 %913
      %v915 = vrot.slane %v914, 4
      %vm916 = vcmask 924672
      %v917 = vsel %vm916, %v914, %v915
      %vm919 = vcmask 922628
      %vm920 = vmand %vm919, %vm682
      %vm921 = vmor %vm920, %vm835
      %v922 = vld [vmem:[#allocation2 + $0x30] sm:$0x33]
      %v923 = vsel %vm921, %v917, %v922
      %924 = vst [vmem:[#allocation2 + $0x30] sm:$0x33] %v923
      %vm925 = vcmask 1042312
      %vm926 = vmand %vm925, %vm640
      %v927 = vld [vmem:[#allocation2 + $0x34] sm:$0x3]
      %v928 = vsel %vm926, 0, %v927
      %929 = vst [vmem:[#allocation2 + $0x34] sm:$0x3] %v928
      %v930 = vlaneseq
      %v931 = vshrl.u32 %v930, 7
      %v932 = vsub.s32 7, %v931
      %v933 = vrot.slane %v496, %v932
      %v934 = vlaneseq
      %v935 = vshrl.u32 %v934, 7
      %v936 = vsub.s32 7, %v935
      %v937 = vrot.slane %v497, %v936
      %v940 = vcombine.low %v933, %v937
      %941 = vrot.lane.b32.xlu0 %v940, 16
      %v942 = vpop.permute.xlu0 %941
      %v943 = vrot.slane %v942, 4
      %vm944 = vcmask 130048
      %v945 = vsel %vm944, %v943, %v942
      %v947 = vmul.f32 %v638, %v945
      %v949 = vcombine.high %v947, %v947
      %v951 = vpack.c.bf16 %v947, %v947
      %v952 = vpack.c.bf16 %v949, %v949
      %v955 = vunpack.c.l.b16 %v951
      %v956 = vunpack.c.l.b16 %v952
      %v957 = vpack.c.b16 %v956, %v955
      %958 = vrot.lane.b32.xlu0 %v957, 112
      %v959 = vpop.permute.xlu0 %958
      %v960 = vrot.slane %v959, 4
      %vm961 = vcmask 916480
      %v962 = vsel %vm961, %v959, %v960
      %vm964 = vcmask 914436
      %vm965 = vmand %vm964, %vm682
      %vm966 = vmor %vm965, %vm835
      %v967 = vld [vmem:[#allocation2 + $0x38] sm:$0x33]
      %v968 = vsel %vm966, %v962, %v967
      %969 = vst [vmem:[#allocation2 + $0x38] sm:$0x33] %v968
      %vm970 = vcmask 1042304
      %vm971 = vmand %vm970, %vm640
      %v972 = vld [vmem:[#allocation2 + $0x3c] sm:$0x3]
      %v973 = vsel %vm971, 0, %v972
      %974 = vst [vmem:[#allocation2 + $0x3c] sm:$0x3] %v973
      %v975 = vlaneseq
      %v976 = vshrl.u32 %v975, 7
      %v977 = vsub.s32 0, %v976
      %v978 = vrot.slane %v498, %v977
      %v979 = vlaneseq
      %v980 = vshrl.u32 %v979, 7
      %v981 = vsub.s32 0, %v980
      %v982 = vrot.slane %v499, %v981
      %v985 = vcombine.low %v978, %v982
      %986 = vrot.lane.b32.xlu0 %v985, 17
      %v987 = vpop.permute.xlu0 %986
      %v988 = vrot.slane %v987, 4
      %vm989 = vcmask 138240
      %v990 = vsel %vm989, %v988, %v987
      %v992 = vmul.f32 %v638, %v990
      %v994 = vcombine.high %v992, %v992
      %v996 = vpack.c.bf16 %v992, %v992
      %v997 = vpack.c.bf16 %v994, %v994
      %v1000 = vunpack.c.l.b16 %v996
      %v1001 = vunpack.c.l.b16 %v997
      %v1002 = vpack.c.b16 %v1001, %v1000
      %1003 = vrot.lane.b32.xlu0 %v1002, 111
      %v1004 = vpop.permute.xlu0 %1003
      %v1005 = vrot.slane %v1004, 4
      %vm1006 = vcmask 908288
      %v1007 = vsel %vm1006, %v1004, %v1005
      %vm1009 = vcmask 906244
      %vm1010 = vmand %vm1009, %vm682
      %vm1011 = vmor %vm1010, %vm835
      %v1012 = vld [vmem:[#allocation2 + $0x40] sm:$0x33]
      %v1013 = vsel %vm1011, %v1007, %v1012
      %1014 = vst [vmem:[#allocation2 + $0x40] sm:$0x33] %v1013
      %vm1015 = vcmask 1042296
      %vm1016 = vmand %vm1015, %vm640
      %v1017 = vld [vmem:[#allocation2 + $0x44] sm:$0x3]
      %v1018 = vsel %vm1016, 0, %v1017
      %1019 = vst [vmem:[#allocation2 + $0x44] sm:$0x3] %v1018
      %v1020 = vld [vmem:[%s3] sm:$0xf]
      %v1021 = vld [vmem:[%s3 + $0x4] sm:$0xf]
      %v1022 = vld [vmem:[%s3 + $0x8] sm:$0xf]
      %v1023 = vld [vmem:[%s3 + $0xc] sm:$0xf]
      %v1024 = vld [vmem:[#allocation2] sm:$0xff]
      %v1025 = vld [vmem:[#allocation2 + $0x8] sm:$0xff]
      %v1026 = vld [vmem:[#allocation2 + $0x10] sm:$0xff]
      %v1027 = vld [vmem:[#allocation2 + $0x18] sm:$0xff]
      %v1028 = vld [vmem:[#allocation2 + $0x20] sm:$0xff]
      %v1029 = vld [vmem:[#allocation2 + $0x28] sm:$0xff]
      %v1030 = vld [vmem:[#allocation2 + $0x30] sm:$0xff]
      %v1031 = vld [vmem:[#allocation2 + $0x38] sm:$0xff]
      %v1032 = vld [vmem:[#allocation2 + $0x40] sm:$0xff]
      %v1033 = vld [vmem:[%s4] sm:$0xff]
      %v1034 = vld [vmem:[%s4 + $0x8] sm:$0xff]
      %v1035 = vld [vmem:[%s4 + $0x10] sm:$0xff]
      %v1036 = vld [vmem:[%s4 + $0x18] sm:$0xff]
      %1038 = vset.pattern.permute.xlu0 0
      %1039 = vperm.xlu0 %1038, %v1033
      %v1040 = vpop.permute.xlu0 %1039
      %1043 = vset.pattern.permute.xlu0 0
      %1044 = vperm.xlu0 %1043, %v1034
      %v1045 = vpop.permute.xlu0 %1044
      %1048 = vset.pattern.permute.xlu0 0
      %1049 = vperm.xlu0 %1048, %v1035
      %v1050 = vpop.permute.xlu0 %1049
      %1053 = vset.pattern.permute.xlu0 0
      %1054 = vperm.xlu0 %1053, %v1036
      %v1055 = vpop.permute.xlu0 %1054
      %v1061 = vunpack.c.l.b16 %v1020
      %v1062 = vunpack.c.l.b16 %v1021
      %v1063 = vunpack.c.l.b16 %v1022
      %v1064 = vunpack.c.l.b16 %v1023
      %v1065 = vpack.c.b16 %v1062, %v1061
      %v1066 = vpack.c.b16 %v1064, %v1063
      %v1076 = vunpack.c.l.b16 %v1024
      %v1077 = vunpack.c.h.b16 %v1024
      %v1078 = vunpack.c.l.b16 %v1025
      %v1079 = vunpack.c.h.b16 %v1025
      %v1080 = vunpack.c.l.b16 %v1026
      %v1081 = vunpack.c.h.b16 %v1026
      %v1082 = vunpack.c.l.b16 %v1027
      %v1083 = vunpack.c.h.b16 %v1027
      %v1084 = vunpack.c.l.b16 %v1028
      %v1085 = vunpack.c.h.b16 %v1028
      %v1086 = vunpack.c.l.b16 %v1029
      %v1087 = vunpack.c.h.b16 %v1029
      %v1088 = vunpack.c.l.b16 %v1030
      %v1089 = vunpack.c.h.b16 %v1030
      %v1090 = vunpack.c.l.b16 %v1031
      %v1091 = vunpack.c.h.b16 %v1031
      %v1092 = vunpack.c.l.b16 %v1032
      %v1093 = vunpack.c.h.b16 %v1032
      %v1094 = vpack.c.b16 %v1078, %v1076
      %v1095 = vpack.c.b16 %v1079, %v1077
      %v1096 = vpack.c.b16 %v1082, %v1080
      %v1097 = vpack.c.b16 %v1083, %v1081
      %v1098 = vpack.c.b16 %v1086, %v1084
      %v1099 = vpack.c.b16 %v1087, %v1085
      %v1100 = vpack.c.b16 %v1090, %v1088
      %v1101 = vpack.c.b16 %v1091, %v1089
      %v1102 = vpack.c.b16 %v1092, %v1092
      %v1103 = vpack.c.b16 %v1093, %v1093
      %vm1112 = vcmask 588800
      %v1114 = vsel %vm1112, %v1065, 0
      %v1117 = vsel %vm1112, %v1066, 0
      %vm1119 = vcmask 1043456
      %v1121 = vsel %vm1119, %v1102, 0
      %v1124 = vsel %vm1119, %v1103, 0
      %1126 = vmatprep.subr.bf16.mxu0 0
      %1127 = vmatpush1.bf16.msra.mxu0 0
      %1128 = vmatprep.subr.bf16.mxu0 0
      %1129 = vmatpush1.bf16.msra.mxu0 0
      %1130 = vmatprep.subr.bf16.mxu0 0
      %1131 = vmatpush1.bf16.msra.mxu0 0
      %1132 = vmatprep.subr.bf16.mxu0 %v1124
      %1133 = vmatpush1.bf16.msra.mxu0 %v1121
      %1134 = vmatprep.subr.bf16.mxu0 %v1101
      %1135 = vmatpush1.bf16.msra.mxu0 %v1100
      %1136 = vmatprep.subr.bf16.mxu0 %v1099
      %1137 = vmatpush1.bf16.msra.mxu0 %v1098
      %1138 = vmatprep.subr.bf16.mxu0 %v1097
      %1139 = vmatpush1.bf16.msra.mxu0 %v1096
      %1140 = vmatprep.subr.bf16.mxu0 %v1095
      %1141 = vmatpush1.bf16.msra.mxu0 %v1094
      %1142 = vmatprep.subr.bf16.mxu0 0
      %1143 = vmatpush2.bf16.msra.mxu0 0
      %1144 = vmatprep.subr.bf16.mxu0 0
      %1145 = vmatpush2.bf16.msra.mxu0 0
      %1146 = vmatprep.subr.bf16.mxu0 0
      %1147 = vmatpush2.bf16.msra.mxu0 0
      %1148 = vmatprep.subr.bf16.mxu0 0
      %1149 = vmatpush2.bf16.msra.mxu0 0
      %1150 = vmatprep.subr.bf16.mxu0 0
      %1151 = vmatpush2.bf16.msra.mxu0 0
      %1152 = vmatprep.subr.bf16.mxu0 0
      %1153 = vmatpush2.bf16.msra.mxu0 0
      %1154 = vmatprep.subr.bf16.mxu0 0
      %1155 = vmatpush2.bf16.msra.mxu0 0
      %1156 = vmatprep.subr.bf16.mxu0 0
      %1157 = vmatpush2.bf16.msra.mxu0 0
      %1158 = vmatprep.mubr.bf16.mxu0 0
      %1159 = vmatmul.mubr.bf16.gmra.mxu0 %v1114
      %v1160 = vpop.f32.mrf.mxu0
      %v1161 = vadd.f32 %v1040, %v1160
      %v1162 = vpop.f32.mrf.mxu0
      %v1163 = vadd.f32 %v1040, %v1162
      %v1164 = vpop.f32.mrf.mxu0
      %v1165 = vadd.f32 %v1045, %v1164
      %v1166 = vpop.f32.mrf.mxu0
      %v1167 = vadd.f32 %v1045, %v1166
      %1168 = vmatprep.mubr.bf16.mxu0 0
      %1169 = vmatmul.mubr.bf16.gmra.mxu0 %v1117
      %v1170 = vpop.f32.mrf.mxu0
      %v1171 = vadd.f32 %v1050, %v1170
      %v1172 = vpop.f32.mrf.mxu0
      %v1173 = vadd.f32 %v1050, %v1172
      %v1174 = vpop.f32.mrf.mxu0
      %v1175 = vadd.f32 %v1055, %v1174
      %v1176 = vpop.f32.mrf.mxu0
      %v1177 = vadd.f32 %v1055, %v1176
      %1178 = vdwg.mxu0
      %1179 = vst [vmem:[#allocation5] sm:$0xff] %v1161
      %1180 = vst [vmem:[#allocation5 + $0x8] sm:$0xff] %v1163
      %1181 = vst [vmem:[#allocation5 + $0x10] sm:$0xff] %v1165
      %1182 = vst [vmem:[#allocation5 + $0x18] sm:$0xff] %v1167
      %1183 = vst [vmem:[#allocation5 + $0x20] sm:$0xff] %v1171
      %1184 = vst [vmem:[#allocation5 + $0x28] sm:$0xff] %v1173
      %1185 = vst [vmem:[#allocation5 + $0x30] sm:$0xff] %v1175
      %1186 = vst [vmem:[#allocation5 + $0x38] sm:$0xff] %v1177
      %1187 = vst [vmem:[#allocation4] sm:$0xff] %v1161
      %1188 = vst [vmem:[#allocation4 + $0x8] sm:$0xff] %v1163
      %1189 = vst [vmem:[#allocation4 + $0x10] sm:$0xff] %v1165
      %1190 = vst [vmem:[#allocation4 + $0x18] sm:$0xff] %v1167
      %1191 = vst [vmem:[#allocation4 + $0x20] sm:$0xff] %v1171
      %1192 = vst [vmem:[#allocation4 + $0x28] sm:$0xff] %v1173
      %1193 = vst [vmem:[#allocation4 + $0x30] sm:$0xff] %v1175
      %1194 = vst [vmem:[#allocation4 + $0x38] sm:$0xff] %v1177
      %v1195 = vld [vmem:[#allocation4] sm:$0xff]
      %v1196 = vld [vmem:[#allocation4 + $0x8] sm:$0xff]
      %v1197 = vld [vmem:[#allocation4 + $0x10] sm:$0xff]
      %v1198 = vld [vmem:[#allocation4 + $0x18] sm:$0xff]
      %v1199 = vld [vmem:[#allocation4 + $0x20] sm:$0xff]
      %v1200 = vld [vmem:[#allocation4 + $0x28] sm:$0xff]
      %v1201 = vld [vmem:[#allocation4 + $0x30] sm:$0xff]
      %v1202 = vld [vmem:[#allocation4 + $0x38] sm:$0xff]
      %vm1203 = vcmask 134144
      %1204 = vst.msk [vmem:[#allocation3] sm:$0xf] %vm1203, 0
      %1205 = vst.msk [vmem:[#allocation3 + $0x8] sm:$0xf] %vm1203, 0
      %1206 = vst.msk [vmem:[#allocation3 + $0x10] sm:$0xf] %vm1203, 0
      %1207 = vst.msk [vmem:[#allocation3 + $0x18] sm:$0xf] %vm1203, 0
      %1208 = vrot.lane.b32.xlu0 %v648, 111
      %v1209 = vpop.permute.xlu0 %1208
      %1210 = vrot.lane.b32.xlu0 %v652, 111
      %v1211 = vpop.permute.xlu0 %1210
      %v1212 = vsel %vm659, %v1209, %v1211
      %v1215 = vmul.f32 %v1195, %v1212
      %v1216 = vmul.f32 %v1196, %v1211
      %v1217 = vmul.f32 %v1197, %v1212
      %v1218 = vmul.f32 %v1198, %v1211
      %v1219 = vmul.f32 %v1199, %v1212
      %v1220 = vmul.f32 %v1200, %v1211
      %v1221 = vmul.f32 %v1201, %v1212
      %v1222 = vmul.f32 %v1202, %v1211
      %v1223 = vpack.c.bf16 %v1217, %v1215
      %v1224 = vpack.c.bf16 %v1218, %v1216
      %v1225 = vpack.c.bf16 %v1221, %v1219
      %v1226 = vpack.c.bf16 %v1222, %v1220
      %v1231 = vunpack.c.l.b16 %v1223
      %v1232 = vunpack.c.l.b16 %v1224
      %v1233 = vunpack.c.h.b16 %v1223
      %v1234 = vunpack.c.h.b16 %v1224
      %v1235 = vunpack.c.l.b16 %v1225
      %v1236 = vunpack.c.l.b16 %v1226
      %v1237 = vunpack.c.h.b16 %v1225
      %v1238 = vunpack.c.h.b16 %v1226
      %v1239 = vpack.c.b16 %v1232, %v1231
      %v1240 = vpack.c.b16 %v1234, %v1233
      %v1241 = vpack.c.b16 %v1236, %v1235
      %v1242 = vpack.c.b16 %v1238, %v1237
      %1243 = vrot.lane.b32.xlu0 %v1239, 17
      %v1244 = vpop.permute.xlu0 %1243
      %1245 = vrot.lane.b32.xlu0 %v1240, 17
      %v1246 = vpop.permute.xlu0 %1245
      %1247 = vrot.lane.b32.xlu0 %v1241, 17
      %v1248 = vpop.permute.xlu0 %1247
      %1249 = vrot.lane.b32.xlu0 %v1242, 17
      %v1250 = vpop.permute.xlu0 %1249
      %v1251 = vrot.slane %v1244, 4
      %v1252 = vrot.slane %v1246, 4
      %v1253 = vrot.slane %v1248, 4
      %v1254 = vrot.slane %v1250, 4
      %v1255 = vsel %vm676, %v1251, %v1244
      %v1256 = vsel %vm676, %v1252, %v1246
      %v1257 = vsel %vm676, %v1253, %v1248
      %v1258 = vsel %vm676, %v1254, %v1250
      %vm1263 = vcmask 1043592
      %vm1264 = vcmask 1047556
      %vm1265 = vmor %vm1264, %vm1263
      %1266 = vst.msk [vmem:[#allocation3] sm:$0xff] %vm1265, %v1255
      %1267 = vst.msk [vmem:[#allocation3 + $0x8] sm:$0xff] %vm1265, %v1256
      %1268 = vst.msk [vmem:[#allocation3 + $0x10] sm:$0xff] %vm1265, %v1257
      %1269 = vst.msk [vmem:[#allocation3 + $0x18] sm:$0xff] %vm1265, %v1258
      %vm1270 = vcmask 125952
      %1271 = vst.msk [vmem:[#allocation3 + $0x20] sm:$0xf] %vm1270, 0
      %1272 = vst.msk [vmem:[#allocation3 + $0x28] sm:$0xf] %vm1270, 0
      %1273 = vst.msk [vmem:[#allocation3 + $0x30] sm:$0xf] %vm1270, 0
      %1274 = vst.msk [vmem:[#allocation3 + $0x38] sm:$0xf] %vm1270, 0
      %1275 = vrot.lane.b32.xlu0 %v696, 112
      %v1276 = vpop.permute.xlu0 %1275
      %1277 = vrot.lane.b32.xlu0 %v700, 112
      %v1278 = vpop.permute.xlu0 %1277
      %v1279 = vsel %vm707, %v1276, %v1278
      %v1282 = vmul.f32 %v1195, %v1279
      %v1283 = vmul.f32 %v1196, %v1278
      %v1284 = vmul.f32 %v1197, %v1279
      %v1285 = vmul.f32 %v1198, %v1278
      %v1286 = vmul.f32 %v1199, %v1279
      %v1287 = vmul.f32 %v1200, %v1278
      %v1288 = vmul.f32 %v1201, %v1279
      %v1289 = vmul.f32 %v1202, %v1278
      %v1290 = vpack.c.bf16 %v1284, %v1282
      %v1291 = vpack.c.bf16 %v1285, %v1283
      %v1292 = vpack.c.bf16 %v1288, %v1286
      %v1293 = vpack.c.bf16 %v1289, %v1287
      %v1298 = vunpack.c.l.b16 %v1290
      %v1299 = vunpack.c.l.b16 %v1291
      %v1300 = vunpack.c.h.b16 %v1290
      %v1301 = vunpack.c.h.b16 %v1291
      %v1302 = vunpack.c.l.b16 %v1292
      %v1303 = vunpack.c.l.b16 %v1293
      %v1304 = vunpack.c.h.b16 %v1292
      %v1305 = vunpack.c.h.b16 %v1293
      %v1306 = vpack.c.b16 %v1299, %v1298
      %v1307 = vpack.c.b16 %v1301, %v1300
      %v1308 = vpack.c.b16 %v1303, %v1302
      %v1309 = vpack.c.b16 %v1305, %v1304
      %1310 = vrot.lane.b32.xlu0 %v1306, 16
      %v1311 = vpop.permute.xlu0 %1310
      %1312 = vrot.lane.b32.xlu0 %v1307, 16
      %v1313 = vpop.permute.xlu0 %1312
      %1314 = vrot.lane.b32.xlu0 %v1308, 16
      %v1315 = vpop.permute.xlu0 %1314
      %1316 = vrot.lane.b32.xlu0 %v1309, 16
      %v1317 = vpop.permute.xlu0 %1316
      %v1318 = vrot.slane %v1311, 4
      %v1319 = vrot.slane %v1313, 4
      %v1320 = vrot.slane %v1315, 4
      %v1321 = vrot.slane %v1317, 4
      %v1322 = vsel %vm724, %v1318, %v1311
      %v1323 = vsel %vm724, %v1319, %v1313
      %v1324 = vsel %vm724, %v1320, %v1315
      %v1325 = vsel %vm724, %v1321, %v1317
      %vm1330 = vcmask 1043584
      %vm1331 = vmor %vm1264, %vm1330
      %1332 = vst.msk [vmem:[#allocation3 + $0x20] sm:$0xff] %vm1331, %v1322
      %1333 = vst.msk [vmem:[#allocation3 + $0x28] sm:$0xff] %vm1331, %v1323
      %1334 = vst.msk [vmem:[#allocation3 + $0x30] sm:$0xff] %vm1331, %v1324
      %1335 = vst.msk [vmem:[#allocation3 + $0x38] sm:$0xff] %vm1331, %v1325
      %vm1336 = vcmask 117760
      %1337 = vst.msk [vmem:[#allocation3 + $0x40] sm:$0xf] %vm1336, 0
      %1338 = vst.msk [vmem:[#allocation3 + $0x48] sm:$0xf] %vm1336, 0
      %1339 = vst.msk [vmem:[#allocation3 + $0x50] sm:$0xf] %vm1336, 0
      %1340 = vst.msk [vmem:[#allocation3 + $0x58] sm:$0xf] %vm1336, 0
      %1341 = vrot.lane.b32.xlu0 %v741, 113
      %v1342 = vpop.permute.xlu0 %1341
      %1343 = vrot.lane.b32.xlu0 %v745, 113
      %v1344 = vpop.permute.xlu0 %1343
      %v1345 = vsel %vm752, %v1342, %v1344
      %v1348 = vmul.f32 %v1195, %v1345
      %v1349 = vmul.f32 %v1196, %v1344
      %v1350 = vmul.f32 %v1197, %v1345
      %v1351 = vmul.f32 %v1198, %v1344
      %v1352 = vmul.f32 %v1199, %v1345
      %v1353 = vmul.f32 %v1200, %v1344
      %v1354 = vmul.f32 %v1201, %v1345
      %v1355 = vmul.f32 %v1202, %v1344
      %v1356 = vpack.c.bf16 %v1350, %v1348
      %v1357 = vpack.c.bf16 %v1351, %v1349
      %v1358 = vpack.c.bf16 %v1354, %v1352
      %v1359 = vpack.c.bf16 %v1355, %v1353
      %v1364 = vunpack.c.l.b16 %v1356
      %v1365 = vunpack.c.l.b16 %v1357
      %v1366 = vunpack.c.h.b16 %v1356
      %v1367 = vunpack.c.h.b16 %v1357
      %v1368 = vunpack.c.l.b16 %v1358
      %v1369 = vunpack.c.l.b16 %v1359
      %v1370 = vunpack.c.h.b16 %v1358
      %v1371 = vunpack.c.h.b16 %v1359
      %v1372 = vpack.c.b16 %v1365, %v1364
      %v1373 = vpack.c.b16 %v1367, %v1366
      %v1374 = vpack.c.b16 %v1369, %v1368
      %v1375 = vpack.c.b16 %v1371, %v1370
      %1376 = vrot.lane.b32.xlu0 %v1372, 15
      %v1377 = vpop.permute.xlu0 %1376
      %1378 = vrot.lane.b32.xlu0 %v1373, 15
      %v1379 = vpop.permute.xlu0 %1378
      %1380 = vrot.lane.b32.xlu0 %v1374, 15
      %v1381 = vpop.permute.xlu0 %1380
      %1382 = vrot.lane.b32.xlu0 %v1375, 15
      %v1383 = vpop.permute.xlu0 %1382
      %v1384 = vrot.slane %v1377, 4
      %v1385 = vrot.slane %v1379, 4
      %v1386 = vrot.slane %v1381, 4
      %v1387 = vrot.slane %v1383, 4
      %v1388 = vsel %vm769, %v1384, %v1377
      %v1389 = vsel %vm769, %v1385, %v1379
      %v1390 = vsel %vm769, %v1386, %v1381
      %v1391 = vsel %vm769, %v1387, %v1383
      %vm1396 = vcmask 1043576
      %vm1397 = vmor %vm1264, %vm1396
      %1398 = vst.msk [vmem:[#allocation3 + $0x40] sm:$0xff] %vm1397, %v1388
      %1399 = vst.msk [vmem:[#allocation3 + $0x48] sm:$0xff] %vm1397, %v1389
      %1400 = vst.msk [vmem:[#allocation3 + $0x50] sm:$0xff] %vm1397, %v1390
      %1401 = vst.msk [vmem:[#allocation3 + $0x58] sm:$0xff] %vm1397, %v1391
      %vm1402 = vcmask 3072
      %1403 = vst.msk [vmem:[#allocation3 + $0x60] sm:$0xf] %vm1402, 0
      %1404 = vst.msk [vmem:[#allocation3 + $0x68] sm:$0xf] %vm1402, 0
      %1405 = vst.msk [vmem:[#allocation3 + $0x70] sm:$0xf] %vm1402, 0
      %1406 = vst.msk [vmem:[#allocation3 + $0x78] sm:$0xf] %vm1402, 0
      %1407 = vrot.lane.b32.xlu0 %v786, 127
      %v1408 = vpop.permute.xlu0 %1407
      %1409 = vrot.lane.b32.xlu0 %v790, 127
      %v1410 = vpop.permute.xlu0 %1409
      %v1411 = vsel %vm797, %v1408, %v1410
      %v1414 = vmul.f32 %v1195, %v1411
      %v1415 = vmul.f32 %v1196, %v1410
      %v1416 = vmul.f32 %v1197, %v1411
      %v1417 = vmul.f32 %v1198, %v1410
      %v1418 = vmul.f32 %v1199, %v1411
      %v1419 = vmul.f32 %v1200, %v1410
      %v1420 = vmul.f32 %v1201, %v1411
      %v1421 = vmul.f32 %v1202, %v1410
      %v1422 = vpack.c.bf16 %v1416, %v1414
      %v1423 = vpack.c.bf16 %v1417, %v1415
      %v1424 = vpack.c.bf16 %v1420, %v1418
      %v1425 = vpack.c.bf16 %v1421, %v1419
      %v1430 = vunpack.c.l.b16 %v1422
      %v1431 = vunpack.c.l.b16 %v1423
      %v1432 = vunpack.c.h.b16 %v1422
      %v1433 = vunpack.c.h.b16 %v1423
      %v1434 = vunpack.c.l.b16 %v1424
      %v1435 = vunpack.c.l.b16 %v1425
      %v1436 = vunpack.c.h.b16 %v1424
      %v1437 = vunpack.c.h.b16 %v1425
      %v1438 = vpack.c.b16 %v1431, %v1430
      %v1439 = vpack.c.b16 %v1433, %v1432
      %v1440 = vpack.c.b16 %v1435, %v1434
      %v1441 = vpack.c.b16 %v1437, %v1436
      %1442 = vrot.lane.b32.xlu0 %v1438, 1
      %v1443 = vpop.permute.xlu0 %1442
      %1444 = vrot.lane.b32.xlu0 %v1439, 1
      %v1445 = vpop.permute.xlu0 %1444
      %1446 = vrot.lane.b32.xlu0 %v1440, 1
      %v1447 = vpop.permute.xlu0 %1446
      %1448 = vrot.lane.b32.xlu0 %v1441, 1
      %v1449 = vpop.permute.xlu0 %1448
      %v1450 = vrot.slane %v1443, 4
      %v1451 = vrot.slane %v1445, 4
      %v1452 = vrot.slane %v1447, 4
      %v1453 = vrot.slane %v1449, 4
      %v1454 = vsel %vm814, %v1450, %v1443
      %v1455 = vsel %vm814, %v1451, %v1445
      %v1456 = vsel %vm814, %v1452, %v1447
      %v1457 = vsel %vm814, %v1453, %v1449
      %vm1462 = vcmask 1043464
      %vm1463 = vmor %vm1264, %vm1462
      %1464 = vst.msk [vmem:[#allocation3 + $0x60] sm:$0xff] %vm1463, %v1454
      %1465 = vst.msk [vmem:[#allocation3 + $0x68] sm:$0xff] %vm1463, %v1455
      %1466 = vst.msk [vmem:[#allocation3 + $0x70] sm:$0xff] %vm1463, %v1456
      %1467 = vst.msk [vmem:[#allocation3 + $0x78] sm:$0xff] %vm1463, %v1457
      %v1468 = vpack.c.bf16 %v1197, %v1195
      %v1469 = vpack.c.bf16 %v1198, %v1196
      %v1470 = vpack.c.bf16 %v1201, %v1199
      %v1471 = vpack.c.bf16 %v1202, %v1200
      %v1476 = vunpack.c.l.b16 %v1468
      %v1477 = vunpack.c.l.b16 %v1469
      %v1478 = vunpack.c.h.b16 %v1468
      %v1479 = vunpack.c.h.b16 %v1469
      %v1480 = vunpack.c.l.b16 %v1470
      %v1481 = vunpack.c.l.b16 %v1471
      %v1482 = vunpack.c.h.b16 %v1470
      %v1483 = vunpack.c.h.b16 %v1471
      %v1484 = vpack.c.b16 %v1477, %v1476
      %v1485 = vpack.c.b16 %v1479, %v1478
      %v1486 = vpack.c.b16 %v1481, %v1480
      %v1487 = vpack.c.b16 %v1483, %v1482
      %1492 = vst [vmem:[#allocation3 + $0x80] sm:$0xff] %v1484
      %1493 = vst [vmem:[#allocation3 + $0x88] sm:$0xff] %v1485
      %1494 = vst [vmem:[#allocation3 + $0x90] sm:$0xff] %v1486
      %1495 = vst [vmem:[#allocation3 + $0x98] sm:$0xff] %v1487
      %1496 = vrot.lane.b32.xlu0 %v843, 1
      %v1497 = vpop.permute.xlu0 %1496
      %1498 = vrot.lane.b32.xlu0 %v847, 1
      %v1499 = vpop.permute.xlu0 %1498
      %v1500 = vsel %vm854, %v1497, %v1499
      %v1503 = vmul.f32 %v1195, %v1497
      %v1504 = vmul.f32 %v1196, %v1500
      %v1505 = vmul.f32 %v1197, %v1497
      %v1506 = vmul.f32 %v1198, %v1500
      %v1507 = vmul.f32 %v1199, %v1497
      %v1508 = vmul.f32 %v1200, %v1500
      %v1509 = vmul.f32 %v1201, %v1497
      %v1510 = vmul.f32 %v1202, %v1500
      %v1511 = vpack.c.bf16 %v1505, %v1503
      %v1512 = vpack.c.bf16 %v1506, %v1504
      %v1513 = vpack.c.bf16 %v1509, %v1507
      %v1514 = vpack.c.bf16 %v1510, %v1508
      %v1519 = vunpack.c.l.b16 %v1511
      %v1520 = vunpack.c.l.b16 %v1512
      %v1521 = vunpack.c.h.b16 %v1511
      %v1522 = vunpack.c.h.b16 %v1512
      %v1523 = vunpack.c.l.b16 %v1513
      %v1524 = vunpack.c.l.b16 %v1514
      %v1525 = vunpack.c.h.b16 %v1513
      %v1526 = vunpack.c.h.b16 %v1514
      %v1527 = vpack.c.b16 %v1520, %v1519
      %v1528 = vpack.c.b16 %v1522, %v1521
      %v1529 = vpack.c.b16 %v1524, %v1523
      %v1530 = vpack.c.b16 %v1526, %v1525
      %1531 = vrot.lane.b32.xlu0 %v1527, 127
      %v1532 = vpop.permute.xlu0 %1531
      %1533 = vrot.lane.b32.xlu0 %v1528, 127
      %v1534 = vpop.permute.xlu0 %1533
      %1535 = vrot.lane.b32.xlu0 %v1529, 127
      %v1536 = vpop.permute.xlu0 %1535
      %1537 = vrot.lane.b32.xlu0 %v1530, 127
      %v1538 = vpop.permute.xlu0 %1537
      %v1539 = vrot.slane %v1532, 4
      %v1540 = vrot.slane %v1534, 4
      %v1541 = vrot.slane %v1536, 4
      %v1542 = vrot.slane %v1538, 4
      %v1543 = vsel %vm871, %v1532, %v1539
      %v1544 = vsel %vm871, %v1534, %v1540
      %v1545 = vsel %vm871, %v1536, %v1541
      %v1546 = vsel %vm871, %v1538, %v1542
      %vm1551 = vcmask 1039364
      %vm1552 = vmor %vm1551, %vm1119
      %1553 = vst.msk [vmem:[#allocation3 + $0xa0] sm:$0xff] %vm1552, %v1543
      %1554 = vst.msk [vmem:[#allocation3 + $0xa8] sm:$0xff] %vm1552, %v1544
      %1555 = vst.msk [vmem:[#allocation3 + $0xb0] sm:$0xff] %vm1552, %v1545
      %1556 = vst.msk [vmem:[#allocation3 + $0xb8] sm:$0xff] %vm1552, %v1546
      %vm1557 = vcmask 1044472
      %1558 = vst.msk [vmem:[#allocation3 + $0xa4] sm:$0xf] %vm1557, 0
      %1559 = vst.msk [vmem:[#allocation3 + $0xac] sm:$0xf] %vm1557, 0
      %1560 = vst.msk [vmem:[#allocation3 + $0xb4] sm:$0xf] %vm1557, 0
      %1561 = vst.msk [vmem:[#allocation3 + $0xbc] sm:$0xf] %vm1557, 0
      %1562 = vrot.lane.b32.xlu0 %v888, 15
      %v1563 = vpop.permute.xlu0 %1562
      %1564 = vrot.lane.b32.xlu0 %v892, 15
      %v1565 = vpop.permute.xlu0 %1564
      %v1566 = vsel %vm899, %v1563, %v1565
      %v1569 = vmul.f32 %v1195, %v1563
      %v1570 = vmul.f32 %v1196, %v1566
      %v1571 = vmul.f32 %v1197, %v1563
      %v1572 = vmul.f32 %v1198, %v1566
      %v1573 = vmul.f32 %v1199, %v1563
      %v1574 = vmul.f32 %v1200, %v1566
      %v1575 = vmul.f32 %v1201, %v1563
      %v1576 = vmul.f32 %v1202, %v1566
      %v1577 = vpack.c.bf16 %v1571, %v1569
      %v1578 = vpack.c.bf16 %v1572, %v1570
      %v1579 = vpack.c.bf16 %v1575, %v1573
      %v1580 = vpack.c.bf16 %v1576, %v1574
      %v1585 = vunpack.c.l.b16 %v1577
      %v1586 = vunpack.c.l.b16 %v1578
      %v1587 = vunpack.c.h.b16 %v1577
      %v1588 = vunpack.c.h.b16 %v1578
      %v1589 = vunpack.c.l.b16 %v1579
      %v1590 = vunpack.c.l.b16 %v1580
      %v1591 = vunpack.c.h.b16 %v1579
      %v1592 = vunpack.c.h.b16 %v1580
      %v1593 = vpack.c.b16 %v1586, %v1585
      %v1594 = vpack.c.b16 %v1588, %v1587
      %v1595 = vpack.c.b16 %v1590, %v1589
      %v1596 = vpack.c.b16 %v1592, %v1591
      %1597 = vrot.lane.b32.xlu0 %v1593, 113
      %v1598 = vpop.permute.xlu0 %1597
      %1599 = vrot.lane.b32.xlu0 %v1594, 113
      %v1600 = vpop.permute.xlu0 %1599
      %1601 = vrot.lane.b32.xlu0 %v1595, 113
      %v1602 = vpop.permute.xlu0 %1601
      %1603 = vrot.lane.b32.xlu0 %v1596, 113
      %v1604 = vpop.permute.xlu0 %1603
      %v1605 = vrot.slane %v1598, 4
      %v1606 = vrot.slane %v1600, 4
      %v1607 = vrot.slane %v1602, 4
      %v1608 = vrot.slane %v1604, 4
      %v1609 = vsel %vm916, %v1598, %v1605
      %v1610 = vsel %vm916, %v1600, %v1606
      %v1611 = vsel %vm916, %v1602, %v1607
      %v1612 = vsel %vm916, %v1604, %v1608
      %vm1617 = vcmask 924676
      %vm1618 = vmor %vm1617, %vm1119
      %1619 = vst.msk [vmem:[#allocation3 + $0xc0] sm:$0xff] %vm1618, %v1609
      %1620 = vst.msk [vmem:[#allocation3 + $0xc8] sm:$0xff] %vm1618, %v1610
      %1621 = vst.msk [vmem:[#allocation3 + $0xd0] sm:$0xff] %vm1618, %v1611
      %1622 = vst.msk [vmem:[#allocation3 + $0xd8] sm:$0xff] %vm1618, %v1612
      %vm1623 = vcmask 1044360
      %1624 = vst.msk [vmem:[#allocation3 + $0xc4] sm:$0xf] %vm1623, 0
      %1625 = vst.msk [vmem:[#allocation3 + $0xcc] sm:$0xf] %vm1623, 0
      %1626 = vst.msk [vmem:[#allocation3 + $0xd4] sm:$0xf] %vm1623, 0
      %1627 = vst.msk [vmem:[#allocation3 + $0xdc] sm:$0xf] %vm1623, 0
      %1628 = vrot.lane.b32.xlu0 %v933, 16
      %v1629 = vpop.permute.xlu0 %1628
      %1630 = vrot.lane.b32.xlu0 %v937, 16
      %v1631 = vpop.permute.xlu0 %1630
      %v1632 = vsel %vm944, %v1629, %v1631
      %v1635 = vmul.f32 %v1195, %v1629
      %v1636 = vmul.f32 %v1196, %v1632
      %v1637 = vmul.f32 %v1197, %v1629
      %v1638 = vmul.f32 %v1198, %v1632
      %v1639 = vmul.f32 %v1199, %v1629
      %v1640 = vmul.f32 %v1200, %v1632
      %v1641 = vmul.f32 %v1201, %v1629
      %v1642 = vmul.f32 %v1202, %v1632
      %v1643 = vpack.c.bf16 %v1637, %v1635
      %v1644 = vpack.c.bf16 %v1638, %v1636
      %v1645 = vpack.c.bf16 %v1641, %v1639
      %v1646 = vpack.c.bf16 %v1642, %v1640
      %v1651 = vunpack.c.l.b16 %v1643
      %v1652 = vunpack.c.l.b16 %v1644
      %v1653 = vunpack.c.h.b16 %v1643
      %v1654 = vunpack.c.h.b16 %v1644
      %v1655 = vunpack.c.l.b16 %v1645
      %v1656 = vunpack.c.l.b16 %v1646
      %v1657 = vunpack.c.h.b16 %v1645
      %v1658 = vunpack.c.h.b16 %v1646
      %v1659 = vpack.c.b16 %v1652, %v1651
      %v1660 = vpack.c.b16 %v1654, %v1653
      %v1661 = vpack.c.b16 %v1656, %v1655
      %v1662 = vpack.c.b16 %v1658, %v1657
      %1663 = vrot.lane.b32.xlu0 %v1659, 112
      %v1664 = vpop.permute.xlu0 %1663
      %1665 = vrot.lane.b32.xlu0 %v1660, 112
      %v1666 = vpop.permute.xlu0 %1665
      %1667 = vrot.lane.b32.xlu0 %v1661, 112
      %v1668 = vpop.permute.xlu0 %1667
      %1669 = vrot.lane.b32.xlu0 %v1662, 112
      %v1670 = vpop.permute.xlu0 %1669
      %v1671 = vrot.slane %v1664, 4
      %v1672 = vrot.slane %v1666, 4
      %v1673 = vrot.slane %v1668, 4
      %v1674 = vrot.slane %v1670, 4
      %v1675 = vsel %vm961, %v1664, %v1671
      %v1676 = vsel %vm961, %v1666, %v1672
      %v1677 = vsel %vm961, %v1668, %v1673
      %v1678 = vsel %vm961, %v1670, %v1674
      %vm1683 = vcmask 916484
      %vm1684 = vmor %vm1683, %vm1119
      %1685 = vst.msk [vmem:[#allocation3 + $0xe0] sm:$0xff] %vm1684, %v1675
      %1686 = vst.msk [vmem:[#allocation3 + $0xe8] sm:$0xff] %vm1684, %v1676
      %1687 = vst.msk [vmem:[#allocation3 + $0xf0] sm:$0xff] %vm1684, %v1677
      %1688 = vst.msk [vmem:[#allocation3 + $0xf8] sm:$0xff] %vm1684, %v1678
      %vm1689 = vcmask 1044352
      %1690 = vst.msk [vmem:[#allocation3 + $0xe4] sm:$0xf] %vm1689, 0
      %1691 = vst.msk [vmem:[#allocation3 + $0xec] sm:$0xf] %vm1689, 0
      %1692 = vst.msk [vmem:[#allocation3 + $0xf4] sm:$0xf] %vm1689, 0
      %1693 = vst.msk [vmem:[#allocation3 + $0xfc] sm:$0xf] %vm1689, 0
      %1694 = vrot.lane.b32.xlu0 %v978, 17
      %v1695 = vpop.permute.xlu0 %1694
      %1696 = vrot.lane.b32.xlu0 %v982, 17
      %v1697 = vpop.permute.xlu0 %1696
      %v1698 = vsel %vm989, %v1695, %v1697
      %v1701 = vmul.f32 %v1195, %v1695
      %v1702 = vmul.f32 %v1196, %v1698
      %v1703 = vmul.f32 %v1197, %v1695
      %v1704 = vmul.f32 %v1198, %v1698
      %v1705 = vmul.f32 %v1199, %v1695
      %v1706 = vmul.f32 %v1200, %v1698
      %v1707 = vmul.f32 %v1201, %v1695
      %v1708 = vmul.f32 %v1202, %v1698
      %v1709 = vpack.c.bf16 %v1703, %v1701
      %v1710 = vpack.c.bf16 %v1704, %v1702
      %v1711 = vpack.c.bf16 %v1707, %v1705
      %v1712 = vpack.c.bf16 %v1708, %v1706
      %v1717 = vunpack.c.l.b16 %v1709
      %v1718 = vunpack.c.l.b16 %v1710
      %v1719 = vunpack.c.h.b16 %v1709
      %v1720 = vunpack.c.h.b16 %v1710
      %v1721 = vunpack.c.l.b16 %v1711
      %v1722 = vunpack.c.l.b16 %v1712
      %v1723 = vunpack.c.h.b16 %v1711
      %v1724 = vunpack.c.h.b16 %v1712
      %v1725 = vpack.c.b16 %v1718, %v1717
      %v1726 = vpack.c.b16 %v1720, %v1719
      %v1727 = vpack.c.b16 %v1722, %v1721
      %v1728 = vpack.c.b16 %v1724, %v1723
      %1729 = vrot.lane.b32.xlu0 %v1725, 111
      %v1730 = vpop.permute.xlu0 %1729
      %1731 = vrot.lane.b32.xlu0 %v1726, 111
      %v1732 = vpop.permute.xlu0 %1731
      %1733 = vrot.lane.b32.xlu0 %v1727, 111
      %v1734 = vpop.permute.xlu0 %1733
      %1735 = vrot.lane.b32.xlu0 %v1728, 111
      %v1736 = vpop.permute.xlu0 %1735
      %v1737 = vrot.slane %v1730, 4
      %v1738 = vrot.slane %v1732, 4
      %v1739 = vrot.slane %v1734, 4
      %v1740 = vrot.slane %v1736, 4
      %v1741 = vsel %vm1006, %v1730, %v1737
      %v1742 = vsel %vm1006, %v1732, %v1738
      %v1743 = vsel %vm1006, %v1734, %v1739
      %v1744 = vsel %vm1006, %v1736, %v1740
      %vm1749 = vcmask 908292
      %vm1750 = vmor %vm1749, %vm1119
      %1751 = vst.msk [vmem:[#allocation3 + $0x100] sm:$0xff] %vm1750, %v1741
      %1752 = vst.msk [vmem:[#allocation3 + $0x108] sm:$0xff] %vm1750, %v1742
      %1753 = vst.msk [vmem:[#allocation3 + $0x110] sm:$0xff] %vm1750, %v1743
      %1754 = vst.msk [vmem:[#allocation3 + $0x118] sm:$0xff] %vm1750, %v1744
      %vm1755 = vcmask 1044344
      %1756 = vst.msk [vmem:[#allocation3 + $0x104] sm:$0xf] %vm1755, 0
      %1757 = vst.msk [vmem:[#allocation3 + $0x10c] sm:$0xf] %vm1755, 0
      %1758 = vst.msk [vmem:[#allocation3 + $0x114] sm:$0xf] %vm1755, 0
      %1759 = vst.msk [vmem:[#allocation3 + $0x11c] sm:$0xf] %vm1755, 0
      %v1760 = vld [vmem:[%s5] sm:$0xff]
      %v1761 = vld [vmem:[%s5 + $0x8] sm:$0xf]
      %v1762 = vld [vmem:[%s5 + $0xc] sm:$0xff]
      %v1763 = vld [vmem:[%s5 + $0x14] sm:$0xf]
      %v1764 = vld [vmem:[%s5 + $0x18] sm:$0xff]
      %v1765 = vld [vmem:[%s5 + $0x20] sm:$0xf]
      %v1766 = vld [vmem:[%s5 + $0x24] sm:$0xff]
      %v1767 = vld [vmem:[%s5 + $0x2c] sm:$0xf]
      %v1768 = vld [vmem:[#allocation3] sm:$0xff]
      %v1769 = vld [vmem:[#allocation3 + $0x8] sm:$0xff]
      %v1770 = vld [vmem:[#allocation3 + $0x10] sm:$0xff]
      %v1771 = vld [vmem:[#allocation3 + $0x18] sm:$0xff]
      %v1772 = vld [vmem:[#allocation3 + $0x20] sm:$0xff]
      %v1773 = vld [vmem:[#allocation3 + $0x28] sm:$0xff]
      %v1774 = vld [vmem:[#allocation3 + $0x30] sm:$0xff]
      %v1775 = vld [vmem:[#allocation3 + $0x38] sm:$0xff]
      %v1776 = vld [vmem:[#allocation3 + $0x40] sm:$0xff]
      %v1777 = vld [vmem:[#allocation3 + $0x48] sm:$0xff]
      %v1778 = vld [vmem:[#allocation3 + $0x50] sm:$0xff]
      %v1779 = vld [vmem:[#allocation3 + $0x58] sm:$0xff]
      %v1780 = vld [vmem:[#allocation3 + $0x60] sm:$0xff]
      %v1781 = vld [vmem:[#allocation3 + $0x68] sm:$0xff]
      %v1782 = vld [vmem:[#allocation3 + $0x70] sm:$0xff]
      %v1783 = vld [vmem:[#allocation3 + $0x78] sm:$0xff]
      %v1784 = vld [vmem:[#allocation3 + $0x80] sm:$0xff]
      %v1785 = vld [vmem:[#allocation3 + $0x88] sm:$0xff]
      %v1786 = vld [vmem:[#allocation3 + $0x90] sm:$0xff]
      %v1787 = vld [vmem:[#allocation3 + $0x98] sm:$0xff]
      %v1788 = vld [vmem:[#allocation3 + $0xa0] sm:$0xff]
      %v1789 = vld [vmem:[#allocation3 + $0xa8] sm:$0xff]
      %v1790 = vld [vmem:[#allocation3 + $0xb0] sm:$0xff]
      %v1791 = vld [vmem:[#allocation3 + $0xb8] sm:$0xff]
      %v1792 = vld [vmem:[#allocation3 + $0xc0] sm:$0xff]
      %v1793 = vld [vmem:[#allocation3 + $0xc8] sm:$0xff]
      %v1794 = vld [vmem:[#allocation3 + $0xd0] sm:$0xff]
      %v1795 = vld [vmem:[#allocation3 + $0xd8] sm:$0xff]
      %v1796 = vld [vmem:[#allocation3 + $0xe0] sm:$0xff]
      %v1797 = vld [vmem:[#allocation3 + $0xe8] sm:$0xff]
      %v1798 = vld [vmem:[#allocation3 + $0xf0] sm:$0xff]
      %v1799 = vld [vmem:[#allocation3 + $0xf8] sm:$0xff]
      %v1800 = vld [vmem:[#allocation3 + $0x100] sm:$0xff]
      %v1801 = vld [vmem:[#allocation3 + $0x108] sm:$0xff]
      %v1802 = vld [vmem:[#allocation3 + $0x110] sm:$0xff]
      %v1803 = vld [vmem:[#allocation3 + $0x118] sm:$0xff]
      %v1804 = vld [vmem:[%s6] sm:$0xff]
      %v1805 = vld [vmem:[%s6 + $0x8] sm:$0xff]
      %v1806 = vld [vmem:[%s6 + $0x10] sm:$0xff]
      %v1807 = vld [vmem:[%s6 + $0x18] sm:$0xff]
      %1809 = vset.pattern.permute.xlu0 0
      %1810 = vperm.xlu0 %1809, %v1804
      %v1811 = vpop.permute.xlu0 %1810
      %1814 = vset.pattern.permute.xlu0 0
      %1815 = vperm.xlu0 %1814, %v1805
      %v1816 = vpop.permute.xlu0 %1815
      %1819 = vset.pattern.permute.xlu0 0
      %1820 = vperm.xlu0 %1819, %v1806
      %v1821 = vpop.permute.xlu0 %1820
      %1824 = vset.pattern.permute.xlu0 0
      %1825 = vperm.xlu0 %1824, %v1807
      %v1826 = vpop.permute.xlu0 %1825
      %v1836 = vunpack.c.l.b16 %v1760
      %v1837 = vunpack.c.h.b16 %v1760
      %v1838 = vunpack.c.l.b16 %v1761
      %v1839 = vunpack.c.l.b16 %v1762
      %v1840 = vunpack.c.h.b16 %v1762
      %v1841 = vunpack.c.l.b16 %v1763
      %v1842 = vunpack.c.l.b16 %v1764
      %v1843 = vunpack.c.h.b16 %v1764
      %v1844 = vunpack.c.l.b16 %v1765
      %v1845 = vunpack.c.l.b16 %v1766
      %v1846 = vunpack.c.h.b16 %v1766
      %v1847 = vunpack.c.l.b16 %v1767
      %v1848 = vpack.c.b16 %v1839, %v1836
      %v1849 = vpack.c.b16 %v1840, %v1837
      %v1850 = vpack.c.b16 %v1841, %v1838
      %v1851 = vpack.c.b16 %v1845, %v1842
      %v1852 = vpack.c.b16 %v1846, %v1843
      %v1853 = vpack.c.b16 %v1847, %v1844
      %v1894 = vunpack.c.l.b16 %v1768
      %v1895 = vunpack.c.h.b16 %v1768
      %v1896 = vunpack.c.l.b16 %v1769
      %v1897 = vunpack.c.h.b16 %v1769
      %v1898 = vunpack.c.l.b16 %v1770
      %v1899 = vunpack.c.h.b16 %v1770
      %v1900 = vunpack.c.l.b16 %v1771
      %v1901 = vunpack.c.h.b16 %v1771
      %v1902 = vunpack.c.l.b16 %v1772
      %v1903 = vunpack.c.h.b16 %v1772
      %v1904 = vunpack.c.l.b16 %v1773
      %v1905 = vunpack.c.h.b16 %v1773
      %v1906 = vunpack.c.l.b16 %v1774
      %v1907 = vunpack.c.h.b16 %v1774
      %v1908 = vunpack.c.l.b16 %v1775
      %v1909 = vunpack.c.h.b16 %v1775
      %v1910 = vunpack.c.l.b16 %v1776
      %v1911 = vunpack.c.h.b16 %v1776
      %v1912 = vunpack.c.l.b16 %v1777
      %v1913 = vunpack.c.h.b16 %v1777
      %v1914 = vunpack.c.l.b16 %v1778
      %v1915 = vunpack.c.h.b16 %v1778
      %v1916 = vunpack.c.l.b16 %v1779
      %v1917 = vunpack.c.h.b16 %v1779
      %v1918 = vunpack.c.l.b16 %v1780
      %v1919 = vunpack.c.h.b16 %v1780
      %v1920 = vunpack.c.l.b16 %v1781
      %v1921 = vunpack.c.h.b16 %v1781
      %v1922 = vunpack.c.l.b16 %v1782
      %v1923 = vunpack.c.h.b16 %v1782
      %v1924 = vunpack.c.l.b16 %v1783
      %v1925 = vunpack.c.h.b16 %v1783
      %v1926 = vunpack.c.l.b16 %v1784
      %v1927 = vunpack.c.h.b16 %v1784
      %v1928 = vunpack.c.l.b16 %v1785
      %v1929 = vunpack.c.h.b16 %v1785
      %v1930 = vunpack.c.l.b16 %v1786
      %v1931 = vunpack.c.h.b16 %v1786
      %v1932 = vunpack.c.l.b16 %v1787
      %v1933 = vunpack.c.h.b16 %v1787
      %v1934 = vunpack.c.l.b16 %v1788
      %v1935 = vunpack.c.h.b16 %v1788
      %v1936 = vunpack.c.l.b16 %v1789
      %v1937 = vunpack.c.h.b16 %v1789
      %v1938 = vunpack.c.l.b16 %v1790
      %v1939 = vunpack.c.h.b16 %v1790
      %v1940 = vunpack.c.l.b16 %v1791
      %v1941 = vunpack.c.h.b16 %v1791
      %v1942 = vunpack.c.l.b16 %v1792
      %v1943 = vunpack.c.h.b16 %v1792
      %v1944 = vunpack.c.l.b16 %v1793
      %v1945 = vunpack.c.h.b16 %v1793
      %v1946 = vunpack.c.l.b16 %v1794
      %v1947 = vunpack.c.h.b16 %v1794
      %v1948 = vunpack.c.l.b16 %v1795
      %v1949 = vunpack.c.h.b16 %v1795
      %v1950 = vunpack.c.l.b16 %v1796
      %v1951 = vunpack.c.h.b16 %v1796
      %v1952 = vunpack.c.l.b16 %v1797
      %v1953 = vunpack.c.h.b16 %v1797
      %v1954 = vunpack.c.l.b16 %v1798
      %v1955 = vunpack.c.h.b16 %v1798
      %v1956 = vunpack.c.l.b16 %v1799
      %v1957 = vunpack.c.h.b16 %v1799
      %v1958 = vunpack.c.l.b16 %v1800
      %v1959 = vunpack.c.h.b16 %v1800
      %v1960 = vunpack.c.l.b16 %v1801
      %v1961 = vunpack.c.h.b16 %v1801
      %v1962 = vunpack.c.l.b16 %v1802
      %v1963 = vunpack.c.h.b16 %v1802
      %v1964 = vunpack.c.l.b16 %v1803
      %v1965 = vunpack.c.h.b16 %v1803
      %v1966 = vpack.c.b16 %v1896, %v1894
      %v1967 = vpack.c.b16 %v1897, %v1895
      %v1968 = vpack.c.b16 %v1900, %v1898
      %v1969 = vpack.c.b16 %v1901, %v1899
      %v1970 = vpack.c.b16 %v1904, %v1902
      %v1971 = vpack.c.b16 %v1905, %v1903
      %v1972 = vpack.c.b16 %v1908, %v1906
      %v1973 = vpack.c.b16 %v1909, %v1907
      %v1974 = vpack.c.b16 %v1912, %v1910
      %v1975 = vpack.c.b16 %v1913, %v1911
      %v1976 = vpack.c.b16 %v1916, %v1914
      %v1977 = vpack.c.b16 %v1917, %v1915
      %v1978 = vpack.c.b16 %v1920, %v1918
      %v1979 = vpack.c.b16 %v1921, %v1919
      %v1980 = vpack.c.b16 %v1924, %v1922
      %v1981 = vpack.c.b16 %v1925, %v1923
      %v1982 = vpack.c.b16 %v1928, %v1926
      %v1983 = vpack.c.b16 %v1929, %v1927
      %v1984 = vpack.c.b16 %v1932, %v1930
      %v1985 = vpack.c.b16 %v1933, %v1931
      %v1986 = vpack.c.b16 %v1936, %v1934
      %v1987 = vpack.c.b16 %v1937, %v1935
      %v1988 = vpack.c.b16 %v1940, %v1938
      %v1989 = vpack.c.b16 %v1941, %v1939
      %v1990 = vpack.c.b16 %v1944, %v1942
      %v1991 = vpack.c.b16 %v1945, %v1943
      %v1992 = vpack.c.b16 %v1948, %v1946
      %v1993 = vpack.c.b16 %v1949, %v1947
      %v1994 = vpack.c.b16 %v1952, %v1950
      %v1995 = vpack.c.b16 %v1953, %v1951
      %v1996 = vpack.c.b16 %v1956, %v1954
      %v1997 = vpack.c.b16 %v1957, %v1955
      %v1998 = vpack.c.b16 %v1960, %v1958
      %v1999 = vpack.c.b16 %v1961, %v1959
      %v2000 = vpack.c.b16 %v1964, %v1962
      %v2001 = vpack.c.b16 %v1965, %v1963
      %vm2038 = vcmask 261120
      %v2040 = vsel %vm2038, %v1850, 0
      %v2043 = vsel %vm2038, %v1853, 0
      %2045 = vmatprep.subr.bf16.mxu0 %v1981
      %2046 = vmatpush1.bf16.msra.mxu0 %v1980
      %2047 = vmatprep.subr.bf16.mxu0 %v1979
      %2048 = vmatpush1.bf16.msra.mxu0 %v1978
      %2049 = vmatprep.subr.bf16.mxu0 %v1977
      %2050 = vmatpush1.bf16.msra.mxu0 %v1976
      %2051 = vmatprep.subr.bf16.mxu0 %v1975
      %2052 = vmatpush1.bf16.msra.mxu0 %v1974
      %2053 = vmatprep.subr.bf16.mxu0 %v1973
      %2054 = vmatpush1.bf16.msra.mxu0 %v1972
      %2055 = vmatprep.subr.bf16.mxu0 %v1971
      %2056 = vmatpush1.bf16.msra.mxu0 %v1970
      %2057 = vmatprep.subr.bf16.mxu0 %v1969
      %2058 = vmatpush1.bf16.msra.mxu0 %v1968
      %2059 = vmatprep.subr.bf16.mxu0 %v1967
      %2060 = vmatpush1.bf16.msra.mxu0 %v1966
      %2061 = vmatprep.subr.bf16.mxu0 %v1997
      %2062 = vmatpush2.bf16.msra.mxu0 %v1996
      %2063 = vmatprep.subr.bf16.mxu0 %v1995
      %2064 = vmatpush2.bf16.msra.mxu0 %v1994
      %2065 = vmatprep.subr.bf16.mxu0 %v1993
      %2066 = vmatpush2.bf16.msra.mxu0 %v1992
      %2067 = vmatprep.subr.bf16.mxu0 %v1991
      %2068 = vmatpush2.bf16.msra.mxu0 %v1990
      %2069 = vmatprep.subr.bf16.mxu0 %v1989
      %2070 = vmatpush2.bf16.msra.mxu0 %v1988
      %2071 = vmatprep.subr.bf16.mxu0 %v1987
      %2072 = vmatpush2.bf16.msra.mxu0 %v1986
      %2073 = vmatprep.subr.bf16.mxu0 %v1985
      %2074 = vmatpush2.bf16.msra.mxu0 %v1984
      %2075 = vmatprep.subr.bf16.mxu0 %v1983
      %2076 = vmatpush2.bf16.msra.mxu0 %v1982
      %2077 = vmatprep.mubr.bf16.mxu0 %v1849
      %2078 = vmatmul.mubr.bf16.gmra.mxu0 %v1848
      %v2079 = vpop.f32.mrf.mxu0
      %v2080 = vadd.f32 %v1811, %v2079
      %v2081 = vpop.f32.mrf.mxu0
      %v2082 = vadd.f32 %v1811, %v2081
      %v2083 = vpop.f32.mrf.mxu0
      %v2084 = vadd.f32 %v1816, %v2083
      %v2085 = vpop.f32.mrf.mxu0
      %v2086 = vadd.f32 %v1816, %v2085
      %2087 = vmatprep.mubr.bf16.mxu0 %v1852
      %2088 = vmatmul.mubr.bf16.gmra.mxu0 %v1851
      %v2089 = vpop.f32.mrf.mxu0
      %v2090 = vadd.f32 %v1821, %v2089
      %v2091 = vpop.f32.mrf.mxu0
      %v2092 = vadd.f32 %v1821, %v2091
      %v2093 = vpop.f32.mrf.mxu0
      %v2094 = vadd.f32 %v1826, %v2093
      %v2095 = vpop.f32.mrf.mxu0
      %v2096 = vadd.f32 %v1826, %v2095
      %2097 = vdwg.mxu0
      %2098 = vmatprep.subr.bf16.mxu0 0
      %2099 = vmatpush1.bf16.msra.mxu0 0
      %2100 = vmatprep.subr.bf16.mxu0 0
      %2101 = vmatpush1.bf16.msra.mxu0 0
      %2102 = vmatprep.subr.bf16.mxu0 0
      %2103 = vmatpush1.bf16.msra.mxu0 0
      %2104 = vmatprep.subr.bf16.mxu0 0
      %2105 = vmatpush1.bf16.msra.mxu0 0
      %2106 = vmatprep.subr.bf16.mxu0 0
      %2107 = vmatpush1.bf16.msra.mxu0 0
      %2108 = vmatprep.subr.bf16.mxu0 0
      %2109 = vmatpush1.bf16.msra.mxu0 0
      %2110 = vmatprep.subr.bf16.mxu0 %v2001
      %2111 = vmatpush1.bf16.msra.mxu0 %v2000
      %2112 = vmatprep.subr.bf16.mxu0 %v1999
      %2113 = vmatpush1.bf16.msra.mxu0 %v1998
      %2114 = vmatprep.subr.bf16.mxu0 0
      %2115 = vmatpush2.bf16.msra.mxu0 0
      %2116 = vmatprep.subr.bf16.mxu0 0
      %2117 = vmatpush2.bf16.msra.mxu0 0
      %2118 = vmatprep.subr.bf16.mxu0 0
      %2119 = vmatpush2.bf16.msra.mxu0 0
      %2120 = vmatprep.subr.bf16.mxu0 0
      %2121 = vmatpush2.bf16.msra.mxu0 0
      %2122 = vmatprep.subr.bf16.mxu0 0
      %2123 = vmatpush2.bf16.msra.mxu0 0
      %2124 = vmatprep.subr.bf16.mxu0 0
      %2125 = vmatpush2.bf16.msra.mxu0 0
      %2126 = vmatprep.subr.bf16.mxu0 0
      %2127 = vmatpush2.bf16.msra.mxu0 0
      %2128 = vmatprep.subr.bf16.mxu0 0
      %2129 = vmatpush2.bf16.msra.mxu0 0
      %2130 = vmatprep.mubr.bf16.mxu0 0
      %2131 = vmatmul.mubr.bf16.gmra.mxu0 %v2040
      %v2132 = vpop.f32.mrf.mxu0
      %v2133 = vadd.f32 %v2080, %v2132
      %v2134 = vpop.f32.mrf.mxu0
      %v2135 = vadd.f32 %v2082, %v2134
      %v2136 = vpop.f32.mrf.mxu0
      %v2137 = vadd.f32 %v2084, %v2136
      %v2138 = vpop.f32.mrf.mxu0
      %v2139 = vadd.f32 %v2086, %v2138
      %2140 = vmatprep.mubr.bf16.mxu0 0
      %2141 = vmatmul.mubr.bf16.gmra.mxu0 %v2043
      %v2142 = vpop.f32.mrf.mxu0
      %v2143 = vadd.f32 %v2090, %v2142
      %v2144 = vpop.f32.mrf.mxu0
      %v2145 = vadd.f32 %v2092, %v2144
      %v2146 = vpop.f32.mrf.mxu0
      %v2147 = vadd.f32 %v2094, %v2146
      %v2148 = vpop.f32.mrf.mxu0
      %v2149 = vadd.f32 %v2096, %v2148
      %2150 = vdwg.mxu0
      %v2151 = vmax.f32 %v2133, 0.0
      %v2152 = vmax.f32 %v2135, 0.0
      %v2153 = vmax.f32 %v2137, 0.0
      %v2154 = vmax.f32 %v2139, 0.0
      %v2155 = vmax.f32 %v2143, 0.0
      %v2156 = vmax.f32 %v2145, 0.0
      %v2157 = vmax.f32 %v2147, 0.0
      %v2158 = vmax.f32 %v2149, 0.0
      %2159 = vst.msk [vmem:[#allocation3] sm:$0xf] %vm1203, 0
      %2160 = vst.msk [vmem:[#allocation3 + $0x8] sm:$0xf] %vm1203, 0
      %2161 = vst.msk [vmem:[#allocation3 + $0x10] sm:$0xf] %vm1203, 0
      %2162 = vst.msk [vmem:[#allocation3 + $0x18] sm:$0xf] %vm1203, 0
      %v2163 = vmul.f32 %v2151, %v1212
      %v2164 = vmul.f32 %v2152, %v1211
      %v2165 = vmul.f32 %v2153, %v1212
      %v2166 = vmul.f32 %v2154, %v1211
      %v2167 = vmul.f32 %v2155, %v1212
      %v2168 = vmul.f32 %v2156, %v1211
      %v2169 = vmul.f32 %v2157, %v1212
      %v2170 = vmul.f32 %v2158, %v1211
      %v2171 = vpack.c.bf16 %v2165, %v2163
      %v2172 = vpack.c.bf16 %v2166, %v2164
      %v2173 = vpack.c.bf16 %v2169, %v2167
      %v2174 = vpack.c.bf16 %v2170, %v2168
      %v2179 = vunpack.c.l.b16 %v2171
      %v2180 = vunpack.c.l.b16 %v2172
      %v2181 = vunpack.c.h.b16 %v2171
      %v2182 = vunpack.c.h.b16 %v2172
      %v2183 = vunpack.c.l.b16 %v2173
      %v2184 = vunpack.c.l.b16 %v2174
      %v2185 = vunpack.c.h.b16 %v2173
      %v2186 = vunpack.c.h.b16 %v2174
      %v2187 = vpack.c.b16 %v2180, %v2179
      %v2188 = vpack.c.b16 %v2182, %v2181
      %v2189 = vpack.c.b16 %v2184, %v2183
      %v2190 = vpack.c.b16 %v2186, %v2185
      %2191 = vrot.lane.b32.xlu0 %v2187, 17
      %v2192 = vpop.permute.xlu0 %2191
      %2193 = vrot.lane.b32.xlu0 %v2188, 17
      %v2194 = vpop.permute.xlu0 %2193
      %2195 = vrot.lane.b32.xlu0 %v2189, 17
      %v2196 = vpop.permute.xlu0 %2195
      %2197 = vrot.lane.b32.xlu0 %v2190, 17
      %v2198 = vpop.permute.xlu0 %2197
      %v2199 = vrot.slane %v2192, 4
      %v2200 = vrot.slane %v2194, 4
      %v2201 = vrot.slane %v2196, 4
      %v2202 = vrot.slane %v2198, 4
      %v2203 = vsel %vm676, %v2199, %v2192
      %v2204 = vsel %vm676, %v2200, %v2194
      %v2205 = vsel %vm676, %v2201, %v2196
      %v2206 = vsel %vm676, %v2202, %v2198
      %2211 = vst.msk [vmem:[#allocation3] sm:$0xff] %vm1265, %v2203
      %2212 = vst.msk [vmem:[#allocation3 + $0x8] sm:$0xff] %vm1265, %v2204
      %2213 = vst.msk [vmem:[#allocation3 + $0x10] sm:$0xff] %vm1265, %v2205
      %2214 = vst.msk [vmem:[#allocation3 + $0x18] sm:$0xff] %vm1265, %v2206
      %2215 = vst.msk [vmem:[#allocation3 + $0x20] sm:$0xf] %vm1270, 0
      %2216 = vst.msk [vmem:[#allocation3 + $0x28] sm:$0xf] %vm1270, 0
      %2217 = vst.msk [vmem:[#allocation3 + $0x30] sm:$0xf] %vm1270, 0
      %2218 = vst.msk [vmem:[#allocation3 + $0x38] sm:$0xf] %vm1270, 0
      %v2219 = vmul.f32 %v2151, %v1279
      %v2220 = vmul.f32 %v2152, %v1278
      %v2221 = vmul.f32 %v2153, %v1279
      %v2222 = vmul.f32 %v2154, %v1278
      %v2223 = vmul.f32 %v2155, %v1279
      %v2224 = vmul.f32 %v2156, %v1278
      %v2225 = vmul.f32 %v2157, %v1279
      %v2226 = vmul.f32 %v2158, %v1278
      %v2227 = vpack.c.bf16 %v2221, %v2219
      %v2228 = vpack.c.bf16 %v2222, %v2220
      %v2229 = vpack.c.bf16 %v2225, %v2223
      %v2230 = vpack.c.bf16 %v2226, %v2224
      %v2235 = vunpack.c.l.b16 %v2227
      %v2236 = vunpack.c.l.b16 %v2228
      %v2237 = vunpack.c.h.b16 %v2227
      %v2238 = vunpack.c.h.b16 %v2228
      %v2239 = vunpack.c.l.b16 %v2229
      %v2240 = vunpack.c.l.b16 %v2230
      %v2241 = vunpack.c.h.b16 %v2229
      %v2242 = vunpack.c.h.b16 %v2230
      %v2243 = vpack.c.b16 %v2236, %v2235
      %v2244 = vpack.c.b16 %v2238, %v2237
      %v2245 = vpack.c.b16 %v2240, %v2239
      %v2246 = vpack.c.b16 %v2242, %v2241
      %2247 = vrot.lane.b32.xlu0 %v2243, 16
      %v2248 = vpop.permute.xlu0 %2247
      %2249 = vrot.lane.b32.xlu0 %v2244, 16
      %v2250 = vpop.permute.xlu0 %2249
      %2251 = vrot.lane.b32.xlu0 %v2245, 16
      %v2252 = vpop.permute.xlu0 %2251
      %2253 = vrot.lane.b32.xlu0 %v2246, 16
      %v2254 = vpop.permute.xlu0 %2253
      %v2255 = vrot.slane %v2248, 4
      %v2256 = vrot.slane %v2250, 4
      %v2257 = vrot.slane %v2252, 4
      %v2258 = vrot.slane %v2254, 4
      %v2259 = vsel %vm724, %v2255, %v2248
      %v2260 = vsel %vm724, %v2256, %v2250
      %v2261 = vsel %vm724, %v2257, %v2252
      %v2262 = vsel %vm724, %v2258, %v2254
      %2267 = vst.msk [vmem:[#allocation3 + $0x20] sm:$0xff] %vm1331, %v2259
      %2268 = vst.msk [vmem:[#allocation3 + $0x28] sm:$0xff] %vm1331, %v2260
      %2269 = vst.msk [vmem:[#allocation3 + $0x30] sm:$0xff] %vm1331, %v2261
      %2270 = vst.msk [vmem:[#allocation3 + $0x38] sm:$0xff] %vm1331, %v2262
      %2271 = vst.msk [vmem:[#allocation3 + $0x40] sm:$0xf] %vm1336, 0
      %2272 = vst.msk [vmem:[#allocation3 + $0x48] sm:$0xf] %vm1336, 0
      %2273 = vst.msk [vmem:[#allocation3 + $0x50] sm:$0xf] %vm1336, 0
      %2274 = vst.msk [vmem:[#allocation3 + $0x58] sm:$0xf] %vm1336, 0
      %v2275 = vmul.f32 %v2151, %v1345
      %v2276 = vmul.f32 %v2152, %v1344
      %v2277 = vmul.f32 %v2153, %v1345
      %v2278 = vmul.f32 %v2154, %v1344
      %v2279 = vmul.f32 %v2155, %v1345
      %v2280 = vmul.f32 %v2156, %v1344
      %v2281 = vmul.f32 %v2157, %v1345
      %v2282 = vmul.f32 %v2158, %v1344
      %v2283 = vpack.c.bf16 %v2277, %v2275
      %v2284 = vpack.c.bf16 %v2278, %v2276
      %v2285 = vpack.c.bf16 %v2281, %v2279
      %v2286 = vpack.c.bf16 %v2282, %v2280
      %v2291 = vunpack.c.l.b16 %v2283
      %v2292 = vunpack.c.l.b16 %v2284
      %v2293 = vunpack.c.h.b16 %v2283
      %v2294 = vunpack.c.h.b16 %v2284
      %v2295 = vunpack.c.l.b16 %v2285
      %v2296 = vunpack.c.l.b16 %v2286
      %v2297 = vunpack.c.h.b16 %v2285
      %v2298 = vunpack.c.h.b16 %v2286
      %v2299 = vpack.c.b16 %v2292, %v2291
      %v2300 = vpack.c.b16 %v2294, %v2293
      %v2301 = vpack.c.b16 %v2296, %v2295
      %v2302 = vpack.c.b16 %v2298, %v2297
      %2303 = vrot.lane.b32.xlu0 %v2299, 15
      %v2304 = vpop.permute.xlu0 %2303
      %2305 = vrot.lane.b32.xlu0 %v2300, 15
      %v2306 = vpop.permute.xlu0 %2305
      %2307 = vrot.lane.b32.xlu0 %v2301, 15
      %v2308 = vpop.permute.xlu0 %2307
      %2309 = vrot.lane.b32.xlu0 %v2302, 15
      %v2310 = vpop.permute.xlu0 %2309
      %v2311 = vrot.slane %v2304, 4
      %v2312 = vrot.slane %v2306, 4
      %v2313 = vrot.slane %v2308, 4
      %v2314 = vrot.slane %v2310, 4
      %v2315 = vsel %vm769, %v2311, %v2304
      %v2316 = vsel %vm769, %v2312, %v2306
      %v2317 = vsel %vm769, %v2313, %v2308
      %v2318 = vsel %vm769, %v2314, %v2310
      %2323 = vst.msk [vmem:[#allocation3 + $0x40] sm:$0xff] %vm1397, %v2315
      %2324 = vst.msk [vmem:[#allocation3 + $0x48] sm:$0xff] %vm1397, %v2316
      %2325 = vst.msk [vmem:[#allocation3 + $0x50] sm:$0xff] %vm1397, %v2317
      %2326 = vst.msk [vmem:[#allocation3 + $0x58] sm:$0xff] %vm1397, %v2318
      %2327 = vst.msk [vmem:[#allocation3 + $0x60] sm:$0xf] %vm1402, 0
      %2328 = vst.msk [vmem:[#allocation3 + $0x68] sm:$0xf] %vm1402, 0
      %2329 = vst.msk [vmem:[#allocation3 + $0x70] sm:$0xf] %vm1402, 0
      %2330 = vst.msk [vmem:[#allocation3 + $0x78] sm:$0xf] %vm1402, 0
      %v2331 = vmul.f32 %v2151, %v1411
      %v2332 = vmul.f32 %v2152, %v1410
      %v2333 = vmul.f32 %v2153, %v1411
      %v2334 = vmul.f32 %v2154, %v1410
      %v2335 = vmul.f32 %v2155, %v1411
      %v2336 = vmul.f32 %v2156, %v1410
      %v2337 = vmul.f32 %v2157, %v1411
      %v2338 = vmul.f32 %v2158, %v1410
      %v2339 = vpack.c.bf16 %v2333, %v2331
      %v2340 = vpack.c.bf16 %v2334, %v2332
      %v2341 = vpack.c.bf16 %v2337, %v2335
      %v2342 = vpack.c.bf16 %v2338, %v2336
      %v2347 = vunpack.c.l.b16 %v2339
      %v2348 = vunpack.c.l.b16 %v2340
      %v2349 = vunpack.c.h.b16 %v2339
      %v2350 = vunpack.c.h.b16 %v2340
      %v2351 = vunpack.c.l.b16 %v2341
      %v2352 = vunpack.c.l.b16 %v2342
      %v2353 = vunpack.c.h.b16 %v2341
      %v2354 = vunpack.c.h.b16 %v2342
      %v2355 = vpack.c.b16 %v2348, %v2347
      %v2356 = vpack.c.b16 %v2350, %v2349
      %v2357 = vpack.c.b16 %v2352, %v2351
      %v2358 = vpack.c.b16 %v2354, %v2353
      %2359 = vrot.lane.b32.xlu0 %v2355, 1
      %v2360 = vpop.permute.xlu0 %2359
      %2361 = vrot.lane.b32.xlu0 %v2356, 1
      %v2362 = vpop.permute.xlu0 %2361
      %2363 = vrot.lane.b32.xlu0 %v2357, 1
      %v2364 = vpop.permute.xlu0 %2363
      %2365 = vrot.lane.b32.xlu0 %v2358, 1
      %v2366 = vpop.permute.xlu0 %2365
      %v2367 = vrot.slane %v2360, 4
      %v2368 = vrot.slane %v2362, 4
      %v2369 = vrot.slane %v2364, 4
      %v2370 = vrot.slane %v2366, 4
      %v2371 = vsel %vm814, %v2367, %v2360
      %v2372 = vsel %vm814, %v2368, %v2362
      %v2373 = vsel %vm814, %v2369, %v2364
      %v2374 = vsel %vm814, %v2370, %v2366
      %2379 = vst.msk [vmem:[#allocation3 + $0x60] sm:$0xff] %vm1463, %v2371
      %2380 = vst.msk [vmem:[#allocation3 + $0x68] sm:$0xff] %vm1463, %v2372
      %2381 = vst.msk [vmem:[#allocation3 + $0x70] sm:$0xff] %vm1463, %v2373
      %2382 = vst.msk [vmem:[#allocation3 + $0x78] sm:$0xff] %vm1463, %v2374
      %v2383 = vpack.c.bf16 %v2153, %v2151
      %v2384 = vpack.c.bf16 %v2154, %v2152
      %v2385 = vpack.c.bf16 %v2157, %v2155
      %v2386 = vpack.c.bf16 %v2158, %v2156
      %v2391 = vunpack.c.l.b16 %v2383
      %v2392 = vunpack.c.l.b16 %v2384
      %v2393 = vunpack.c.h.b16 %v2383
      %v2394 = vunpack.c.h.b16 %v2384
      %v2395 = vunpack.c.l.b16 %v2385
      %v2396 = vunpack.c.l.b16 %v2386
      %v2397 = vunpack.c.h.b16 %v2385
      %v2398 = vunpack.c.h.b16 %v2386
      %v2399 = vpack.c.b16 %v2392, %v2391
      %v2400 = vpack.c.b16 %v2394, %v2393
      %v2401 = vpack.c.b16 %v2396, %v2395
      %v2402 = vpack.c.b16 %v2398, %v2397
      %2407 = vst [vmem:[#allocation3 + $0x80] sm:$0xff] %v2399
      %2408 = vst [vmem:[#allocation3 + $0x88] sm:$0xff] %v2400
      %2409 = vst [vmem:[#allocation3 + $0x90] sm:$0xff] %v2401
      %2410 = vst [vmem:[#allocation3 + $0x98] sm:$0xff] %v2402
      %v2411 = vmul.f32 %v2151, %v1497
      %v2412 = vmul.f32 %v2152, %v1500
      %v2413 = vmul.f32 %v2153, %v1497
      %v2414 = vmul.f32 %v2154, %v1500
      %v2415 = vmul.f32 %v2155, %v1497
      %v2416 = vmul.f32 %v2156, %v1500
      %v2417 = vmul.f32 %v2157, %v1497
      %v2418 = vmul.f32 %v2158, %v1500
      %v2419 = vpack.c.bf16 %v2413, %v2411
      %v2420 = vpack.c.bf16 %v2414, %v2412
      %v2421 = vpack.c.bf16 %v2417, %v2415
      %v2422 = vpack.c.bf16 %v2418, %v2416
      %v2427 = vunpack.c.l.b16 %v2419
      %v2428 = vunpack.c.l.b16 %v2420
      %v2429 = vunpack.c.h.b16 %v2419
      %v2430 = vunpack.c.h.b16 %v2420
      %v2431 = vunpack.c.l.b16 %v2421
      %v2432 = vunpack.c.l.b16 %v2422
      %v2433 = vunpack.c.h.b16 %v2421
      %v2434 = vunpack.c.h.b16 %v2422
      %v2435 = vpack.c.b16 %v2428, %v2427
      %v2436 = vpack.c.b16 %v2430, %v2429
      %v2437 = vpack.c.b16 %v2432, %v2431
      %v2438 = vpack.c.b16 %v2434, %v2433
      %2439 = vrot.lane.b32.xlu0 %v2435, 127
      %v2440 = vpop.permute.xlu0 %2439
      %2441 = vrot.lane.b32.xlu0 %v2436, 127
      %v2442 = vpop.permute.xlu0 %2441
      %2443 = vrot.lane.b32.xlu0 %v2437, 127
      %v2444 = vpop.permute.xlu0 %2443
      %2445 = vrot.lane.b32.xlu0 %v2438, 127
      %v2446 = vpop.permute.xlu0 %2445
      %v2447 = vrot.slane %v2440, 4
      %v2448 = vrot.slane %v2442, 4
      %v2449 = vrot.slane %v2444, 4
      %v2450 = vrot.slane %v2446, 4
      %v2451 = vsel %vm871, %v2440, %v2447
      %v2452 = vsel %vm871, %v2442, %v2448
      %v2453 = vsel %vm871, %v2444, %v2449
      %v2454 = vsel %vm871, %v2446, %v2450
      %2459 = vst.msk [vmem:[#allocation3 + $0xa0] sm:$0xff] %vm1552, %v2451
      %2460 = vst.msk [vmem:[#allocation3 + $0xa8] sm:$0xff] %vm1552, %v2452
      %2461 = vst.msk [vmem:[#allocation3 + $0xb0] sm:$0xff] %vm1552, %v2453
      %2462 = vst.msk [vmem:[#allocation3 + $0xb8] sm:$0xff] %vm1552, %v2454
      %2463 = vst.msk [vmem:[#allocation3 + $0xa4] sm:$0xf] %vm1557, 0
      %2464 = vst.msk [vmem:[#allocation3 + $0xac] sm:$0xf] %vm1557, 0
      %2465 = vst.msk [vmem:[#allocation3 + $0xb4] sm:$0xf] %vm1557, 0
      %2466 = vst.msk [vmem:[#allocation3 + $0xbc] sm:$0xf] %vm1557, 0
      %v2467 = vmul.f32 %v2151, %v1563
      %v2468 = vmul.f32 %v2152, %v1566
      %v2469 = vmul.f32 %v2153, %v1563
      %v2470 = vmul.f32 %v2154, %v1566
      %v2471 = vmul.f32 %v2155, %v1563
      %v2472 = vmul.f32 %v2156, %v1566
      %v2473 = vmul.f32 %v2157, %v1563
      %v2474 = vmul.f32 %v2158, %v1566
      %v2475 = vpack.c.bf16 %v2469, %v2467
      %v2476 = vpack.c.bf16 %v2470, %v2468
      %v2477 = vpack.c.bf16 %v2473, %v2471
      %v2478 = vpack.c.bf16 %v2474, %v2472
      %v2483 = vunpack.c.l.b16 %v2475
      %v2484 = vunpack.c.l.b16 %v2476
      %v2485 = vunpack.c.h.b16 %v2475
      %v2486 = vunpack.c.h.b16 %v2476
      %v2487 = vunpack.c.l.b16 %v2477
      %v2488 = vunpack.c.l.b16 %v2478
      %v2489 = vunpack.c.h.b16 %v2477
      %v2490 = vunpack.c.h.b16 %v2478
      %v2491 = vpack.c.b16 %v2484, %v2483
      %v2492 = vpack.c.b16 %v2486, %v2485
      %v2493 = vpack.c.b16 %v2488, %v2487
      %v2494 = vpack.c.b16 %v2490, %v2489
      %2495 = vrot.lane.b32.xlu0 %v2491, 113
      %v2496 = vpop.permute.xlu0 %2495
      %2497 = vrot.lane.b32.xlu0 %v2492, 113
      %v2498 = vpop.permute.xlu0 %2497
      %2499 = vrot.lane.b32.xlu0 %v2493, 113
      %v2500 = vpop.permute.xlu0 %2499
      %2501 = vrot.lane.b32.xlu0 %v2494, 113
      %v2502 = vpop.permute.xlu0 %2501
      %v2503 = vrot.slane %v2496, 4
      %v2504 = vrot.slane %v2498, 4
      %v2505 = vrot.slane %v2500, 4
      %v2506 = vrot.slane %v2502, 4
      %v2507 = vsel %vm916, %v2496, %v2503
      %v2508 = vsel %vm916, %v2498, %v2504
      %v2509 = vsel %vm916, %v2500, %v2505
      %v2510 = vsel %vm916, %v2502, %v2506
      %2515 = vst.msk [vmem:[#allocation3 + $0xc0] sm:$0xff] %vm1618, %v2507
      %2516 = vst.msk [vmem:[#allocation3 + $0xc8] sm:$0xff] %vm1618, %v2508
      %2517 = vst.msk [vmem:[#allocation3 + $0xd0] sm:$0xff] %vm1618, %v2509
      %2518 = vst.msk [vmem:[#allocation3 + $0xd8] sm:$0xff] %vm1618, %v2510
      %2519 = vst.msk [vmem:[#allocation3 + $0xc4] sm:$0xf] %vm1623, 0
      %2520 = vst.msk [vmem:[#allocation3 + $0xcc] sm:$0xf] %vm1623, 0
      %2521 = vst.msk [vmem:[#allocation3 + $0xd4] sm:$0xf] %vm1623, 0
      %2522 = vst.msk [vmem:[#allocation3 + $0xdc] sm:$0xf] %vm1623, 0
      %v2523 = vmul.f32 %v2151, %v1629
      %v2524 = vmul.f32 %v2152, %v1632
      %v2525 = vmul.f32 %v2153, %v1629
      %v2526 = vmul.f32 %v2154, %v1632
      %v2527 = vmul.f32 %v2155, %v1629
      %v2528 = vmul.f32 %v2156, %v1632
      %v2529 = vmul.f32 %v2157, %v1629
      %v2530 = vmul.f32 %v2158, %v1632
      %v2531 = vpack.c.bf16 %v2525, %v2523
      %v2532 = vpack.c.bf16 %v2526, %v2524
      %v2533 = vpack.c.bf16 %v2529, %v2527
      %v2534 = vpack.c.bf16 %v2530, %v2528
      %v2539 = vunpack.c.l.b16 %v2531
      %v2540 = vunpack.c.l.b16 %v2532
      %v2541 = vunpack.c.h.b16 %v2531
      %v2542 = vunpack.c.h.b16 %v2532
      %v2543 = vunpack.c.l.b16 %v2533
      %v2544 = vunpack.c.l.b16 %v2534
      %v2545 = vunpack.c.h.b16 %v2533
      %v2546 = vunpack.c.h.b16 %v2534
      %v2547 = vpack.c.b16 %v2540, %v2539
      %v2548 = vpack.c.b16 %v2542, %v2541
      %v2549 = vpack.c.b16 %v2544, %v2543
      %v2550 = vpack.c.b16 %v2546, %v2545
      %2551 = vrot.lane.b32.xlu0 %v2547, 112
      %v2552 = vpop.permute.xlu0 %2551
      %2553 = vrot.lane.b32.xlu0 %v2548, 112
      %v2554 = vpop.permute.xlu0 %2553
      %2555 = vrot.lane.b32.xlu0 %v2549, 112
      %v2556 = vpop.permute.xlu0 %2555
      %2557 = vrot.lane.b32.xlu0 %v2550, 112
      %v2558 = vpop.permute.xlu0 %2557
      %v2559 = vrot.slane %v2552, 4
      %v2560 = vrot.slane %v2554, 4
      %v2561 = vrot.slane %v2556, 4
      %v2562 = vrot.slane %v2558, 4
      %v2563 = vsel %vm961, %v2552, %v2559
      %v2564 = vsel %vm961, %v2554, %v2560
      %v2565 = vsel %vm961, %v2556, %v2561
      %v2566 = vsel %vm961, %v2558, %v2562
      %2571 = vst.msk [vmem:[#allocation3 + $0xe0] sm:$0xff] %vm1684, %v2563
      %2572 = vst.msk [vmem:[#allocation3 + $0xe8] sm:$0xff] %vm1684, %v2564
      %2573 = vst.msk [vmem:[#allocation3 + $0xf0] sm:$0xff] %vm1684, %v2565
      %2574 = vst.msk [vmem:[#allocation3 + $0xf8] sm:$0xff] %vm1684, %v2566
      %2575 = vst.msk [vmem:[#allocation3 + $0xe4] sm:$0xf] %vm1689, 0
      %2576 = vst.msk [vmem:[#allocation3 + $0xec] sm:$0xf] %vm1689, 0
      %2577 = vst.msk [vmem:[#allocation3 + $0xf4] sm:$0xf] %vm1689, 0
      %2578 = vst.msk [vmem:[#allocation3 + $0xfc] sm:$0xf] %vm1689, 0
      %v2579 = vmul.f32 %v2151, %v1695
      %v2580 = vmul.f32 %v2152, %v1698
      %v2581 = vmul.f32 %v2153, %v1695
      %v2582 = vmul.f32 %v2154, %v1698
      %v2583 = vmul.f32 %v2155, %v1695
      %v2584 = vmul.f32 %v2156, %v1698
      %v2585 = vmul.f32 %v2157, %v1695
      %v2586 = vmul.f32 %v2158, %v1698
      %v2587 = vpack.c.bf16 %v2581, %v2579
      %v2588 = vpack.c.bf16 %v2582, %v2580
      %v2589 = vpack.c.bf16 %v2585, %v2583
      %v2590 = vpack.c.bf16 %v2586, %v2584
      %v2595 = vunpack.c.l.b16 %v2587
      %v2596 = vunpack.c.l.b16 %v2588
      %v2597 = vunpack.c.h.b16 %v2587
      %v2598 = vunpack.c.h.b16 %v2588
      %v2599 = vunpack.c.l.b16 %v2589
      %v2600 = vunpack.c.l.b16 %v2590
      %v2601 = vunpack.c.h.b16 %v2589
      %v2602 = vunpack.c.h.b16 %v2590
      %v2603 = vpack.c.b16 %v2596, %v2595
      %v2604 = vpack.c.b16 %v2598, %v2597
      %v2605 = vpack.c.b16 %v2600, %v2599
      %v2606 = vpack.c.b16 %v2602, %v2601
      %2607 = vrot.lane.b32.xlu0 %v2603, 111
      %v2608 = vpop.permute.xlu0 %2607
      %2609 = vrot.lane.b32.xlu0 %v2604, 111
      %v2610 = vpop.permute.xlu0 %2609
      %2611 = vrot.lane.b32.xlu0 %v2605, 111
      %v2612 = vpop.permute.xlu0 %2611
      %2613 = vrot.lane.b32.xlu0 %v2606, 111
      %v2614 = vpop.permute.xlu0 %2613
      %v2615 = vrot.slane %v2608, 4
      %v2616 = vrot.slane %v2610, 4
      %v2617 = vrot.slane %v2612, 4
      %v2618 = vrot.slane %v2614, 4
      %v2619 = vsel %vm1006, %v2608, %v2615
      %v2620 = vsel %vm1006, %v2610, %v2616
      %v2621 = vsel %vm1006, %v2612, %v2617
      %v2622 = vsel %vm1006, %v2614, %v2618
      %2627 = vst.msk [vmem:[#allocation3 + $0x100] sm:$0xff] %vm1750, %v2619
      %2628 = vst.msk [vmem:[#allocation3 + $0x108] sm:$0xff] %vm1750, %v2620
      %2629 = vst.msk [vmem:[#allocation3 + $0x110] sm:$0xff] %vm1750, %v2621
      %2630 = vst.msk [vmem:[#allocation3 + $0x118] sm:$0xff] %vm1750, %v2622
      %2631 = vst.msk [vmem:[#allocation3 + $0x104] sm:$0xf] %vm1755, 0
      %2632 = vst.msk [vmem:[#allocation3 + $0x10c] sm:$0xf] %vm1755, 0
      %2633 = vst.msk [vmem:[#allocation3 + $0x114] sm:$0xf] %vm1755, 0
      %2634 = vst.msk [vmem:[#allocation3 + $0x11c] sm:$0xf] %vm1755, 0
      %v2635 = vld [vmem:[%s7] sm:$0xff]
      %v2636 = vld [vmem:[%s7 + $0x8] sm:$0xf]
      %v2637 = vld [vmem:[%s7 + $0xc] sm:$0xff]
      %v2638 = vld [vmem:[%s7 + $0x14] sm:$0xf]
      %v2639 = vld [vmem:[%s7 + $0x18] sm:$0xff]
      %v2640 = vld [vmem:[%s7 + $0x20] sm:$0xf]
      %v2641 = vld [vmem:[%s7 + $0x24] sm:$0xff]
      %v2642 = vld [vmem:[%s7 + $0x2c] sm:$0xf]
      %v2643 = vld [vmem:[#allocation3] sm:$0xff]
      %v2644 = vld [vmem:[#allocation3 + $0x8] sm:$0xff]
      %v2645 = vld [vmem:[#allocation3 + $0x10] sm:$0xff]
      %v2646 = vld [vmem:[#allocation3 + $0x18] sm:$0xff]
      %v2647 = vld [vmem:[#allocation3 + $0x20] sm:$0xff]
      %v2648 = vld [vmem:[#allocation3 + $0x28] sm:$0xff]
      %v2649 = vld [vmem:[#allocation3 + $0x30] sm:$0xff]
      %v2650 = vld [vmem:[#allocation3 + $0x38] sm:$0xff]
      %v2651 = vld [vmem:[#allocation3 + $0x40] sm:$0xff]
      %v2652 = vld [vmem:[#allocation3 + $0x48] sm:$0xff]
      %v2653 = vld [vmem:[#allocation3 + $0x50] sm:$0xff]
      %v2654 = vld [vmem:[#allocation3 + $0x58] sm:$0xff]
      %v2655 = vld [vmem:[#allocation3 + $0x60] sm:$0xff]
      %v2656 = vld [vmem:[#allocation3 + $0x68] sm:$0xff]
      %v2657 = vld [vmem:[#allocation3 + $0x70] sm:$0xff]
      %v2658 = vld [vmem:[#allocation3 + $0x78] sm:$0xff]
      %v2659 = vld [vmem:[#allocation3 + $0x80] sm:$0xff]
      %v2660 = vld [vmem:[#allocation3 + $0x88] sm:$0xff]
      %v2661 = vld [vmem:[#allocation3 + $0x90] sm:$0xff]
      %v2662 = vld [vmem:[#allocation3 + $0x98] sm:$0xff]
      %v2663 = vld [vmem:[#allocation3 + $0xa0] sm:$0xff]
      %v2664 = vld [vmem:[#allocation3 + $0xa8] sm:$0xff]
      %v2665 = vld [vmem:[#allocation3 + $0xb0] sm:$0xff]
      %v2666 = vld [vmem:[#allocation3 + $0xb8] sm:$0xff]
      %v2667 = vld [vmem:[#allocation3 + $0xc0] sm:$0xff]
      %v2668 = vld [vmem:[#allocation3 + $0xc8] sm:$0xff]
      %v2669 = vld [vmem:[#allocation3 + $0xd0] sm:$0xff]
      %v2670 = vld [vmem:[#allocation3 + $0xd8] sm:$0xff]
      %v2671 = vld [vmem:[#allocation3 + $0xe0] sm:$0xff]
      %v2672 = vld [vmem:[#allocation3 + $0xe8] sm:$0xff]
      %v2673 = vld [vmem:[#allocation3 + $0xf0] sm:$0xff]
      %v2674 = vld [vmem:[#allocation3 + $0xf8] sm:$0xff]
      %v2675 = vld [vmem:[#allocation3 + $0x100] sm:$0xff]
      %v2676 = vld [vmem:[#allocation3 + $0x108] sm:$0xff]
      %v2677 = vld [vmem:[#allocation3 + $0x110] sm:$0xff]
      %v2678 = vld [vmem:[#allocation3 + $0x118] sm:$0xff]
      %v2679 = vld [vmem:[%s8] sm:$0xff]
      %v2680 = vld [vmem:[%s8 + $0x8] sm:$0xff]
      %v2681 = vld [vmem:[%s8 + $0x10] sm:$0xff]
      %v2682 = vld [vmem:[%s8 + $0x18] sm:$0xff]
      %2684 = vset.pattern.permute.xlu0 0
      %2685 = vperm.xlu0 %2684, %v2679
      %v2686 = vpop.permute.xlu0 %2685
      %2689 = vset.pattern.permute.xlu0 0
      %2690 = vperm.xlu0 %2689, %v2680
      %v2691 = vpop.permute.xlu0 %2690
      %2694 = vset.pattern.permute.xlu0 0
      %2695 = vperm.xlu0 %2694, %v2681
      %v2696 = vpop.permute.xlu0 %2695
      %2699 = vset.pattern.permute.xlu0 0
      %2700 = vperm.xlu0 %2699, %v2682
      %v2701 = vpop.permute.xlu0 %2700
      %v2711 = vunpack.c.l.b16 %v2635
      %v2712 = vunpack.c.h.b16 %v2635
      %v2713 = vunpack.c.l.b16 %v2636
      %v2714 = vunpack.c.l.b16 %v2637
      %v2715 = vunpack.c.h.b16 %v2637
      %v2716 = vunpack.c.l.b16 %v2638
      %v2717 = vunpack.c.l.b16 %v2639
      %v2718 = vunpack.c.h.b16 %v2639
      %v2719 = vunpack.c.l.b16 %v2640
      %v2720 = vunpack.c.l.b16 %v2641
      %v2721 = vunpack.c.h.b16 %v2641
      %v2722 = vunpack.c.l.b16 %v2642
      %v2723 = vpack.c.b16 %v2714, %v2711
      %v2724 = vpack.c.b16 %v2715, %v2712
      %v2725 = vpack.c.b16 %v2716, %v2713
      %v2726 = vpack.c.b16 %v2720, %v2717
      %v2727 = vpack.c.b16 %v2721, %v2718
      %v2728 = vpack.c.b16 %v2722, %v2719
      %v2769 = vunpack.c.l.b16 %v2643
      %v2770 = vunpack.c.h.b16 %v2643
      %v2771 = vunpack.c.l.b16 %v2644
      %v2772 = vunpack.c.h.b16 %v2644
      %v2773 = vunpack.c.l.b16 %v2645
      %v2774 = vunpack.c.h.b16 %v2645
      %v2775 = vunpack.c.l.b16 %v2646
      %v2776 = vunpack.c.h.b16 %v2646
      %v2777 = vunpack.c.l.b16 %v2647
      %v2778 = vunpack.c.h.b16 %v2647
      %v2779 = vunpack.c.l.b16 %v2648
      %v2780 = vunpack.c.h.b16 %v2648
      %v2781 = vunpack.c.l.b16 %v2649
      %v2782 = vunpack.c.h.b16 %v2649
      %v2783 = vunpack.c.l.b16 %v2650
      %v2784 = vunpack.c.h.b16 %v2650
      %v2785 = vunpack.c.l.b16 %v2651
      %v2786 = vunpack.c.h.b16 %v2651
      %v2787 = vunpack.c.l.b16 %v2652
      %v2788 = vunpack.c.h.b16 %v2652
      %v2789 = vunpack.c.l.b16 %v2653
      %v2790 = vunpack.c.h.b16 %v2653
      %v2791 = vunpack.c.l.b16 %v2654
      %v2792 = vunpack.c.h.b16 %v2654
      %v2793 = vunpack.c.l.b16 %v2655
      %v2794 = vunpack.c.h.b16 %v2655
      %v2795 = vunpack.c.l.b16 %v2656
      %v2796 = vunpack.c.h.b16 %v2656
      %v2797 = vunpack.c.l.b16 %v2657
      %v2798 = vunpack.c.h.b16 %v2657
      %v2799 = vunpack.c.l.b16 %v2658
      %v2800 = vunpack.c.h.b16 %v2658
      %v2801 = vunpack.c.l.b16 %v2659
      %v2802 = vunpack.c.h.b16 %v2659
      %v2803 = vunpack.c.l.b16 %v2660
      %v2804 = vunpack.c.h.b16 %v2660
      %v2805 = vunpack.c.l.b16 %v2661
      %v2806 = vunpack.c.h.b16 %v2661
      %v2807 = vunpack.c.l.b16 %v2662
      %v2808 = vunpack.c.h.b16 %v2662
      %v2809 = vunpack.c.l.b16 %v2663
      %v2810 = vunpack.c.h.b16 %v2663
      %v2811 = vunpack.c.l.b16 %v2664
      %v2812 = vunpack.c.h.b16 %v2664
      %v2813 = vunpack.c.l.b16 %v2665
      %v2814 = vunpack.c.h.b16 %v2665
      %v2815 = vunpack.c.l.b16 %v2666
      %v2816 = vunpack.c.h.b16 %v2666
      %v2817 = vunpack.c.l.b16 %v2667
      %v2818 = vunpack.c.h.b16 %v2667
      %v2819 = vunpack.c.l.b16 %v2668
      %v2820 = vunpack.c.h.b16 %v2668
      %v2821 = vunpack.c.l.b16 %v2669
      %v2822 = vunpack.c.h.b16 %v2669
      %v2823 = vunpack.c.l.b16 %v2670
      %v2824 = vunpack.c.h.b16 %v2670
      %v2825 = vunpack.c.l.b16 %v2671
      %v2826 = vunpack.c.h.b16 %v2671
      %v2827 = vunpack.c.l.b16 %v2672
      %v2828 = vunpack.c.h.b16 %v2672
      %v2829 = vunpack.c.l.b16 %v2673
      %v2830 = vunpack.c.h.b16 %v2673
      %v2831 = vunpack.c.l.b16 %v2674
      %v2832 = vunpack.c.h.b16 %v2674
      %v2833 = vunpack.c.l.b16 %v2675
      %v2834 = vunpack.c.h.b16 %v2675
      %v2835 = vunpack.c.l.b16 %v2676
      %v2836 = vunpack.c.h.b16 %v2676
      %v2837 = vunpack.c.l.b16 %v2677
      %v2838 = vunpack.c.h.b16 %v2677
      %v2839 = vunpack.c.l.b16 %v2678
      %v2840 = vunpack.c.h.b16 %v2678
      %v2841 = vpack.c.b16 %v2771, %v2769
      %v2842 = vpack.c.b16 %v2772, %v2770
      %v2843 = vpack.c.b16 %v2775, %v2773
      %v2844 = vpack.c.b16 %v2776, %v2774
      %v2845 = vpack.c.b16 %v2779, %v2777
      %v2846 = vpack.c.b16 %v2780, %v2778
      %v2847 = vpack.c.b16 %v2783, %v2781
      %v2848 = vpack.c.b16 %v2784, %v2782
      %v2849 = vpack.c.b16 %v2787, %v2785
      %v2850 = vpack.c.b16 %v2788, %v2786
      %v2851 = vpack.c.b16 %v2791, %v2789
      %v2852 = vpack.c.b16 %v2792, %v2790
      %v2853 = vpack.c.b16 %v2795, %v2793
      %v2854 = vpack.c.b16 %v2796, %v2794
      %v2855 = vpack.c.b16 %v2799, %v2797
      %v2856 = vpack.c.b16 %v2800, %v2798
      %v2857 = vpack.c.b16 %v2803, %v2801
      %v2858 = vpack.c.b16 %v2804, %v2802
      %v2859 = vpack.c.b16 %v2807, %v2805
      %v2860 = vpack.c.b16 %v2808, %v2806
      %v2861 = vpack.c.b16 %v2811, %v2809
      %v2862 = vpack.c.b16 %v2812, %v2810
      %v2863 = vpack.c.b16 %v2815, %v2813
      %v2864 = vpack.c.b16 %v2816, %v2814
      %v2865 = vpack.c.b16 %v2819, %v2817
      %v2866 = vpack.c.b16 %v2820, %v2818
      %v2867 = vpack.c.b16 %v2823, %v2821
      %v2868 = vpack.c.b16 %v2824, %v2822
      %v2869 = vpack.c.b16 %v2827, %v2825
      %v2870 = vpack.c.b16 %v2828, %v2826
      %v2871 = vpack.c.b16 %v2831, %v2829
      %v2872 = vpack.c.b16 %v2832, %v2830
      %v2873 = vpack.c.b16 %v2835, %v2833
      %v2874 = vpack.c.b16 %v2836, %v2834
      %v2875 = vpack.c.b16 %v2839, %v2837
      %v2876 = vpack.c.b16 %v2840, %v2838
      %v2914 = vsel %vm2038, %v2725, 0
      %v2917 = vsel %vm2038, %v2728, 0
      %2919 = vmatprep.subr.bf16.mxu0 %v2856
      %2920 = vmatpush1.bf16.msra.mxu0 %v2855
      %2921 = vmatprep.subr.bf16.mxu0 %v2854
      %2922 = vmatpush1.bf16.msra.mxu0 %v2853
      %2923 = vmatprep.subr.bf16.mxu0 %v2852
      %2924 = vmatpush1.bf16.msra.mxu0 %v2851
      %2925 = vmatprep.subr.bf16.mxu0 %v2850
      %2926 = vmatpush1.bf16.msra.mxu0 %v2849
      %2927 = vmatprep.subr.bf16.mxu0 %v2848
      %2928 = vmatpush1.bf16.msra.mxu0 %v2847
      %2929 = vmatprep.subr.bf16.mxu0 %v2846
      %2930 = vmatpush1.bf16.msra.mxu0 %v2845
      %2931 = vmatprep.subr.bf16.mxu0 %v2844
      %2932 = vmatpush1.bf16.msra.mxu0 %v2843
      %2933 = vmatprep.subr.bf16.mxu0 %v2842
      %2934 = vmatpush1.bf16.msra.mxu0 %v2841
      %2935 = vmatprep.subr.bf16.mxu0 %v2872
      %2936 = vmatpush2.bf16.msra.mxu0 %v2871
      %2937 = vmatprep.subr.bf16.mxu0 %v2870
      %2938 = vmatpush2.bf16.msra.mxu0 %v2869
      %2939 = vmatprep.subr.bf16.mxu0 %v2868
      %2940 = vmatpush2.bf16.msra.mxu0 %v2867
      %2941 = vmatprep.subr.bf16.mxu0 %v2866
      %2942 = vmatpush2.bf16.msra.mxu0 %v2865
      %2943 = vmatprep.subr.bf16.mxu0 %v2864
      %2944 = vmatpush2.bf16.msra.mxu0 %v2863
      %2945 = vmatprep.subr.bf16.mxu0 %v2862
      %2946 = vmatpush2.bf16.msra.mxu0 %v2861
      %2947 = vmatprep.subr.bf16.mxu0 %v2860
      %2948 = vmatpush2.bf16.msra.mxu0 %v2859
      %2949 = vmatprep.subr.bf16.mxu0 %v2858
      %2950 = vmatpush2.bf16.msra.mxu0 %v2857
      %2951 = vmatprep.mubr.bf16.mxu0 %v2724
      %2952 = vmatmul.mubr.bf16.gmra.mxu0 %v2723
      %v2953 = vpop.f32.mrf.mxu0
      %v2954 = vadd.f32 %v2686, %v2953
      %v2955 = vpop.f32.mrf.mxu0
      %v2956 = vadd.f32 %v2686, %v2955
      %v2957 = vpop.f32.mrf.mxu0
      %v2958 = vadd.f32 %v2691, %v2957
      %v2959 = vpop.f32.mrf.mxu0
      %v2960 = vadd.f32 %v2691, %v2959
      %2961 = vmatprep.mubr.bf16.mxu0 %v2727
      %2962 = vmatmul.mubr.bf16.gmra.mxu0 %v2726
      %v2963 = vpop.f32.mrf.mxu0
      %v2964 = vadd.f32 %v2696, %v2963
      %v2965 = vpop.f32.mrf.mxu0
      %v2966 = vadd.f32 %v2696, %v2965
      %v2967 = vpop.f32.mrf.mxu0
      %v2968 = vadd.f32 %v2701, %v2967
      %v2969 = vpop.f32.mrf.mxu0
      %v2970 = vadd.f32 %v2701, %v2969
      %2971 = vdwg.mxu0
      %2972 = vmatprep.subr.bf16.mxu0 0
      %2973 = vmatpush1.bf16.msra.mxu0 0
      %2974 = vmatprep.subr.bf16.mxu0 0
      %2975 = vmatpush1.bf16.msra.mxu0 0
      %2976 = vmatprep.subr.bf16.mxu0 0
      %2977 = vmatpush1.bf16.msra.mxu0 0
      %2978 = vmatprep.subr.bf16.mxu0 0
      %2979 = vmatpush1.bf16.msra.mxu0 0
      %2980 = vmatprep.subr.bf16.mxu0 0
      %2981 = vmatpush1.bf16.msra.mxu0 0
      %2982 = vmatprep.subr.bf16.mxu0 0
      %2983 = vmatpush1.bf16.msra.mxu0 0
      %2984 = vmatprep.subr.bf16.mxu0 %v2876
      %2985 = vmatpush1.bf16.msra.mxu0 %v2875
      %2986 = vmatprep.subr.bf16.mxu0 %v2874
      %2987 = vmatpush1.bf16.msra.mxu0 %v2873
      %2988 = vmatprep.subr.bf16.mxu0 0
      %2989 = vmatpush2.bf16.msra.mxu0 0
      %2990 = vmatprep.subr.bf16.mxu0 0
      %2991 = vmatpush2.bf16.msra.mxu0 0
      %2992 = vmatprep.subr.bf16.mxu0 0
      %2993 = vmatpush2.bf16.msra.mxu0 0
      %2994 = vmatprep.subr.bf16.mxu0 0
      %2995 = vmatpush2.bf16.msra.mxu0 0
      %2996 = vmatprep.subr.bf16.mxu0 0
      %2997 = vmatpush2.bf16.msra.mxu0 0
      %2998 = vmatprep.subr.bf16.mxu0 0
      %2999 = vmatpush2.bf16.msra.mxu0 0
      %3000 = vmatprep.subr.bf16.mxu0 0
      %3001 = vmatpush2.bf16.msra.mxu0 0
      %3002 = vmatprep.subr.bf16.mxu0 0
      %3003 = vmatpush2.bf16.msra.mxu0 0
      %3004 = vmatprep.mubr.bf16.mxu0 0
      %3005 = vmatmul.mubr.bf16.gmra.mxu0 %v2914
      %v3006 = vpop.f32.mrf.mxu0
      %v3007 = vadd.f32 %v2954, %v3006
      %v3008 = vpop.f32.mrf.mxu0
      %v3009 = vadd.f32 %v2956, %v3008
      %v3010 = vpop.f32.mrf.mxu0
      %v3011 = vadd.f32 %v2958, %v3010
      %v3012 = vpop.f32.mrf.mxu0
      %v3013 = vadd.f32 %v2960, %v3012
      %3014 = vmatprep.mubr.bf16.mxu0 0
      %3015 = vmatmul.mubr.bf16.gmra.mxu0 %v2917
      %v3016 = vpop.f32.mrf.mxu0
      %v3017 = vadd.f32 %v2964, %v3016
      %v3018 = vpop.f32.mrf.mxu0
      %v3019 = vadd.f32 %v2966, %v3018
      %v3020 = vpop.f32.mrf.mxu0
      %v3021 = vadd.f32 %v2968, %v3020
      %v3022 = vpop.f32.mrf.mxu0
      %v3023 = vadd.f32 %v2970, %v3022
      %3024 = vdwg.mxu0
      %v3025 = vld [vmem:[%s13] sm:$0xff]
      %v3026 = vld [vmem:[%s13 + $0x8] sm:$0xff]
      %v3027 = vld [vmem:[%s13 + $0x10] sm:$0xff]
      %v3028 = vld [vmem:[%s13 + $0x18] sm:$0xff]
      %v3029 = vld [vmem:[#allocation6] sm:$0xff]
      %v3030 = vld [vmem:[#allocation6 + $0x8] sm:$0xff]
      %v3031 = vld [vmem:[#allocation6 + $0x10] sm:$0xff]
      %v3032 = vld [vmem:[#allocation6 + $0x18] sm:$0xff]
      %v3033 = vld [vmem:[#allocation6 + $0x20] sm:$0xff]
      %v3034 = vld [vmem:[#allocation6 + $0x28] sm:$0xff]
      %v3035 = vld [vmem:[#allocation6 + $0x30] sm:$0xff]
      %v3036 = vld [vmem:[#allocation6 + $0x38] sm:$0xff]
      %v3037 = vld [vmem:[%s14] sm:$0xff]
      %v3038 = vld [vmem:[%s14 + $0x8] sm:$0xff]
      %v3039 = vld [vmem:[%s14 + $0x10] sm:$0xff]
      %v3040 = vld [vmem:[%s14 + $0x18] sm:$0xff]
      %3042 = vset.pattern.permute.xlu0 0
      %3043 = vperm.xlu0 %3042, %v3037
      %v3044 = vpop.permute.xlu0 %3043
      %3047 = vset.pattern.permute.xlu0 0
      %3048 = vperm.xlu0 %3047, %v3038
      %v3049 = vpop.permute.xlu0 %3048
      %3052 = vset.pattern.permute.xlu0 0
      %3053 = vperm.xlu0 %3052, %v3039
      %v3054 = vpop.permute.xlu0 %3053
      %3057 = vset.pattern.permute.xlu0 0
      %3058 = vperm.xlu0 %3057, %v3040
      %v3059 = vpop.permute.xlu0 %3058
      %v3062 = vsel %vm2038, %v3025, 0
      %v3065 = vsel %vm2038, %v3026, 0
      %v3068 = vsel %vm2038, %v3027, 0
      %v3071 = vsel %vm2038, %v3028, 0
      %3073 = vmatprep.subr.mxu0 0.0
      %3074 = vmatpush1.msra.mxu0 0.0
      %3075 = vmatprep.subr.mxu0 0.0
      %3076 = vmatpush1.msra.mxu0 0.0
      %3077 = vmatprep.subr.mxu0 0.0
      %3078 = vmatpush1.msra.mxu0 0.0
      %3079 = vmatprep.subr.mxu0 0.0
      %3080 = vmatpush1.msra.mxu0 0.0
      %3081 = vmatprep.subr.mxu0 0.0
      %3082 = vmatpush1.msra.mxu0 0.0
      %3083 = vmatprep.subr.mxu0 0.0
      %3084 = vmatpush1.msra.mxu0 0.0
      %3085 = vmatprep.subr.mxu0 0.0
      %3086 = vmatpush1.msra.mxu0 0.0
      %3087 = vmatprep.subr.mxu0 0.0
      %3088 = vmatpush1.msra.mxu0 0.0
      %3089 = vmatprep.subr.mxu0 0.0
      %3090 = vmatpush1.msra.mxu0 0.0
      %3091 = vmatprep.subr.mxu0 0.0
      %3092 = vmatpush1.msra.mxu0 0.0
      %3093 = vmatprep.subr.mxu0 0.0
      %3094 = vmatpush1.msra.mxu0 0.0
      %3095 = vmatprep.subr.mxu0 0.0
      %3096 = vmatpush1.msra.mxu0 0.0
      %v3097 = vand.u32 %v3036, 4294901760
      %3098 = vmatprep.subr.mxu0 %v3097
      %v3099 = vand.u32 %v3035, 4294901760
      %3100 = vmatpush1.msra.mxu0 %v3099
      %v3101 = vand.u32 %v3034, 4294901760
      %3102 = vmatprep.subr.mxu0 %v3101
      %v3103 = vand.u32 %v3033, 4294901760
      %3104 = vmatpush1.msra.mxu0 %v3103
      %v3105 = vand.u32 %v3032, 4294901760
      %3106 = vmatprep.subr.mxu0 %v3105
      %v3107 = vand.u32 %v3031, 4294901760
      %3108 = vmatpush1.msra.mxu0 %v3107
      %v3109 = vand.u32 %v3030, 4294901760
      %3110 = vmatprep.subr.mxu0 %v3109
      %v3111 = vand.u32 %v3029, 4294901760
      %3112 = vmatpush1.msra.mxu0 %v3111
      %3113 = vmatprep.subr.mxu0 0.0
      %3114 = vmatpush2.msra.mxu0 0.0
      %3115 = vmatprep.subr.mxu0 0.0
      %3116 = vmatpush2.msra.mxu0 0.0
      %3117 = vmatprep.subr.mxu0 0.0
      %3118 = vmatpush2.msra.mxu0 0.0
      %3119 = vmatprep.subr.mxu0 0.0
      %3120 = vmatpush2.msra.mxu0 0.0
      %3121 = vmatprep.subr.mxu0 0.0
      %3122 = vmatpush2.msra.mxu0 0.0
      %3123 = vmatprep.subr.mxu0 0.0
      %3124 = vmatpush2.msra.mxu0 0.0
      %3125 = vmatprep.subr.mxu0 0.0
      %3126 = vmatpush2.msra.mxu0 0.0
      %3127 = vmatprep.subr.mxu0 0.0
      %3128 = vmatpush2.msra.mxu0 0.0
      %3129 = vmatprep.subr.mxu0 0.0
      %3130 = vmatpush2.msra.mxu0 0.0
      %3131 = vmatprep.subr.mxu0 0.0
      %3132 = vmatpush2.msra.mxu0 0.0
      %3133 = vmatprep.subr.mxu0 0.0
      %3134 = vmatpush2.msra.mxu0 0.0
      %3135 = vmatprep.subr.mxu0 0.0
      %3136 = vmatpush2.msra.mxu0 0.0
      %3137 = vmatprep.subr.mxu0 0.0
      %3138 = vmatpush2.msra.mxu0 0.0
      %3139 = vmatprep.subr.mxu0 0.0
      %3140 = vmatpush2.msra.mxu0 0.0
      %3141 = vmatprep.subr.mxu0 0.0
      %3142 = vmatpush2.msra.mxu0 0.0
      %3143 = vmatprep.subr.mxu0 0.0
      %3144 = vmatpush2.msra.mxu0 0.0
      %3145 = vmatprep.mubr.f32.mxu0 0.0
      %v3146 = vand.u32 %v3062, 4294901760
      %v3147 = vsub.f32 %v3062, %v3146
      %v3148 = vand.u32 %v3147, 4294901760
      %v3149 = vsub.f32 %v3147, %v3148
      %v3150 = vand.u32 %v3149, 4294901760
      %3151 = vmatmul.mubr.f32.gmra.mxu0 %v3150
      %v3152 = vpop.f32.mrf.mxu0
      %v3153 = vadd.f32 %v3044, %v3152
      %v3154 = vpop.f32.mrf.mxu0
      %v3155 = vadd.f32 %v3044, %v3154
      %3156 = vmatprep.mubr.f32.mxu0 0.0
      %v3157 = vand.u32 %v3065, 4294901760
      %v3158 = vsub.f32 %v3065, %v3157
      %v3159 = vand.u32 %v3158, 4294901760
      %v3160 = vsub.f32 %v3158, %v3159
      %v3161 = vand.u32 %v3160, 4294901760
      %3162 = vmatmul.mubr.f32.gmra.mxu0 %v3161
      %v3163 = vpop.f32.mrf.mxu0
      %v3164 = vadd.f32 %v3049, %v3163
      %v3165 = vpop.f32.mrf.mxu0
      %v3166 = vadd.f32 %v3049, %v3165
      %3167 = vmatprep.mubr.f32.mxu0 0.0
      %v3168 = vand.u32 %v3068, 4294901760
      %v3169 = vsub.f32 %v3068, %v3168
      %v3170 = vand.u32 %v3169, 4294901760
      %v3171 = vsub.f32 %v3169, %v3170
      %v3172 = vand.u32 %v3171, 4294901760
      %3173 = vmatmul.mubr.f32.gmra.mxu0 %v3172
      %v3174 = vpop.f32.mrf.mxu0
      %v3175 = vadd.f32 %v3054, %v3174
      %v3176 = vpop.f32.mrf.mxu0
      %v3177 = vadd.f32 %v3054, %v3176
      %3178 = vmatprep.mubr.f32.mxu0 0.0
      %v3179 = vand.u32 %v3071, 4294901760
      %v3180 = vsub.f32 %v3071, %v3179
      %v3181 = vand.u32 %v3180, 4294901760
      %v3182 = vsub.f32 %v3180, %v3181
      %v3183 = vand.u32 %v3182, 4294901760
      %3184 = vmatmul.mubr.f32.gmra.mxu0 %v3183
      %v3185 = vpop.f32.mrf.mxu0
      %v3186 = vadd.f32 %v3059, %v3185
      %v3187 = vpop.f32.mrf.mxu0
      %v3188 = vadd.f32 %v3059, %v3187
      %3189 = vdwg.mxu0
      %3190 = vmatprep.subr.mxu0 0.0
      %3191 = vmatpush1.msra.mxu0 0.0
      %3192 = vmatprep.subr.mxu0 0.0
      %3193 = vmatpush1.msra.mxu0 0.0
      %3194 = vmatprep.subr.mxu0 0.0
      %3195 = vmatpush1.msra.mxu0 0.0
      %3196 = vmatprep.subr.mxu0 0.0
      %3197 = vmatpush1.msra.mxu0 0.0
      %3198 = vmatprep.subr.mxu0 0.0
      %3199 = vmatpush1.msra.mxu0 0.0
      %3200 = vmatprep.subr.mxu0 0.0
      %3201 = vmatpush1.msra.mxu0 0.0
      %3202 = vmatprep.subr.mxu0 0.0
      %3203 = vmatpush1.msra.mxu0 0.0
      %3204 = vmatprep.subr.mxu0 0.0
      %3205 = vmatpush1.msra.mxu0 0.0
      %3206 = vmatprep.subr.mxu0 0.0
      %3207 = vmatpush1.msra.mxu0 0.0
      %3208 = vmatprep.subr.mxu0 0.0
      %3209 = vmatpush1.msra.mxu0 0.0
      %3210 = vmatprep.subr.mxu0 0.0
      %3211 = vmatpush1.msra.mxu0 0.0
      %3212 = vmatprep.subr.mxu0 0.0
      %3213 = vmatpush1.msra.mxu0 0.0
      %v3214 = vand.u32 %v3036, 4294901760
      %v3215 = vsub.f32 %v3036, %v3214
      %v3216 = vand.u32 %v3215, 4294901760
      %v3217 = vsub.f32 %v3215, %v3216
      %v3218 = vand.u32 %v3217, 4294901760
      %3219 = vmatprep.subr.mxu0 %v3218
      %v3220 = vand.u32 %v3035, 4294901760
      %v3221 = vsub.f32 %v3035, %v3220
      %v3222 = vand.u32 %v3221, 4294901760
      %v3223 = vsub.f32 %v3221, %v3222
      %v3224 = vand.u32 %v3223, 4294901760
      %3225 = vmatpush1.msra.mxu0 %v3224
      %v3226 = vand.u32 %v3034, 4294901760
      %v3227 = vsub.f32 %v3034, %v3226
      %v3228 = vand.u32 %v3227, 4294901760
      %v3229 = vsub.f32 %v3227, %v3228
      %v3230 = vand.u32 %v3229, 4294901760
      %3231 = vmatprep.subr.mxu0 %v3230
      %v3232 = vand.u32 %v3033, 4294901760
      %v3233 = vsub.f32 %v3033, %v3232
      %v3234 = vand.u32 %v3233, 4294901760
      %v3235 = vsub.f32 %v3233, %v3234
      %v3236 = vand.u32 %v3235, 4294901760
      %3237 = vmatpush1.msra.mxu0 %v3236
      %v3238 = vand.u32 %v3032, 4294901760
      %v3239 = vsub.f32 %v3032, %v3238
      %v3240 = vand.u32 %v3239, 4294901760
      %v3241 = vsub.f32 %v3239, %v3240
      %v3242 = vand.u32 %v3241, 4294901760
      %3243 = vmatprep.subr.mxu0 %v3242
      %v3244 = vand.u32 %v3031, 4294901760
      %v3245 = vsub.f32 %v3031, %v3244
      %v3246 = vand.u32 %v3245, 4294901760
      %v3247 = vsub.f32 %v3245, %v3246
      %v3248 = vand.u32 %v3247, 4294901760
      %3249 = vmatpush1.msra.mxu0 %v3248
      %v3250 = vand.u32 %v3030, 4294901760
      %v3251 = vsub.f32 %v3030, %v3250
      %v3252 = vand.u32 %v3251, 4294901760
      %v3253 = vsub.f32 %v3251, %v3252
      %v3254 = vand.u32 %v3253, 4294901760
      %3255 = vmatprep.subr.mxu0 %v3254
      %v3256 = vand.u32 %v3029, 4294901760
      %v3257 = vsub.f32 %v3029, %v3256
      %v3258 = vand.u32 %v3257, 4294901760
      %v3259 = vsub.f32 %v3257, %v3258
      %v3260 = vand.u32 %v3259, 4294901760
      %3261 = vmatpush1.msra.mxu0 %v3260
      %3262 = vmatprep.subr.mxu0 0.0
      %3263 = vmatpush2.msra.mxu0 0.0
      %3264 = vmatprep.subr.mxu0 0.0
      %3265 = vmatpush2.msra.mxu0 0.0
      %3266 = vmatprep.subr.mxu0 0.0
      %3267 = vmatpush2.msra.mxu0 0.0
      %3268 = vmatprep.subr.mxu0 0.0
      %3269 = vmatpush2.msra.mxu0 0.0
      %3270 = vmatprep.subr.mxu0 0.0
      %3271 = vmatpush2.msra.mxu0 0.0
      %3272 = vmatprep.subr.mxu0 0.0
      %3273 = vmatpush2.msra.mxu0 0.0
      %3274 = vmatprep.subr.mxu0 0.0
      %3275 = vmatpush2.msra.mxu0 0.0
      %3276 = vmatprep.subr.mxu0 0.0
      %3277 = vmatpush2.msra.mxu0 0.0
      %3278 = vmatprep.subr.mxu0 0.0
      %3279 = vmatpush2.msra.mxu0 0.0
      %3280 = vmatprep.subr.mxu0 0.0
      %3281 = vmatpush2.msra.mxu0 0.0
      %3282 = vmatprep.subr.mxu0 0.0
      %3283 = vmatpush2.msra.mxu0 0.0
      %3284 = vmatprep.subr.mxu0 0.0
      %3285 = vmatpush2.msra.mxu0 0.0
      %3286 = vmatprep.subr.mxu0 0.0
      %3287 = vmatpush2.msra.mxu0 0.0
      %3288 = vmatprep.subr.mxu0 0.0
      %3289 = vmatpush2.msra.mxu0 0.0
      %3290 = vmatprep.subr.mxu0 0.0
      %3291 = vmatpush2.msra.mxu0 0.0
      %3292 = vmatprep.subr.mxu0 0.0
      %3293 = vmatpush2.msra.mxu0 0.0
      %3294 = vmatprep.mubr.f32.mxu0 0.0
      %v3295 = vand.u32 %v3062, 4294901760
      %3296 = vmatmul.mubr.f32.gmra.mxu0 %v3295
      %v3297 = vpop.f32.mrf.mxu0
      %v3298 = vadd.f32 %v3153, %v3297
      %v3299 = vpop.f32.mrf.mxu0
      %v3300 = vadd.f32 %v3155, %v3299
      %3301 = vmatprep.mubr.f32.mxu0 0.0
      %v3302 = vand.u32 %v3065, 4294901760
      %3303 = vmatmul.mubr.f32.gmra.mxu0 %v3302
      %v3304 = vpop.f32.mrf.mxu0
      %v3305 = vadd.f32 %v3164, %v3304
      %v3306 = vpop.f32.mrf.mxu0
      %v3307 = vadd.f32 %v3166, %v3306
      %3308 = vmatprep.mubr.f32.mxu0 0.0
      %v3309 = vand.u32 %v3068, 4294901760
      %3310 = vmatmul.mubr.f32.gmra.mxu0 %v3309
      %v3311 = vpop.f32.mrf.mxu0
      %v3312 = vadd.f32 %v3175, %v3311
      %v3313 = vpop.f32.mrf.mxu0
      %v3314 = vadd.f32 %v3177, %v3313
      %3315 = vmatprep.mubr.f32.mxu0 0.0
      %v3316 = vand.u32 %v3071, 4294901760
      %3317 = vmatmul.mubr.f32.gmra.mxu0 %v3316
      %v3318 = vpop.f32.mrf.mxu0
      %v3319 = vadd.f32 %v3186, %v3318
      %v3320 = vpop.f32.mrf.mxu0
      %v3321 = vadd.f32 %v3188, %v3320
      %3322 = vdwg.mxu0
      %3323 = vmatprep.subr.mxu0 0.0
      %3324 = vmatpush1.msra.mxu0 0.0
      %3325 = vmatprep.subr.mxu0 0.0
      %3326 = vmatpush1.msra.mxu0 0.0
      %3327 = vmatprep.subr.mxu0 0.0
      %3328 = vmatpush1.msra.mxu0 0.0
      %3329 = vmatprep.subr.mxu0 0.0
      %3330 = vmatpush1.msra.mxu0 0.0
      %3331 = vmatprep.subr.mxu0 0.0
      %3332 = vmatpush1.msra.mxu0 0.0
      %3333 = vmatprep.subr.mxu0 0.0
      %3334 = vmatpush1.msra.mxu0 0.0
      %3335 = vmatprep.subr.mxu0 0.0
      %3336 = vmatpush1.msra.mxu0 0.0
      %3337 = vmatprep.subr.mxu0 0.0
      %3338 = vmatpush1.msra.mxu0 0.0
      %3339 = vmatprep.subr.mxu0 0.0
      %3340 = vmatpush1.msra.mxu0 0.0
      %3341 = vmatprep.subr.mxu0 0.0
      %3342 = vmatpush1.msra.mxu0 0.0
      %3343 = vmatprep.subr.mxu0 0.0
      %3344 = vmatpush1.msra.mxu0 0.0
      %3345 = vmatprep.subr.mxu0 0.0
      %3346 = vmatpush1.msra.mxu0 0.0
      %v3347 = vand.u32 %v3036, 4294901760
      %v3348 = vsub.f32 %v3036, %v3347
      %3349 = vmatprep.subr.mxu0 %v3348
      %v3350 = vand.u32 %v3035, 4294901760
      %v3351 = vsub.f32 %v3035, %v3350
      %3352 = vmatpush1.msra.mxu0 %v3351
      %v3353 = vand.u32 %v3034, 4294901760
      %v3354 = vsub.f32 %v3034, %v3353
      %3355 = vmatprep.subr.mxu0 %v3354
      %v3356 = vand.u32 %v3033, 4294901760
      %v3357 = vsub.f32 %v3033, %v3356
      %3358 = vmatpush1.msra.mxu0 %v3357
      %v3359 = vand.u32 %v3032, 4294901760
      %v3360 = vsub.f32 %v3032, %v3359
      %3361 = vmatprep.subr.mxu0 %v3360
      %v3362 = vand.u32 %v3031, 4294901760
      %v3363 = vsub.f32 %v3031, %v3362
      %3364 = vmatpush1.msra.mxu0 %v3363
      %v3365 = vand.u32 %v3030, 4294901760
      %v3366 = vsub.f32 %v3030, %v3365
      %3367 = vmatprep.subr.mxu0 %v3366
      %v3368 = vand.u32 %v3029, 4294901760
      %v3369 = vsub.f32 %v3029, %v3368
      %3370 = vmatpush1.msra.mxu0 %v3369
      %3371 = vmatprep.subr.mxu0 0.0
      %3372 = vmatpush2.msra.mxu0 0.0
      %3373 = vmatprep.subr.mxu0 0.0
      %3374 = vmatpush2.msra.mxu0 0.0
      %3375 = vmatprep.subr.mxu0 0.0
      %3376 = vmatpush2.msra.mxu0 0.0
      %3377 = vmatprep.subr.mxu0 0.0
      %3378 = vmatpush2.msra.mxu0 0.0
      %3379 = vmatprep.subr.mxu0 0.0
      %3380 = vmatpush2.msra.mxu0 0.0
      %3381 = vmatprep.subr.mxu0 0.0
      %3382 = vmatpush2.msra.mxu0 0.0
      %3383 = vmatprep.subr.mxu0 0.0
      %3384 = vmatpush2.msra.mxu0 0.0
      %3385 = vmatprep.subr.mxu0 0.0
      %3386 = vmatpush2.msra.mxu0 0.0
      %3387 = vmatprep.subr.mxu0 0.0
      %3388 = vmatpush2.msra.mxu0 0.0
      %3389 = vmatprep.subr.mxu0 0.0
      %3390 = vmatpush2.msra.mxu0 0.0
      %3391 = vmatprep.subr.mxu0 0.0
      %3392 = vmatpush2.msra.mxu0 0.0
      %3393 = vmatprep.subr.mxu0 0.0
      %3394 = vmatpush2.msra.mxu0 0.0
      %3395 = vmatprep.subr.mxu0 0.0
      %3396 = vmatpush2.msra.mxu0 0.0
      %3397 = vmatprep.subr.mxu0 0.0
      %3398 = vmatpush2.msra.mxu0 0.0
      %3399 = vmatprep.subr.mxu0 0.0
      %3400 = vmatpush2.msra.mxu0 0.0
      %3401 = vmatprep.subr.mxu0 0.0
      %3402 = vmatpush2.msra.mxu0 0.0
      %3403 = vmatprep.mubr.f32.mxu0 0.0
      %v3404 = vand.u32 %v3062, 4294901760
      %v3405 = vsub.f32 %v3062, %v3404
      %3406 = vmatmul.mubr.f32.gmra.mxu0 %v3405
      %v3407 = vpop.f32.mrf.mxu0
      %v3408 = vadd.f32 %v3298, %v3407
      %v3409 = vpop.f32.mrf.mxu0
      %v3410 = vadd.f32 %v3300, %v3409
      %3411 = vmatprep.mubr.f32.mxu0 0.0
      %v3412 = vand.u32 %v3065, 4294901760
      %v3413 = vsub.f32 %v3065, %v3412
      %3414 = vmatmul.mubr.f32.gmra.mxu0 %v3413
      %v3415 = vpop.f32.mrf.mxu0
      %v3416 = vadd.f32 %v3305, %v3415
      %v3417 = vpop.f32.mrf.mxu0
      %v3418 = vadd.f32 %v3307, %v3417
      %3419 = vmatprep.mubr.f32.mxu0 0.0
      %v3420 = vand.u32 %v3068, 4294901760
      %v3421 = vsub.f32 %v3068, %v3420
      %3422 = vmatmul.mubr.f32.gmra.mxu0 %v3421
      %v3423 = vpop.f32.mrf.mxu0
      %v3424 = vadd.f32 %v3312, %v3423
      %v3425 = vpop.f32.mrf.mxu0
      %v3426 = vadd.f32 %v3314, %v3425
      %3427 = vmatprep.mubr.f32.mxu0 0.0
      %v3428 = vand.u32 %v3071, 4294901760
      %v3429 = vsub.f32 %v3071, %v3428
      %3430 = vmatmul.mubr.f32.gmra.mxu0 %v3429
      %v3431 = vpop.f32.mrf.mxu0
      %v3432 = vadd.f32 %v3319, %v3431
      %v3433 = vpop.f32.mrf.mxu0
      %v3434 = vadd.f32 %v3321, %v3433
      %3435 = vdwg.mxu0
      %3436 = vmatprep.subr.mxu0 0.0
      %3437 = vmatpush1.msra.mxu0 0.0
      %3438 = vmatprep.subr.mxu0 0.0
      %3439 = vmatpush1.msra.mxu0 0.0
      %3440 = vmatprep.subr.mxu0 0.0
      %3441 = vmatpush1.msra.mxu0 0.0
      %3442 = vmatprep.subr.mxu0 0.0
      %3443 = vmatpush1.msra.mxu0 0.0
      %3444 = vmatprep.subr.mxu0 0.0
      %3445 = vmatpush1.msra.mxu0 0.0
      %3446 = vmatprep.subr.mxu0 0.0
      %3447 = vmatpush1.msra.mxu0 0.0
      %3448 = vmatprep.subr.mxu0 0.0
      %3449 = vmatpush1.msra.mxu0 0.0
      %3450 = vmatprep.subr.mxu0 0.0
      %3451 = vmatpush1.msra.mxu0 0.0
      %3452 = vmatprep.subr.mxu0 0.0
      %3453 = vmatpush1.msra.mxu0 0.0
      %3454 = vmatprep.subr.mxu0 0.0
      %3455 = vmatpush1.msra.mxu0 0.0
      %3456 = vmatprep.subr.mxu0 0.0
      %3457 = vmatpush1.msra.mxu0 0.0
      %3458 = vmatprep.subr.mxu0 0.0
      %3459 = vmatpush1.msra.mxu0 0.0
      %v3460 = vand.u32 %v3036, 4294901760
      %3461 = vmatprep.subr.mxu0 %v3460
      %v3462 = vand.u32 %v3035, 4294901760
      %3463 = vmatpush1.msra.mxu0 %v3462
      %v3464 = vand.u32 %v3034, 4294901760
      %3465 = vmatprep.subr.mxu0 %v3464
      %v3466 = vand.u32 %v3033, 4294901760
      %3467 = vmatpush1.msra.mxu0 %v3466
      %v3468 = vand.u32 %v3032, 4294901760
      %3469 = vmatprep.subr.mxu0 %v3468
      %v3470 = vand.u32 %v3031, 4294901760
      %3471 = vmatpush1.msra.mxu0 %v3470
      %v3472 = vand.u32 %v3030, 4294901760
      %3473 = vmatprep.subr.mxu0 %v3472
      %v3474 = vand.u32 %v3029, 4294901760
      %3475 = vmatpush1.msra.mxu0 %v3474
      %3476 = vmatprep.subr.mxu0 0.0
      %3477 = vmatpush2.msra.mxu0 0.0
      %3478 = vmatprep.subr.mxu0 0.0
      %3479 = vmatpush2.msra.mxu0 0.0
      %3480 = vmatprep.subr.mxu0 0.0
      %3481 = vmatpush2.msra.mxu0 0.0
      %3482 = vmatprep.subr.mxu0 0.0
      %3483 = vmatpush2.msra.mxu0 0.0
      %3484 = vmatprep.subr.mxu0 0.0
      %3485 = vmatpush2.msra.mxu0 0.0
      %3486 = vmatprep.subr.mxu0 0.0
      %3487 = vmatpush2.msra.mxu0 0.0
      %3488 = vmatprep.subr.mxu0 0.0
      %3489 = vmatpush2.msra.mxu0 0.0
      %3490 = vmatprep.subr.mxu0 0.0
      %3491 = vmatpush2.msra.mxu0 0.0
      %3492 = vmatprep.subr.mxu0 0.0
      %3493 = vmatpush2.msra.mxu0 0.0
      %3494 = vmatprep.subr.mxu0 0.0
      %3495 = vmatpush2.msra.mxu0 0.0
      %3496 = vmatprep.subr.mxu0 0.0
      %3497 = vmatpush2.msra.mxu0 0.0
      %3498 = vmatprep.subr.mxu0 0.0
      %3499 = vmatpush2.msra.mxu0 0.0
      %3500 = vmatprep.subr.mxu0 0.0
      %3501 = vmatpush2.msra.mxu0 0.0
      %3502 = vmatprep.subr.mxu0 0.0
      %3503 = vmatpush2.msra.mxu0 0.0
      %3504 = vmatprep.subr.mxu0 0.0
      %3505 = vmatpush2.msra.mxu0 0.0
      %3506 = vmatprep.subr.mxu0 0.0
      %3507 = vmatpush2.msra.mxu0 0.0
      %3508 = vmatprep.mubr.f32.mxu0 0.0
      %v3509 = vand.u32 %v3062, 4294901760
      %v3510 = vsub.f32 %v3062, %v3509
      %v3511 = vand.u32 %v3510, 4294901760
      %3512 = vmatmul.mubr.f32.gmra.mxu0 %v3511
      %v3513 = vpop.f32.mrf.mxu0
      %v3514 = vadd.f32 %v3408, %v3513
      %v3515 = vpop.f32.mrf.mxu0
      %v3516 = vadd.f32 %v3410, %v3515
      %3517 = vmatprep.mubr.f32.mxu0 0.0
      %v3518 = vand.u32 %v3065, 4294901760
      %v3519 = vsub.f32 %v3065, %v3518
      %v3520 = vand.u32 %v3519, 4294901760
      %3521 = vmatmul.mubr.f32.gmra.mxu0 %v3520
      %v3522 = vpop.f32.mrf.mxu0
      %v3523 = vadd.f32 %v3416, %v3522
      %v3524 = vpop.f32.mrf.mxu0
      %v3525 = vadd.f32 %v3418, %v3524
      %3526 = vmatprep.mubr.f32.mxu0 0.0
      %v3527 = vand.u32 %v3068, 4294901760
      %v3528 = vsub.f32 %v3068, %v3527
      %v3529 = vand.u32 %v3528, 4294901760
      %3530 = vmatmul.mubr.f32.gmra.mxu0 %v3529
      %v3531 = vpop.f32.mrf.mxu0
      %v3532 = vadd.f32 %v3424, %v3531
      %v3533 = vpop.f32.mrf.mxu0
      %v3534 = vadd.f32 %v3426, %v3533
      %3535 = vmatprep.mubr.f32.mxu0 0.0
      %v3536 = vand.u32 %v3071, 4294901760
      %v3537 = vsub.f32 %v3071, %v3536
      %v3538 = vand.u32 %v3537, 4294901760
      %3539 = vmatmul.mubr.f32.gmra.mxu0 %v3538
      %v3540 = vpop.f32.mrf.mxu0
      %v3541 = vadd.f32 %v3432, %v3540
      %v3542 = vpop.f32.mrf.mxu0
      %v3543 = vadd.f32 %v3434, %v3542
      %3544 = vdwg.mxu0
      %3545 = vmatprep.subr.mxu0 0.0
      %3546 = vmatpush1.msra.mxu0 0.0
      %3547 = vmatprep.subr.mxu0 0.0
      %3548 = vmatpush1.msra.mxu0 0.0
      %3549 = vmatprep.subr.mxu0 0.0
      %3550 = vmatpush1.msra.mxu0 0.0
      %3551 = vmatprep.subr.mxu0 0.0
      %3552 = vmatpush1.msra.mxu0 0.0
      %3553 = vmatprep.subr.mxu0 0.0
      %3554 = vmatpush1.msra.mxu0 0.0
      %3555 = vmatprep.subr.mxu0 0.0
      %3556 = vmatpush1.msra.mxu0 0.0
      %3557 = vmatprep.subr.mxu0 0.0
      %3558 = vmatpush1.msra.mxu0 0.0
      %3559 = vmatprep.subr.mxu0 0.0
      %3560 = vmatpush1.msra.mxu0 0.0
      %3561 = vmatprep.subr.mxu0 0.0
      %3562 = vmatpush1.msra.mxu0 0.0
      %3563 = vmatprep.subr.mxu0 0.0
      %3564 = vmatpush1.msra.mxu0 0.0
      %3565 = vmatprep.subr.mxu0 0.0
      %3566 = vmatpush1.msra.mxu0 0.0
      %3567 = vmatprep.subr.mxu0 0.0
      %3568 = vmatpush1.msra.mxu0 0.0
      %v3569 = vand.u32 %v3036, 4294901760
      %v3570 = vsub.f32 %v3036, %v3569
      %v3571 = vand.u32 %v3570, 4294901760
      %3572 = vmatprep.subr.mxu0 %v3571
      %v3573 = vand.u32 %v3035, 4294901760
      %v3574 = vsub.f32 %v3035, %v3573
      %v3575 = vand.u32 %v3574, 4294901760
      %3576 = vmatpush1.msra.mxu0 %v3575
      %v3577 = vand.u32 %v3034, 4294901760
      %v3578 = vsub.f32 %v3034, %v3577
      %v3579 = vand.u32 %v3578, 4294901760
      %3580 = vmatprep.subr.mxu0 %v3579
      %v3581 = vand.u32 %v3033, 4294901760
      %v3582 = vsub.f32 %v3033, %v3581
      %v3583 = vand.u32 %v3582, 4294901760
      %3584 = vmatpush1.msra.mxu0 %v3583
      %v3585 = vand.u32 %v3032, 4294901760
      %v3586 = vsub.f32 %v3032, %v3585
      %v3587 = vand.u32 %v3586, 4294901760
      %3588 = vmatprep.subr.mxu0 %v3587
      %v3589 = vand.u32 %v3031, 4294901760
      %v3590 = vsub.f32 %v3031, %v3589
      %v3591 = vand.u32 %v3590, 4294901760
      %3592 = vmatpush1.msra.mxu0 %v3591
      %v3593 = vand.u32 %v3030, 4294901760
      %v3594 = vsub.f32 %v3030, %v3593
      %v3595 = vand.u32 %v3594, 4294901760
      %3596 = vmatprep.subr.mxu0 %v3595
      %v3597 = vand.u32 %v3029, 4294901760
      %v3598 = vsub.f32 %v3029, %v3597
      %v3599 = vand.u32 %v3598, 4294901760
      %3600 = vmatpush1.msra.mxu0 %v3599
      %3601 = vmatprep.subr.mxu0 0.0
      %3602 = vmatpush2.msra.mxu0 0.0
      %3603 = vmatprep.subr.mxu0 0.0
      %3604 = vmatpush2.msra.mxu0 0.0
      %3605 = vmatprep.subr.mxu0 0.0
      %3606 = vmatpush2.msra.mxu0 0.0
      %3607 = vmatprep.subr.mxu0 0.0
      %3608 = vmatpush2.msra.mxu0 0.0
      %3609 = vmatprep.subr.mxu0 0.0
      %3610 = vmatpush2.msra.mxu0 0.0
      %3611 = vmatprep.subr.mxu0 0.0
      %3612 = vmatpush2.msra.mxu0 0.0
      %3613 = vmatprep.subr.mxu0 0.0
      %3614 = vmatpush2.msra.mxu0 0.0
      %3615 = vmatprep.subr.mxu0 0.0
      %3616 = vmatpush2.msra.mxu0 0.0
      %3617 = vmatprep.subr.mxu0 0.0
      %3618 = vmatpush2.msra.mxu0 0.0
      %3619 = vmatprep.subr.mxu0 0.0
      %3620 = vmatpush2.msra.mxu0 0.0
      %3621 = vmatprep.subr.mxu0 0.0
      %3622 = vmatpush2.msra.mxu0 0.0
      %3623 = vmatprep.subr.mxu0 0.0
      %3624 = vmatpush2.msra.mxu0 0.0
      %3625 = vmatprep.subr.mxu0 0.0
      %3626 = vmatpush2.msra.mxu0 0.0
      %3627 = vmatprep.subr.mxu0 0.0
      %3628 = vmatpush2.msra.mxu0 0.0
      %3629 = vmatprep.subr.mxu0 0.0
      %3630 = vmatpush2.msra.mxu0 0.0
      %3631 = vmatprep.subr.mxu0 0.0
      %3632 = vmatpush2.msra.mxu0 0.0
      %3633 = vmatprep.mubr.f32.mxu0 0.0
      %v3634 = vand.u32 %v3062, 4294901760
      %3635 = vmatmul.mubr.f32.gmra.mxu0 %v3634
      %v3636 = vpop.f32.mrf.mxu0
      %v3637 = vadd.f32 %v3514, %v3636
      %v3638 = vpop.f32.mrf.mxu0
      %v3639 = vadd.f32 %v3516, %v3638
      %3640 = vmatprep.mubr.f32.mxu0 0.0
      %v3641 = vand.u32 %v3065, 4294901760
      %3642 = vmatmul.mubr.f32.gmra.mxu0 %v3641
      %v3643 = vpop.f32.mrf.mxu0
      %v3644 = vadd.f32 %v3523, %v3643
      %v3645 = vpop.f32.mrf.mxu0
      %v3646 = vadd.f32 %v3525, %v3645
      %3647 = vmatprep.mubr.f32.mxu0 0.0
      %v3648 = vand.u32 %v3068, 4294901760
      %3649 = vmatmul.mubr.f32.gmra.mxu0 %v3648
      %v3650 = vpop.f32.mrf.mxu0
      %v3651 = vadd.f32 %v3532, %v3650
      %v3652 = vpop.f32.mrf.mxu0
      %v3653 = vadd.f32 %v3534, %v3652
      %3654 = vmatprep.mubr.f32.mxu0 0.0
      %v3655 = vand.u32 %v3071, 4294901760
      %3656 = vmatmul.mubr.f32.gmra.mxu0 %v3655
      %v3657 = vpop.f32.mrf.mxu0
      %v3658 = vadd.f32 %v3541, %v3657
      %v3659 = vpop.f32.mrf.mxu0
      %v3660 = vadd.f32 %v3543, %v3659
      %3661 = vdwg.mxu0
      %3662 = vmatprep.subr.mxu0 0.0
      %3663 = vmatpush1.msra.mxu0 0.0
      %3664 = vmatprep.subr.mxu0 0.0
      %3665 = vmatpush1.msra.mxu0 0.0
      %3666 = vmatprep.subr.mxu0 0.0
      %3667 = vmatpush1.msra.mxu0 0.0
      %3668 = vmatprep.subr.mxu0 0.0
      %3669 = vmatpush1.msra.mxu0 0.0
      %3670 = vmatprep.subr.mxu0 0.0
      %3671 = vmatpush1.msra.mxu0 0.0
      %3672 = vmatprep.subr.mxu0 0.0
      %3673 = vmatpush1.msra.mxu0 0.0
      %3674 = vmatprep.subr.mxu0 0.0
      %3675 = vmatpush1.msra.mxu0 0.0
      %3676 = vmatprep.subr.mxu0 0.0
      %3677 = vmatpush1.msra.mxu0 0.0
      %3678 = vmatprep.subr.mxu0 0.0
      %3679 = vmatpush1.msra.mxu0 0.0
      %3680 = vmatprep.subr.mxu0 0.0
      %3681 = vmatpush1.msra.mxu0 0.0
      %3682 = vmatprep.subr.mxu0 0.0
      %3683 = vmatpush1.msra.mxu0 0.0
      %3684 = vmatprep.subr.mxu0 0.0
      %3685 = vmatpush1.msra.mxu0 0.0
      %v3686 = vand.u32 %v3036, 4294901760
      %3687 = vmatprep.subr.mxu0 %v3686
      %v3688 = vand.u32 %v3035, 4294901760
      %3689 = vmatpush1.msra.mxu0 %v3688
      %v3690 = vand.u32 %v3034, 4294901760
      %3691 = vmatprep.subr.mxu0 %v3690
      %v3692 = vand.u32 %v3033, 4294901760
      %3693 = vmatpush1.msra.mxu0 %v3692
      %v3694 = vand.u32 %v3032, 4294901760
      %3695 = vmatprep.subr.mxu0 %v3694
      %v3696 = vand.u32 %v3031, 4294901760
      %3697 = vmatpush1.msra.mxu0 %v3696
      %v3698 = vand.u32 %v3030, 4294901760
      %3699 = vmatprep.subr.mxu0 %v3698
      %v3700 = vand.u32 %v3029, 4294901760
      %3701 = vmatpush1.msra.mxu0 %v3700
      %3702 = vmatprep.subr.mxu0 0.0
      %3703 = vmatpush2.msra.mxu0 0.0
      %3704 = vmatprep.subr.mxu0 0.0
      %3705 = vmatpush2.msra.mxu0 0.0
      %3706 = vmatprep.subr.mxu0 0.0
      %3707 = vmatpush2.msra.mxu0 0.0
      %3708 = vmatprep.subr.mxu0 0.0
      %3709 = vmatpush2.msra.mxu0 0.0
      %3710 = vmatprep.subr.mxu0 0.0
      %3711 = vmatpush2.msra.mxu0 0.0
      %3712 = vmatprep.subr.mxu0 0.0
      %3713 = vmatpush2.msra.mxu0 0.0
      %3714 = vmatprep.subr.mxu0 0.0
      %3715 = vmatpush2.msra.mxu0 0.0
      %3716 = vmatprep.subr.mxu0 0.0
      %3717 = vmatpush2.msra.mxu0 0.0
      %3718 = vmatprep.subr.mxu0 0.0
      %3719 = vmatpush2.msra.mxu0 0.0
      %3720 = vmatprep.subr.mxu0 0.0
      %3721 = vmatpush2.msra.mxu0 0.0
      %3722 = vmatprep.subr.mxu0 0.0
      %3723 = vmatpush2.msra.mxu0 0.0
      %3724 = vmatprep.subr.mxu0 0.0
      %3725 = vmatpush2.msra.mxu0 0.0
      %3726 = vmatprep.subr.mxu0 0.0
      %3727 = vmatpush2.msra.mxu0 0.0
      %3728 = vmatprep.subr.mxu0 0.0
      %3729 = vmatpush2.msra.mxu0 0.0
      %3730 = vmatprep.subr.mxu0 0.0
      %3731 = vmatpush2.msra.mxu0 0.0
      %3732 = vmatprep.subr.mxu0 0.0
      %3733 = vmatpush2.msra.mxu0 0.0
      %3734 = vmatprep.mubr.f32.mxu0 0.0
      %v3735 = vand.u32 %v3062, 4294901760
      %3736 = vmatmul.mubr.f32.gmra.mxu0 %v3735
      %v3737 = vpop.f32.mrf.mxu0
      %v3738 = vadd.f32 %v3637, %v3737
      %v3739 = vpop.f32.mrf.mxu0
      %v3740 = vadd.f32 %v3639, %v3739
      %3741 = vmatprep.mubr.f32.mxu0 0.0
      %v3742 = vand.u32 %v3065, 4294901760
      %3743 = vmatmul.mubr.f32.gmra.mxu0 %v3742
      %v3744 = vpop.f32.mrf.mxu0
      %v3745 = vadd.f32 %v3644, %v3744
      %v3746 = vpop.f32.mrf.mxu0
      %v3747 = vadd.f32 %v3646, %v3746
      %3748 = vmatprep.mubr.f32.mxu0 0.0
      %v3749 = vand.u32 %v3068, 4294901760
      %3750 = vmatmul.mubr.f32.gmra.mxu0 %v3749
      %v3751 = vpop.f32.mrf.mxu0
      %v3752 = vadd.f32 %v3651, %v3751
      %v3753 = vpop.f32.mrf.mxu0
      %v3754 = vadd.f32 %v3653, %v3753
      %3755 = vmatprep.mubr.f32.mxu0 0.0
      %v3756 = vand.u32 %v3071, 4294901760
      %3757 = vmatmul.mubr.f32.gmra.mxu0 %v3756
      %v3758 = vpop.f32.mrf.mxu0
      %v3759 = vadd.f32 %v3658, %v3758
      %v3760 = vpop.f32.mrf.mxu0
      %v3761 = vadd.f32 %v3660, %v3760
      %3762 = vdwg.mxu0
      %v3763 = vmul.f32 %v3738, 6.2831855
      %v3764 = vmul.f32 %v3740, 6.2831855
      %v3765 = vmul.f32 %v3745, 6.2831855
      %v3766 = vmul.f32 %v3747, 6.2831855
      %v3767 = vmul.f32 %v3752, 6.2831855
      %v3768 = vmul.f32 %v3754, 6.2831855
      %v3769 = vmul.f32 %v3759, 6.2831855
      %v3770 = vmul.f32 %v3761, 6.2831855
      %v3771 = vand.u32 2147483647, %v3763
      %vm3772 = vcmp.le.f32.partialorder %v3771, 0.7853982
      %vm3773 = vcmp.lt.s32.totalorder %v3763, 0
      %v3774 = vand.u32 %v3763, 2139095040
      %v3775 = vshrl.u32 %v3774, 23
      %v3776 = vsub.s32 %v3775, 127
      %v3777 = vand.u32 2147483647, %v3763
      %v3778 = vand.u32 %v3777, 8388607
      %v3779 = vor.u32 %v3778, 8388608
      %v3780 = vsub.s32 0, %v3779
      %v3781 = vadd.s32 %v3776, 1
      %vm3782 = vcmp.gt.s32.totalorder %v3781, 0
      %v3783 = vsel %vm3782, %v3781, 0
      %v3784 = vshrl.u32 %v3783, 5
      %v3785 = vand.u32 %v3783, 31
      %v3786 = vsub.s32 32, %v3785
      %v3787 = vshrl.u32 683565275, %v3786
      %v3788 = vshll.u32 683565275, %v3785
      %v3789 = vshrl.u32 2475754826, %v3786
      %v3790 = vor.u32 %v3788, %v3789
      %v3791 = vshll.u32 2475754826, %v3785
      %v3792 = vshrl.u32 2131351028, %v3786
      %v3793 = vor.u32 %v3791, %v3792
      %v3794 = vshll.u32 2131351028, %v3785
      %v3795 = vshrl.u32 2102212464, %v3786
      %v3796 = vor.u32 %v3794, %v3795
      %v3797 = vshll.u32 2102212464, %v3785
      %v3798 = vshrl.u32 920167782, %v3786
      %v3799 = vor.u32 %v3797, %v3798
      %v3800 = vshll.u32 920167782, %v3785
      %v3801 = vshrl.u32 1326507024, %v3786
      %v3802 = vor.u32 %v3800, %v3801
      %vm3803 = vcmp.lt.s32.totalorder %v3784, 1
      %vm3804 = vcmp.lt.s32.totalorder %v3784, 2
      %vm3805 = vcmp.lt.s32.totalorder %v3784, 3
      %vm3806 = vcmp.lt.s32.totalorder %v3784, 4
      %v3807 = vsel %vm3803, %v3787, %v3790
      %v3808 = vsel %vm3806, %v3796, 2102212464
      %v3809 = vsel %vm3805, %v3793, %v3808
      %v3810 = vsel %vm3804, %v3807, %v3809
      %v3811 = vsel %vm3803, %v3790, %v3793
      %v3812 = vsel %vm3806, %v3799, 920167782
      %v3813 = vsel %vm3805, %v3796, %v3812
      %v3814 = vsel %vm3804, %v3811, %v3813
      %v3815 = vsel %vm3803, %v3793, %v3796
      %v3816 = vsel %vm3806, %v3802, 1326507024
      %v3817 = vsel %vm3805, %v3799, %v3816
      %v3818 = vsel %vm3804, %v3815, %v3817
      %v3819 = vshll.u32 %v3779, 8
      %v3820 = vmul.u32.u64.compose %v3819, %v3818
      %v3821 = vextract.low.u32 %v3820
      %v3822 = vextract.high.u32 %v3820
      %v3823 = vmul.u32.u64.compose %v3819, %v3814
      %v3824 = vextract.low.u32 %v3823
      %v3825 = vextract.high.u32 %v3823
      %v3826 = vmul.u32 %v3819, %v3810
      %v3827 = vadd.s32 %v3822, %v3824
      %vm3828 = vc.u32 %v3822, %v3824
      %v3829 = vadd.s32 %v3825, 1
      %v3830 = vsel %vm3828, %v3829, %v3825
      %v3831 = vadd.s32 %v3826, %v3830
      %v3832 = vadd.s32 %v3831, 536870912
      %v3833 = vshrl.u32 %v3832, 30
      %v3834 = vshll.u32 %v3833, 30
      %v3835 = vsub.s32 %v3831, %v3834
      %vm3836 = vcmp.lt.s32.totalorder %v3835, 0
      %v3837 = vsub.s32 0, %v3835
      %v3838 = vsel %vm3836, %v3837, %v3835
      %v3839 = vclz %v3838
      %v3840 = vsub.s32 %v3839, 2
      %vm3841 = vcmp.gt.s32.totalorder 0, %v3840
      %v3842 = vsel %vm3841, 0, %v3840
      %v3843 = vsub.s32 32, %v3842
      %v3844 = vshll.u32 %v3835, %v3842
      %v3845 = vshrl.u32 %v3827, %v3843
      %v3846 = vor.u32 %v3844, %v3845
      %v3847 = vsub.s32 4294967266, %v3842
      %v3848 = vadd.s32 %v3847, 127
      %v3849 = vshll.u32 %v3848, 23
      %v3850 = vor.u32 4788187, %v3849
      %v3851 = vand.u32 2147483647, %v3850
      %v3853 = vcvt.s32.f32 %v3846
      %v3854 = vmul.f32 %v3853, %v3851
      %v3855 = vxor.u32 %v3854, 2147483648
      %v3856 = vsel %vm3773, %v3855, %v3854
      %v3857 = vsub.s32 4, %v3833
      %v3858 = vsel %vm3773, %v3857, %v3833
      %v3859 = vsel %vm3772, %v3763, %v3856
      %v3860 = vsel %vm3772, 0, %v3858
      %v3861 = vcosq.f32.pop %v3859
      %v3862 = vsinq.f32.pop %v3859
      %vm3863 = vweird.f32 %v3763
      %v3864 = vadd.s32 %v3860, 3
      %v3865 = vand.u32 %v3864, 3
      %vm3866 = vcmp.lt.s32.totalorder %v3865, 2
      %vm3867 = vcmp.eq.s32.totalorder %v3865, 0
      %v3868 = vxor.u32 %v3862, 2147483648
      %v3869 = vsel %vm3867, %v3861, %v3868
      %vm3870 = vcmp.eq.s32.totalorder %v3865, 2
      %v3871 = vxor.u32 %v3861, 2147483648
      %v3872 = vsel %vm3870, %v3871, %v3862
      %v3873 = vsel %vm3866, %v3869, %v3872
      %v3874 = vsel %vm3863, nan, %v3873
      %v3875 = vand.u32 2147483647, %v3764
      %vm3876 = vcmp.le.f32.partialorder %v3875, 0.7853982
      %vm3877 = vcmp.lt.s32.totalorder %v3764, 0
      %v3878 = vand.u32 %v3764, 2139095040
      %v3879 = vshrl.u32 %v3878, 23
      %v3880 = vsub.s32 %v3879, 127
      %v3881 = vand.u32 2147483647, %v3764
      %v3882 = vand.u32 %v3881, 8388607
      %v3883 = vor.u32 %v3882, 8388608
      %v3884 = vsub.s32 0, %v3883
      %v3885 = vadd.s32 %v3880, 1
      %vm3886 = vcmp.gt.s32.totalorder %v3885, 0
      %v3887 = vsel %vm3886, %v3885, 0
      %v3888 = vshrl.u32 %v3887, 5
      %v3889 = vand.u32 %v3887, 31
      %v3890 = vsub.s32 32, %v3889
      %v3891 = vshrl.u32 683565275, %v3890
      %v3892 = vshll.u32 683565275, %v3889
      %v3893 = vshrl.u32 2475754826, %v3890
      %v3894 = vor.u32 %v3892, %v3893
      %v3895 = vshll.u32 2475754826, %v3889
      %v3896 = vshrl.u32 2131351028, %v3890
      %v3897 = vor.u32 %v3895, %v3896
      %v3898 = vshll.u32 2131351028, %v3889
      %v3899 = vshrl.u32 2102212464, %v3890
      %v3900 = vor.u32 %v3898, %v3899
      %v3901 = vshll.u32 2102212464, %v3889
      %v3902 = vshrl.u32 920167782, %v3890
      %v3903 = vor.u32 %v3901, %v3902
      %v3904 = vshll.u32 920167782, %v3889
      %v3905 = vshrl.u32 1326507024, %v3890
      %v3906 = vor.u32 %v3904, %v3905
      %vm3907 = vcmp.lt.s32.totalorder %v3888, 1
      %vm3908 = vcmp.lt.s32.totalorder %v3888, 2
      %vm3909 = vcmp.lt.s32.totalorder %v3888, 3
      %vm3910 = vcmp.lt.s32.totalorder %v3888, 4
      %v3911 = vsel %vm3907, %v3891, %v3894
      %v3912 = vsel %vm3910, %v3900, 2102212464
      %v3913 = vsel %vm3909, %v3897, %v3912
      %v3914 = vsel %vm3908, %v3911, %v3913
      %v3915 = vsel %vm3907, %v3894, %v3897
      %v3916 = vsel %vm3910, %v3903, 920167782
      %v3917 = vsel %vm3909, %v3900, %v3916
      %v3918 = vsel %vm3908, %v3915, %v3917
      %v3919 = vsel %vm3907, %v3897, %v3900
      %v3920 = vsel %vm3910, %v3906, 1326507024
      %v3921 = vsel %vm3909, %v3903, %v3920
      %v3922 = vsel %vm3908, %v3919, %v3921
      %v3923 = vshll.u32 %v3883, 8
      %v3924 = vmul.u32.u64.compose %v3923, %v3922
      %v3925 = vextract.low.u32 %v3924
      %v3926 = vextract.high.u32 %v3924
      %v3927 = vmul.u32.u64.compose %v3923, %v3918
      %v3928 = vextract.low.u32 %v3927
      %v3929 = vextract.high.u32 %v3927
      %v3930 = vmul.u32 %v3923, %v3914
      %v3931 = vadd.s32 %v3926, %v3928
      %vm3932 = vc.u32 %v3926, %v3928
      %v3933 = vadd.s32 %v3929, 1
      %v3934 = vsel %vm3932, %v3933, %v3929
      %v3935 = vadd.s32 %v3930, %v3934
      %v3936 = vadd.s32 %v3935, 536870912
      %v3937 = vshrl.u32 %v3936, 30
      %v3938 = vshll.u32 %v3937, 30
      %v3939 = vsub.s32 %v3935, %v3938
      %vm3940 = vcmp.lt.s32.totalorder %v3939, 0
      %v3941 = vsub.s32 0, %v3939
      %v3942 = vsel %vm3940, %v3941, %v3939
      %v3943 = vclz %v3942
      %v3944 = vsub.s32 %v3943, 2
      %vm3945 = vcmp.gt.s32.totalorder 0, %v3944
      %v3946 = vsel %vm3945, 0, %v3944
      %v3947 = vsub.s32 32, %v3946
      %v3948 = vshll.u32 %v3939, %v3946
      %v3949 = vshrl.u32 %v3931, %v3947
      %v3950 = vor.u32 %v3948, %v3949
      %v3951 = vsub.s32 4294967266, %v3946
      %v3952 = vadd.s32 %v3951, 127
      %v3953 = vshll.u32 %v3952, 23
      %v3954 = vor.u32 4788187, %v3953
      %v3955 = vand.u32 2147483647, %v3954
      %v3957 = vcvt.s32.f32 %v3950
      %v3958 = vmul.f32 %v3957, %v3955
      %v3959 = vxor.u32 %v3958, 2147483648
      %v3960 = vsel %vm3877, %v3959, %v3958
      %v3961 = vsub.s32 4, %v3937
      %v3962 = vsel %vm3877, %v3961, %v3937
      %v3963 = vsel %vm3876, %v3764, %v3960
      %v3964 = vsel %vm3876, 0, %v3962
      %v3965 = vcosq.f32.pop %v3963
      %v3966 = vsinq.f32.pop %v3963
      %vm3967 = vweird.f32 %v3764
      %v3968 = vadd.s32 %v3964, 3
      %v3969 = vand.u32 %v3968, 3
      %vm3970 = vcmp.lt.s32.totalorder %v3969, 2
      %vm3971 = vcmp.eq.s32.totalorder %v3969, 0
      %v3972 = vxor.u32 %v3966, 2147483648
      %v3973 = vsel %vm3971, %v3965, %v3972
      %vm3974 = vcmp.eq.s32.totalorder %v3969, 2
      %v3975 = vxor.u32 %v3965, 2147483648
      %v3976 = vsel %vm3974, %v3975, %v3966
      %v3977 = vsel %vm3970, %v3973, %v3976
      %v3978 = vsel %vm3967, nan, %v3977
      %v3979 = vand.u32 2147483647, %v3765
      %vm3980 = vcmp.le.f32.partialorder %v3979, 0.7853982
      %vm3981 = vcmp.lt.s32.totalorder %v3765, 0
      %v3982 = vand.u32 %v3765, 2139095040
      %v3983 = vshrl.u32 %v3982, 23
      %v3984 = vsub.s32 %v3983, 127
      %v3985 = vand.u32 2147483647, %v3765
      %v3986 = vand.u32 %v3985, 8388607
      %v3987 = vor.u32 %v3986, 8388608
      %v3988 = vsub.s32 0, %v3987
      %v3989 = vadd.s32 %v3984, 1
      %vm3990 = vcmp.gt.s32.totalorder %v3989, 0
      %v3991 = vsel %vm3990, %v3989, 0
      %v3992 = vshrl.u32 %v3991, 5
      %v3993 = vand.u32 %v3991, 31
      %v3994 = vsub.s32 32, %v3993
      %v3995 = vshrl.u32 683565275, %v3994
      %v3996 = vshll.u32 683565275, %v3993
      %v3997 = vshrl.u32 2475754826, %v3994
      %v3998 = vor.u32 %v3996, %v3997
      %v3999 = vshll.u32 2475754826, %v3993
      %v4000 = vshrl.u32 2131351028, %v3994
      %v4001 = vor.u32 %v3999, %v4000
      %v4002 = vshll.u32 2131351028, %v3993
      %v4003 = vshrl.u32 2102212464, %v3994
      %v4004 = vor.u32 %v4002, %v4003
      %v4005 = vshll.u32 2102212464, %v3993
      %v4006 = vshrl.u32 920167782, %v3994
      %v4007 = vor.u32 %v4005, %v4006
      %v4008 = vshll.u32 920167782, %v3993
      %v4009 = vshrl.u32 1326507024, %v3994
      %v4010 = vor.u32 %v4008, %v4009
      %vm4011 = vcmp.lt.s32.totalorder %v3992, 1
      %vm4012 = vcmp.lt.s32.totalorder %v3992, 2
      %vm4013 = vcmp.lt.s32.totalorder %v3992, 3
      %vm4014 = vcmp.lt.s32.totalorder %v3992, 4
      %v4015 = vsel %vm4011, %v3995, %v3998
      %v4016 = vsel %vm4014, %v4004, 2102212464
      %v4017 = vsel %vm4013, %v4001, %v4016
      %v4018 = vsel %vm4012, %v4015, %v4017
      %v4019 = vsel %vm4011, %v3998, %v4001
      %v4020 = vsel %vm4014, %v4007, 920167782
      %v4021 = vsel %vm4013, %v4004, %v4020
      %v4022 = vsel %vm4012, %v4019, %v4021
      %v4023 = vsel %vm4011, %v4001, %v4004
      %v4024 = vsel %vm4014, %v4010, 1326507024
      %v4025 = vsel %vm4013, %v4007, %v4024
      %v4026 = vsel %vm4012, %v4023, %v4025
      %v4027 = vshll.u32 %v3987, 8
      %v4028 = vmul.u32.u64.compose %v4027, %v4026
      %v4029 = vextract.low.u32 %v4028
      %v4030 = vextract.high.u32 %v4028
      %v4031 = vmul.u32.u64.compose %v4027, %v4022
      %v4032 = vextract.low.u32 %v4031
      %v4033 = vextract.high.u32 %v4031
      %v4034 = vmul.u32 %v4027, %v4018
      %v4035 = vadd.s32 %v4030, %v4032
      %vm4036 = vc.u32 %v4030, %v4032
      %v4037 = vadd.s32 %v4033, 1
      %v4038 = vsel %vm4036, %v4037, %v4033
      %v4039 = vadd.s32 %v4034, %v4038
      %v4040 = vadd.s32 %v4039, 536870912
      %v4041 = vshrl.u32 %v4040, 30
      %v4042 = vshll.u32 %v4041, 30
      %v4043 = vsub.s32 %v4039, %v4042
      %vm4044 = vcmp.lt.s32.totalorder %v4043, 0
      %v4045 = vsub.s32 0, %v4043
      %v4046 = vsel %vm4044, %v4045, %v4043
      %v4047 = vclz %v4046
      %v4048 = vsub.s32 %v4047, 2
      %vm4049 = vcmp.gt.s32.totalorder 0, %v4048
      %v4050 = vsel %vm4049, 0, %v4048
      %v4051 = vsub.s32 32, %v4050
      %v4052 = vshll.u32 %v4043, %v4050
      %v4053 = vshrl.u32 %v4035, %v4051
      %v4054 = vor.u32 %v4052, %v4053
      %v4055 = vsub.s32 4294967266, %v4050
      %v4056 = vadd.s32 %v4055, 127
      %v4057 = vshll.u32 %v4056, 23
      %v4058 = vor.u32 4788187, %v4057
      %v4059 = vand.u32 2147483647, %v4058
      %v4061 = vcvt.s32.f32 %v4054
      %v4062 = vmul.f32 %v4061, %v4059
      %v4063 = vxor.u32 %v4062, 2147483648
      %v4064 = vsel %vm3981, %v4063, %v4062
      %v4065 = vsub.s32 4, %v4041
      %v4066 = vsel %vm3981, %v4065, %v4041
      %v4067 = vsel %vm3980, %v3765, %v4064
      %v4068 = vsel %vm3980, 0, %v4066
      %v4069 = vcosq.f32.pop %v4067
      %v4070 = vsinq.f32.pop %v4067
      %vm4071 = vweird.f32 %v3765
      %v4072 = vadd.s32 %v4068, 3
      %v4073 = vand.u32 %v4072, 3
      %vm4074 = vcmp.lt.s32.totalorder %v4073, 2
      %vm4075 = vcmp.eq.s32.totalorder %v4073, 0
      %v4076 = vxor.u32 %v4070, 2147483648
      %v4077 = vsel %vm4075, %v4069, %v4076
      %vm4078 = vcmp.eq.s32.totalorder %v4073, 2
      %v4079 = vxor.u32 %v4069, 2147483648
      %v4080 = vsel %vm4078, %v4079, %v4070
      %v4081 = vsel %vm4074, %v4077, %v4080
      %v4082 = vsel %vm4071, nan, %v4081
      %v4083 = vand.u32 2147483647, %v3766
      %vm4084 = vcmp.le.f32.partialorder %v4083, 0.7853982
      %vm4085 = vcmp.lt.s32.totalorder %v3766, 0
      %v4086 = vand.u32 %v3766, 2139095040
      %v4087 = vshrl.u32 %v4086, 23
      %v4088 = vsub.s32 %v4087, 127
      %v4089 = vand.u32 2147483647, %v3766
      %v4090 = vand.u32 %v4089, 8388607
      %v4091 = vor.u32 %v4090, 8388608
      %v4092 = vsub.s32 0, %v4091
      %v4093 = vadd.s32 %v4088, 1
      %vm4094 = vcmp.gt.s32.totalorder %v4093, 0
      %v4095 = vsel %vm4094, %v4093, 0
      %v4096 = vshrl.u32 %v4095, 5
      %v4097 = vand.u32 %v4095, 31
      %v4098 = vsub.s32 32, %v4097
      %v4099 = vshrl.u32 683565275, %v4098
      %v4100 = vshll.u32 683565275, %v4097
      %v4101 = vshrl.u32 2475754826, %v4098
      %v4102 = vor.u32 %v4100, %v4101
      %v4103 = vshll.u32 2475754826, %v4097
      %v4104 = vshrl.u32 2131351028, %v4098
      %v4105 = vor.u32 %v4103, %v4104
      %v4106 = vshll.u32 2131351028, %v4097
      %v4107 = vshrl.u32 2102212464, %v4098
      %v4108 = vor.u32 %v4106, %v4107
      %v4109 = vshll.u32 2102212464, %v4097
      %v4110 = vshrl.u32 920167782, %v4098
      %v4111 = vor.u32 %v4109, %v4110
      %v4112 = vshll.u32 920167782, %v4097
      %v4113 = vshrl.u32 1326507024, %v4098
      %v4114 = vor.u32 %v4112, %v4113
      %vm4115 = vcmp.lt.s32.totalorder %v4096, 1
      %vm4116 = vcmp.lt.s32.totalorder %v4096, 2
      %vm4117 = vcmp.lt.s32.totalorder %v4096, 3
      %vm4118 = vcmp.lt.s32.totalorder %v4096, 4
      %v4119 = vsel %vm4115, %v4099, %v4102
      %v4120 = vsel %vm4118, %v4108, 2102212464
      %v4121 = vsel %vm4117, %v4105, %v4120
      %v4122 = vsel %vm4116, %v4119, %v4121
      %v4123 = vsel %vm4115, %v4102, %v4105
      %v4124 = vsel %vm4118, %v4111, 920167782
      %v4125 = vsel %vm4117, %v4108, %v4124
      %v4126 = vsel %vm4116, %v4123, %v4125
      %v4127 = vsel %vm4115, %v4105, %v4108
      %v4128 = vsel %vm4118, %v4114, 1326507024
      %v4129 = vsel %vm4117, %v4111, %v4128
      %v4130 = vsel %vm4116, %v4127, %v4129
      %v4131 = vshll.u32 %v4091, 8
      %v4132 = vmul.u32.u64.compose %v4131, %v4130
      %v4133 = vextract.low.u32 %v4132
      %v4134 = vextract.high.u32 %v4132
      %v4135 = vmul.u32.u64.compose %v4131, %v4126
      %v4136 = vextract.low.u32 %v4135
      %v4137 = vextract.high.u32 %v4135
      %v4138 = vmul.u32 %v4131, %v4122
      %v4139 = vadd.s32 %v4134, %v4136
      %vm4140 = vc.u32 %v4134, %v4136
      %v4141 = vadd.s32 %v4137, 1
      %v4142 = vsel %vm4140, %v4141, %v4137
      %v4143 = vadd.s32 %v4138, %v4142
      %v4144 = vadd.s32 %v4143, 536870912
      %v4145 = vshrl.u32 %v4144, 30
      %v4146 = vshll.u32 %v4145, 30
      %v4147 = vsub.s32 %v4143, %v4146
      %vm4148 = vcmp.lt.s32.totalorder %v4147, 0
      %v4149 = vsub.s32 0, %v4147
      %v4150 = vsel %vm4148, %v4149, %v4147
      %v4151 = vclz %v4150
      %v4152 = vsub.s32 %v4151, 2
      %vm4153 = vcmp.gt.s32.totalorder 0, %v4152
      %v4154 = vsel %vm4153, 0, %v4152
      %v4155 = vsub.s32 32, %v4154
      %v4156 = vshll.u32 %v4147, %v4154
      %v4157 = vshrl.u32 %v4139, %v4155
      %v4158 = vor.u32 %v4156, %v4157
      %v4159 = vsub.s32 4294967266, %v4154
      %v4160 = vadd.s32 %v4159, 127
      %v4161 = vshll.u32 %v4160, 23
      %v4162 = vor.u32 4788187, %v4161
      %v4163 = vand.u32 2147483647, %v4162
      %v4165 = vcvt.s32.f32 %v4158
      %v4166 = vmul.f32 %v4165, %v4163
      %v4167 = vxor.u32 %v4166, 2147483648
      %v4168 = vsel %vm4085, %v4167, %v4166
      %v4169 = vsub.s32 4, %v4145
      %v4170 = vsel %vm4085, %v4169, %v4145
      %v4171 = vsel %vm4084, %v3766, %v4168
      %v4172 = vsel %vm4084, 0, %v4170
      %v4173 = vcosq.f32.pop %v4171
      %v4174 = vsinq.f32.pop %v4171
      %vm4175 = vweird.f32 %v3766
      %v4176 = vadd.s32 %v4172, 3
      %v4177 = vand.u32 %v4176, 3
      %vm4178 = vcmp.lt.s32.totalorder %v4177, 2
      %vm4179 = vcmp.eq.s32.totalorder %v4177, 0
      %v4180 = vxor.u32 %v4174, 2147483648
      %v4181 = vsel %vm4179, %v4173, %v4180
      %vm4182 = vcmp.eq.s32.totalorder %v4177, 2
      %v4183 = vxor.u32 %v4173, 2147483648
      %v4184 = vsel %vm4182, %v4183, %v4174
      %v4185 = vsel %vm4178, %v4181, %v4184
      %v4186 = vsel %vm4175, nan, %v4185
      %v4187 = vand.u32 2147483647, %v3767
      %vm4188 = vcmp.le.f32.partialorder %v4187, 0.7853982
      %vm4189 = vcmp.lt.s32.totalorder %v3767, 0
      %v4190 = vand.u32 %v3767, 2139095040
      %v4191 = vshrl.u32 %v4190, 23
      %v4192 = vsub.s32 %v4191, 127
      %v4193 = vand.u32 2147483647, %v3767
      %v4194 = vand.u32 %v4193, 8388607
      %v4195 = vor.u32 %v4194, 8388608
      %v4196 = vsub.s32 0, %v4195
      %v4197 = vadd.s32 %v4192, 1
      %vm4198 = vcmp.gt.s32.totalorder %v4197, 0
      %v4199 = vsel %vm4198, %v4197, 0
      %v4200 = vshrl.u32 %v4199, 5
      %v4201 = vand.u32 %v4199, 31
      %v4202 = vsub.s32 32, %v4201
      %v4203 = vshrl.u32 683565275, %v4202
      %v4204 = vshll.u32 683565275, %v4201
      %v4205 = vshrl.u32 2475754826, %v4202
      %v4206 = vor.u32 %v4204, %v4205
      %v4207 = vshll.u32 2475754826, %v4201
      %v4208 = vshrl.u32 2131351028, %v4202
      %v4209 = vor.u32 %v4207, %v4208
      %v4210 = vshll.u32 2131351028, %v4201
      %v4211 = vshrl.u32 2102212464, %v4202
      %v4212 = vor.u32 %v4210, %v4211
      %v4213 = vshll.u32 2102212464, %v4201
      %v4214 = vshrl.u32 920167782, %v4202
      %v4215 = vor.u32 %v4213, %v4214
      %v4216 = vshll.u32 920167782, %v4201
      %v4217 = vshrl.u32 1326507024, %v4202
      %v4218 = vor.u32 %v4216, %v4217
      %vm4219 = vcmp.lt.s32.totalorder %v4200, 1
      %vm4220 = vcmp.lt.s32.totalorder %v4200, 2
      %vm4221 = vcmp.lt.s32.totalorder %v4200, 3
      %vm4222 = vcmp.lt.s32.totalorder %v4200, 4
      %v4223 = vsel %vm4219, %v4203, %v4206
      %v4224 = vsel %vm4222, %v4212, 2102212464
      %v4225 = vsel %vm4221, %v4209, %v4224
      %v4226 = vsel %vm4220, %v4223, %v4225
      %v4227 = vsel %vm4219, %v4206, %v4209
      %v4228 = vsel %vm4222, %v4215, 920167782
      %v4229 = vsel %vm4221, %v4212, %v4228
      %v4230 = vsel %vm4220, %v4227, %v4229
      %v4231 = vsel %vm4219, %v4209, %v4212
      %v4232 = vsel %vm4222, %v4218, 1326507024
      %v4233 = vsel %vm4221, %v4215, %v4232
      %v4234 = vsel %vm4220, %v4231, %v4233
      %v4235 = vshll.u32 %v4195, 8
      %v4236 = vmul.u32.u64.compose %v4235, %v4234
      %v4237 = vextract.low.u32 %v4236
      %v4238 = vextract.high.u32 %v4236
      %v4239 = vmul.u32.u64.compose %v4235, %v4230
      %v4240 = vextract.low.u32 %v4239
      %v4241 = vextract.high.u32 %v4239
      %v4242 = vmul.u32 %v4235, %v4226
      %v4243 = vadd.s32 %v4238, %v4240
      %vm4244 = vc.u32 %v4238, %v4240
      %v4245 = vadd.s32 %v4241, 1
      %v4246 = vsel %vm4244, %v4245, %v4241
      %v4247 = vadd.s32 %v4242, %v4246
      %v4248 = vadd.s32 %v4247, 536870912
      %v4249 = vshrl.u32 %v4248, 30
      %v4250 = vshll.u32 %v4249, 30
      %v4251 = vsub.s32 %v4247, %v4250
      %vm4252 = vcmp.lt.s32.totalorder %v4251, 0
      %v4253 = vsub.s32 0, %v4251
      %v4254 = vsel %vm4252, %v4253, %v4251
      %v4255 = vclz %v4254
      %v4256 = vsub.s32 %v4255, 2
      %vm4257 = vcmp.gt.s32.totalorder 0, %v4256
      %v4258 = vsel %vm4257, 0, %v4256
      %v4259 = vsub.s32 32, %v4258
      %v4260 = vshll.u32 %v4251, %v4258
      %v4261 = vshrl.u32 %v4243, %v4259
      %v4262 = vor.u32 %v4260, %v4261
      %v4263 = vsub.s32 4294967266, %v4258
      %v4264 = vadd.s32 %v4263, 127
      %v4265 = vshll.u32 %v4264, 23
      %v4266 = vor.u32 4788187, %v4265
      %v4267 = vand.u32 2147483647, %v4266
      %v4269 = vcvt.s32.f32 %v4262
      %v4270 = vmul.f32 %v4269, %v4267
      %v4271 = vxor.u32 %v4270, 2147483648
      %v4272 = vsel %vm4189, %v4271, %v4270
      %v4273 = vsub.s32 4, %v4249
      %v4274 = vsel %vm4189, %v4273, %v4249
      %v4275 = vsel %vm4188, %v3767, %v4272
      %v4276 = vsel %vm4188, 0, %v4274
      %v4277 = vcosq.f32.pop %v4275
      %v4278 = vsinq.f32.pop %v4275
      %vm4279 = vweird.f32 %v3767
      %v4280 = vadd.s32 %v4276, 3
      %v4281 = vand.u32 %v4280, 3
      %vm4282 = vcmp.lt.s32.totalorder %v4281, 2
      %vm4283 = vcmp.eq.s32.totalorder %v4281, 0
      %v4284 = vxor.u32 %v4278, 2147483648
      %v4285 = vsel %vm4283, %v4277, %v4284
      %vm4286 = vcmp.eq.s32.totalorder %v4281, 2
      %v4287 = vxor.u32 %v4277, 2147483648
      %v4288 = vsel %vm4286, %v4287, %v4278
      %v4289 = vsel %vm4282, %v4285, %v4288
      %v4290 = vsel %vm4279, nan, %v4289
      %v4291 = vand.u32 2147483647, %v3768
      %vm4292 = vcmp.le.f32.partialorder %v4291, 0.7853982
      %vm4293 = vcmp.lt.s32.totalorder %v3768, 0
      %v4294 = vand.u32 %v3768, 2139095040
      %v4295 = vshrl.u32 %v4294, 23
      %v4296 = vsub.s32 %v4295, 127
      %v4297 = vand.u32 2147483647, %v3768
      %v4298 = vand.u32 %v4297, 8388607
      %v4299 = vor.u32 %v4298, 8388608
      %v4300 = vsub.s32 0, %v4299
      %v4301 = vadd.s32 %v4296, 1
      %vm4302 = vcmp.gt.s32.totalorder %v4301, 0
      %v4303 = vsel %vm4302, %v4301, 0
      %v4304 = vshrl.u32 %v4303, 5
      %v4305 = vand.u32 %v4303, 31
      %v4306 = vsub.s32 32, %v4305
      %v4307 = vshrl.u32 683565275, %v4306
      %v4308 = vshll.u32 683565275, %v4305
      %v4309 = vshrl.u32 2475754826, %v4306
      %v4310 = vor.u32 %v4308, %v4309
      %v4311 = vshll.u32 2475754826, %v4305
      %v4312 = vshrl.u32 2131351028, %v4306
      %v4313 = vor.u32 %v4311, %v4312
      %v4314 = vshll.u32 2131351028, %v4305
      %v4315 = vshrl.u32 2102212464, %v4306
      %v4316 = vor.u32 %v4314, %v4315
      %v4317 = vshll.u32 2102212464, %v4305
      %v4318 = vshrl.u32 920167782, %v4306
      %v4319 = vor.u32 %v4317, %v4318
      %v4320 = vshll.u32 920167782, %v4305
      %v4321 = vshrl.u32 1326507024, %v4306
      %v4322 = vor.u32 %v4320, %v4321
      %vm4323 = vcmp.lt.s32.totalorder %v4304, 1
      %vm4324 = vcmp.lt.s32.totalorder %v4304, 2
      %vm4325 = vcmp.lt.s32.totalorder %v4304, 3
      %vm4326 = vcmp.lt.s32.totalorder %v4304, 4
      %v4327 = vsel %vm4323, %v4307, %v4310
      %v4328 = vsel %vm4326, %v4316, 2102212464
      %v4329 = vsel %vm4325, %v4313, %v4328
      %v4330 = vsel %vm4324, %v4327, %v4329
      %v4331 = vsel %vm4323, %v4310, %v4313
      %v4332 = vsel %vm4326, %v4319, 920167782
      %v4333 = vsel %vm4325, %v4316, %v4332
      %v4334 = vsel %vm4324, %v4331, %v4333
      %v4335 = vsel %vm4323, %v4313, %v4316
      %v4336 = vsel %vm4326, %v4322, 1326507024
      %v4337 = vsel %vm4325, %v4319, %v4336
      %v4338 = vsel %vm4324, %v4335, %v4337
      %v4339 = vshll.u32 %v4299, 8
      %v4340 = vmul.u32.u64.compose %v4339, %v4338
      %v4341 = vextract.low.u32 %v4340
      %v4342 = vextract.high.u32 %v4340
      %v4343 = vmul.u32.u64.compose %v4339, %v4334
      %v4344 = vextract.low.u32 %v4343
      %v4345 = vextract.high.u32 %v4343
      %v4346 = vmul.u32 %v4339, %v4330
      %v4347 = vadd.s32 %v4342, %v4344
      %vm4348 = vc.u32 %v4342, %v4344
      %v4349 = vadd.s32 %v4345, 1
      %v4350 = vsel %vm4348, %v4349, %v4345
      %v4351 = vadd.s32 %v4346, %v4350
      %v4352 = vadd.s32 %v4351, 536870912
      %v4353 = vshrl.u32 %v4352, 30
      %v4354 = vshll.u32 %v4353, 30
      %v4355 = vsub.s32 %v4351, %v4354
      %vm4356 = vcmp.lt.s32.totalorder %v4355, 0
      %v4357 = vsub.s32 0, %v4355
      %v4358 = vsel %vm4356, %v4357, %v4355
      %v4359 = vclz %v4358
      %v4360 = vsub.s32 %v4359, 2
      %vm4361 = vcmp.gt.s32.totalorder 0, %v4360
      %v4362 = vsel %vm4361, 0, %v4360
      %v4363 = vsub.s32 32, %v4362
      %v4364 = vshll.u32 %v4355, %v4362
      %v4365 = vshrl.u32 %v4347, %v4363
      %v4366 = vor.u32 %v4364, %v4365
      %v4367 = vsub.s32 4294967266, %v4362
      %v4368 = vadd.s32 %v4367, 127
      %v4369 = vshll.u32 %v4368, 23
      %v4370 = vor.u32 4788187, %v4369
      %v4371 = vand.u32 2147483647, %v4370
      %v4373 = vcvt.s32.f32 %v4366
      %v4374 = vmul.f32 %v4373, %v4371
      %v4375 = vxor.u32 %v4374, 2147483648
      %v4376 = vsel %vm4293, %v4375, %v4374
      %v4377 = vsub.s32 4, %v4353
      %v4378 = vsel %vm4293, %v4377, %v4353
      %v4379 = vsel %vm4292, %v3768, %v4376
      %v4380 = vsel %vm4292, 0, %v4378
      %v4381 = vcosq.f32.pop %v4379
      %v4382 = vsinq.f32.pop %v4379
      %vm4383 = vweird.f32 %v3768
      %v4384 = vadd.s32 %v4380, 3
      %v4385 = vand.u32 %v4384, 3
      %vm4386 = vcmp.lt.s32.totalorder %v4385, 2
      %vm4387 = vcmp.eq.s32.totalorder %v4385, 0
      %v4388 = vxor.u32 %v4382, 2147483648
      %v4389 = vsel %vm4387, %v4381, %v4388
      %vm4390 = vcmp.eq.s32.totalorder %v4385, 2
      %v4391 = vxor.u32 %v4381, 2147483648
      %v4392 = vsel %vm4390, %v4391, %v4382
      %v4393 = vsel %vm4386, %v4389, %v4392
      %v4394 = vsel %vm4383, nan, %v4393
      %v4395 = vand.u32 2147483647, %v3769
      %vm4396 = vcmp.le.f32.partialorder %v4395, 0.7853982
      %vm4397 = vcmp.lt.s32.totalorder %v3769, 0
      %v4398 = vand.u32 %v3769, 2139095040
      %v4399 = vshrl.u32 %v4398, 23
      %v4400 = vsub.s32 %v4399, 127
      %v4401 = vand.u32 2147483647, %v3769
      %v4402 = vand.u32 %v4401, 8388607
      %v4403 = vor.u32 %v4402, 8388608
      %v4404 = vsub.s32 0, %v4403
      %v4405 = vadd.s32 %v4400, 1
      %vm4406 = vcmp.gt.s32.totalorder %v4405, 0
      %v4407 = vsel %vm4406, %v4405, 0
      %v4408 = vshrl.u32 %v4407, 5
      %v4409 = vand.u32 %v4407, 31
      %v4410 = vsub.s32 32, %v4409
      %v4411 = vshrl.u32 683565275, %v4410
      %v4412 = vshll.u32 683565275, %v4409
      %v4413 = vshrl.u32 2475754826, %v4410
      %v4414 = vor.u32 %v4412, %v4413
      %v4415 = vshll.u32 2475754826, %v4409
      %v4416 = vshrl.u32 2131351028, %v4410
      %v4417 = vor.u32 %v4415, %v4416
      %v4418 = vshll.u32 2131351028, %v4409
      %v4419 = vshrl.u32 2102212464, %v4410
      %v4420 = vor.u32 %v4418, %v4419
      %v4421 = vshll.u32 2102212464, %v4409
      %v4422 = vshrl.u32 920167782, %v4410
      %v4423 = vor.u32 %v4421, %v4422
      %v4424 = vshll.u32 920167782, %v4409
      %v4425 = vshrl.u32 1326507024, %v4410
      %v4426 = vor.u32 %v4424, %v4425
      %vm4427 = vcmp.lt.s32.totalorder %v4408, 1
      %vm4428 = vcmp.lt.s32.totalorder %v4408, 2
      %vm4429 = vcmp.lt.s32.totalorder %v4408, 3
      %vm4430 = vcmp.lt.s32.totalorder %v4408, 4
      %v4431 = vsel %vm4427, %v4411, %v4414
      %v4432 = vsel %vm4430, %v4420, 2102212464
      %v4433 = vsel %vm4429, %v4417, %v4432
      %v4434 = vsel %vm4428, %v4431, %v4433
      %v4435 = vsel %vm4427, %v4414, %v4417
      %v4436 = vsel %vm4430, %v4423, 920167782
      %v4437 = vsel %vm4429, %v4420, %v4436
      %v4438 = vsel %vm4428, %v4435, %v4437
      %v4439 = vsel %vm4427, %v4417, %v4420
      %v4440 = vsel %vm4430, %v4426, 1326507024
      %v4441 = vsel %vm4429, %v4423, %v4440
      %v4442 = vsel %vm4428, %v4439, %v4441
      %v4443 = vshll.u32 %v4403, 8
      %v4444 = vmul.u32.u64.compose %v4443, %v4442
      %v4445 = vextract.low.u32 %v4444
      %v4446 = vextract.high.u32 %v4444
      %v4447 = vmul.u32.u64.compose %v4443, %v4438
      %v4448 = vextract.low.u32 %v4447
      %v4449 = vextract.high.u32 %v4447
      %v4450 = vmul.u32 %v4443, %v4434
      %v4451 = vadd.s32 %v4446, %v4448
      %vm4452 = vc.u32 %v4446, %v4448
      %v4453 = vadd.s32 %v4449, 1
      %v4454 = vsel %vm4452, %v4453, %v4449
      %v4455 = vadd.s32 %v4450, %v4454
      %v4456 = vadd.s32 %v4455, 536870912
      %v4457 = vshrl.u32 %v4456, 30
      %v4458 = vshll.u32 %v4457, 30
      %v4459 = vsub.s32 %v4455, %v4458
      %vm4460 = vcmp.lt.s32.totalorder %v4459, 0
      %v4461 = vsub.s32 0, %v4459
      %v4462 = vsel %vm4460, %v4461, %v4459
      %v4463 = vclz %v4462
      %v4464 = vsub.s32 %v4463, 2
      %vm4465 = vcmp.gt.s32.totalorder 0, %v4464
      %v4466 = vsel %vm4465, 0, %v4464
      %v4467 = vsub.s32 32, %v4466
      %v4468 = vshll.u32 %v4459, %v4466
      %v4469 = vshrl.u32 %v4451, %v4467
      %v4470 = vor.u32 %v4468, %v4469
      %v4471 = vsub.s32 4294967266, %v4466
      %v4472 = vadd.s32 %v4471, 127
      %v4473 = vshll.u32 %v4472, 23
      %v4474 = vor.u32 4788187, %v4473
      %v4475 = vand.u32 2147483647, %v4474
      %v4477 = vcvt.s32.f32 %v4470
      %v4478 = vmul.f32 %v4477, %v4475
      %v4479 = vxor.u32 %v4478, 2147483648
      %v4480 = vsel %vm4397, %v4479, %v4478
      %v4481 = vsub.s32 4, %v4457
      %v4482 = vsel %vm4397, %v4481, %v4457
      %v4483 = vsel %vm4396, %v3769, %v4480
      %v4484 = vsel %vm4396, 0, %v4482
      %v4485 = vcosq.f32.pop %v4483
      %v4486 = vsinq.f32.pop %v4483
      %vm4487 = vweird.f32 %v3769
      %v4488 = vadd.s32 %v4484, 3
      %v4489 = vand.u32 %v4488, 3
      %vm4490 = vcmp.lt.s32.totalorder %v4489, 2
      %vm4491 = vcmp.eq.s32.totalorder %v4489, 0
      %v4492 = vxor.u32 %v4486, 2147483648
      %v4493 = vsel %vm4491, %v4485, %v4492
      %vm4494 = vcmp.eq.s32.totalorder %v4489, 2
      %v4495 = vxor.u32 %v4485, 2147483648
      %v4496 = vsel %vm4494, %v4495, %v4486
      %v4497 = vsel %vm4490, %v4493, %v4496
      %v4498 = vsel %vm4487, nan, %v4497
      %v4499 = vand.u32 2147483647, %v3770
      %vm4500 = vcmp.le.f32.partialorder %v4499, 0.7853982
      %vm4501 = vcmp.lt.s32.totalorder %v3770, 0
      %v4502 = vand.u32 %v3770, 2139095040
      %v4503 = vshrl.u32 %v4502, 23
      %v4504 = vsub.s32 %v4503, 127
      %v4505 = vand.u32 2147483647, %v3770
      %v4506 = vand.u32 %v4505, 8388607
      %v4507 = vor.u32 %v4506, 8388608
      %v4508 = vsub.s32 0, %v4507
      %v4509 = vadd.s32 %v4504, 1
      %vm4510 = vcmp.gt.s32.totalorder %v4509, 0
      %v4511 = vsel %vm4510, %v4509, 0
      %v4512 = vshrl.u32 %v4511, 5
      %v4513 = vand.u32 %v4511, 31
      %v4514 = vsub.s32 32, %v4513
      %v4515 = vshrl.u32 683565275, %v4514
      %v4516 = vshll.u32 683565275, %v4513
      %v4517 = vshrl.u32 2475754826, %v4514
      %v4518 = vor.u32 %v4516, %v4517
      %v4519 = vshll.u32 2475754826, %v4513
      %v4520 = vshrl.u32 2131351028, %v4514
      %v4521 = vor.u32 %v4519, %v4520
      %v4522 = vshll.u32 2131351028, %v4513
      %v4523 = vshrl.u32 2102212464, %v4514
      %v4524 = vor.u32 %v4522, %v4523
      %v4525 = vshll.u32 2102212464, %v4513
      %v4526 = vshrl.u32 920167782, %v4514
      %v4527 = vor.u32 %v4525, %v4526
      %v4528 = vshll.u32 920167782, %v4513
      %v4529 = vshrl.u32 1326507024, %v4514
      %v4530 = vor.u32 %v4528, %v4529
      %vm4531 = vcmp.lt.s32.totalorder %v4512, 1
      %vm4532 = vcmp.lt.s32.totalorder %v4512, 2
      %vm4533 = vcmp.lt.s32.totalorder %v4512, 3
      %vm4534 = vcmp.lt.s32.totalorder %v4512, 4
      %v4535 = vsel %vm4531, %v4515, %v4518
      %v4536 = vsel %vm4534, %v4524, 2102212464
      %v4537 = vsel %vm4533, %v4521, %v4536
      %v4538 = vsel %vm4532, %v4535, %v4537
      %v4539 = vsel %vm4531, %v4518, %v4521
      %v4540 = vsel %vm4534, %v4527, 920167782
      %v4541 = vsel %vm4533, %v4524, %v4540
      %v4542 = vsel %vm4532, %v4539, %v4541
      %v4543 = vsel %vm4531, %v4521, %v4524
      %v4544 = vsel %vm4534, %v4530, 1326507024
      %v4545 = vsel %vm4533, %v4527, %v4544
      %v4546 = vsel %vm4532, %v4543, %v4545
      %v4547 = vshll.u32 %v4507, 8
      %v4548 = vmul.u32.u64.compose %v4547, %v4546
      %v4549 = vextract.low.u32 %v4548
      %v4550 = vextract.high.u32 %v4548
      %v4551 = vmul.u32.u64.compose %v4547, %v4542
      %v4552 = vextract.low.u32 %v4551
      %v4553 = vextract.high.u32 %v4551
      %v4554 = vmul.u32 %v4547, %v4538
      %v4555 = vadd.s32 %v4550, %v4552
      %vm4556 = vc.u32 %v4550, %v4552
      %v4557 = vadd.s32 %v4553, 1
      %v4558 = vsel %vm4556, %v4557, %v4553
      %v4559 = vadd.s32 %v4554, %v4558
      %v4560 = vadd.s32 %v4559, 536870912
      %v4561 = vshrl.u32 %v4560, 30
      %v4562 = vshll.u32 %v4561, 30
      %v4563 = vsub.s32 %v4559, %v4562
      %vm4564 = vcmp.lt.s32.totalorder %v4563, 0
      %v4565 = vsub.s32 0, %v4563
      %v4566 = vsel %vm4564, %v4565, %v4563
      %v4567 = vclz %v4566
      %v4568 = vsub.s32 %v4567, 2
      %vm4569 = vcmp.gt.s32.totalorder 0, %v4568
      %v4570 = vsel %vm4569, 0, %v4568
      %v4571 = vsub.s32 32, %v4570
      %v4572 = vshll.u32 %v4563, %v4570
      %v4573 = vshrl.u32 %v4555, %v4571
      %v4574 = vor.u32 %v4572, %v4573
      %v4575 = vsub.s32 4294967266, %v4570
      %v4576 = vadd.s32 %v4575, 127
      %v4577 = vshll.u32 %v4576, 23
      %v4578 = vor.u32 4788187, %v4577
      %v4579 = vand.u32 2147483647, %v4578
      %v4581 = vcvt.s32.f32 %v4574
      %v4582 = vmul.f32 %v4581, %v4579
      %v4583 = vxor.u32 %v4582, 2147483648
      %v4584 = vsel %vm4501, %v4583, %v4582
      %v4585 = vsub.s32 4, %v4561
      %v4586 = vsel %vm4501, %v4585, %v4561
      %v4587 = vsel %vm4500, %v3770, %v4584
      %v4588 = vsel %vm4500, 0, %v4586
      %v4589 = vcosq.f32.pop %v4587
      %v4590 = vsinq.f32.pop %v4587
      %vm4591 = vweird.f32 %v3770
      %v4592 = vadd.s32 %v4588, 3
      %v4593 = vand.u32 %v4592, 3
      %vm4594 = vcmp.lt.s32.totalorder %v4593, 2
      %vm4595 = vcmp.eq.s32.totalorder %v4593, 0
      %v4596 = vxor.u32 %v4590, 2147483648
      %v4597 = vsel %vm4595, %v4589, %v4596
      %vm4598 = vcmp.eq.s32.totalorder %v4593, 2
      %v4599 = vxor.u32 %v4589, 2147483648
      %v4600 = vsel %vm4598, %v4599, %v4590
      %v4601 = vsel %vm4594, %v4597, %v4600
      %v4602 = vsel %vm4591, nan, %v4601
      %v4603 = vld [vmem:[#allocation4] sm:$0xff]
      %v4604 = vld [vmem:[#allocation4 + $0x8] sm:$0xff]
      %v4605 = vld [vmem:[#allocation4 + $0x10] sm:$0xff]
      %v4606 = vld [vmem:[#allocation4 + $0x18] sm:$0xff]
      %v4607 = vld [vmem:[#allocation4 + $0x20] sm:$0xff]
      %v4608 = vld [vmem:[#allocation4 + $0x28] sm:$0xff]
      %v4609 = vld [vmem:[#allocation4 + $0x30] sm:$0xff]
      %v4610 = vld [vmem:[#allocation4 + $0x38] sm:$0xff]
      %v4611 = vadd.f32 %v3007, %v4603
      %v4612 = vadd.f32 %v3009, %v4604
      %v4613 = vadd.f32 %v3011, %v4605
      %v4614 = vadd.f32 %v3013, %v4606
      %v4615 = vadd.f32 %v3017, %v4607
      %v4616 = vadd.f32 %v3019, %v4608
      %v4617 = vadd.f32 %v3021, %v4609
      %v4618 = vadd.f32 %v3023, %v4610
      %v4619 = vmul.f32 %v4611, %v3874
      %v4620 = vmul.f32 %v4612, %v3978
      %v4621 = vmul.f32 %v4613, %v4082
      %v4622 = vmul.f32 %v4614, %v4186
      %v4623 = vmul.f32 %v4615, %v4290
      %v4624 = vmul.f32 %v4616, %v4394
      %v4625 = vmul.f32 %v4617, %v4498
      %v4626 = vmul.f32 %v4618, %v4602
      %4627 = vst [vmem:[#allocation4] sm:$0xff] %v4619
      %4628 = vst [vmem:[#allocation4 + $0x8] sm:$0xff] %v4620
      %4629 = vst [vmem:[#allocation4 + $0x10] sm:$0xff] %v4621
      %4630 = vst [vmem:[#allocation4 + $0x18] sm:$0xff] %v4622
      %4631 = vst [vmem:[#allocation4 + $0x20] sm:$0xff] %v4623
      %4632 = vst [vmem:[#allocation4 + $0x28] sm:$0xff] %v4624
      %4633 = vst [vmem:[#allocation4 + $0x30] sm:$0xff] %v4625
      %4634 = vst [vmem:[#allocation4 + $0x38] sm:$0xff] %v4626
      %v4635 = vld [vmem:[#allocation4] sm:$0xff]
      %v4636 = vld [vmem:[#allocation4 + $0x8] sm:$0xff]
      %v4637 = vld [vmem:[#allocation4 + $0x10] sm:$0xff]
      %v4638 = vld [vmem:[#allocation4 + $0x18] sm:$0xff]
      %v4639 = vld [vmem:[#allocation4 + $0x20] sm:$0xff]
      %v4640 = vld [vmem:[#allocation4 + $0x28] sm:$0xff]
      %v4641 = vld [vmem:[#allocation4 + $0x30] sm:$0xff]
      %v4642 = vld [vmem:[#allocation4 + $0x38] sm:$0xff]
      %4643 = vst.msk [vmem:[#allocation3] sm:$0xf] %vm1203, 0
      %4644 = vst.msk [vmem:[#allocation3 + $0x8] sm:$0xf] %vm1203, 0
      %4645 = vst.msk [vmem:[#allocation3 + $0x10] sm:$0xf] %vm1203, 0
      %4646 = vst.msk [vmem:[#allocation3 + $0x18] sm:$0xf] %vm1203, 0
      %v4647 = vmul.f32 %v4635, %v1212
      %v4648 = vmul.f32 %v4636, %v1211
      %v4649 = vmul.f32 %v4637, %v1212
      %v4650 = vmul.f32 %v4638, %v1211
      %v4651 = vmul.f32 %v4639, %v1212
      %v4652 = vmul.f32 %v4640, %v1211
      %v4653 = vmul.f32 %v4641, %v1212
      %v4654 = vmul.f32 %v4642, %v1211
      %v4655 = vpack.c.bf16 %v4649, %v4647
      %v4656 = vpack.c.bf16 %v4650, %v4648
      %v4657 = vpack.c.bf16 %v4653, %v4651
      %v4658 = vpack.c.bf16 %v4654, %v4652
      %v4663 = vunpack.c.l.b16 %v4655
      %v4664 = vunpack.c.l.b16 %v4656
      %v4665 = vunpack.c.h.b16 %v4655
      %v4666 = vunpack.c.h.b16 %v4656
      %v4667 = vunpack.c.l.b16 %v4657
      %v4668 = vunpack.c.l.b16 %v4658
      %v4669 = vunpack.c.h.b16 %v4657
      %v4670 = vunpack.c.h.b16 %v4658
      %v4671 = vpack.c.b16 %v4664, %v4663
      %v4672 = vpack.c.b16 %v4666, %v4665
      %v4673 = vpack.c.b16 %v4668, %v4667
      %v4674 = vpack.c.b16 %v4670, %v4669
      %4675 = vrot.lane.b32.xlu0 %v4671, 17
      %v4676 = vpop.permute.xlu0 %4675
      %4677 = vrot.lane.b32.xlu0 %v4672, 17
      %v4678 = vpop.permute.xlu0 %4677
      %4679 = vrot.lane.b32.xlu0 %v4673, 17
      %v4680 = vpop.permute.xlu0 %4679
      %4681 = vrot.lane.b32.xlu0 %v4674, 17
      %v4682 = vpop.permute.xlu0 %4681
      %v4683 = vrot.slane %v4676, 4
      %v4684 = vrot.slane %v4678, 4
      %v4685 = vrot.slane %v4680, 4
      %v4686 = vrot.slane %v4682, 4
      %v4687 = vsel %vm676, %v4683, %v4676
      %v4688 = vsel %vm676, %v4684, %v4678
      %v4689 = vsel %vm676, %v4685, %v4680
      %v4690 = vsel %vm676, %v4686, %v4682
      %4695 = vst.msk [vmem:[#allocation3] sm:$0xff] %vm1265, %v4687
      %4696 = vst.msk [vmem:[#allocation3 + $0x8] sm:$0xff] %vm1265, %v4688
      %4697 = vst.msk [vmem:[#allocation3 + $0x10] sm:$0xff] %vm1265, %v4689
      %4698 = vst.msk [vmem:[#allocation3 + $0x18] sm:$0xff] %vm1265, %v4690
      %4699 = vst.msk [vmem:[#allocation3 + $0x20] sm:$0xf] %vm1270, 0
      %4700 = vst.msk [vmem:[#allocation3 + $0x28] sm:$0xf] %vm1270, 0
      %4701 = vst.msk [vmem:[#allocation3 + $0x30] sm:$0xf] %vm1270, 0
      %4702 = vst.msk [vmem:[#allocation3 + $0x38] sm:$0xf] %vm1270, 0
      %v4703 = vmul.f32 %v4635, %v1279
      %v4704 = vmul.f32 %v4636, %v1278
      %v4705 = vmul.f32 %v4637, %v1279
      %v4706 = vmul.f32 %v4638, %v1278
      %v4707 = vmul.f32 %v4639, %v1279
      %v4708 = vmul.f32 %v4640, %v1278
      %v4709 = vmul.f32 %v4641, %v1279
      %v4710 = vmul.f32 %v4642, %v1278
      %v4711 = vpack.c.bf16 %v4705, %v4703
      %v4712 = vpack.c.bf16 %v4706, %v4704
      %v4713 = vpack.c.bf16 %v4709, %v4707
      %v4714 = vpack.c.bf16 %v4710, %v4708
      %v4719 = vunpack.c.l.b16 %v4711
      %v4720 = vunpack.c.l.b16 %v4712
      %v4721 = vunpack.c.h.b16 %v4711
      %v4722 = vunpack.c.h.b16 %v4712
      %v4723 = vunpack.c.l.b16 %v4713
      %v4724 = vunpack.c.l.b16 %v4714
      %v4725 = vunpack.c.h.b16 %v4713
      %v4726 = vunpack.c.h.b16 %v4714
      %v4727 = vpack.c.b16 %v4720, %v4719
      %v4728 = vpack.c.b16 %v4722, %v4721
      %v4729 = vpack.c.b16 %v4724, %v4723
      %v4730 = vpack.c.b16 %v4726, %v4725
      %4731 = vrot.lane.b32.xlu0 %v4727, 16
      %v4732 = vpop.permute.xlu0 %4731
      %4733 = vrot.lane.b32.xlu0 %v4728, 16
      %v4734 = vpop.permute.xlu0 %4733
      %4735 = vrot.lane.b32.xlu0 %v4729, 16
      %v4736 = vpop.permute.xlu0 %4735
      %4737 = vrot.lane.b32.xlu0 %v4730, 16
      %v4738 = vpop.permute.xlu0 %4737
      %v4739 = vrot.slane %v4732, 4
      %v4740 = vrot.slane %v4734, 4
      %v4741 = vrot.slane %v4736, 4
      %v4742 = vrot.slane %v4738, 4
      %v4743 = vsel %vm724, %v4739, %v4732
      %v4744 = vsel %vm724, %v4740, %v4734
      %v4745 = vsel %vm724, %v4741, %v4736
      %v4746 = vsel %vm724, %v4742, %v4738
      %4751 = vst.msk [vmem:[#allocation3 + $0x20] sm:$0xff] %vm1331, %v4743
      %4752 = vst.msk [vmem:[#allocation3 + $0x28] sm:$0xff] %vm1331, %v4744
      %4753 = vst.msk [vmem:[#allocation3 + $0x30] sm:$0xff] %vm1331, %v4745
      %4754 = vst.msk [vmem:[#allocation3 + $0x38] sm:$0xff] %vm1331, %v4746
      %4755 = vst.msk [vmem:[#allocation3 + $0x40] sm:$0xf] %vm1336, 0
      %4756 = vst.msk [vmem:[#allocation3 + $0x48] sm:$0xf] %vm1336, 0
      %4757 = vst.msk [vmem:[#allocation3 + $0x50] sm:$0xf] %vm1336, 0
      %4758 = vst.msk [vmem:[#allocation3 + $0x58] sm:$0xf] %vm1336, 0
      %v4759 = vmul.f32 %v4635, %v1345
      %v4760 = vmul.f32 %v4636, %v1344
      %v4761 = vmul.f32 %v4637, %v1345
      %v4762 = vmul.f32 %v4638, %v1344
      %v4763 = vmul.f32 %v4639, %v1345
      %v4764 = vmul.f32 %v4640, %v1344
      %v4765 = vmul.f32 %v4641, %v1345
      %v4766 = vmul.f32 %v4642, %v1344
      %v4767 = vpack.c.bf16 %v4761, %v4759
      %v4768 = vpack.c.bf16 %v4762, %v4760
      %v4769 = vpack.c.bf16 %v4765, %v4763
      %v4770 = vpack.c.bf16 %v4766, %v4764
      %v4775 = vunpack.c.l.b16 %v4767
      %v4776 = vunpack.c.l.b16 %v4768
      %v4777 = vunpack.c.h.b16 %v4767
      %v4778 = vunpack.c.h.b16 %v4768
      %v4779 = vunpack.c.l.b16 %v4769
      %v4780 = vunpack.c.l.b16 %v4770
      %v4781 = vunpack.c.h.b16 %v4769
      %v4782 = vunpack.c.h.b16 %v4770
      %v4783 = vpack.c.b16 %v4776, %v4775
      %v4784 = vpack.c.b16 %v4778, %v4777
      %v4785 = vpack.c.b16 %v4780, %v4779
      %v4786 = vpack.c.b16 %v4782, %v4781
      %4787 = vrot.lane.b32.xlu0 %v4783, 15
      %v4788 = vpop.permute.xlu0 %4787
      %4789 = vrot.lane.b32.xlu0 %v4784, 15
      %v4790 = vpop.permute.xlu0 %4789
      %4791 = vrot.lane.b32.xlu0 %v4785, 15
      %v4792 = vpop.permute.xlu0 %4791
      %4793 = vrot.lane.b32.xlu0 %v4786, 15
      %v4794 = vpop.permute.xlu0 %4793
      %v4795 = vrot.slane %v4788, 4
      %v4796 = vrot.slane %v4790, 4
      %v4797 = vrot.slane %v4792, 4
      %v4798 = vrot.slane %v4794, 4
      %v4799 = vsel %vm769, %v4795, %v4788
      %v4800 = vsel %vm769, %v4796, %v4790
      %v4801 = vsel %vm769, %v4797, %v4792
      %v4802 = vsel %vm769, %v4798, %v4794
      %4807 = vst.msk [vmem:[#allocation3 + $0x40] sm:$0xff] %vm1397, %v4799
      %4808 = vst.msk [vmem:[#allocation3 + $0x48] sm:$0xff] %vm1397, %v4800
      %4809 = vst.msk [vmem:[#allocation3 + $0x50] sm:$0xff] %vm1397, %v4801
      %4810 = vst.msk [vmem:[#allocation3 + $0x58] sm:$0xff] %vm1397, %v4802
      %4811 = vst.msk [vmem:[#allocation3 + $0x60] sm:$0xf] %vm1402, 0
      %4812 = vst.msk [vmem:[#allocation3 + $0x68] sm:$0xf] %vm1402, 0
      %4813 = vst.msk [vmem:[#allocation3 + $0x70] sm:$0xf] %vm1402, 0
      %4814 = vst.msk [vmem:[#allocation3 + $0x78] sm:$0xf] %vm1402, 0
      %v4815 = vmul.f32 %v4635, %v1411
      %v4816 = vmul.f32 %v4636, %v1410
      %v4817 = vmul.f32 %v4637, %v1411
      %v4818 = vmul.f32 %v4638, %v1410
      %v4819 = vmul.f32 %v4639, %v1411
      %v4820 = vmul.f32 %v4640, %v1410
      %v4821 = vmul.f32 %v4641, %v1411
      %v4822 = vmul.f32 %v4642, %v1410
      %v4823 = vpack.c.bf16 %v4817, %v4815
      %v4824 = vpack.c.bf16 %v4818, %v4816
      %v4825 = vpack.c.bf16 %v4821, %v4819
      %v4826 = vpack.c.bf16 %v4822, %v4820
      %v4831 = vunpack.c.l.b16 %v4823
      %v4832 = vunpack.c.l.b16 %v4824
      %v4833 = vunpack.c.h.b16 %v4823
      %v4834 = vunpack.c.h.b16 %v4824
      %v4835 = vunpack.c.l.b16 %v4825
      %v4836 = vunpack.c.l.b16 %v4826
      %v4837 = vunpack.c.h.b16 %v4825
      %v4838 = vunpack.c.h.b16 %v4826
      %v4839 = vpack.c.b16 %v4832, %v4831
      %v4840 = vpack.c.b16 %v4834, %v4833
      %v4841 = vpack.c.b16 %v4836, %v4835
      %v4842 = vpack.c.b16 %v4838, %v4837
      %4843 = vrot.lane.b32.xlu0 %v4839, 1
      %v4844 = vpop.permute.xlu0 %4843
      %4845 = vrot.lane.b32.xlu0 %v4840, 1
      %v4846 = vpop.permute.xlu0 %4845
      %4847 = vrot.lane.b32.xlu0 %v4841, 1
      %v4848 = vpop.permute.xlu0 %4847
      %4849 = vrot.lane.b32.xlu0 %v4842, 1
      %v4850 = vpop.permute.xlu0 %4849
      %v4851 = vrot.slane %v4844, 4
      %v4852 = vrot.slane %v4846, 4
      %v4853 = vrot.slane %v4848, 4
      %v4854 = vrot.slane %v4850, 4
      %v4855 = vsel %vm814, %v4851, %v4844
      %v4856 = vsel %vm814, %v4852, %v4846
      %v4857 = vsel %vm814, %v4853, %v4848
      %v4858 = vsel %vm814, %v4854, %v4850
      %4863 = vst.msk [vmem:[#allocation3 + $0x60] sm:$0xff] %vm1463, %v4855
      %4864 = vst.msk [vmem:[#allocation3 + $0x68] sm:$0xff] %vm1463, %v4856
      %4865 = vst.msk [vmem:[#allocation3 + $0x70] sm:$0xff] %vm1463, %v4857
      %4866 = vst.msk [vmem:[#allocation3 + $0x78] sm:$0xff] %vm1463, %v4858
      %v4867 = vpack.c.bf16 %v4637, %v4635
      %v4868 = vpack.c.bf16 %v4638, %v4636
      %v4869 = vpack.c.bf16 %v4641, %v4639
      %v4870 = vpack.c.bf16 %v4642, %v4640
      %v4875 = vunpack.c.l.b16 %v4867
      %v4876 = vunpack.c.l.b16 %v4868
      %v4877 = vunpack.c.h.b16 %v4867
      %v4878 = vunpack.c.h.b16 %v4868
      %v4879 = vunpack.c.l.b16 %v4869
      %v4880 = vunpack.c.l.b16 %v4870
      %v4881 = vunpack.c.h.b16 %v4869
      %v4882 = vunpack.c.h.b16 %v4870
      %v4883 = vpack.c.b16 %v4876, %v4875
      %v4884 = vpack.c.b16 %v4878, %v4877
      %v4885 = vpack.c.b16 %v4880, %v4879
      %v4886 = vpack.c.b16 %v4882, %v4881
      %4891 = vst [vmem:[#allocation3 + $0x80] sm:$0xff] %v4883
      %4892 = vst [vmem:[#allocation3 + $0x88] sm:$0xff] %v4884
      %4893 = vst [vmem:[#allocation3 + $0x90] sm:$0xff] %v4885
      %4894 = vst [vmem:[#allocation3 + $0x98] sm:$0xff] %v4886
      %v4895 = vmul.f32 %v4635, %v1497
      %v4896 = vmul.f32 %v4636, %v1500
      %v4897 = vmul.f32 %v4637, %v1497
      %v4898 = vmul.f32 %v4638, %v1500
      %v4899 = vmul.f32 %v4639, %v1497
      %v4900 = vmul.f32 %v4640, %v1500
      %v4901 = vmul.f32 %v4641, %v1497
      %v4902 = vmul.f32 %v4642, %v1500
      %v4903 = vpack.c.bf16 %v4897, %v4895
      %v4904 = vpack.c.bf16 %v4898, %v4896
      %v4905 = vpack.c.bf16 %v4901, %v4899
      %v4906 = vpack.c.bf16 %v4902, %v4900
      %v4911 = vunpack.c.l.b16 %v4903
      %v4912 = vunpack.c.l.b16 %v4904
      %v4913 = vunpack.c.h.b16 %v4903
      %v4914 = vunpack.c.h.b16 %v4904
      %v4915 = vunpack.c.l.b16 %v4905
      %v4916 = vunpack.c.l.b16 %v4906
      %v4917 = vunpack.c.h.b16 %v4905
      %v4918 = vunpack.c.h.b16 %v4906
      %v4919 = vpack.c.b16 %v4912, %v4911
      %v4920 = vpack.c.b16 %v4914, %v4913
      %v4921 = vpack.c.b16 %v4916, %v4915
      %v4922 = vpack.c.b16 %v4918, %v4917
      %4923 = vrot.lane.b32.xlu0 %v4919, 127
      %v4924 = vpop.permute.xlu0 %4923
      %4925 = vrot.lane.b32.xlu0 %v4920, 127
      %v4926 = vpop.permute.xlu0 %4925
      %4927 = vrot.lane.b32.xlu0 %v4921, 127
      %v4928 = vpop.permute.xlu0 %4927
      %4929 = vrot.lane.b32.xlu0 %v4922, 127
      %v4930 = vpop.permute.xlu0 %4929
      %v4931 = vrot.slane %v4924, 4
      %v4932 = vrot.slane %v4926, 4
      %v4933 = vrot.slane %v4928, 4
      %v4934 = vrot.slane %v4930, 4
      %v4935 = vsel %vm871, %v4924, %v4931
      %v4936 = vsel %vm871, %v4926, %v4932
      %v4937 = vsel %vm871, %v4928, %v4933
      %v4938 = vsel %vm871, %v4930, %v4934
      %4943 = vst.msk [vmem:[#allocation3 + $0xa0] sm:$0xff] %vm1552, %v4935
      %4944 = vst.msk [vmem:[#allocation3 + $0xa8] sm:$0xff] %vm1552, %v4936
      %4945 = vst.msk [vmem:[#allocation3 + $0xb0] sm:$0xff] %vm1552, %v4937
      %4946 = vst.msk [vmem:[#allocation3 + $0xb8] sm:$0xff] %vm1552, %v4938
      %4947 = vst.msk [vmem:[#allocation3 + $0xa4] sm:$0xf] %vm1557, 0
      %4948 = vst.msk [vmem:[#allocation3 + $0xac] sm:$0xf] %vm1557, 0
      %4949 = vst.msk [vmem:[#allocation3 + $0xb4] sm:$0xf] %vm1557, 0
      %4950 = vst.msk [vmem:[#allocation3 + $0xbc] sm:$0xf] %vm1557, 0
      %v4951 = vmul.f32 %v4635, %v1563
      %v4952 = vmul.f32 %v4636, %v1566
      %v4953 = vmul.f32 %v4637, %v1563
      %v4954 = vmul.f32 %v4638, %v1566
      %v4955 = vmul.f32 %v4639, %v1563
      %v4956 = vmul.f32 %v4640, %v1566
      %v4957 = vmul.f32 %v4641, %v1563
      %v4958 = vmul.f32 %v4642, %v1566
      %v4959 = vpack.c.bf16 %v4953, %v4951
      %v4960 = vpack.c.bf16 %v4954, %v4952
      %v4961 = vpack.c.bf16 %v4957, %v4955
      %v4962 = vpack.c.bf16 %v4958, %v4956
      %v4967 = vunpack.c.l.b16 %v4959
      %v4968 = vunpack.c.l.b16 %v4960
      %v4969 = vunpack.c.h.b16 %v4959
      %v4970 = vunpack.c.h.b16 %v4960
      %v4971 = vunpack.c.l.b16 %v4961
      %v4972 = vunpack.c.l.b16 %v4962
      %v4973 = vunpack.c.h.b16 %v4961
      %v4974 = vunpack.c.h.b16 %v4962
      %v4975 = vpack.c.b16 %v4968, %v4967
      %v4976 = vpack.c.b16 %v4970, %v4969
      %v4977 = vpack.c.b16 %v4972, %v4971
      %v4978 = vpack.c.b16 %v4974, %v4973
      %4979 = vrot.lane.b32.xlu0 %v4975, 113
      %v4980 = vpop.permute.xlu0 %4979
      %4981 = vrot.lane.b32.xlu0 %v4976, 113
      %v4982 = vpop.permute.xlu0 %4981
      %4983 = vrot.lane.b32.xlu0 %v4977, 113
      %v4984 = vpop.permute.xlu0 %4983
      %4985 = vrot.lane.b32.xlu0 %v4978, 113
      %v4986 = vpop.permute.xlu0 %4985
      %v4987 = vrot.slane %v4980, 4
      %v4988 = vrot.slane %v4982, 4
      %v4989 = vrot.slane %v4984, 4
      %v4990 = vrot.slane %v4986, 4
      %v4991 = vsel %vm916, %v4980, %v4987
      %v4992 = vsel %vm916, %v4982, %v4988
      %v4993 = vsel %vm916, %v4984, %v4989
      %v4994 = vsel %vm916, %v4986, %v4990
      %4999 = vst.msk [vmem:[#allocation3 + $0xc0] sm:$0xff] %vm1618, %v4991
      %5000 = vst.msk [vmem:[#allocation3 + $0xc8] sm:$0xff] %vm1618, %v4992
      %5001 = vst.msk [vmem:[#allocation3 + $0xd0] sm:$0xff] %vm1618, %v4993
      %5002 = vst.msk [vmem:[#allocation3 + $0xd8] sm:$0xff] %vm1618, %v4994
      %5003 = vst.msk [vmem:[#allocation3 + $0xc4] sm:$0xf] %vm1623, 0
      %5004 = vst.msk [vmem:[#allocation3 + $0xcc] sm:$0xf] %vm1623, 0
      %5005 = vst.msk [vmem:[#allocation3 + $0xd4] sm:$0xf] %vm1623, 0
      %5006 = vst.msk [vmem:[#allocation3 + $0xdc] sm:$0xf] %vm1623, 0
      %v5007 = vmul.f32 %v4635, %v1629
      %v5008 = vmul.f32 %v4636, %v1632
      %v5009 = vmul.f32 %v4637, %v1629
      %v5010 = vmul.f32 %v4638, %v1632
      %v5011 = vmul.f32 %v4639, %v1629
      %v5012 = vmul.f32 %v4640, %v1632
      %v5013 = vmul.f32 %v4641, %v1629
      %v5014 = vmul.f32 %v4642, %v1632
      %v5015 = vpack.c.bf16 %v5009, %v5007
      %v5016 = vpack.c.bf16 %v5010, %v5008
      %v5017 = vpack.c.bf16 %v5013, %v5011
      %v5018 = vpack.c.bf16 %v5014, %v5012
      %v5023 = vunpack.c.l.b16 %v5015
      %v5024 = vunpack.c.l.b16 %v5016
      %v5025 = vunpack.c.h.b16 %v5015
      %v5026 = vunpack.c.h.b16 %v5016
      %v5027 = vunpack.c.l.b16 %v5017
      %v5028 = vunpack.c.l.b16 %v5018
      %v5029 = vunpack.c.h.b16 %v5017
      %v5030 = vunpack.c.h.b16 %v5018
      %v5031 = vpack.c.b16 %v5024, %v5023
      %v5032 = vpack.c.b16 %v5026, %v5025
      %v5033 = vpack.c.b16 %v5028, %v5027
      %v5034 = vpack.c.b16 %v5030, %v5029
      %5035 = vrot.lane.b32.xlu0 %v5031, 112
      %v5036 = vpop.permute.xlu0 %5035
      %5037 = vrot.lane.b32.xlu0 %v5032, 112
      %v5038 = vpop.permute.xlu0 %5037
      %5039 = vrot.lane.b32.xlu0 %v5033, 112
      %v5040 = vpop.permute.xlu0 %5039
      %5041 = vrot.lane.b32.xlu0 %v5034, 112
      %v5042 = vpop.permute.xlu0 %5041
      %v5043 = vrot.slane %v5036, 4
      %v5044 = vrot.slane %v5038, 4
      %v5045 = vrot.slane %v5040, 4
      %v5046 = vrot.slane %v5042, 4
      %v5047 = vsel %vm961, %v5036, %v5043
      %v5048 = vsel %vm961, %v5038, %v5044
      %v5049 = vsel %vm961, %v5040, %v5045
      %v5050 = vsel %vm961, %v5042, %v5046
      %5055 = vst.msk [vmem:[#allocation3 + $0xe0] sm:$0xff] %vm1684, %v5047
      %5056 = vst.msk [vmem:[#allocation3 + $0xe8] sm:$0xff] %vm1684, %v5048
      %5057 = vst.msk [vmem:[#allocation3 + $0xf0] sm:$0xff] %vm1684, %v5049
      %5058 = vst.msk [vmem:[#allocation3 + $0xf8] sm:$0xff] %vm1684, %v5050
      %5059 = vst.msk [vmem:[#allocation3 + $0xe4] sm:$0xf] %vm1689, 0
      %5060 = vst.msk [vmem:[#allocation3 + $0xec] sm:$0xf] %vm1689, 0
      %5061 = vst.msk [vmem:[#allocation3 + $0xf4] sm:$0xf] %vm1689, 0
      %5062 = vst.msk [vmem:[#allocation3 + $0xfc] sm:$0xf] %vm1689, 0
      %v5063 = vmul.f32 %v4635, %v1695
      %v5064 = vmul.f32 %v4636, %v1698
      %v5065 = vmul.f32 %v4637, %v1695
      %v5066 = vmul.f32 %v4638, %v1698
      %v5067 = vmul.f32 %v4639, %v1695
      %v5068 = vmul.f32 %v4640, %v1698
      %v5069 = vmul.f32 %v4641, %v1695
      %v5070 = vmul.f32 %v4642, %v1698
      %v5071 = vpack.c.bf16 %v5065, %v5063
      %v5072 = vpack.c.bf16 %v5066, %v5064
      %v5073 = vpack.c.bf16 %v5069, %v5067
      %v5074 = vpack.c.bf16 %v5070, %v5068
      %v5079 = vunpack.c.l.b16 %v5071
      %v5080 = vunpack.c.l.b16 %v5072
      %v5081 = vunpack.c.h.b16 %v5071
      %v5082 = vunpack.c.h.b16 %v5072
      %v5083 = vunpack.c.l.b16 %v5073
      %v5084 = vunpack.c.l.b16 %v5074
      %v5085 = vunpack.c.h.b16 %v5073
      %v5086 = vunpack.c.h.b16 %v5074
      %v5087 = vpack.c.b16 %v5080, %v5079
      %v5088 = vpack.c.b16 %v5082, %v5081
      %v5089 = vpack.c.b16 %v5084, %v5083
      %v5090 = vpack.c.b16 %v5086, %v5085
      %5091 = vrot.lane.b32.xlu0 %v5087, 111
      %v5092 = vpop.permute.xlu0 %5091
      %5093 = vrot.lane.b32.xlu0 %v5088, 111
      %v5094 = vpop.permute.xlu0 %5093
      %5095 = vrot.lane.b32.xlu0 %v5089, 111
      %v5096 = vpop.permute.xlu0 %5095
      %5097 = vrot.lane.b32.xlu0 %v5090, 111
      %v5098 = vpop.permute.xlu0 %5097
      %v5099 = vrot.slane %v5092, 4
      %v5100 = vrot.slane %v5094, 4
      %v5101 = vrot.slane %v5096, 4
      %v5102 = vrot.slane %v5098, 4
      %v5103 = vsel %vm1006, %v5092, %v5099
      %v5104 = vsel %vm1006, %v5094, %v5100
      %v5105 = vsel %vm1006, %v5096, %v5101
      %v5106 = vsel %vm1006, %v5098, %v5102
      %5111 = vst.msk [vmem:[#allocation3 + $0x100] sm:$0xff] %vm1750, %v5103
      %5112 = vst.msk [vmem:[#allocation3 + $0x108] sm:$0xff] %vm1750, %v5104
      %5113 = vst.msk [vmem:[#allocation3 + $0x110] sm:$0xff] %vm1750, %v5105
      %5114 = vst.msk [vmem:[#allocation3 + $0x118] sm:$0xff] %vm1750, %v5106
      %5115 = vst.msk [vmem:[#allocation3 + $0x104] sm:$0xf] %vm1755, 0
      %5116 = vst.msk [vmem:[#allocation3 + $0x10c] sm:$0xf] %vm1755, 0
      %5117 = vst.msk [vmem:[#allocation3 + $0x114] sm:$0xf] %vm1755, 0
      %5118 = vst.msk [vmem:[#allocation3 + $0x11c] sm:$0xf] %vm1755, 0
      %s5119 = scalar_lea.vmem %s5, 48
      %v5120 = vld [vmem:[%s5119] sm:$0xff]
      %v5121 = vld [vmem:[%s5119 + $0x8] sm:$0xf]
      %v5122 = vld [vmem:[%s5119 + $0xc] sm:$0xff]
      %v5123 = vld [vmem:[%s5119 + $0x14] sm:$0xf]
      %v5124 = vld [vmem:[%s5119 + $0x18] sm:$0xff]
      %v5125 = vld [vmem:[%s5119 + $0x20] sm:$0xf]
      %v5126 = vld [vmem:[%s5119 + $0x24] sm:$0xff]
      %v5127 = vld [vmem:[%s5119 + $0x2c] sm:$0xf]
      %v5128 = vld [vmem:[#allocation3] sm:$0xff]
      %v5129 = vld [vmem:[#allocation3 + $0x8] sm:$0xff]
      %v5130 = vld [vmem:[#allocation3 + $0x10] sm:$0xff]
      %v5131 = vld [vmem:[#allocation3 + $0x18] sm:$0xff]
      %v5132 = vld [vmem:[#allocation3 + $0x20] sm:$0xff]
      %v5133 = vld [vmem:[#allocation3 + $0x28] sm:$0xff]
      %v5134 = vld [vmem:[#allocation3 + $0x30] sm:$0xff]
      %v5135 = vld [vmem:[#allocation3 + $0x38] sm:$0xff]
      %v5136 = vld [vmem:[#allocation3 + $0x40] sm:$0xff]
      %v5137 = vld [vmem:[#allocation3 + $0x48] sm:$0xff]
      %v5138 = vld [vmem:[#allocation3 + $0x50] sm:$0xff]
      %v5139 = vld [vmem:[#allocation3 + $0x58] sm:$0xff]
      %v5140 = vld [vmem:[#allocation3 + $0x60] sm:$0xff]
      %v5141 = vld [vmem:[#allocation3 + $0x68] sm:$0xff]
      %v5142 = vld [vmem:[#allocation3 + $0x70] sm:$0xff]
      %v5143 = vld [vmem:[#allocation3 + $0x78] sm:$0xff]
      %v5144 = vld [vmem:[#allocation3 + $0x80] sm:$0xff]
      %v5145 = vld [vmem:[#allocation3 + $0x88] sm:$0xff]
      %v5146 = vld [vmem:[#allocation3 + $0x90] sm:$0xff]
      %v5147 = vld [vmem:[#allocation3 + $0x98] sm:$0xff]
      %v5148 = vld [vmem:[#allocation3 + $0xa0] sm:$0xff]
      %v5149 = vld [vmem:[#allocation3 + $0xa8] sm:$0xff]
      %v5150 = vld [vmem:[#allocation3 + $0xb0] sm:$0xff]
      %v5151 = vld [vmem:[#allocation3 + $0xb8] sm:$0xff]
      %v5152 = vld [vmem:[#allocation3 + $0xc0] sm:$0xff]
      %v5153 = vld [vmem:[#allocation3 + $0xc8] sm:$0xff]
      %v5154 = vld [vmem:[#allocation3 + $0xd0] sm:$0xff]
      %v5155 = vld [vmem:[#allocation3 + $0xd8] sm:$0xff]
      %v5156 = vld [vmem:[#allocation3 + $0xe0] sm:$0xff]
      %v5157 = vld [vmem:[#allocation3 + $0xe8] sm:$0xff]
      %v5158 = vld [vmem:[#allocation3 + $0xf0] sm:$0xff]
      %v5159 = vld [vmem:[#allocation3 + $0xf8] sm:$0xff]
      %v5160 = vld [vmem:[#allocation3 + $0x100] sm:$0xff]
      %v5161 = vld [vmem:[#allocation3 + $0x108] sm:$0xff]
      %v5162 = vld [vmem:[#allocation3 + $0x110] sm:$0xff]
      %v5163 = vld [vmem:[#allocation3 + $0x118] sm:$0xff]
      %s5164 = scalar_lea.vmem %s6, 32
      %v5165 = vld [vmem:[%s5164] sm:$0xff]
      %v5166 = vld [vmem:[%s5164 + $0x8] sm:$0xff]
      %v5167 = vld [vmem:[%s5164 + $0x10] sm:$0xff]
      %v5168 = vld [vmem:[%s5164 + $0x18] sm:$0xff]
      %5170 = vset.pattern.permute.xlu0 0
      %5171 = vperm.xlu0 %5170, %v5165
      %v5172 = vpop.permute.xlu0 %5171
      %5175 = vset.pattern.permute.xlu0 0
      %5176 = vperm.xlu0 %5175, %v5166
      %v5177 = vpop.permute.xlu0 %5176
      %5180 = vset.pattern.permute.xlu0 0
      %5181 = vperm.xlu0 %5180, %v5167
      %v5182 = vpop.permute.xlu0 %5181
      %5185 = vset.pattern.permute.xlu0 0
      %5186 = vperm.xlu0 %5185, %v5168
      %v5187 = vpop.permute.xlu0 %5186
      %v5197 = vunpack.c.l.b16 %v5120
      %v5198 = vunpack.c.h.b16 %v5120
      %v5199 = vunpack.c.l.b16 %v5121
      %v5200 = vunpack.c.l.b16 %v5122
      %v5201 = vunpack.c.h.b16 %v5122
      %v5202 = vunpack.c.l.b16 %v5123
      %v5203 = vunpack.c.l.b16 %v5124
      %v5204 = vunpack.c.h.b16 %v5124
      %v5205 = vunpack.c.l.b16 %v5125
      %v5206 = vunpack.c.l.b16 %v5126
      %v5207 = vunpack.c.h.b16 %v5126
      %v5208 = vunpack.c.l.b16 %v5127
      %v5209 = vpack.c.b16 %v5200, %v5197
      %v5210 = vpack.c.b16 %v5201, %v5198
      %v5211 = vpack.c.b16 %v5202, %v5199
      %v5212 = vpack.c.b16 %v5206, %v5203
      %v5213 = vpack.c.b16 %v5207, %v5204
      %v5214 = vpack.c.b16 %v5208, %v5205
      %v5255 = vunpack.c.l.b16 %v5128
      %v5256 = vunpack.c.h.b16 %v5128
      %v5257 = vunpack.c.l.b16 %v5129
      %v5258 = vunpack.c.h.b16 %v5129
      %v5259 = vunpack.c.l.b16 %v5130
      %v5260 = vunpack.c.h.b16 %v5130
      %v5261 = vunpack.c.l.b16 %v5131
      %v5262 = vunpack.c.h.b16 %v5131
      %v5263 = vunpack.c.l.b16 %v5132
      %v5264 = vunpack.c.h.b16 %v5132
      %v5265 = vunpack.c.l.b16 %v5133
      %v5266 = vunpack.c.h.b16 %v5133
      %v5267 = vunpack.c.l.b16 %v5134
      %v5268 = vunpack.c.h.b16 %v5134
      %v5269 = vunpack.c.l.b16 %v5135
      %v5270 = vunpack.c.h.b16 %v5135
      %v5271 = vunpack.c.l.b16 %v5136
      %v5272 = vunpack.c.h.b16 %v5136
      %v5273 = vunpack.c.l.b16 %v5137
      %v5274 = vunpack.c.h.b16 %v5137
      %v5275 = vunpack.c.l.b16 %v5138
      %v5276 = vunpack.c.h.b16 %v5138
      %v5277 = vunpack.c.l.b16 %v5139
      %v5278 = vunpack.c.h.b16 %v5139
      %v5279 = vunpack.c.l.b16 %v5140
      %v5280 = vunpack.c.h.b16 %v5140
      %v5281 = vunpack.c.l.b16 %v5141
      %v5282 = vunpack.c.h.b16 %v5141
      %v5283 = vunpack.c.l.b16 %v5142
      %v5284 = vunpack.c.h.b16 %v5142
      %v5285 = vunpack.c.l.b16 %v5143
      %v5286 = vunpack.c.h.b16 %v5143
      %v5287 = vunpack.c.l.b16 %v5144
      %v5288 = vunpack.c.h.b16 %v5144
      %v5289 = vunpack.c.l.b16 %v5145
      %v5290 = vunpack.c.h.b16 %v5145
      %v5291 = vunpack.c.l.b16 %v5146
      %v5292 = vunpack.c.h.b16 %v5146
      %v5293 = vunpack.c.l.b16 %v5147
      %v5294 = vunpack.c.h.b16 %v5147
      %v5295 = vunpack.c.l.b16 %v5148
      %v5296 = vunpack.c.h.b16 %v5148
      %v5297 = vunpack.c.l.b16 %v5149
      %v5298 = vunpack.c.h.b16 %v5149
      %v5299 = vunpack.c.l.b16 %v5150
      %v5300 = vunpack.c.h.b16 %v5150
      %v5301 = vunpack.c.l.b16 %v5151
      %v5302 = vunpack.c.h.b16 %v5151
      %v5303 = vunpack.c.l.b16 %v5152
      %v5304 = vunpack.c.h.b16 %v5152
      %v5305 = vunpack.c.l.b16 %v5153
      %v5306 = vunpack.c.h.b16 %v5153
      %v5307 = vunpack.c.l.b16 %v5154
      %v5308 = vunpack.c.h.b16 %v5154
      %v5309 = vunpack.c.l.b16 %v5155
      %v5310 = vunpack.c.h.b16 %v5155
      %v5311 = vunpack.c.l.b16 %v5156
      %v5312 = vunpack.c.h.b16 %v5156
      %v5313 = vunpack.c.l.b16 %v5157
      %v5314 = vunpack.c.h.b16 %v5157
      %v5315 = vunpack.c.l.b16 %v5158
      %v5316 = vunpack.c.h.b16 %v5158
      %v5317 = vunpack.c.l.b16 %v5159
      %v5318 = vunpack.c.h.b16 %v5159
      %v5319 = vunpack.c.l.b16 %v5160
      %v5320 = vunpack.c.h.b16 %v5160
      %v5321 = vunpack.c.l.b16 %v5161
      %v5322 = vunpack.c.h.b16 %v5161
      %v5323 = vunpack.c.l.b16 %v5162
      %v5324 = vunpack.c.h.b16 %v5162
      %v5325 = vunpack.c.l.b16 %v5163
      %v5326 = vunpack.c.h.b16 %v5163
      %v5327 = vpack.c.b16 %v5257, %v5255
      %v5328 = vpack.c.b16 %v5258, %v5256
      %v5329 = vpack.c.b16 %v5261, %v5259
      %v5330 = vpack.c.b16 %v5262, %v5260
      %v5331 = vpack.c.b16 %v5265, %v5263
      %v5332 = vpack.c.b16 %v5266, %v5264
      %v5333 = vpack.c.b16 %v5269, %v5267
      %v5334 = vpack.c.b16 %v5270, %v5268
      %v5335 = vpack.c.b16 %v5273, %v5271
      %v5336 = vpack.c.b16 %v5274, %v5272
      %v5337 = vpack.c.b16 %v5277, %v5275
      %v5338 = vpack.c.b16 %v5278, %v5276
      %v5339 = vpack.c.b16 %v5281, %v5279
      %v5340 = vpack.c.b16 %v5282, %v5280
      %v5341 = vpack.c.b16 %v5285, %v5283
      %v5342 = vpack.c.b16 %v5286, %v5284
      %v5343 = vpack.c.b16 %v5289, %v5287
      %v5344 = vpack.c.b16 %v5290, %v5288
      %v5345 = vpack.c.b16 %v5293, %v5291
      %v5346 = vpack.c.b16 %v5294, %v5292
      %v5347 = vpack.c.b16 %v5297, %v5295
      %v5348 = vpack.c.b16 %v5298, %v5296
      %v5349 = vpack.c.b16 %v5301, %v5299
      %v5350 = vpack.c.b16 %v5302, %v5300
      %v5351 = vpack.c.b16 %v5305, %v5303
      %v5352 = vpack.c.b16 %v5306, %v5304
      %v5353 = vpack.c.b16 %v5309, %v5307
      %v5354 = vpack.c.b16 %v5310, %v5308
      %v5355 = vpack.c.b16 %v5313, %v5311
      %v5356 = vpack.c.b16 %v5314, %v5312
      %v5357 = vpack.c.b16 %v5317, %v5315
      %v5358 = vpack.c.b16 %v5318, %v5316
      %v5359 = vpack.c.b16 %v5321, %v5319
      %v5360 = vpack.c.b16 %v5322, %v5320
      %v5361 = vpack.c.b16 %v5325, %v5323
      %v5362 = vpack.c.b16 %v5326, %v5324
      %v5400 = vsel %vm2038, %v5211, 0
      %v5403 = vsel %vm2038, %v5214, 0
      %5405 = vmatprep.subr.bf16.mxu0 %v5342
      %5406 = vmatpush1.bf16.msra.mxu0 %v5341
      %5407 = vmatprep.subr.bf16.mxu0 %v5340
      %5408 = vmatpush1.bf16.msra.mxu0 %v5339
      %5409 = vmatprep.subr.bf16.mxu0 %v5338
      %5410 = vmatpush1.bf16.msra.mxu0 %v5337
      %5411 = vmatprep.subr.bf16.mxu0 %v5336
      %5412 = vmatpush1.bf16.msra.mxu0 %v5335
      %5413 = vmatprep.subr.bf16.mxu0 %v5334
      %5414 = vmatpush1.bf16.msra.mxu0 %v5333
      %5415 = vmatprep.subr.bf16.mxu0 %v5332
      %5416 = vmatpush1.bf16.msra.mxu0 %v5331
      %5417 = vmatprep.subr.bf16.mxu0 %v5330
      %5418 = vmatpush1.bf16.msra.mxu0 %v5329
      %5419 = vmatprep.subr.bf16.mxu0 %v5328
      %5420 = vmatpush1.bf16.msra.mxu0 %v5327
      %5421 = vmatprep.subr.bf16.mxu0 %v5358
      %5422 = vmatpush2.bf16.msra.mxu0 %v5357
      %5423 = vmatprep.subr.bf16.mxu0 %v5356
      %5424 = vmatpush2.bf16.msra.mxu0 %v5355
      %5425 = vmatprep.subr.bf16.mxu0 %v5354
      %5426 = vmatpush2.bf16.msra.mxu0 %v5353
      %5427 = vmatprep.subr.bf16.mxu0 %v5352
      %5428 = vmatpush2.bf16.msra.mxu0 %v5351
      %5429 = vmatprep.subr.bf16.mxu0 %v5350
      %5430 = vmatpush2.bf16.msra.mxu0 %v5349
      %5431 = vmatprep.subr.bf16.mxu0 %v5348
      %5432 = vmatpush2.bf16.msra.mxu0 %v5347
      %5433 = vmatprep.subr.bf16.mxu0 %v5346
      %5434 = vmatpush2.bf16.msra.mxu0 %v5345
      %5435 = vmatprep.subr.bf16.mxu0 %v5344
      %5436 = vmatpush2.bf16.msra.mxu0 %v5343
      %5437 = vmatprep.mubr.bf16.mxu0 %v5210
      %5438 = vmatmul.mubr.bf16.gmra.mxu0 %v5209
      %v5439 = vpop.f32.mrf.mxu0
      %v5440 = vadd.f32 %v5172, %v5439
      %v5441 = vpop.f32.mrf.mxu0
      %v5442 = vadd.f32 %v5172, %v5441
      %v5443 = vpop.f32.mrf.mxu0
      %v5444 = vadd.f32 %v5177, %v5443
      %v5445 = vpop.f32.mrf.mxu0
      %v5446 = vadd.f32 %v5177, %v5445
      %5447 = vmatprep.mubr.bf16.mxu0 %v5213
      %5448 = vmatmul.mubr.bf16.gmra.mxu0 %v5212
      %v5449 = vpop.f32.mrf.mxu0
      %v5450 = vadd.f32 %v5182, %v5449
      %v5451 = vpop.f32.mrf.mxu0
      %v5452 = vadd.f32 %v5182, %v5451
      %v5453 = vpop.f32.mrf.mxu0
      %v5454 = vadd.f32 %v5187, %v5453
      %v5455 = vpop.f32.mrf.mxu0
      %v5456 = vadd.f32 %v5187, %v5455
      %5457 = vdwg.mxu0
      %5458 = vmatprep.subr.bf16.mxu0 0
      %5459 = vmatpush1.bf16.msra.mxu0 0
      %5460 = vmatprep.subr.bf16.mxu0 0
      %5461 = vmatpush1.bf16.msra.mxu0 0
      %5462 = vmatprep.subr.bf16.mxu0 0
      %5463 = vmatpush1.bf16.msra.mxu0 0
      %5464 = vmatprep.subr.bf16.mxu0 0
      %5465 = vmatpush1.bf16.msra.mxu0 0
      %5466 = vmatprep.subr.bf16.mxu0 0
      %5467 = vmatpush1.bf16.msra.mxu0 0
      %5468 = vmatprep.subr.bf16.mxu0 0
      %5469 = vmatpush1.bf16.msra.mxu0 0
      %5470 = vmatprep.subr.bf16.mxu0 %v5362
      %5471 = vmatpush1.bf16.msra.mxu0 %v5361
      %5472 = vmatprep.subr.bf16.mxu0 %v5360
      %5473 = vmatpush1.bf16.msra.mxu0 %v5359
      %5474 = vmatprep.subr.bf16.mxu0 0
      %5475 = vmatpush2.bf16.msra.mxu0 0
      %5476 = vmatprep.subr.bf16.mxu0 0
      %5477 = vmatpush2.bf16.msra.mxu0 0
      %5478 = vmatprep.subr.bf16.mxu0 0
      %5479 = vmatpush2.bf16.msra.mxu0 0
      %5480 = vmatprep.subr.bf16.mxu0 0
      %5481 = vmatpush2.bf16.msra.mxu0 0
      %5482 = vmatprep.subr.bf16.mxu0 0
      %5483 = vmatpush2.bf16.msra.mxu0 0
      %5484 = vmatprep.subr.bf16.mxu0 0
      %5485 = vmatpush2.bf16.msra.mxu0 0
      %5486 = vmatprep.subr.bf16.mxu0 0
      %5487 = vmatpush2.bf16.msra.mxu0 0
      %5488 = vmatprep.subr.bf16.mxu0 0
      %5489 = vmatpush2.bf16.msra.mxu0 0
      %5490 = vmatprep.mubr.bf16.mxu0 0
      %5491 = vmatmul.mubr.bf16.gmra.mxu0 %v5400
      %v5492 = vpop.f32.mrf.mxu0
      %v5493 = vadd.f32 %v5440, %v5492
      %v5494 = vpop.f32.mrf.mxu0
      %v5495 = vadd.f32 %v5442, %v5494
      %v5496 = vpop.f32.mrf.mxu0
      %v5497 = vadd.f32 %v5444, %v5496
      %v5498 = vpop.f32.mrf.mxu0
      %v5499 = vadd.f32 %v5446, %v5498
      %5500 = vmatprep.mubr.bf16.mxu0 0
      %5501 = vmatmul.mubr.bf16.gmra.mxu0 %v5403
      %v5502 = vpop.f32.mrf.mxu0
      %v5503 = vadd.f32 %v5450, %v5502
      %v5504 = vpop.f32.mrf.mxu0
      %v5505 = vadd.f32 %v5452, %v5504
      %v5506 = vpop.f32.mrf.mxu0
      %v5507 = vadd.f32 %v5454, %v5506
      %v5508 = vpop.f32.mrf.mxu0
      %v5509 = vadd.f32 %v5456, %v5508
      %5510 = vdwg.mxu0
      %v5511 = vmax.f32 %v5493, 0.0
      %v5512 = vmax.f32 %v5495, 0.0
      %v5513 = vmax.f32 %v5497, 0.0
      %v5514 = vmax.f32 %v5499, 0.0
      %v5515 = vmax.f32 %v5503, 0.0
      %v5516 = vmax.f32 %v5505, 0.0
      %v5517 = vmax.f32 %v5507, 0.0
      %v5518 = vmax.f32 %v5509, 0.0
      %5519 = vst.msk [vmem:[#allocation3] sm:$0xf] %vm1203, 0
      %5520 = vst.msk [vmem:[#allocation3 + $0x8] sm:$0xf] %vm1203, 0
      %5521 = vst.msk [vmem:[#allocation3 + $0x10] sm:$0xf] %vm1203, 0
      %5522 = vst.msk [vmem:[#allocation3 + $0x18] sm:$0xf] %vm1203, 0
      %v5523 = vmul.f32 %v5511, %v1212
      %v5524 = vmul.f32 %v5512, %v1211
      %v5525 = vmul.f32 %v5513, %v1212
      %v5526 = vmul.f32 %v5514, %v1211
      %v5527 = vmul.f32 %v5515, %v1212
      %v5528 = vmul.f32 %v5516, %v1211
      %v5529 = vmul.f32 %v5517, %v1212
      %v5530 = vmul.f32 %v5518, %v1211
      %v5531 = vpack.c.bf16 %v5525, %v5523
      %v5532 = vpack.c.bf16 %v5526, %v5524
      %v5533 = vpack.c.bf16 %v5529, %v5527
      %v5534 = vpack.c.bf16 %v5530, %v5528
      %v5539 = vunpack.c.l.b16 %v5531
      %v5540 = vunpack.c.l.b16 %v5532
      %v5541 = vunpack.c.h.b16 %v5531
      %v5542 = vunpack.c.h.b16 %v5532
      %v5543 = vunpack.c.l.b16 %v5533
      %v5544 = vunpack.c.l.b16 %v5534
      %v5545 = vunpack.c.h.b16 %v5533
      %v5546 = vunpack.c.h.b16 %v5534
      %v5547 = vpack.c.b16 %v5540, %v5539
      %v5548 = vpack.c.b16 %v5542, %v5541
      %v5549 = vpack.c.b16 %v5544, %v5543
      %v5550 = vpack.c.b16 %v5546, %v5545
      %5551 = vrot.lane.b32.xlu0 %v5547, 17
      %v5552 = vpop.permute.xlu0 %5551
      %5553 = vrot.lane.b32.xlu0 %v5548, 17
      %v5554 = vpop.permute.xlu0 %5553
      %5555 = vrot.lane.b32.xlu0 %v5549, 17
      %v5556 = vpop.permute.xlu0 %5555
      %5557 = vrot.lane.b32.xlu0 %v5550, 17
      %v5558 = vpop.permute.xlu0 %5557
      %v5559 = vrot.slane %v5552, 4
      %v5560 = vrot.slane %v5554, 4
      %v5561 = vrot.slane %v5556, 4
      %v5562 = vrot.slane %v5558, 4
      %v5563 = vsel %vm676, %v5559, %v5552
      %v5564 = vsel %vm676, %v5560, %v5554
      %v5565 = vsel %vm676, %v5561, %v5556
      %v5566 = vsel %vm676, %v5562, %v5558
      %5571 = vst.msk [vmem:[#allocation3] sm:$0xff] %vm1265, %v5563
      %5572 = vst.msk [vmem:[#allocation3 + $0x8] sm:$0xff] %vm1265, %v5564
      %5573 = vst.msk [vmem:[#allocation3 + $0x10] sm:$0xff] %vm1265, %v5565
      %5574 = vst.msk [vmem:[#allocation3 + $0x18] sm:$0xff] %vm1265, %v5566
      %5575 = vst.msk [vmem:[#allocation3 + $0x20] sm:$0xf] %vm1270, 0
      %5576 = vst.msk [vmem:[#allocation3 + $0x28] sm:$0xf] %vm1270, 0
      %5577 = vst.msk [vmem:[#allocation3 + $0x30] sm:$0xf] %vm1270, 0
      %5578 = vst.msk [vmem:[#allocation3 + $0x38] sm:$0xf] %vm1270, 0
      %v5579 = vmul.f32 %v5511, %v1279
      %v5580 = vmul.f32 %v5512, %v1278
      %v5581 = vmul.f32 %v5513, %v1279
      %v5582 = vmul.f32 %v5514, %v1278
      %v5583 = vmul.f32 %v5515, %v1279
      %v5584 = vmul.f32 %v5516, %v1278
      %v5585 = vmul.f32 %v5517, %v1279
      %v5586 = vmul.f32 %v5518, %v1278
      %v5587 = vpack.c.bf16 %v5581, %v5579
      %v5588 = vpack.c.bf16 %v5582, %v5580
      %v5589 = vpack.c.bf16 %v5585, %v5583
      %v5590 = vpack.c.bf16 %v5586, %v5584
      %v5595 = vunpack.c.l.b16 %v5587
      %v5596 = vunpack.c.l.b16 %v5588
      %v5597 = vunpack.c.h.b16 %v5587
      %v5598 = vunpack.c.h.b16 %v5588
      %v5599 = vunpack.c.l.b16 %v5589
      %v5600 = vunpack.c.l.b16 %v5590
      %v5601 = vunpack.c.h.b16 %v5589
      %v5602 = vunpack.c.h.b16 %v5590
      %v5603 = vpack.c.b16 %v5596, %v5595
      %v5604 = vpack.c.b16 %v5598, %v5597
      %v5605 = vpack.c.b16 %v5600, %v5599
      %v5606 = vpack.c.b16 %v5602, %v5601
      %5607 = vrot.lane.b32.xlu0 %v5603, 16
      %v5608 = vpop.permute.xlu0 %5607
      %5609 = vrot.lane.b32.xlu0 %v5604, 16
      %v5610 = vpop.permute.xlu0 %5609
      %5611 = vrot.lane.b32.xlu0 %v5605, 16
      %v5612 = vpop.permute.xlu0 %5611
      %5613 = vrot.lane.b32.xlu0 %v5606, 16
      %v5614 = vpop.permute.xlu0 %5613
      %v5615 = vrot.slane %v5608, 4
      %v5616 = vrot.slane %v5610, 4
      %v5617 = vrot.slane %v5612, 4
      %v5618 = vrot.slane %v5614, 4
      %v5619 = vsel %vm724, %v5615, %v5608
      %v5620 = vsel %vm724, %v5616, %v5610
      %v5621 = vsel %vm724, %v5617, %v5612
      %v5622 = vsel %vm724, %v5618, %v5614
      %5627 = vst.msk [vmem:[#allocation3 + $0x20] sm:$0xff] %vm1331, %v5619
      %5628 = vst.msk [vmem:[#allocation3 + $0x28] sm:$0xff] %vm1331, %v5620
      %5629 = vst.msk [vmem:[#allocation3 + $0x30] sm:$0xff] %vm1331, %v5621
      %5630 = vst.msk [vmem:[#allocation3 + $0x38] sm:$0xff] %vm1331, %v5622
      %5631 = vst.msk [vmem:[#allocation3 + $0x40] sm:$0xf] %vm1336, 0
      %5632 = vst.msk [vmem:[#allocation3 + $0x48] sm:$0xf] %vm1336, 0
      %5633 = vst.msk [vmem:[#allocation3 + $0x50] sm:$0xf] %vm1336, 0
      %5634 = vst.msk [vmem:[#allocation3 + $0x58] sm:$0xf] %vm1336, 0
      %v5635 = vmul.f32 %v5511, %v1345
      %v5636 = vmul.f32 %v5512, %v1344
      %v5637 = vmul.f32 %v5513, %v1345
      %v5638 = vmul.f32 %v5514, %v1344
      %v5639 = vmul.f32 %v5515, %v1345
      %v5640 = vmul.f32 %v5516, %v1344
      %v5641 = vmul.f32 %v5517, %v1345
      %v5642 = vmul.f32 %v5518, %v1344
      %v5643 = vpack.c.bf16 %v5637, %v5635
      %v5644 = vpack.c.bf16 %v5638, %v5636
      %v5645 = vpack.c.bf16 %v5641, %v5639
      %v5646 = vpack.c.bf16 %v5642, %v5640
      %v5651 = vunpack.c.l.b16 %v5643
      %v5652 = vunpack.c.l.b16 %v5644
      %v5653 = vunpack.c.h.b16 %v5643
      %v5654 = vunpack.c.h.b16 %v5644
      %v5655 = vunpack.c.l.b16 %v5645
      %v5656 = vunpack.c.l.b16 %v5646
      %v5657 = vunpack.c.h.b16 %v5645
      %v5658 = vunpack.c.h.b16 %v5646
      %v5659 = vpack.c.b16 %v5652, %v5651
      %v5660 = vpack.c.b16 %v5654, %v5653
      %v5661 = vpack.c.b16 %v5656, %v5655
      %v5662 = vpack.c.b16 %v5658, %v5657
      %5663 = vrot.lane.b32.xlu0 %v5659, 15
      %v5664 = vpop.permute.xlu0 %5663
      %5665 = vrot.lane.b32.xlu0 %v5660, 15
      %v5666 = vpop.permute.xlu0 %5665
      %5667 = vrot.lane.b32.xlu0 %v5661, 15
      %v5668 = vpop.permute.xlu0 %5667
      %5669 = vrot.lane.b32.xlu0 %v5662, 15
      %v5670 = vpop.permute.xlu0 %5669
      %v5671 = vrot.slane %v5664, 4
      %v5672 = vrot.slane %v5666, 4
      %v5673 = vrot.slane %v5668, 4
      %v5674 = vrot.slane %v5670, 4
      %v5675 = vsel %vm769, %v5671, %v5664
      %v5676 = vsel %vm769, %v5672, %v5666
      %v5677 = vsel %vm769, %v5673, %v5668
      %v5678 = vsel %vm769, %v5674, %v5670
      %5683 = vst.msk [vmem:[#allocation3 + $0x40] sm:$0xff] %vm1397, %v5675
      %5684 = vst.msk [vmem:[#allocation3 + $0x48] sm:$0xff] %vm1397, %v5676
      %5685 = vst.msk [vmem:[#allocation3 + $0x50] sm:$0xff] %vm1397, %v5677
      %5686 = vst.msk [vmem:[#allocation3 + $0x58] sm:$0xff] %vm1397, %v5678
      %5687 = vst.msk [vmem:[#allocation3 + $0x60] sm:$0xf] %vm1402, 0
      %5688 = vst.msk [vmem:[#allocation3 + $0x68] sm:$0xf] %vm1402, 0
      %5689 = vst.msk [vmem:[#allocation3 + $0x70] sm:$0xf] %vm1402, 0
      %5690 = vst.msk [vmem:[#allocation3 + $0x78] sm:$0xf] %vm1402, 0
      %v5691 = vmul.f32 %v5511, %v1411
      %v5692 = vmul.f32 %v5512, %v1410
      %v5693 = vmul.f32 %v5513, %v1411
      %v5694 = vmul.f32 %v5514, %v1410
      %v5695 = vmul.f32 %v5515, %v1411
      %v5696 = vmul.f32 %v5516, %v1410
      %v5697 = vmul.f32 %v5517, %v1411
      %v5698 = vmul.f32 %v5518, %v1410
      %v5699 = vpack.c.bf16 %v5693, %v5691
      %v5700 = vpack.c.bf16 %v5694, %v5692
      %v5701 = vpack.c.bf16 %v5697, %v5695
      %v5702 = vpack.c.bf16 %v5698, %v5696
      %v5707 = vunpack.c.l.b16 %v5699
      %v5708 = vunpack.c.l.b16 %v5700
      %v5709 = vunpack.c.h.b16 %v5699
      %v5710 = vunpack.c.h.b16 %v5700
      %v5711 = vunpack.c.l.b16 %v5701
      %v5712 = vunpack.c.l.b16 %v5702
      %v5713 = vunpack.c.h.b16 %v5701
      %v5714 = vunpack.c.h.b16 %v5702
      %v5715 = vpack.c.b16 %v5708, %v5707
      %v5716 = vpack.c.b16 %v5710, %v5709
      %v5717 = vpack.c.b16 %v5712, %v5711
      %v5718 = vpack.c.b16 %v5714, %v5713
      %5719 = vrot.lane.b32.xlu0 %v5715, 1
      %v5720 = vpop.permute.xlu0 %5719
      %5721 = vrot.lane.b32.xlu0 %v5716, 1
      %v5722 = vpop.permute.xlu0 %5721
      %5723 = vrot.lane.b32.xlu0 %v5717, 1
      %v5724 = vpop.permute.xlu0 %5723
      %5725 = vrot.lane.b32.xlu0 %v5718, 1
      %v5726 = vpop.permute.xlu0 %5725
      %v5727 = vrot.slane %v5720, 4
      %v5728 = vrot.slane %v5722, 4
      %v5729 = vrot.slane %v5724, 4
      %v5730 = vrot.slane %v5726, 4
      %v5731 = vsel %vm814, %v5727, %v5720
      %v5732 = vsel %vm814, %v5728, %v5722
      %v5733 = vsel %vm814, %v5729, %v5724
      %v5734 = vsel %vm814, %v5730, %v5726
      %5739 = vst.msk [vmem:[#allocation3 + $0x60] sm:$0xff] %vm1463, %v5731
      %5740 = vst.msk [vmem:[#allocation3 + $0x68] sm:$0xff] %vm1463, %v5732
      %5741 = vst.msk [vmem:[#allocation3 + $0x70] sm:$0xff] %vm1463, %v5733
      %5742 = vst.msk [vmem:[#allocation3 + $0x78] sm:$0xff] %vm1463, %v5734
      %v5743 = vpack.c.bf16 %v5513, %v5511
      %v5744 = vpack.c.bf16 %v5514, %v5512
      %v5745 = vpack.c.bf16 %v5517, %v5515
      %v5746 = vpack.c.bf16 %v5518, %v5516
      %v5751 = vunpack.c.l.b16 %v5743
      %v5752 = vunpack.c.l.b16 %v5744
      %v5753 = vunpack.c.h.b16 %v5743
      %v5754 = vunpack.c.h.b16 %v5744
      %v5755 = vunpack.c.l.b16 %v5745
      %v5756 = vunpack.c.l.b16 %v5746
      %v5757 = vunpack.c.h.b16 %v5745
      %v5758 = vunpack.c.h.b16 %v5746
      %v5759 = vpack.c.b16 %v5752, %v5751
      %v5760 = vpack.c.b16 %v5754, %v5753
      %v5761 = vpack.c.b16 %v5756, %v5755
      %v5762 = vpack.c.b16 %v5758, %v5757
      %5767 = vst [vmem:[#allocation3 + $0x80] sm:$0xff] %v5759
      %5768 = vst [vmem:[#allocation3 + $0x88] sm:$0xff] %v5760
      %5769 = vst [vmem:[#allocation3 + $0x90] sm:$0xff] %v5761
      %5770 = vst [vmem:[#allocation3 + $0x98] sm:$0xff] %v5762
      %v5771 = vmul.f32 %v5511, %v1497
      %v5772 = vmul.f32 %v5512, %v1500
      %v5773 = vmul.f32 %v5513, %v1497
      %v5774 = vmul.f32 %v5514, %v1500
      %v5775 = vmul.f32 %v5515, %v1497
      %v5776 = vmul.f32 %v5516, %v1500
      %v5777 = vmul.f32 %v5517, %v1497
      %v5778 = vmul.f32 %v5518, %v1500
      %v5779 = vpack.c.bf16 %v5773, %v5771
      %v5780 = vpack.c.bf16 %v5774, %v5772
      %v5781 = vpack.c.bf16 %v5777, %v5775
      %v5782 = vpack.c.bf16 %v5778, %v5776
      %v5787 = vunpack.c.l.b16 %v5779
      %v5788 = vunpack.c.l.b16 %v5780
      %v5789 = vunpack.c.h.b16 %v5779
      %v5790 = vunpack.c.h.b16 %v5780
      %v5791 = vunpack.c.l.b16 %v5781
      %v5792 = vunpack.c.l.b16 %v5782
      %v5793 = vunpack.c.h.b16 %v5781
      %v5794 = vunpack.c.h.b16 %v5782
      %v5795 = vpack.c.b16 %v5788, %v5787
      %v5796 = vpack.c.b16 %v5790, %v5789
      %v5797 = vpack.c.b16 %v5792, %v5791
      %v5798 = vpack.c.b16 %v5794, %v5793
      %5799 = vrot.lane.b32.xlu0 %v5795, 127
      %v5800 = vpop.permute.xlu0 %5799
      %5801 = vrot.lane.b32.xlu0 %v5796, 127
      %v5802 = vpop.permute.xlu0 %5801
      %5803 = vrot.lane.b32.xlu0 %v5797, 127
      %v5804 = vpop.permute.xlu0 %5803
      %5805 = vrot.lane.b32.xlu0 %v5798, 127
      %v5806 = vpop.permute.xlu0 %5805
      %v5807 = vrot.slane %v5800, 4
      %v5808 = vrot.slane %v5802, 4
      %v5809 = vrot.slane %v5804, 4
      %v5810 = vrot.slane %v5806, 4
      %v5811 = vsel %vm871, %v5800, %v5807
      %v5812 = vsel %vm871, %v5802, %v5808
      %v5813 = vsel %vm871, %v5804, %v5809
      %v5814 = vsel %vm871, %v5806, %v5810
      %5819 = vst.msk [vmem:[#allocation3 + $0xa0] sm:$0xff] %vm1552, %v5811
      %5820 = vst.msk [vmem:[#allocation3 + $0xa8] sm:$0xff] %vm1552, %v5812
      %5821 = vst.msk [vmem:[#allocation3 + $0xb0] sm:$0xff] %vm1552, %v5813
      %5822 = vst.msk [vmem:[#allocation3 + $0xb8] sm:$0xff] %vm1552, %v5814
      %5823 = vst.msk [vmem:[#allocation3 + $0xa4] sm:$0xf] %vm1557, 0
      %5824 = vst.msk [vmem:[#allocation3 + $0xac] sm:$0xf] %vm1557, 0
      %5825 = vst.msk [vmem:[#allocation3 + $0xb4] sm:$0xf] %vm1557, 0
      %5826 = vst.msk [vmem:[#allocation3 + $0xbc] sm:$0xf] %vm1557, 0
      %v5827 = vmul.f32 %v5511, %v1563
      %v5828 = vmul.f32 %v5512, %v1566
      %v5829 = vmul.f32 %v5513, %v1563
      %v5830 = vmul.f32 %v5514, %v1566
      %v5831 = vmul.f32 %v5515, %v1563
      %v5832 = vmul.f32 %v5516, %v1566
      %v5833 = vmul.f32 %v5517, %v1563
      %v5834 = vmul.f32 %v5518, %v1566
      %v5835 = vpack.c.bf16 %v5829, %v5827
      %v5836 = vpack.c.bf16 %v5830, %v5828
      %v5837 = vpack.c.bf16 %v5833, %v5831
      %v5838 = vpack.c.bf16 %v5834, %v5832
      %v5843 = vunpack.c.l.b16 %v5835
      %v5844 = vunpack.c.l.b16 %v5836
      %v5845 = vunpack.c.h.b16 %v5835
      %v5846 = vunpack.c.h.b16 %v5836
      %v5847 = vunpack.c.l.b16 %v5837
      %v5848 = vunpack.c.l.b16 %v5838
      %v5849 = vunpack.c.h.b16 %v5837
      %v5850 = vunpack.c.h.b16 %v5838
      %v5851 = vpack.c.b16 %v5844, %v5843
      %v5852 = vpack.c.b16 %v5846, %v5845
      %v5853 = vpack.c.b16 %v5848, %v5847
      %v5854 = vpack.c.b16 %v5850, %v5849
      %5855 = vrot.lane.b32.xlu0 %v5851, 113
      %v5856 = vpop.permute.xlu0 %5855
      %5857 = vrot.lane.b32.xlu0 %v5852, 113
      %v5858 = vpop.permute.xlu0 %5857
      %5859 = vrot.lane.b32.xlu0 %v5853, 113
      %v5860 = vpop.permute.xlu0 %5859
      %5861 = vrot.lane.b32.xlu0 %v5854, 113
      %v5862 = vpop.permute.xlu0 %5861
      %v5863 = vrot.slane %v5856, 4
      %v5864 = vrot.slane %v5858, 4
      %v5865 = vrot.slane %v5860, 4
      %v5866 = vrot.slane %v5862, 4
      %v5867 = vsel %vm916, %v5856, %v5863
      %v5868 = vsel %vm916, %v5858, %v5864
      %v5869 = vsel %vm916, %v5860, %v5865
      %v5870 = vsel %vm916, %v5862, %v5866
      %5875 = vst.msk [vmem:[#allocation3 + $0xc0] sm:$0xff] %vm1618, %v5867
      %5876 = vst.msk [vmem:[#allocation3 + $0xc8] sm:$0xff] %vm1618, %v5868
      %5877 = vst.msk [vmem:[#allocation3 + $0xd0] sm:$0xff] %vm1618, %v5869
      %5878 = vst.msk [vmem:[#allocation3 + $0xd8] sm:$0xff] %vm1618, %v5870
      %5879 = vst.msk [vmem:[#allocation3 + $0xc4] sm:$0xf] %vm1623, 0
      %5880 = vst.msk [vmem:[#allocation3 + $0xcc] sm:$0xf] %vm1623, 0
      %5881 = vst.msk [vmem:[#allocation3 + $0xd4] sm:$0xf] %vm1623, 0
      %5882 = vst.msk [vmem:[#allocation3 + $0xdc] sm:$0xf] %vm1623, 0
      %v5883 = vmul.f32 %v5511, %v1629
      %v5884 = vmul.f32 %v5512, %v1632
      %v5885 = vmul.f32 %v5513, %v1629
      %v5886 = vmul.f32 %v5514, %v1632
      %v5887 = vmul.f32 %v5515, %v1629
      %v5888 = vmul.f32 %v5516, %v1632
      %v5889 = vmul.f32 %v5517, %v1629
      %v5890 = vmul.f32 %v5518, %v1632
      %v5891 = vpack.c.bf16 %v5885, %v5883
      %v5892 = vpack.c.bf16 %v5886, %v5884
      %v5893 = vpack.c.bf16 %v5889, %v5887
      %v5894 = vpack.c.bf16 %v5890, %v5888
      %v5899 = vunpack.c.l.b16 %v5891
      %v5900 = vunpack.c.l.b16 %v5892
      %v5901 = vunpack.c.h.b16 %v5891
      %v5902 = vunpack.c.h.b16 %v5892
      %v5903 = vunpack.c.l.b16 %v5893
      %v5904 = vunpack.c.l.b16 %v5894
      %v5905 = vunpack.c.h.b16 %v5893
      %v5906 = vunpack.c.h.b16 %v5894
      %v5907 = vpack.c.b16 %v5900, %v5899
      %v5908 = vpack.c.b16 %v5902, %v5901
      %v5909 = vpack.c.b16 %v5904, %v5903
      %v5910 = vpack.c.b16 %v5906, %v5905
      %5911 = vrot.lane.b32.xlu0 %v5907, 112
      %v5912 = vpop.permute.xlu0 %5911
      %5913 = vrot.lane.b32.xlu0 %v5908, 112
      %v5914 = vpop.permute.xlu0 %5913
      %5915 = vrot.lane.b32.xlu0 %v5909, 112
      %v5916 = vpop.permute.xlu0 %5915
      %5917 = vrot.lane.b32.xlu0 %v5910, 112
      %v5918 = vpop.permute.xlu0 %5917
      %v5919 = vrot.slane %v5912, 4
      %v5920 = vrot.slane %v5914, 4
      %v5921 = vrot.slane %v5916, 4
      %v5922 = vrot.slane %v5918, 4
      %v5923 = vsel %vm961, %v5912, %v5919
      %v5924 = vsel %vm961, %v5914, %v5920
      %v5925 = vsel %vm961, %v5916, %v5921
      %v5926 = vsel %vm961, %v5918, %v5922
      %5931 = vst.msk [vmem:[#allocation3 + $0xe0] sm:$0xff] %vm1684, %v5923
      %5932 = vst.msk [vmem:[#allocation3 + $0xe8] sm:$0xff] %vm1684, %v5924
      %5933 = vst.msk [vmem:[#allocation3 + $0xf0] sm:$0xff] %vm1684, %v5925
      %5934 = vst.msk [vmem:[#allocation3 + $0xf8] sm:$0xff] %vm1684, %v5926
      %5935 = vst.msk [vmem:[#allocation3 + $0xe4] sm:$0xf] %vm1689, 0
      %5936 = vst.msk [vmem:[#allocation3 + $0xec] sm:$0xf] %vm1689, 0
      %5937 = vst.msk [vmem:[#allocation3 + $0xf4] sm:$0xf] %vm1689, 0
      %5938 = vst.msk [vmem:[#allocation3 + $0xfc] sm:$0xf] %vm1689, 0
      %v5939 = vmul.f32 %v5511, %v1695
      %v5940 = vmul.f32 %v5512, %v1698
      %v5941 = vmul.f32 %v5513, %v1695
      %v5942 = vmul.f32 %v5514, %v1698
      %v5943 = vmul.f32 %v5515, %v1695
      %v5944 = vmul.f32 %v5516, %v1698
      %v5945 = vmul.f32 %v5517, %v1695
      %v5946 = vmul.f32 %v5518, %v1698
      %v5947 = vpack.c.bf16 %v5941, %v5939
      %v5948 = vpack.c.bf16 %v5942, %v5940
      %v5949 = vpack.c.bf16 %v5945, %v5943
      %v5950 = vpack.c.bf16 %v5946, %v5944
      %v5955 = vunpack.c.l.b16 %v5947
      %v5956 = vunpack.c.l.b16 %v5948
      %v5957 = vunpack.c.h.b16 %v5947
      %v5958 = vunpack.c.h.b16 %v5948
      %v5959 = vunpack.c.l.b16 %v5949
      %v5960 = vunpack.c.l.b16 %v5950
      %v5961 = vunpack.c.h.b16 %v5949
      %v5962 = vunpack.c.h.b16 %v5950
      %v5963 = vpack.c.b16 %v5956, %v5955
      %v5964 = vpack.c.b16 %v5958, %v5957
      %v5965 = vpack.c.b16 %v5960, %v5959
      %v5966 = vpack.c.b16 %v5962, %v5961
      %5967 = vrot.lane.b32.xlu0 %v5963, 111
      %v5968 = vpop.permute.xlu0 %5967
      %5969 = vrot.lane.b32.xlu0 %v5964, 111
      %v5970 = vpop.permute.xlu0 %5969
      %5971 = vrot.lane.b32.xlu0 %v5965, 111
      %v5972 = vpop.permute.xlu0 %5971
      %5973 = vrot.lane.b32.xlu0 %v5966, 111
      %v5974 = vpop.permute.xlu0 %5973
      %v5975 = vrot.slane %v5968, 4
      %v5976 = vrot.slane %v5970, 4
      %v5977 = vrot.slane %v5972, 4
      %v5978 = vrot.slane %v5974, 4
      %v5979 = vsel %vm1006, %v5968, %v5975
      %v5980 = vsel %vm1006, %v5970, %v5976
      %v5981 = vsel %vm1006, %v5972, %v5977
      %v5982 = vsel %vm1006, %v5974, %v5978
      %5987 = vst.msk [vmem:[#allocation3 + $0x100] sm:$0xff] %vm1750, %v5979
      %5988 = vst.msk [vmem:[#allocation3 + $0x108] sm:$0xff] %vm1750, %v5980
      %5989 = vst.msk [vmem:[#allocation3 + $0x110] sm:$0xff] %vm1750, %v5981
      %5990 = vst.msk [vmem:[#allocation3 + $0x118] sm:$0xff] %vm1750, %v5982
      %5991 = vst.msk [vmem:[#allocation3 + $0x104] sm:$0xf] %vm1755, 0
      %5992 = vst.msk [vmem:[#allocation3 + $0x10c] sm:$0xf] %vm1755, 0
      %5993 = vst.msk [vmem:[#allocation3 + $0x114] sm:$0xf] %vm1755, 0
      %5994 = vst.msk [vmem:[#allocation3 + $0x11c] sm:$0xf] %vm1755, 0
      %s5995 = scalar_lea.vmem %s7, 48
      %v5996 = vld [vmem:[%s5995] sm:$0xff]
      %v5997 = vld [vmem:[%s5995 + $0x8] sm:$0xf]
      %v5998 = vld [vmem:[%s5995 + $0xc] sm:$0xff]
      %v5999 = vld [vmem:[%s5995 + $0x14] sm:$0xf]
      %v6000 = vld [vmem:[%s5995 + $0x18] sm:$0xff]
      %v6001 = vld [vmem:[%s5995 + $0x20] sm:$0xf]
      %v6002 = vld [vmem:[%s5995 + $0x24] sm:$0xff]
      %v6003 = vld [vmem:[%s5995 + $0x2c] sm:$0xf]
      %v6004 = vld [vmem:[#allocation3] sm:$0xff]
      %v6005 = vld [vmem:[#allocation3 + $0x8] sm:$0xff]
      %v6006 = vld [vmem:[#allocation3 + $0x10] sm:$0xff]
      %v6007 = vld [vmem:[#allocation3 + $0x18] sm:$0xff]
      %v6008 = vld [vmem:[#allocation3 + $0x20] sm:$0xff]
      %v6009 = vld [vmem:[#allocation3 + $0x28] sm:$0xff]
      %v6010 = vld [vmem:[#allocation3 + $0x30] sm:$0xff]
      %v6011 = vld [vmem:[#allocation3 + $0x38] sm:$0xff]
      %v6012 = vld [vmem:[#allocation3 + $0x40] sm:$0xff]
      %v6013 = vld [vmem:[#allocation3 + $0x48] sm:$0xff]
      %v6014 = vld [vmem:[#allocation3 + $0x50] sm:$0xff]
      %v6015 = vld [vmem:[#allocation3 + $0x58] sm:$0xff]
      %v6016 = vld [vmem:[#allocation3 + $0x60] sm:$0xff]
      %v6017 = vld [vmem:[#allocation3 + $0x68] sm:$0xff]
      %v6018 = vld [vmem:[#allocation3 + $0x70] sm:$0xff]
      %v6019 = vld [vmem:[#allocation3 + $0x78] sm:$0xff]
      %v6020 = vld [vmem:[#allocation3 + $0x80] sm:$0xff]
      %v6021 = vld [vmem:[#allocation3 + $0x88] sm:$0xff]
      %v6022 = vld [vmem:[#allocation3 + $0x90] sm:$0xff]
      %v6023 = vld [vmem:[#allocation3 + $0x98] sm:$0xff]
      %v6024 = vld [vmem:[#allocation3 + $0xa0] sm:$0xff]
      %v6025 = vld [vmem:[#allocation3 + $0xa8] sm:$0xff]
      %v6026 = vld [vmem:[#allocation3 + $0xb0] sm:$0xff]
      %v6027 = vld [vmem:[#allocation3 + $0xb8] sm:$0xff]
      %v6028 = vld [vmem:[#allocation3 + $0xc0] sm:$0xff]
      %v6029 = vld [vmem:[#allocation3 + $0xc8] sm:$0xff]
      %v6030 = vld [vmem:[#allocation3 + $0xd0] sm:$0xff]
      %v6031 = vld [vmem:[#allocation3 + $0xd8] sm:$0xff]
      %v6032 = vld [vmem:[#allocation3 + $0xe0] sm:$0xff]
      %v6033 = vld [vmem:[#allocation3 + $0xe8] sm:$0xff]
      %v6034 = vld [vmem:[#allocation3 + $0xf0] sm:$0xff]
      %v6035 = vld [vmem:[#allocation3 + $0xf8] sm:$0xff]
      %v6036 = vld [vmem:[#allocation3 + $0x100] sm:$0xff]
      %v6037 = vld [vmem:[#allocation3 + $0x108] sm:$0xff]
      %v6038 = vld [vmem:[#allocation3 + $0x110] sm:$0xff]
      %v6039 = vld [vmem:[#allocation3 + $0x118] sm:$0xff]
      %s6040 = scalar_lea.vmem %s8, 32
      %v6041 = vld [vmem:[%s6040] sm:$0xff]
      %v6042 = vld [vmem:[%s6040 + $0x8] sm:$0xff]
      %v6043 = vld [vmem:[%s6040 + $0x10] sm:$0xff]
      %v6044 = vld [vmem:[%s6040 + $0x18] sm:$0xff]
      %6046 = vset.pattern.permute.xlu0 0
      %6047 = vperm.xlu0 %6046, %v6041
      %v6048 = vpop.permute.xlu0 %6047
      %6051 = vset.pattern.permute.xlu0 0
      %6052 = vperm.xlu0 %6051, %v6042
      %v6053 = vpop.permute.xlu0 %6052
      %6056 = vset.pattern.permute.xlu0 0
      %6057 = vperm.xlu0 %6056, %v6043
      %v6058 = vpop.permute.xlu0 %6057
      %6061 = vset.pattern.permute.xlu0 0
      %6062 = vperm.xlu0 %6061, %v6044
      %v6063 = vpop.permute.xlu0 %6062
      %v6073 = vunpack.c.l.b16 %v5996
      %v6074 = vunpack.c.h.b16 %v5996
      %v6075 = vunpack.c.l.b16 %v5997
      %v6076 = vunpack.c.l.b16 %v5998
      %v6077 = vunpack.c.h.b16 %v5998
      %v6078 = vunpack.c.l.b16 %v5999
      %v6079 = vunpack.c.l.b16 %v6000
      %v6080 = vunpack.c.h.b16 %v6000
      %v6081 = vunpack.c.l.b16 %v6001
      %v6082 = vunpack.c.l.b16 %v6002
      %v6083 = vunpack.c.h.b16 %v6002
      %v6084 = vunpack.c.l.b16 %v6003
      %v6085 = vpack.c.b16 %v6076, %v6073
      %v6086 = vpack.c.b16 %v6077, %v6074
      %v6087 = vpack.c.b16 %v6078, %v6075
      %v6088 = vpack.c.b16 %v6082, %v6079
      %v6089 = vpack.c.b16 %v6083, %v6080
      %v6090 = vpack.c.b16 %v6084, %v6081
      %v6131 = vunpack.c.l.b16 %v6004
      %v6132 = vunpack.c.h.b16 %v6004
      %v6133 = vunpack.c.l.b16 %v6005
      %v6134 = vunpack.c.h.b16 %v6005
      %v6135 = vunpack.c.l.b16 %v6006
      %v6136 = vunpack.c.h.b16 %v6006
      %v6137 = vunpack.c.l.b16 %v6007
      %v6138 = vunpack.c.h.b16 %v6007
      %v6139 = vunpack.c.l.b16 %v6008
      %v6140 = vunpack.c.h.b16 %v6008
      %v6141 = vunpack.c.l.b16 %v6009
      %v6142 = vunpack.c.h.b16 %v6009
      %v6143 = vunpack.c.l.b16 %v6010
      %v6144 = vunpack.c.h.b16 %v6010
      %v6145 = vunpack.c.l.b16 %v6011
      %v6146 = vunpack.c.h.b16 %v6011
      %v6147 = vunpack.c.l.b16 %v6012
      %v6148 = vunpack.c.h.b16 %v6012
      %v6149 = vunpack.c.l.b16 %v6013
      %v6150 = vunpack.c.h.b16 %v6013
      %v6151 = vunpack.c.l.b16 %v6014
      %v6152 = vunpack.c.h.b16 %v6014
      %v6153 = vunpack.c.l.b16 %v6015
      %v6154 = vunpack.c.h.b16 %v6015
      %v6155 = vunpack.c.l.b16 %v6016
      %v6156 = vunpack.c.h.b16 %v6016
      %v6157 = vunpack.c.l.b16 %v6017
      %v6158 = vunpack.c.h.b16 %v6017
      %v6159 = vunpack.c.l.b16 %v6018
      %v6160 = vunpack.c.h.b16 %v6018
      %v6161 = vunpack.c.l.b16 %v6019
      %v6162 = vunpack.c.h.b16 %v6019
      %v6163 = vunpack.c.l.b16 %v6020
      %v6164 = vunpack.c.h.b16 %v6020
      %v6165 = vunpack.c.l.b16 %v6021
      %v6166 = vunpack.c.h.b16 %v6021
      %v6167 = vunpack.c.l.b16 %v6022
      %v6168 = vunpack.c.h.b16 %v6022
      %v6169 = vunpack.c.l.b16 %v6023
      %v6170 = vunpack.c.h.b16 %v6023
      %v6171 = vunpack.c.l.b16 %v6024
      %v6172 = vunpack.c.h.b16 %v6024
      %v6173 = vunpack.c.l.b16 %v6025
      %v6174 = vunpack.c.h.b16 %v6025
      %v6175 = vunpack.c.l.b16 %v6026
      %v6176 = vunpack.c.h.b16 %v6026
      %v6177 = vunpack.c.l.b16 %v6027
      %v6178 = vunpack.c.h.b16 %v6027
      %v6179 = vunpack.c.l.b16 %v6028
      %v6180 = vunpack.c.h.b16 %v6028
      %v6181 = vunpack.c.l.b16 %v6029
      %v6182 = vunpack.c.h.b16 %v6029
      %v6183 = vunpack.c.l.b16 %v6030
      %v6184 = vunpack.c.h.b16 %v6030
      %v6185 = vunpack.c.l.b16 %v6031
      %v6186 = vunpack.c.h.b16 %v6031
      %v6187 = vunpack.c.l.b16 %v6032
      %v6188 = vunpack.c.h.b16 %v6032
      %v6189 = vunpack.c.l.b16 %v6033
      %v6190 = vunpack.c.h.b16 %v6033
      %v6191 = vunpack.c.l.b16 %v6034
      %v6192 = vunpack.c.h.b16 %v6034
      %v6193 = vunpack.c.l.b16 %v6035
      %v6194 = vunpack.c.h.b16 %v6035
      %v6195 = vunpack.c.l.b16 %v6036
      %v6196 = vunpack.c.h.b16 %v6036
      %v6197 = vunpack.c.l.b16 %v6037
      %v6198 = vunpack.c.h.b16 %v6037
      %v6199 = vunpack.c.l.b16 %v6038
      %v6200 = vunpack.c.h.b16 %v6038
      %v6201 = vunpack.c.l.b16 %v6039
      %v6202 = vunpack.c.h.b16 %v6039
      %v6203 = vpack.c.b16 %v6133, %v6131
      %v6204 = vpack.c.b16 %v6134, %v6132
      %v6205 = vpack.c.b16 %v6137, %v6135
      %v6206 = vpack.c.b16 %v6138, %v6136
      %v6207 = vpack.c.b16 %v6141, %v6139
      %v6208 = vpack.c.b16 %v6142, %v6140
      %v6209 = vpack.c.b16 %v6145, %v6143
      %v6210 = vpack.c.b16 %v6146, %v6144
      %v6211 = vpack.c.b16 %v6149, %v6147
      %v6212 = vpack.c.b16 %v6150, %v6148
      %v6213 = vpack.c.b16 %v6153, %v6151
      %v6214 = vpack.c.b16 %v6154, %v6152
      %v6215 = vpack.c.b16 %v6157, %v6155
      %v6216 = vpack.c.b16 %v6158, %v6156
      %v6217 = vpack.c.b16 %v6161, %v6159
      %v6218 = vpack.c.b16 %v6162, %v6160
      %v6219 = vpack.c.b16 %v6165, %v6163
      %v6220 = vpack.c.b16 %v6166, %v6164
      %v6221 = vpack.c.b16 %v6169, %v6167
      %v6222 = vpack.c.b16 %v6170, %v6168
      %v6223 = vpack.c.b16 %v6173, %v6171
      %v6224 = vpack.c.b16 %v6174, %v6172
      %v6225 = vpack.c.b16 %v6177, %v6175
      %v6226 = vpack.c.b16 %v6178, %v6176
      %v6227 = vpack.c.b16 %v6181, %v6179
      %v6228 = vpack.c.b16 %v6182, %v6180
      %v6229 = vpack.c.b16 %v6185, %v6183
      %v6230 = vpack.c.b16 %v6186, %v6184
      %v6231 = vpack.c.b16 %v6189, %v6187
      %v6232 = vpack.c.b16 %v6190, %v6188
      %v6233 = vpack.c.b16 %v6193, %v6191
      %v6234 = vpack.c.b16 %v6194, %v6192
      %v6235 = vpack.c.b16 %v6197, %v6195
      %v6236 = vpack.c.b16 %v6198, %v6196
      %v6237 = vpack.c.b16 %v6201, %v6199
      %v6238 = vpack.c.b16 %v6202, %v6200
      %v6276 = vsel %vm2038, %v6087, 0
      %v6279 = vsel %vm2038, %v6090, 0
      %6281 = vmatprep.subr.bf16.mxu0 %v6218
      %6282 = vmatpush1.bf16.msra.mxu0 %v6217
      %6283 = vmatprep.subr.bf16.mxu0 %v6216
      %6284 = vmatpush1.bf16.msra.mxu0 %v6215
      %6285 = vmatprep.subr.bf16.mxu0 %v6214
      %6286 = vmatpush1.bf16.msra.mxu0 %v6213
      %6287 = vmatprep.subr.bf16.mxu0 %v6212
      %6288 = vmatpush1.bf16.msra.mxu0 %v6211
      %6289 = vmatprep.subr.bf16.mxu0 %v6210
      %6290 = vmatpush1.bf16.msra.mxu0 %v6209
      %6291 = vmatprep.subr.bf16.mxu0 %v6208
      %6292 = vmatpush1.bf16.msra.mxu0 %v6207
      %6293 = vmatprep.subr.bf16.mxu0 %v6206
      %6294 = vmatpush1.bf16.msra.mxu0 %v6205
      %6295 = vmatprep.subr.bf16.mxu0 %v6204
      %6296 = vmatpush1.bf16.msra.mxu0 %v6203
      %6297 = vmatprep.subr.bf16.mxu0 %v6234
      %6298 = vmatpush2.bf16.msra.mxu0 %v6233
      %6299 = vmatprep.subr.bf16.mxu0 %v6232
      %6300 = vmatpush2.bf16.msra.mxu0 %v6231
      %6301 = vmatprep.subr.bf16.mxu0 %v6230
      %6302 = vmatpush2.bf16.msra.mxu0 %v6229
      %6303 = vmatprep.subr.bf16.mxu0 %v6228
      %6304 = vmatpush2.bf16.msra.mxu0 %v6227
      %6305 = vmatprep.subr.bf16.mxu0 %v6226
      %6306 = vmatpush2.bf16.msra.mxu0 %v6225
      %6307 = vmatprep.subr.bf16.mxu0 %v6224
      %6308 = vmatpush2.bf16.msra.mxu0 %v6223
      %6309 = vmatprep.subr.bf16.mxu0 %v6222
      %6310 = vmatpush2.bf16.msra.mxu0 %v6221
      %6311 = vmatprep.subr.bf16.mxu0 %v6220
      %6312 = vmatpush2.bf16.msra.mxu0 %v6219
      %6313 = vmatprep.mubr.bf16.mxu0 %v6086
      %6314 = vmatmul.mubr.bf16.gmra.mxu0 %v6085
      %v6315 = vpop.f32.mrf.mxu0
      %v6316 = vadd.f32 %v6048, %v6315
      %v6317 = vpop.f32.mrf.mxu0
      %v6318 = vadd.f32 %v6048, %v6317
      %v6319 = vpop.f32.mrf.mxu0
      %v6320 = vadd.f32 %v6053, %v6319
      %v6321 = vpop.f32.mrf.mxu0
      %v6322 = vadd.f32 %v6053, %v6321
      %6323 = vmatprep.mubr.bf16.mxu0 %v6089
      %6324 = vmatmul.mubr.bf16.gmra.mxu0 %v6088
      %v6325 = vpop.f32.mrf.mxu0
      %v6326 = vadd.f32 %v6058, %v6325
      %v6327 = vpop.f32.mrf.mxu0
      %v6328 = vadd.f32 %v6058, %v6327
      %v6329 = vpop.f32.mrf.mxu0
      %v6330 = vadd.f32 %v6063, %v6329
      %v6331 = vpop.f32.mrf.mxu0
      %v6332 = vadd.f32 %v6063, %v6331
      %6333 = vdwg.mxu0
      %6334 = vmatprep.subr.bf16.mxu0 0
      %6335 = vmatpush1.bf16.msra.mxu0 0
      %6336 = vmatprep.subr.bf16.mxu0 0
      %6337 = vmatpush1.bf16.msra.mxu0 0
      %6338 = vmatprep.subr.bf16.mxu0 0
      %6339 = vmatpush1.bf16.msra.mxu0 0
      %6340 = vmatprep.subr.bf16.mxu0 0
      %6341 = vmatpush1.bf16.msra.mxu0 0
      %6342 = vmatprep.subr.bf16.mxu0 0
      %6343 = vmatpush1.bf16.msra.mxu0 0
      %6344 = vmatprep.subr.bf16.mxu0 0
      %6345 = vmatpush1.bf16.msra.mxu0 0
      %6346 = vmatprep.subr.bf16.mxu0 %v6238
      %6347 = vmatpush1.bf16.msra.mxu0 %v6237
      %6348 = vmatprep.subr.bf16.mxu0 %v6236
      %6349 = vmatpush1.bf16.msra.mxu0 %v6235
      %6350 = vmatprep.subr.bf16.mxu0 0
      %6351 = vmatpush2.bf16.msra.mxu0 0
      %6352 = vmatprep.subr.bf16.mxu0 0
      %6353 = vmatpush2.bf16.msra.mxu0 0
      %6354 = vmatprep.subr.bf16.mxu0 0
      %6355 = vmatpush2.bf16.msra.mxu0 0
      %6356 = vmatprep.subr.bf16.mxu0 0
      %6357 = vmatpush2.bf16.msra.mxu0 0
      %6358 = vmatprep.subr.bf16.mxu0 0
      %6359 = vmatpush2.bf16.msra.mxu0 0
      %6360 = vmatprep.subr.bf16.mxu0 0
      %6361 = vmatpush2.bf16.msra.mxu0 0
      %6362 = vmatprep.subr.bf16.mxu0 0
      %6363 = vmatpush2.bf16.msra.mxu0 0
      %6364 = vmatprep.subr.bf16.mxu0 0
      %6365 = vmatpush2.bf16.msra.mxu0 0
      %6366 = vmatprep.mubr.bf16.mxu0 0
      %6367 = vmatmul.mubr.bf16.gmra.mxu0 %v6276
      %v6368 = vpop.f32.mrf.mxu0
      %v6369 = vadd.f32 %v6316, %v6368
      %v6370 = vpop.f32.mrf.mxu0
      %v6371 = vadd.f32 %v6318, %v6370
      %v6372 = vpop.f32.mrf.mxu0
      %v6373 = vadd.f32 %v6320, %v6372
      %v6374 = vpop.f32.mrf.mxu0
      %v6375 = vadd.f32 %v6322, %v6374
      %6376 = vmatprep.mubr.bf16.mxu0 0
      %6377 = vmatmul.mubr.bf16.gmra.mxu0 %v6279
      %v6378 = vpop.f32.mrf.mxu0
      %v6379 = vadd.f32 %v6326, %v6378
      %v6380 = vpop.f32.mrf.mxu0
      %v6381 = vadd.f32 %v6328, %v6380
      %v6382 = vpop.f32.mrf.mxu0
      %v6383 = vadd.f32 %v6330, %v6382
      %v6384 = vpop.f32.mrf.mxu0
      %v6385 = vadd.f32 %v6332, %v6384
      %6386 = vdwg.mxu0
      %s6387 = scalar_lea.vmem %s13, 32
      %v6388 = vld [vmem:[%s6387] sm:$0xff]
      %v6389 = vld [vmem:[%s6387 + $0x8] sm:$0xff]
      %v6390 = vld [vmem:[%s6387 + $0x10] sm:$0xff]
      %v6391 = vld [vmem:[%s6387 + $0x18] sm:$0xff]
      %v6392 = vld [vmem:[#allocation6] sm:$0xff]
      %v6393 = vld [vmem:[#allocation6 + $0x8] sm:$0xff]
      %v6394 = vld [vmem:[#allocation6 + $0x10] sm:$0xff]
      %v6395 = vld [vmem:[#allocation6 + $0x18] sm:$0xff]
      %v6396 = vld [vmem:[#allocation6 + $0x20] sm:$0xff]
      %v6397 = vld [vmem:[#allocation6 + $0x28] sm:$0xff]
      %v6398 = vld [vmem:[#allocation6 + $0x30] sm:$0xff]
      %v6399 = vld [vmem:[#allocation6 + $0x38] sm:$0xff]
      %s6400 = scalar_lea.vmem %s14, 32
      %v6401 = vld [vmem:[%s6400] sm:$0xff]
      %v6402 = vld [vmem:[%s6400 + $0x8] sm:$0xff]
      %v6403 = vld [vmem:[%s6400 + $0x10] sm:$0xff]
      %v6404 = vld [vmem:[%s6400 + $0x18] sm:$0xff]
      %6406 = vset.pattern.permute.xlu0 0
      %6407 = vperm.xlu0 %6406, %v6401
      %v6408 = vpop.permute.xlu0 %6407
      %6411 = vset.pattern.permute.xlu0 0
      %6412 = vperm.xlu0 %6411, %v6402
      %v6413 = vpop.permute.xlu0 %6412
      %6416 = vset.pattern.permute.xlu0 0
      %6417 = vperm.xlu0 %6416, %v6403
      %v6418 = vpop.permute.xlu0 %6417
      %6421 = vset.pattern.permute.xlu0 0
      %6422 = vperm.xlu0 %6421, %v6404
      %v6423 = vpop.permute.xlu0 %6422
      %v6426 = vsel %vm2038, %v6388, 0
      %v6429 = vsel %vm2038, %v6389, 0
      %v6432 = vsel %vm2038, %v6390, 0
      %v6435 = vsel %vm2038, %v6391, 0
      %6437 = vmatprep.subr.mxu0 0.0
      %6438 = vmatpush1.msra.mxu0 0.0
      %6439 = vmatprep.subr.mxu0 0.0
      %6440 = vmatpush1.msra.mxu0 0.0
      %6441 = vmatprep.subr.mxu0 0.0
      %6442 = vmatpush1.msra.mxu0 0.0
      %6443 = vmatprep.subr.mxu0 0.0
      %6444 = vmatpush1.msra.mxu0 0.0
      %6445 = vmatprep.subr.mxu0 0.0
      %6446 = vmatpush1.msra.mxu0 0.0
      %6447 = vmatprep.subr.mxu0 0.0
      %6448 = vmatpush1.msra.mxu0 0.0
      %6449 = vmatprep.subr.mxu0 0.0
      %6450 = vmatpush1.msra.mxu0 0.0
      %6451 = vmatprep.subr.mxu0 0.0
      %6452 = vmatpush1.msra.mxu0 0.0
      %6453 = vmatprep.subr.mxu0 0.0
      %6454 = vmatpush1.msra.mxu0 0.0
      %6455 = vmatprep.subr.mxu0 0.0
      %6456 = vmatpush1.msra.mxu0 0.0
      %6457 = vmatprep.subr.mxu0 0.0
      %6458 = vmatpush1.msra.mxu0 0.0
      %6459 = vmatprep.subr.mxu0 0.0
      %6460 = vmatpush1.msra.mxu0 0.0
      %v6461 = vand.u32 %v6399, 4294901760
      %6462 = vmatprep.subr.mxu0 %v6461
      %v6463 = vand.u32 %v6398, 4294901760
      %6464 = vmatpush1.msra.mxu0 %v6463
      %v6465 = vand.u32 %v6397, 4294901760
      %6466 = vmatprep.subr.mxu0 %v6465
      %v6467 = vand.u32 %v6396, 4294901760
      %6468 = vmatpush1.msra.mxu0 %v6467
      %v6469 = vand.u32 %v6395, 4294901760
      %6470 = vmatprep.subr.mxu0 %v6469
      %v6471 = vand.u32 %v6394, 4294901760
      %6472 = vmatpush1.msra.mxu0 %v6471
      %v6473 = vand.u32 %v6393, 4294901760
      %6474 = vmatprep.subr.mxu0 %v6473
      %v6475 = vand.u32 %v6392, 4294901760
      %6476 = vmatpush1.msra.mxu0 %v6475
      %6477 = vmatprep.subr.mxu0 0.0
      %6478 = vmatpush2.msra.mxu0 0.0
      %6479 = vmatprep.subr.mxu0 0.0
      %6480 = vmatpush2.msra.mxu0 0.0
      %6481 = vmatprep.subr.mxu0 0.0
      %6482 = vmatpush2.msra.mxu0 0.0
      %6483 = vmatprep.subr.mxu0 0.0
      %6484 = vmatpush2.msra.mxu0 0.0
      %6485 = vmatprep.subr.mxu0 0.0
      %6486 = vmatpush2.msra.mxu0 0.0
      %6487 = vmatprep.subr.mxu0 0.0
      %6488 = vmatpush2.msra.mxu0 0.0
      %6489 = vmatprep.subr.mxu0 0.0
      %6490 = vmatpush2.msra.mxu0 0.0
      %6491 = vmatprep.subr.mxu0 0.0
      %6492 = vmatpush2.msra.mxu0 0.0
      %6493 = vmatprep.subr.mxu0 0.0
      %6494 = vmatpush2.msra.mxu0 0.0
      %6495 = vmatprep.subr.mxu0 0.0
      %6496 = vmatpush2.msra.mxu0 0.0
      %6497 = vmatprep.subr.mxu0 0.0
      %6498 = vmatpush2.msra.mxu0 0.0
      %6499 = vmatprep.subr.mxu0 0.0
      %6500 = vmatpush2.msra.mxu0 0.0
      %6501 = vmatprep.subr.mxu0 0.0
      %6502 = vmatpush2.msra.mxu0 0.0
      %6503 = vmatprep.subr.mxu0 0.0
      %6504 = vmatpush2.msra.mxu0 0.0
      %6505 = vmatprep.subr.mxu0 0.0
      %6506 = vmatpush2.msra.mxu0 0.0
      %6507 = vmatprep.subr.mxu0 0.0
      %6508 = vmatpush2.msra.mxu0 0.0
      %6509 = vmatprep.mubr.f32.mxu0 0.0
      %v6510 = vand.u32 %v6426, 4294901760
      %v6511 = vsub.f32 %v6426, %v6510
      %v6512 = vand.u32 %v6511, 4294901760
      %v6513 = vsub.f32 %v6511, %v6512
      %v6514 = vand.u32 %v6513, 4294901760
      %6515 = vmatmul.mubr.f32.gmra.mxu0 %v6514
      %v6516 = vpop.f32.mrf.mxu0
      %v6517 = vadd.f32 %v6408, %v6516
      %v6518 = vpop.f32.mrf.mxu0
      %v6519 = vadd.f32 %v6408, %v6518
      %6520 = vmatprep.mubr.f32.mxu0 0.0
      %v6521 = vand.u32 %v6429, 4294901760
      %v6522 = vsub.f32 %v6429, %v6521
      %v6523 = vand.u32 %v6522, 4294901760
      %v6524 = vsub.f32 %v6522, %v6523
      %v6525 = vand.u32 %v6524, 4294901760
      %6526 = vmatmul.mubr.f32.gmra.mxu0 %v6525
      %v6527 = vpop.f32.mrf.mxu0
      %v6528 = vadd.f32 %v6413, %v6527
      %v6529 = vpop.f32.mrf.mxu0
      %v6530 = vadd.f32 %v6413, %v6529
      %6531 = vmatprep.mubr.f32.mxu0 0.0
      %v6532 = vand.u32 %v6432, 4294901760
      %v6533 = vsub.f32 %v6432, %v6532
      %v6534 = vand.u32 %v6533, 4294901760
      %v6535 = vsub.f32 %v6533, %v6534
      %v6536 = vand.u32 %v6535, 4294901760
      %6537 = vmatmul.mubr.f32.gmra.mxu0 %v6536
      %v6538 = vpop.f32.mrf.mxu0
      %v6539 = vadd.f32 %v6418, %v6538
      %v6540 = vpop.f32.mrf.mxu0
      %v6541 = vadd.f32 %v6418, %v6540
      %6542 = vmatprep.mubr.f32.mxu0 0.0
      %v6543 = vand.u32 %v6435, 4294901760
      %v6544 = vsub.f32 %v6435, %v6543
      %v6545 = vand.u32 %v6544, 4294901760
      %v6546 = vsub.f32 %v6544, %v6545
      %v6547 = vand.u32 %v6546, 4294901760
      %6548 = vmatmul.mubr.f32.gmra.mxu0 %v6547
      %v6549 = vpop.f32.mrf.mxu0
      %v6550 = vadd.f32 %v6423, %v6549
      %v6551 = vpop.f32.mrf.mxu0
      %v6552 = vadd.f32 %v6423, %v6551
      %6553 = vdwg.mxu0
      %6554 = vmatprep.subr.mxu0 0.0
      %6555 = vmatpush1.msra.mxu0 0.0
      %6556 = vmatprep.subr.mxu0 0.0
      %6557 = vmatpush1.msra.mxu0 0.0
      %6558 = vmatprep.subr.mxu0 0.0
      %6559 = vmatpush1.msra.mxu0 0.0
      %6560 = vmatprep.subr.mxu0 0.0
      %6561 = vmatpush1.msra.mxu0 0.0
      %6562 = vmatprep.subr.mxu0 0.0
      %6563 = vmatpush1.msra.mxu0 0.0
      %6564 = vmatprep.subr.mxu0 0.0
      %6565 = vmatpush1.msra.mxu0 0.0
      %6566 = vmatprep.subr.mxu0 0.0
      %6567 = vmatpush1.msra.mxu0 0.0
      %6568 = vmatprep.subr.mxu0 0.0
      %6569 = vmatpush1.msra.mxu0 0.0
      %6570 = vmatprep.subr.mxu0 0.0
      %6571 = vmatpush1.msra.mxu0 0.0
      %6572 = vmatprep.subr.mxu0 0.0
      %6573 = vmatpush1.msra.mxu0 0.0
      %6574 = vmatprep.subr.mxu0 0.0
      %6575 = vmatpush1.msra.mxu0 0.0
      %6576 = vmatprep.subr.mxu0 0.0
      %6577 = vmatpush1.msra.mxu0 0.0
      %v6578 = vand.u32 %v6399, 4294901760
      %v6579 = vsub.f32 %v6399, %v6578
      %v6580 = vand.u32 %v6579, 4294901760
      %v6581 = vsub.f32 %v6579, %v6580
      %v6582 = vand.u32 %v6581, 4294901760
      %6583 = vmatprep.subr.mxu0 %v6582
      %v6584 = vand.u32 %v6398, 4294901760
      %v6585 = vsub.f32 %v6398, %v6584
      %v6586 = vand.u32 %v6585, 4294901760
      %v6587 = vsub.f32 %v6585, %v6586
      %v6588 = vand.u32 %v6587, 4294901760
      %6589 = vmatpush1.msra.mxu0 %v6588
      %v6590 = vand.u32 %v6397, 4294901760
      %v6591 = vsub.f32 %v6397, %v6590
      %v6592 = vand.u32 %v6591, 4294901760
      %v6593 = vsub.f32 %v6591, %v6592
      %v6594 = vand.u32 %v6593, 4294901760
      %6595 = vmatprep.subr.mxu0 %v6594
      %v6596 = vand.u32 %v6396, 4294901760
      %v6597 = vsub.f32 %v6396, %v6596
      %v6598 = vand.u32 %v6597, 4294901760
      %v6599 = vsub.f32 %v6597, %v6598
      %v6600 = vand.u32 %v6599, 4294901760
      %6601 = vmatpush1.msra.mxu0 %v6600
      %v6602 = vand.u32 %v6395, 4294901760
      %v6603 = vsub.f32 %v6395, %v6602
      %v6604 = vand.u32 %v6603, 4294901760
      %v6605 = vsub.f32 %v6603, %v6604
      %v6606 = vand.u32 %v6605, 4294901760
      %6607 = vmatprep.subr.mxu0 %v6606
      %v6608 = vand.u32 %v6394, 4294901760
      %v6609 = vsub.f32 %v6394, %v6608
      %v6610 = vand.u32 %v6609, 4294901760
      %v6611 = vsub.f32 %v6609, %v6610
      %v6612 = vand.u32 %v6611, 4294901760
      %6613 = vmatpush1.msra.mxu0 %v6612
      %v6614 = vand.u32 %v6393, 4294901760
      %v6615 = vsub.f32 %v6393, %v6614
      %v6616 = vand.u32 %v6615, 4294901760
      %v6617 = vsub.f32 %v6615, %v6616
      %v6618 = vand.u32 %v6617, 4294901760
      %6619 = vmatprep.subr.mxu0 %v6618
      %v6620 = vand.u32 %v6392, 4294901760
      %v6621 = vsub.f32 %v6392, %v6620
      %v6622 = vand.u32 %v6621, 4294901760
      %v6623 = vsub.f32 %v6621, %v6622
      %v6624 = vand.u32 %v6623, 4294901760
      %6625 = vmatpush1.msra.mxu0 %v6624
      %6626 = vmatprep.subr.mxu0 0.0
      %6627 = vmatpush2.msra.mxu0 0.0
      %6628 = vmatprep.subr.mxu0 0.0
      %6629 = vmatpush2.msra.mxu0 0.0
      %6630 = vmatprep.subr.mxu0 0.0
      %6631 = vmatpush2.msra.mxu0 0.0
      %6632 = vmatprep.subr.mxu0 0.0
      %6633 = vmatpush2.msra.mxu0 0.0
      %6634 = vmatprep.subr.mxu0 0.0
      %6635 = vmatpush2.msra.mxu0 0.0
      %6636 = vmatprep.subr.mxu0 0.0
      %6637 = vmatpush2.msra.mxu0 0.0
      %6638 = vmatprep.subr.mxu0 0.0
      %6639 = vmatpush2.msra.mxu0 0.0
      %6640 = vmatprep.subr.mxu0 0.0
      %6641 = vmatpush2.msra.mxu0 0.0
      %6642 = vmatprep.subr.mxu0 0.0
      %6643 = vmatpush2.msra.mxu0 0.0
      %6644 = vmatprep.subr.mxu0 0.0
      %6645 = vmatpush2.msra.mxu0 0.0
      %6646 = vmatprep.subr.mxu0 0.0
      %6647 = vmatpush2.msra.mxu0 0.0
      %6648 = vmatprep.subr.mxu0 0.0
      %6649 = vmatpush2.msra.mxu0 0.0
      %6650 = vmatprep.subr.mxu0 0.0
      %6651 = vmatpush2.msra.mxu0 0.0
      %6652 = vmatprep.subr.mxu0 0.0
      %6653 = vmatpush2.msra.mxu0 0.0
      %6654 = vmatprep.subr.mxu0 0.0
      %6655 = vmatpush2.msra.mxu0 0.0
      %6656 = vmatprep.subr.mxu0 0.0
      %6657 = vmatpush2.msra.mxu0 0.0
      %6658 = vmatprep.mubr.f32.mxu0 0.0
      %v6659 = vand.u32 %v6426, 4294901760
      %6660 = vmatmul.mubr.f32.gmra.mxu0 %v6659
      %v6661 = vpop.f32.mrf.mxu0
      %v6662 = vadd.f32 %v6517, %v6661
      %v6663 = vpop.f32.mrf.mxu0
      %v6664 = vadd.f32 %v6519, %v6663
      %6665 = vmatprep.mubr.f32.mxu0 0.0
      %v6666 = vand.u32 %v6429, 4294901760
      %6667 = vmatmul.mubr.f32.gmra.mxu0 %v6666
      %v6668 = vpop.f32.mrf.mxu0
      %v6669 = vadd.f32 %v6528, %v6668
      %v6670 = vpop.f32.mrf.mxu0
      %v6671 = vadd.f32 %v6530, %v6670
      %6672 = vmatprep.mubr.f32.mxu0 0.0
      %v6673 = vand.u32 %v6432, 4294901760
      %6674 = vmatmul.mubr.f32.gmra.mxu0 %v6673
      %v6675 = vpop.f32.mrf.mxu0
      %v6676 = vadd.f32 %v6539, %v6675
      %v6677 = vpop.f32.mrf.mxu0
      %v6678 = vadd.f32 %v6541, %v6677
      %6679 = vmatprep.mubr.f32.mxu0 0.0
      %v6680 = vand.u32 %v6435, 4294901760
      %6681 = vmatmul.mubr.f32.gmra.mxu0 %v6680
      %v6682 = vpop.f32.mrf.mxu0
      %v6683 = vadd.f32 %v6550, %v6682
      %v6684 = vpop.f32.mrf.mxu0
      %v6685 = vadd.f32 %v6552, %v6684
      %6686 = vdwg.mxu0
      %6687 = vmatprep.subr.mxu0 0.0
      %6688 = vmatpush1.msra.mxu0 0.0
      %6689 = vmatprep.subr.mxu0 0.0
      %6690 = vmatpush1.msra.mxu0 0.0
      %6691 = vmatprep.subr.mxu0 0.0
      %6692 = vmatpush1.msra.mxu0 0.0
      %6693 = vmatprep.subr.mxu0 0.0
      %6694 = vmatpush1.msra.mxu0 0.0
      %6695 = vmatprep.subr.mxu0 0.0
      %6696 = vmatpush1.msra.mxu0 0.0
      %6697 = vmatprep.subr.mxu0 0.0
      %6698 = vmatpush1.msra.mxu0 0.0
      %6699 = vmatprep.subr.mxu0 0.0
      %6700 = vmatpush1.msra.mxu0 0.0
      %6701 = vmatprep.subr.mxu0 0.0
      %6702 = vmatpush1.msra.mxu0 0.0
      %6703 = vmatprep.subr.mxu0 0.0
      %6704 = vmatpush1.msra.mxu0 0.0
      %6705 = vmatprep.subr.mxu0 0.0
      %6706 = vmatpush1.msra.mxu0 0.0
      %6707 = vmatprep.subr.mxu0 0.0
      %6708 = vmatpush1.msra.mxu0 0.0
      %6709 = vmatprep.subr.mxu0 0.0
      %6710 = vmatpush1.msra.mxu0 0.0
      %v6711 = vand.u32 %v6399, 4294901760
      %v6712 = vsub.f32 %v6399, %v6711
      %6713 = vmatprep.subr.mxu0 %v6712
      %v6714 = vand.u32 %v6398, 4294901760
      %v6715 = vsub.f32 %v6398, %v6714
      %6716 = vmatpush1.msra.mxu0 %v6715
      %v6717 = vand.u32 %v6397, 4294901760
      %v6718 = vsub.f32 %v6397, %v6717
      %6719 = vmatprep.subr.mxu0 %v6718
      %v6720 = vand.u32 %v6396, 4294901760
      %v6721 = vsub.f32 %v6396, %v6720
      %6722 = vmatpush1.msra.mxu0 %v6721
      %v6723 = vand.u32 %v6395, 4294901760
      %v6724 = vsub.f32 %v6395, %v6723
      %6725 = vmatprep.subr.mxu0 %v6724
      %v6726 = vand.u32 %v6394, 4294901760
      %v6727 = vsub.f32 %v6394, %v6726
      %6728 = vmatpush1.msra.mxu0 %v6727
      %v6729 = vand.u32 %v6393, 4294901760
      %v6730 = vsub.f32 %v6393, %v6729
      %6731 = vmatprep.subr.mxu0 %v6730
      %v6732 = vand.u32 %v6392, 4294901760
      %v6733 = vsub.f32 %v6392, %v6732
      %6734 = vmatpush1.msra.mxu0 %v6733
      %6735 = vmatprep.subr.mxu0 0.0
      %6736 = vmatpush2.msra.mxu0 0.0
      %6737 = vmatprep.subr.mxu0 0.0
      %6738 = vmatpush2.msra.mxu0 0.0
      %6739 = vmatprep.subr.mxu0 0.0
      %6740 = vmatpush2.msra.mxu0 0.0
      %6741 = vmatprep.subr.mxu0 0.0
      %6742 = vmatpush2.msra.mxu0 0.0
      %6743 = vmatprep.subr.mxu0 0.0
      %6744 = vmatpush2.msra.mxu0 0.0
      %6745 = vmatprep.subr.mxu0 0.0
      %6746 = vmatpush2.msra.mxu0 0.0
      %6747 = vmatprep.subr.mxu0 0.0
      %6748 = vmatpush2.msra.mxu0 0.0
      %6749 = vmatprep.subr.mxu0 0.0
      %6750 = vmatpush2.msra.mxu0 0.0
      %6751 = vmatprep.subr.mxu0 0.0
      %6752 = vmatpush2.msra.mxu0 0.0
      %6753 = vmatprep.subr.mxu0 0.0
      %6754 = vmatpush2.msra.mxu0 0.0
      %6755 = vmatprep.subr.mxu0 0.0
      %6756 = vmatpush2.msra.mxu0 0.0
      %6757 = vmatprep.subr.mxu0 0.0
      %6758 = vmatpush2.msra.mxu0 0.0
      %6759 = vmatprep.subr.mxu0 0.0
      %6760 = vmatpush2.msra.mxu0 0.0
      %6761 = vmatprep.subr.mxu0 0.0
      %6762 = vmatpush2.msra.mxu0 0.0
      %6763 = vmatprep.subr.mxu0 0.0
      %6764 = vmatpush2.msra.mxu0 0.0
      %6765 = vmatprep.subr.mxu0 0.0
      %6766 = vmatpush2.msra.mxu0 0.0
      %6767 = vmatprep.mubr.f32.mxu0 0.0
      %v6768 = vand.u32 %v6426, 4294901760
      %v6769 = vsub.f32 %v6426, %v6768
      %6770 = vmatmul.mubr.f32.gmra.mxu0 %v6769
      %v6771 = vpop.f32.mrf.mxu0
      %v6772 = vadd.f32 %v6662, %v6771
      %v6773 = vpop.f32.mrf.mxu0
      %v6774 = vadd.f32 %v6664, %v6773
      %6775 = vmatprep.mubr.f32.mxu0 0.0
      %v6776 = vand.u32 %v6429, 4294901760
      %v6777 = vsub.f32 %v6429, %v6776
      %6778 = vmatmul.mubr.f32.gmra.mxu0 %v6777
      %v6779 = vpop.f32.mrf.mxu0
      %v6780 = vadd.f32 %v6669, %v6779
      %v6781 = vpop.f32.mrf.mxu0
      %v6782 = vadd.f32 %v6671, %v6781
      %6783 = vmatprep.mubr.f32.mxu0 0.0
      %v6784 = vand.u32 %v6432, 4294901760
      %v6785 = vsub.f32 %v6432, %v6784
      %6786 = vmatmul.mubr.f32.gmra.mxu0 %v6785
      %v6787 = vpop.f32.mrf.mxu0
      %v6788 = vadd.f32 %v6676, %v6787
      %v6789 = vpop.f32.mrf.mxu0
      %v6790 = vadd.f32 %v6678, %v6789
      %6791 = vmatprep.mubr.f32.mxu0 0.0
      %v6792 = vand.u32 %v6435, 4294901760
      %v6793 = vsub.f32 %v6435, %v6792
      %6794 = vmatmul.mubr.f32.gmra.mxu0 %v6793
      %v6795 = vpop.f32.mrf.mxu0
      %v6796 = vadd.f32 %v6683, %v6795
      %v6797 = vpop.f32.mrf.mxu0
      %v6798 = vadd.f32 %v6685, %v6797
      %6799 = vdwg.mxu0
      %6800 = vmatprep.subr.mxu0 0.0
      %6801 = vmatpush1.msra.mxu0 0.0
      %6802 = vmatprep.subr.mxu0 0.0
      %6803 = vmatpush1.msra.mxu0 0.0
      %6804 = vmatprep.subr.mxu0 0.0
      %6805 = vmatpush1.msra.mxu0 0.0
      %6806 = vmatprep.subr.mxu0 0.0
      %6807 = vmatpush1.msra.mxu0 0.0
      %6808 = vmatprep.subr.mxu0 0.0
      %6809 = vmatpush1.msra.mxu0 0.0
      %6810 = vmatprep.subr.mxu0 0.0
      %6811 = vmatpush1.msra.mxu0 0.0
      %6812 = vmatprep.subr.mxu0 0.0
      %6813 = vmatpush1.msra.mxu0 0.0
      %6814 = vmatprep.subr.mxu0 0.0
      %6815 = vmatpush1.msra.mxu0 0.0
      %6816 = vmatprep.subr.mxu0 0.0
      %6817 = vmatpush1.msra.mxu0 0.0
      %6818 = vmatprep.subr.mxu0 0.0
      %6819 = vmatpush1.msra.mxu0 0.0
      %6820 = vmatprep.subr.mxu0 0.0
      %6821 = vmatpush1.msra.mxu0 0.0
      %6822 = vmatprep.subr.mxu0 0.0
      %6823 = vmatpush1.msra.mxu0 0.0
      %v6824 = vand.u32 %v6399, 4294901760
      %6825 = vmatprep.subr.mxu0 %v6824
      %v6826 = vand.u32 %v6398, 4294901760
      %6827 = vmatpush1.msra.mxu0 %v6826
      %v6828 = vand.u32 %v6397, 4294901760
      %6829 = vmatprep.subr.mxu0 %v6828
      %v6830 = vand.u32 %v6396, 4294901760
      %6831 = vmatpush1.msra.mxu0 %v6830
      %v6832 = vand.u32 %v6395, 4294901760
      %6833 = vmatprep.subr.mxu0 %v6832
      %v6834 = vand.u32 %v6394, 4294901760
      %6835 = vmatpush1.msra.mxu0 %v6834
      %v6836 = vand.u32 %v6393, 4294901760
      %6837 = vmatprep.subr.mxu0 %v6836
      %v6838 = vand.u32 %v6392, 4294901760
      %6839 = vmatpush1.msra.mxu0 %v6838
      %6840 = vmatprep.subr.mxu0 0.0
      %6841 = vmatpush2.msra.mxu0 0.0
      %6842 = vmatprep.subr.mxu0 0.0
      %6843 = vmatpush2.msra.mxu0 0.0
      %6844 = vmatprep.subr.mxu0 0.0
      %6845 = vmatpush2.msra.mxu0 0.0
      %6846 = vmatprep.subr.mxu0 0.0
      %6847 = vmatpush2.msra.mxu0 0.0
      %6848 = vmatprep.subr.mxu0 0.0
      %6849 = vmatpush2.msra.mxu0 0.0
      %6850 = vmatprep.subr.mxu0 0.0
      %6851 = vmatpush2.msra.mxu0 0.0
      %6852 = vmatprep.subr.mxu0 0.0
      %6853 = vmatpush2.msra.mxu0 0.0
      %6854 = vmatprep.subr.mxu0 0.0
      %6855 = vmatpush2.msra.mxu0 0.0
      %6856 = vmatprep.subr.mxu0 0.0
      %6857 = vmatpush2.msra.mxu0 0.0
      %6858 = vmatprep.subr.mxu0 0.0
      %6859 = vmatpush2.msra.mxu0 0.0
      %6860 = vmatprep.subr.mxu0 0.0
      %6861 = vmatpush2.msra.mxu0 0.0
      %6862 = vmatprep.subr.mxu0 0.0
      %6863 = vmatpush2.msra.mxu0 0.0
      %6864 = vmatprep.subr.mxu0 0.0
      %6865 = vmatpush2.msra.mxu0 0.0
      %6866 = vmatprep.subr.mxu0 0.0
      %6867 = vmatpush2.msra.mxu0 0.0
      %6868 = vmatprep.subr.mxu0 0.0
      %6869 = vmatpush2.msra.mxu0 0.0
      %6870 = vmatprep.subr.mxu0 0.0
      %6871 = vmatpush2.msra.mxu0 0.0
      %6872 = vmatprep.mubr.f32.mxu0 0.0
      %v6873 = vand.u32 %v6426, 4294901760
      %v6874 = vsub.f32 %v6426, %v6873
      %v6875 = vand.u32 %v6874, 4294901760
      %6876 = vmatmul.mubr.f32.gmra.mxu0 %v6875
      %v6877 = vpop.f32.mrf.mxu0
      %v6878 = vadd.f32 %v6772, %v6877
      %v6879 = vpop.f32.mrf.mxu0
      %v6880 = vadd.f32 %v6774, %v6879
      %6881 = vmatprep.mubr.f32.mxu0 0.0
      %v6882 = vand.u32 %v6429, 4294901760
      %v6883 = vsub.f32 %v6429, %v6882
      %v6884 = vand.u32 %v6883, 4294901760
      %6885 = vmatmul.mubr.f32.gmra.mxu0 %v6884
      %v6886 = vpop.f32.mrf.mxu0
      %v6887 = vadd.f32 %v6780, %v6886
      %v6888 = vpop.f32.mrf.mxu0
      %v6889 = vadd.f32 %v6782, %v6888
      %6890 = vmatprep.mubr.f32.mxu0 0.0
      %v6891 = vand.u32 %v6432, 4294901760
      %v6892 = vsub.f32 %v6432, %v6891
      %v6893 = vand.u32 %v6892, 4294901760
      %6894 = vmatmul.mubr.f32.gmra.mxu0 %v6893
      %v6895 = vpop.f32.mrf.mxu0
      %v6896 = vadd.f32 %v6788, %v6895
      %v6897 = vpop.f32.mrf.mxu0
      %v6898 = vadd.f32 %v6790, %v6897
      %6899 = vmatprep.mubr.f32.mxu0 0.0
      %v6900 = vand.u32 %v6435, 4294901760
      %v6901 = vsub.f32 %v6435, %v6900
      %v6902 = vand.u32 %v6901, 4294901760
      %6903 = vmatmul.mubr.f32.gmra.mxu0 %v6902
      %v6904 = vpop.f32.mrf.mxu0
      %v6905 = vadd.f32 %v6796, %v6904
      %v6906 = vpop.f32.mrf.mxu0
      %v6907 = vadd.f32 %v6798, %v6906
      %6908 = vdwg.mxu0
      %6909 = vmatprep.subr.mxu0 0.0
      %6910 = vmatpush1.msra.mxu0 0.0
      %6911 = vmatprep.subr.mxu0 0.0
      %6912 = vmatpush1.msra.mxu0 0.0
      %6913 = vmatprep.subr.mxu0 0.0
      %6914 = vmatpush1.msra.mxu0 0.0
      %6915 = vmatprep.subr.mxu0 0.0
      %6916 = vmatpush1.msra.mxu0 0.0
      %6917 = vmatprep.subr.mxu0 0.0
      %6918 = vmatpush1.msra.mxu0 0.0
      %6919 = vmatprep.subr.mxu0 0.0
      %6920 = vmatpush1.msra.mxu0 0.0
      %6921 = vmatprep.subr.mxu0 0.0
      %6922 = vmatpush1.msra.mxu0 0.0
      %6923 = vmatprep.subr.mxu0 0.0
      %6924 = vmatpush1.msra.mxu0 0.0
      %6925 = vmatprep.subr.mxu0 0.0
      %6926 = vmatpush1.msra.mxu0 0.0
      %6927 = vmatprep.subr.mxu0 0.0
      %6928 = vmatpush1.msra.mxu0 0.0
      %6929 = vmatprep.subr.mxu0 0.0
      %6930 = vmatpush1.msra.mxu0 0.0
      %6931 = vmatprep.subr.mxu0 0.0
      %6932 = vmatpush1.msra.mxu0 0.0
      %v6933 = vand.u32 %v6399, 4294901760
      %v6934 = vsub.f32 %v6399, %v6933
      %v6935 = vand.u32 %v6934, 4294901760
      %6936 = vmatprep.subr.mxu0 %v6935
      %v6937 = vand.u32 %v6398, 4294901760
      %v6938 = vsub.f32 %v6398, %v6937
      %v6939 = vand.u32 %v6938, 4294901760
      %6940 = vmatpush1.msra.mxu0 %v6939
      %v6941 = vand.u32 %v6397, 4294901760
      %v6942 = vsub.f32 %v6397, %v6941
      %v6943 = vand.u32 %v6942, 4294901760
      %6944 = vmatprep.subr.mxu0 %v6943
      %v6945 = vand.u32 %v6396, 4294901760
      %v6946 = vsub.f32 %v6396, %v6945
      %v6947 = vand.u32 %v6946, 4294901760
      %6948 = vmatpush1.msra.mxu0 %v6947
      %v6949 = vand.u32 %v6395, 4294901760
      %v6950 = vsub.f32 %v6395, %v6949
      %v6951 = vand.u32 %v6950, 4294901760
      %6952 = vmatprep.subr.mxu0 %v6951
      %v6953 = vand.u32 %v6394, 4294901760
      %v6954 = vsub.f32 %v6394, %v6953
      %v6955 = vand.u32 %v6954, 4294901760
      %6956 = vmatpush1.msra.mxu0 %v6955
      %v6957 = vand.u32 %v6393, 4294901760
      %v6958 = vsub.f32 %v6393, %v6957
      %v6959 = vand.u32 %v6958, 4294901760
      %6960 = vmatprep.subr.mxu0 %v6959
      %v6961 = vand.u32 %v6392, 4294901760
      %v6962 = vsub.f32 %v6392, %v6961
      %v6963 = vand.u32 %v6962, 4294901760
      %6964 = vmatpush1.msra.mxu0 %v6963
      %6965 = vmatprep.subr.mxu0 0.0
      %6966 = vmatpush2.msra.mxu0 0.0
      %6967 = vmatprep.subr.mxu0 0.0
      %6968 = vmatpush2.msra.mxu0 0.0
      %6969 = vmatprep.subr.mxu0 0.0
      %6970 = vmatpush2.msra.mxu0 0.0
      %6971 = vmatprep.subr.mxu0 0.0
      %6972 = vmatpush2.msra.mxu0 0.0
      %6973 = vmatprep.subr.mxu0 0.0
      %6974 = vmatpush2.msra.mxu0 0.0
      %6975 = vmatprep.subr.mxu0 0.0
      %6976 = vmatpush2.msra.mxu0 0.0
      %6977 = vmatprep.subr.mxu0 0.0
      %6978 = vmatpush2.msra.mxu0 0.0
      %6979 = vmatprep.subr.mxu0 0.0
      %6980 = vmatpush2.msra.mxu0 0.0
      %6981 = vmatprep.subr.mxu0 0.0
      %6982 = vmatpush2.msra.mxu0 0.0
      %6983 = vmatprep.subr.mxu0 0.0
      %6984 = vmatpush2.msra.mxu0 0.0
      %6985 = vmatprep.subr.mxu0 0.0
      %6986 = vmatpush2.msra.mxu0 0.0
      %6987 = vmatprep.subr.mxu0 0.0
      %6988 = vmatpush2.msra.mxu0 0.0
      %6989 = vmatprep.subr.mxu0 0.0
      %6990 = vmatpush2.msra.mxu0 0.0
      %6991 = vmatprep.subr.mxu0 0.0
      %6992 = vmatpush2.msra.mxu0 0.0
      %6993 = vmatprep.subr.mxu0 0.0
      %6994 = vmatpush2.msra.mxu0 0.0
      %6995 = vmatprep.subr.mxu0 0.0
      %6996 = vmatpush2.msra.mxu0 0.0
      %6997 = vmatprep.mubr.f32.mxu0 0.0
      %v6998 = vand.u32 %v6426, 4294901760
      %6999 = vmatmul.mubr.f32.gmra.mxu0 %v6998
      %v7000 = vpop.f32.mrf.mxu0
      %v7001 = vadd.f32 %v6878, %v7000
      %v7002 = vpop.f32.mrf.mxu0
      %v7003 = vadd.f32 %v6880, %v7002
      %7004 = vmatprep.mubr.f32.mxu0 0.0
      %v7005 = vand.u32 %v6429, 4294901760
      %7006 = vmatmul.mubr.f32.gmra.mxu0 %v7005
      %v7007 = vpop.f32.mrf.mxu0
      %v7008 = vadd.f32 %v6887, %v7007
      %v7009 = vpop.f32.mrf.mxu0
      %v7010 = vadd.f32 %v6889, %v7009
      %7011 = vmatprep.mubr.f32.mxu0 0.0
      %v7012 = vand.u32 %v6432, 4294901760
      %7013 = vmatmul.mubr.f32.gmra.mxu0 %v7012
      %v7014 = vpop.f32.mrf.mxu0
      %v7015 = vadd.f32 %v6896, %v7014
      %v7016 = vpop.f32.mrf.mxu0
      %v7017 = vadd.f32 %v6898, %v7016
      %7018 = vmatprep.mubr.f32.mxu0 0.0
      %v7019 = vand.u32 %v6435, 4294901760
      %7020 = vmatmul.mubr.f32.gmra.mxu0 %v7019
      %v7021 = vpop.f32.mrf.mxu0
      %v7022 = vadd.f32 %v6905, %v7021
      %v7023 = vpop.f32.mrf.mxu0
      %v7024 = vadd.f32 %v6907, %v7023
      %7025 = vdwg.mxu0
      %7026 = vmatprep.subr.mxu0 0.0
      %7027 = vmatpush1.msra.mxu0 0.0
      %7028 = vmatprep.subr.mxu0 0.0
      %7029 = vmatpush1.msra.mxu0 0.0
      %7030 = vmatprep.subr.mxu0 0.0
      %7031 = vmatpush1.msra.mxu0 0.0
      %7032 = vmatprep.subr.mxu0 0.0
      %7033 = vmatpush1.msra.mxu0 0.0
      %7034 = vmatprep.subr.mxu0 0.0
      %7035 = vmatpush1.msra.mxu0 0.0
      %7036 = vmatprep.subr.mxu0 0.0
      %7037 = vmatpush1.msra.mxu0 0.0
      %7038 = vmatprep.subr.mxu0 0.0
      %7039 = vmatpush1.msra.mxu0 0.0
      %7040 = vmatprep.subr.mxu0 0.0
      %7041 = vmatpush1.msra.mxu0 0.0
      %7042 = vmatprep.subr.mxu0 0.0
      %7043 = vmatpush1.msra.mxu0 0.0
      %7044 = vmatprep.subr.mxu0 0.0
      %7045 = vmatpush1.msra.mxu0 0.0
      %7046 = vmatprep.subr.mxu0 0.0
      %7047 = vmatpush1.msra.mxu0 0.0
      %7048 = vmatprep.subr.mxu0 0.0
      %7049 = vmatpush1.msra.mxu0 0.0
      %v7050 = vand.u32 %v6399, 4294901760
      %7051 = vmatprep.subr.mxu0 %v7050
      %v7052 = vand.u32 %v6398, 4294901760
      %7053 = vmatpush1.msra.mxu0 %v7052
      %v7054 = vand.u32 %v6397, 4294901760
      %7055 = vmatprep.subr.mxu0 %v7054
      %v7056 = vand.u32 %v6396, 4294901760
      %7057 = vmatpush1.msra.mxu0 %v7056
      %v7058 = vand.u32 %v6395, 4294901760
      %7059 = vmatprep.subr.mxu0 %v7058
      %v7060 = vand.u32 %v6394, 4294901760
      %7061 = vmatpush1.msra.mxu0 %v7060
      %v7062 = vand.u32 %v6393, 4294901760
      %7063 = vmatprep.subr.mxu0 %v7062
      %v7064 = vand.u32 %v6392, 4294901760
      %7065 = vmatpush1.msra.mxu0 %v7064
      %7066 = vmatprep.subr.mxu0 0.0
      %7067 = vmatpush2.msra.mxu0 0.0
      %7068 = vmatprep.subr.mxu0 0.0
      %7069 = vmatpush2.msra.mxu0 0.0
      %7070 = vmatprep.subr.mxu0 0.0
      %7071 = vmatpush2.msra.mxu0 0.0
      %7072 = vmatprep.subr.mxu0 0.0
      %7073 = vmatpush2.msra.mxu0 0.0
      %7074 = vmatprep.subr.mxu0 0.0
      %7075 = vmatpush2.msra.mxu0 0.0
      %7076 = vmatprep.subr.mxu0 0.0
      %7077 = vmatpush2.msra.mxu0 0.0
      %7078 = vmatprep.subr.mxu0 0.0
      %7079 = vmatpush2.msra.mxu0 0.0
      %7080 = vmatprep.subr.mxu0 0.0
      %7081 = vmatpush2.msra.mxu0 0.0
      %7082 = vmatprep.subr.mxu0 0.0
      %7083 = vmatpush2.msra.mxu0 0.0
      %7084 = vmatprep.subr.mxu0 0.0
      %7085 = vmatpush2.msra.mxu0 0.0
      %7086 = vmatprep.subr.mxu0 0.0
      %7087 = vmatpush2.msra.mxu0 0.0
      %7088 = vmatprep.subr.mxu0 0.0
      %7089 = vmatpush2.msra.mxu0 0.0
      %7090 = vmatprep.subr.mxu0 0.0
      %7091 = vmatpush2.msra.mxu0 0.0
      %7092 = vmatprep.subr.mxu0 0.0
      %7093 = vmatpush2.msra.mxu0 0.0
      %7094 = vmatprep.subr.mxu0 0.0
      %7095 = vmatpush2.msra.mxu0 0.0
      %7096 = vmatprep.subr.mxu0 0.0
      %7097 = vmatpush2.msra.mxu0 0.0
      %7098 = vmatprep.mubr.f32.mxu0 0.0
      %v7099 = vand.u32 %v6426, 4294901760
      %7100 = vmatmul.mubr.f32.gmra.mxu0 %v7099
      %v7101 = vpop.f32.mrf.mxu0
      %v7102 = vadd.f32 %v7001, %v7101
      %v7103 = vpop.f32.mrf.mxu0
      %v7104 = vadd.f32 %v7003, %v7103
      %7105 = vmatprep.mubr.f32.mxu0 0.0
      %v7106 = vand.u32 %v6429, 4294901760
      %7107 = vmatmul.mubr.f32.gmra.mxu0 %v7106
      %v7108 = vpop.f32.mrf.mxu0
      %v7109 = vadd.f32 %v7008, %v7108
      %v7110 = vpop.f32.mrf.mxu0
      %v7111 = vadd.f32 %v7010, %v7110
      %7112 = vmatprep.mubr.f32.mxu0 0.0
      %v7113 = vand.u32 %v6432, 4294901760
      %7114 = vmatmul.mubr.f32.gmra.mxu0 %v7113
      %v7115 = vpop.f32.mrf.mxu0
      %v7116 = vadd.f32 %v7015, %v7115
      %v7117 = vpop.f32.mrf.mxu0
      %v7118 = vadd.f32 %v7017, %v7117
      %7119 = vmatprep.mubr.f32.mxu0 0.0
      %v7120 = vand.u32 %v6435, 4294901760
      %7121 = vmatmul.mubr.f32.gmra.mxu0 %v7120
      %v7122 = vpop.f32.mrf.mxu0
      %v7123 = vadd.f32 %v7022, %v7122
      %v7124 = vpop.f32.mrf.mxu0
      %v7125 = vadd.f32 %v7024, %v7124
      %7126 = vdwg.mxu0
      %v7127 = vmul.f32 %v7102, 6.2831855
      %v7128 = vmul.f32 %v7104, 6.2831855
      %v7129 = vmul.f32 %v7109, 6.2831855
      %v7130 = vmul.f32 %v7111, 6.2831855
      %v7131 = vmul.f32 %v7116, 6.2831855
      %v7132 = vmul.f32 %v7118, 6.2831855
      %v7133 = vmul.f32 %v7123, 6.2831855
      %v7134 = vmul.f32 %v7125, 6.2831855
      %v7135 = vand.u32 2147483647, %v7127
      %vm7136 = vcmp.le.f32.partialorder %v7135, 0.7853982
      %vm7137 = vcmp.lt.s32.totalorder %v7127, 0
      %v7138 = vand.u32 %v7127, 2139095040
      %v7139 = vshrl.u32 %v7138, 23
      %v7140 = vsub.s32 %v7139, 127
      %v7141 = vand.u32 2147483647, %v7127
      %v7142 = vand.u32 %v7141, 8388607
      %v7143 = vor.u32 %v7142, 8388608
      %v7144 = vsub.s32 0, %v7143
      %v7145 = vadd.s32 %v7140, 1
      %vm7146 = vcmp.gt.s32.totalorder %v7145, 0
      %v7147 = vsel %vm7146, %v7145, 0
      %v7148 = vshrl.u32 %v7147, 5
      %v7149 = vand.u32 %v7147, 31
      %v7150 = vsub.s32 32, %v7149
      %v7151 = vshrl.u32 683565275, %v7150
      %v7152 = vshll.u32 683565275, %v7149
      %v7153 = vshrl.u32 2475754826, %v7150
      %v7154 = vor.u32 %v7152, %v7153
      %v7155 = vshll.u32 2475754826, %v7149
      %v7156 = vshrl.u32 2131351028, %v7150
      %v7157 = vor.u32 %v7155, %v7156
      %v7158 = vshll.u32 2131351028, %v7149
      %v7159 = vshrl.u32 2102212464, %v7150
      %v7160 = vor.u32 %v7158, %v7159
      %v7161 = vshll.u32 2102212464, %v7149
      %v7162 = vshrl.u32 920167782, %v7150
      %v7163 = vor.u32 %v7161, %v7162
      %v7164 = vshll.u32 920167782, %v7149
      %v7165 = vshrl.u32 1326507024, %v7150
      %v7166 = vor.u32 %v7164, %v7165
      %vm7167 = vcmp.lt.s32.totalorder %v7148, 1
      %vm7168 = vcmp.lt.s32.totalorder %v7148, 2
      %vm7169 = vcmp.lt.s32.totalorder %v7148, 3
      %vm7170 = vcmp.lt.s32.totalorder %v7148, 4
      %v7171 = vsel %vm7167, %v7151, %v7154
      %v7172 = vsel %vm7170, %v7160, 2102212464
      %v7173 = vsel %vm7169, %v7157, %v7172
      %v7174 = vsel %vm7168, %v7171, %v7173
      %v7175 = vsel %vm7167, %v7154, %v7157
      %v7176 = vsel %vm7170, %v7163, 920167782
      %v7177 = vsel %vm7169, %v7160, %v7176
      %v7178 = vsel %vm7168, %v7175, %v7177
      %v7179 = vsel %vm7167, %v7157, %v7160
      %v7180 = vsel %vm7170, %v7166, 1326507024
      %v7181 = vsel %vm7169, %v7163, %v7180
      %v7182 = vsel %vm7168, %v7179, %v7181
      %v7183 = vshll.u32 %v7143, 8
      %v7184 = vmul.u32.u64.compose %v7183, %v7182
      %v7185 = vextract.low.u32 %v7184
      %v7186 = vextract.high.u32 %v7184
      %v7187 = vmul.u32.u64.compose %v7183, %v7178
      %v7188 = vextract.low.u32 %v7187
      %v7189 = vextract.high.u32 %v7187
      %v7190 = vmul.u32 %v7183, %v7174
      %v7191 = vadd.s32 %v7186, %v7188
      %vm7192 = vc.u32 %v7186, %v7188
      %v7193 = vadd.s32 %v7189, 1
      %v7194 = vsel %vm7192, %v7193, %v7189
      %v7195 = vadd.s32 %v7190, %v7194
      %v7196 = vadd.s32 %v7195, 536870912
      %v7197 = vshrl.u32 %v7196, 30
      %v7198 = vshll.u32 %v7197, 30
      %v7199 = vsub.s32 %v7195, %v7198
      %vm7200 = vcmp.lt.s32.totalorder %v7199, 0
      %v7201 = vsub.s32 0, %v7199
      %v7202 = vsel %vm7200, %v7201, %v7199
      %v7203 = vclz %v7202
      %v7204 = vsub.s32 %v7203, 2
      %vm7205 = vcmp.gt.s32.totalorder 0, %v7204
      %v7206 = vsel %vm7205, 0, %v7204
      %v7207 = vsub.s32 32, %v7206
      %v7208 = vshll.u32 %v7199, %v7206
      %v7209 = vshrl.u32 %v7191, %v7207
      %v7210 = vor.u32 %v7208, %v7209
      %v7211 = vsub.s32 4294967266, %v7206
      %v7212 = vadd.s32 %v7211, 127
      %v7213 = vshll.u32 %v7212, 23
      %v7214 = vor.u32 4788187, %v7213
      %v7215 = vand.u32 2147483647, %v7214
      %v7217 = vcvt.s32.f32 %v7210
      %v7218 = vmul.f32 %v7217, %v7215
      %v7219 = vxor.u32 %v7218, 2147483648
      %v7220 = vsel %vm7137, %v7219, %v7218
      %v7221 = vsub.s32 4, %v7197
      %v7222 = vsel %vm7137, %v7221, %v7197
      %v7223 = vsel %vm7136, %v7127, %v7220
      %v7224 = vsel %vm7136, 0, %v7222
      %v7225 = vcosq.f32.pop %v7223
      %v7226 = vsinq.f32.pop %v7223
      %vm7227 = vweird.f32 %v7127
      %v7228 = vadd.s32 %v7224, 3
      %v7229 = vand.u32 %v7228, 3
      %vm7230 = vcmp.lt.s32.totalorder %v7229, 2
      %vm7231 = vcmp.eq.s32.totalorder %v7229, 0
      %v7232 = vxor.u32 %v7226, 2147483648
      %v7233 = vsel %vm7231, %v7225, %v7232
      %vm7234 = vcmp.eq.s32.totalorder %v7229, 2
      %v7235 = vxor.u32 %v7225, 2147483648
      %v7236 = vsel %vm7234, %v7235, %v7226
      %v7237 = vsel %vm7230, %v7233, %v7236
      %v7238 = vsel %vm7227, nan, %v7237
      %v7239 = vand.u32 2147483647, %v7128
      %vm7240 = vcmp.le.f32.partialorder %v7239, 0.7853982
      %vm7241 = vcmp.lt.s32.totalorder %v7128, 0
      %v7242 = vand.u32 %v7128, 2139095040
      %v7243 = vshrl.u32 %v7242, 23
      %v7244 = vsub.s32 %v7243, 127
      %v7245 = vand.u32 2147483647, %v7128
      %v7246 = vand.u32 %v7245, 8388607
      %v7247 = vor.u32 %v7246, 8388608
      %v7248 = vsub.s32 0, %v7247
      %v7249 = vadd.s32 %v7244, 1
      %vm7250 = vcmp.gt.s32.totalorder %v7249, 0
      %v7251 = vsel %vm7250, %v7249, 0
      %v7252 = vshrl.u32 %v7251, 5
      %v7253 = vand.u32 %v7251, 31
      %v7254 = vsub.s32 32, %v7253
      %v7255 = vshrl.u32 683565275, %v7254
      %v7256 = vshll.u32 683565275, %v7253
      %v7257 = vshrl.u32 2475754826, %v7254
      %v7258 = vor.u32 %v7256, %v7257
      %v7259 = vshll.u32 2475754826, %v7253
      %v7260 = vshrl.u32 2131351028, %v7254
      %v7261 = vor.u32 %v7259, %v7260
      %v7262 = vshll.u32 2131351028, %v7253
      %v7263 = vshrl.u32 2102212464, %v7254
      %v7264 = vor.u32 %v7262, %v7263
      %v7265 = vshll.u32 2102212464, %v7253
      %v7266 = vshrl.u32 920167782, %v7254
      %v7267 = vor.u32 %v7265, %v7266
      %v7268 = vshll.u32 920167782, %v7253
      %v7269 = vshrl.u32 1326507024, %v7254
      %v7270 = vor.u32 %v7268, %v7269
      %vm7271 = vcmp.lt.s32.totalorder %v7252, 1
      %vm7272 = vcmp.lt.s32.totalorder %v7252, 2
      %vm7273 = vcmp.lt.s32.totalorder %v7252, 3
      %vm7274 = vcmp.lt.s32.totalorder %v7252, 4
      %v7275 = vsel %vm7271, %v7255, %v7258
      %v7276 = vsel %vm7274, %v7264, 2102212464
      %v7277 = vsel %vm7273, %v7261, %v7276
      %v7278 = vsel %vm7272, %v7275, %v7277
      %v7279 = vsel %vm7271, %v7258, %v7261
      %v7280 = vsel %vm7274, %v7267, 920167782
      %v7281 = vsel %vm7273, %v7264, %v7280
      %v7282 = vsel %vm7272, %v7279, %v7281
      %v7283 = vsel %vm7271, %v7261, %v7264
      %v7284 = vsel %vm7274, %v7270, 1326507024
      %v7285 = vsel %vm7273, %v7267, %v7284
      %v7286 = vsel %vm7272, %v7283, %v7285
      %v7287 = vshll.u32 %v7247, 8
      %v7288 = vmul.u32.u64.compose %v7287, %v7286
      %v7289 = vextract.low.u32 %v7288
      %v7290 = vextract.high.u32 %v7288
      %v7291 = vmul.u32.u64.compose %v7287, %v7282
      %v7292 = vextract.low.u32 %v7291
      %v7293 = vextract.high.u32 %v7291
      %v7294 = vmul.u32 %v7287, %v7278
      %v7295 = vadd.s32 %v7290, %v7292
      %vm7296 = vc.u32 %v7290, %v7292
      %v7297 = vadd.s32 %v7293, 1
      %v7298 = vsel %vm7296, %v7297, %v7293
      %v7299 = vadd.s32 %v7294, %v7298
      %v7300 = vadd.s32 %v7299, 536870912
      %v7301 = vshrl.u32 %v7300, 30
      %v7302 = vshll.u32 %v7301, 30
      %v7303 = vsub.s32 %v7299, %v7302
      %vm7304 = vcmp.lt.s32.totalorder %v7303, 0
      %v7305 = vsub.s32 0, %v7303
      %v7306 = vsel %vm7304, %v7305, %v7303
      %v7307 = vclz %v7306
      %v7308 = vsub.s32 %v7307, 2
      %vm7309 = vcmp.gt.s32.totalorder 0, %v7308
      %v7310 = vsel %vm7309, 0, %v7308
      %v7311 = vsub.s32 32, %v7310
      %v7312 = vshll.u32 %v7303, %v7310
      %v7313 = vshrl.u32 %v7295, %v7311
      %v7314 = vor.u32 %v7312, %v7313
      %v7315 = vsub.s32 4294967266, %v7310
      %v7316 = vadd.s32 %v7315, 127
      %v7317 = vshll.u32 %v7316, 23
      %v7318 = vor.u32 4788187, %v7317
      %v7319 = vand.u32 2147483647, %v7318
      %v7321 = vcvt.s32.f32 %v7314
      %v7322 = vmul.f32 %v7321, %v7319
      %v7323 = vxor.u32 %v7322, 2147483648
      %v7324 = vsel %vm7241, %v7323, %v7322
      %v7325 = vsub.s32 4, %v7301
      %v7326 = vsel %vm7241, %v7325, %v7301
      %v7327 = vsel %vm7240, %v7128, %v7324
      %v7328 = vsel %vm7240, 0, %v7326
      %v7329 = vcosq.f32.pop %v7327
      %v7330 = vsinq.f32.pop %v7327
      %vm7331 = vweird.f32 %v7128
      %v7332 = vadd.s32 %v7328, 3
      %v7333 = vand.u32 %v7332, 3
      %vm7334 = vcmp.lt.s32.totalorder %v7333, 2
      %vm7335 = vcmp.eq.s32.totalorder %v7333, 0
      %v7336 = vxor.u32 %v7330, 2147483648
      %v7337 = vsel %vm7335, %v7329, %v7336
      %vm7338 = vcmp.eq.s32.totalorder %v7333, 2
      %v7339 = vxor.u32 %v7329, 2147483648
      %v7340 = vsel %vm7338, %v7339, %v7330
      %v7341 = vsel %vm7334, %v7337, %v7340
      %v7342 = vsel %vm7331, nan, %v7341
      %v7343 = vand.u32 2147483647, %v7129
      %vm7344 = vcmp.le.f32.partialorder %v7343, 0.7853982
      %vm7345 = vcmp.lt.s32.totalorder %v7129, 0
      %v7346 = vand.u32 %v7129, 2139095040
      %v7347 = vshrl.u32 %v7346, 23
      %v7348 = vsub.s32 %v7347, 127
      %v7349 = vand.u32 2147483647, %v7129
      %v7350 = vand.u32 %v7349, 8388607
      %v7351 = vor.u32 %v7350, 8388608
      %v7352 = vsub.s32 0, %v7351
      %v7353 = vadd.s32 %v7348, 1
      %vm7354 = vcmp.gt.s32.totalorder %v7353, 0
      %v7355 = vsel %vm7354, %v7353, 0
      %v7356 = vshrl.u32 %v7355, 5
      %v7357 = vand.u32 %v7355, 31
      %v7358 = vsub.s32 32, %v7357
      %v7359 = vshrl.u32 683565275, %v7358
      %v7360 = vshll.u32 683565275, %v7357
      %v7361 = vshrl.u32 2475754826, %v7358
      %v7362 = vor.u32 %v7360, %v7361
      %v7363 = vshll.u32 2475754826, %v7357
      %v7364 = vshrl.u32 2131351028, %v7358
      %v7365 = vor.u32 %v7363, %v7364
      %v7366 = vshll.u32 2131351028, %v7357
      %v7367 = vshrl.u32 2102212464, %v7358
      %v7368 = vor.u32 %v7366, %v7367
      %v7369 = vshll.u32 2102212464, %v7357
      %v7370 = vshrl.u32 920167782, %v7358
      %v7371 = vor.u32 %v7369, %v7370
      %v7372 = vshll.u32 920167782, %v7357
      %v7373 = vshrl.u32 1326507024, %v7358
      %v7374 = vor.u32 %v7372, %v7373
      %vm7375 = vcmp.lt.s32.totalorder %v7356, 1
      %vm7376 = vcmp.lt.s32.totalorder %v7356, 2
      %vm7377 = vcmp.lt.s32.totalorder %v7356, 3
      %vm7378 = vcmp.lt.s32.totalorder %v7356, 4
      %v7379 = vsel %vm7375, %v7359, %v7362
      %v7380 = vsel %vm7378, %v7368, 2102212464
      %v7381 = vsel %vm7377, %v7365, %v7380
      %v7382 = vsel %vm7376, %v7379, %v7381
      %v7383 = vsel %vm7375, %v7362, %v7365
      %v7384 = vsel %vm7378, %v7371, 920167782
      %v7385 = vsel %vm7377, %v7368, %v7384
      %v7386 = vsel %vm7376, %v7383, %v7385
      %v7387 = vsel %vm7375, %v7365, %v7368
      %v7388 = vsel %vm7378, %v7374, 1326507024
      %v7389 = vsel %vm7377, %v7371, %v7388
      %v7390 = vsel %vm7376, %v7387, %v7389
      %v7391 = vshll.u32 %v7351, 8
      %v7392 = vmul.u32.u64.compose %v7391, %v7390
      %v7393 = vextract.low.u32 %v7392
      %v7394 = vextract.high.u32 %v7392
      %v7395 = vmul.u32.u64.compose %v7391, %v7386
      %v7396 = vextract.low.u32 %v7395
      %v7397 = vextract.high.u32 %v7395
      %v7398 = vmul.u32 %v7391, %v7382
      %v7399 = vadd.s32 %v7394, %v7396
      %vm7400 = vc.u32 %v7394, %v7396
      %v7401 = vadd.s32 %v7397, 1
      %v7402 = vsel %vm7400, %v7401, %v7397
      %v7403 = vadd.s32 %v7398, %v7402
      %v7404 = vadd.s32 %v7403, 536870912
      %v7405 = vshrl.u32 %v7404, 30
      %v7406 = vshll.u32 %v7405, 30
      %v7407 = vsub.s32 %v7403, %v7406
      %vm7408 = vcmp.lt.s32.totalorder %v7407, 0
      %v7409 = vsub.s32 0, %v7407
      %v7410 = vsel %vm7408, %v7409, %v7407
      %v7411 = vclz %v7410
      %v7412 = vsub.s32 %v7411, 2
      %vm7413 = vcmp.gt.s32.totalorder 0, %v7412
      %v7414 = vsel %vm7413, 0, %v7412
      %v7415 = vsub.s32 32, %v7414
      %v7416 = vshll.u32 %v7407, %v7414
      %v7417 = vshrl.u32 %v7399, %v7415
      %v7418 = vor.u32 %v7416, %v7417
      %v7419 = vsub.s32 4294967266, %v7414
      %v7420 = vadd.s32 %v7419, 127
      %v7421 = vshll.u32 %v7420, 23
      %v7422 = vor.u32 4788187, %v7421
      %v7423 = vand.u32 2147483647, %v7422
      %v7425 = vcvt.s32.f32 %v7418
      %v7426 = vmul.f32 %v7425, %v7423
      %v7427 = vxor.u32 %v7426, 2147483648
      %v7428 = vsel %vm7345, %v7427, %v7426
      %v7429 = vsub.s32 4, %v7405
      %v7430 = vsel %vm7345, %v7429, %v7405
      %v7431 = vsel %vm7344, %v7129, %v7428
      %v7432 = vsel %vm7344, 0, %v7430
      %v7433 = vcosq.f32.pop %v7431
      %v7434 = vsinq.f32.pop %v7431
      %vm7435 = vweird.f32 %v7129
      %v7436 = vadd.s32 %v7432, 3
      %v7437 = vand.u32 %v7436, 3
      %vm7438 = vcmp.lt.s32.totalorder %v7437, 2
      %vm7439 = vcmp.eq.s32.totalorder %v7437, 0
      %v7440 = vxor.u32 %v7434, 2147483648
      %v7441 = vsel %vm7439, %v7433, %v7440
      %vm7442 = vcmp.eq.s32.totalorder %v7437, 2
      %v7443 = vxor.u32 %v7433, 2147483648
      %v7444 = vsel %vm7442, %v7443, %v7434
      %v7445 = vsel %vm7438, %v7441, %v7444
      %v7446 = vsel %vm7435, nan, %v7445
      %v7447 = vand.u32 2147483647, %v7130
      %vm7448 = vcmp.le.f32.partialorder %v7447, 0.7853982
      %vm7449 = vcmp.lt.s32.totalorder %v7130, 0
      %v7450 = vand.u32 %v7130, 2139095040
      %v7451 = vshrl.u32 %v7450, 23
      %v7452 = vsub.s32 %v7451, 127
      %v7453 = vand.u32 2147483647, %v7130
      %v7454 = vand.u32 %v7453, 8388607
      %v7455 = vor.u32 %v7454, 8388608
      %v7456 = vsub.s32 0, %v7455
      %v7457 = vadd.s32 %v7452, 1
      %vm7458 = vcmp.gt.s32.totalorder %v7457, 0
      %v7459 = vsel %vm7458, %v7457, 0
      %v7460 = vshrl.u32 %v7459, 5
      %v7461 = vand.u32 %v7459, 31
      %v7462 = vsub.s32 32, %v7461
      %v7463 = vshrl.u32 683565275, %v7462
      %v7464 = vshll.u32 683565275, %v7461
      %v7465 = vshrl.u32 2475754826, %v7462
      %v7466 = vor.u32 %v7464, %v7465
      %v7467 = vshll.u32 2475754826, %v7461
      %v7468 = vshrl.u32 2131351028, %v7462
      %v7469 = vor.u32 %v7467, %v7468
      %v7470 = vshll.u32 2131351028, %v7461
      %v7471 = vshrl.u32 2102212464, %v7462
      %v7472 = vor.u32 %v7470, %v7471
      %v7473 = vshll.u32 2102212464, %v7461
      %v7474 = vshrl.u32 920167782, %v7462
      %v7475 = vor.u32 %v7473, %v7474
      %v7476 = vshll.u32 920167782, %v7461
      %v7477 = vshrl.u32 1326507024, %v7462
      %v7478 = vor.u32 %v7476, %v7477
      %vm7479 = vcmp.lt.s32.totalorder %v7460, 1
      %vm7480 = vcmp.lt.s32.totalorder %v7460, 2
      %vm7481 = vcmp.lt.s32.totalorder %v7460, 3
      %vm7482 = vcmp.lt.s32.totalorder %v7460, 4
      %v7483 = vsel %vm7479, %v7463, %v7466
      %v7484 = vsel %vm7482, %v7472, 2102212464
      %v7485 = vsel %vm7481, %v7469, %v7484
      %v7486 = vsel %vm7480, %v7483, %v7485
      %v7487 = vsel %vm7479, %v7466, %v7469
      %v7488 = vsel %vm7482, %v7475, 920167782
      %v7489 = vsel %vm7481, %v7472, %v7488
      %v7490 = vsel %vm7480, %v7487, %v7489
      %v7491 = vsel %vm7479, %v7469, %v7472
      %v7492 = vsel %vm7482, %v7478, 1326507024
      %v7493 = vsel %vm7481, %v7475, %v7492
      %v7494 = vsel %vm7480, %v7491, %v7493
      %v7495 = vshll.u32 %v7455, 8
      %v7496 = vmul.u32.u64.compose %v7495, %v7494
      %v7497 = vextract.low.u32 %v7496
      %v7498 = vextract.high.u32 %v7496
      %v7499 = vmul.u32.u64.compose %v7495, %v7490
      %v7500 = vextract.low.u32 %v7499
      %v7501 = vextract.high.u32 %v7499
      %v7502 = vmul.u32 %v7495, %v7486
      %v7503 = vadd.s32 %v7498, %v7500
      %vm7504 = vc.u32 %v7498, %v7500
      %v7505 = vadd.s32 %v7501, 1
      %v7506 = vsel %vm7504, %v7505, %v7501
      %v7507 = vadd.s32 %v7502, %v7506
      %v7508 = vadd.s32 %v7507, 536870912
      %v7509 = vshrl.u32 %v7508, 30
      %v7510 = vshll.u32 %v7509, 30
      %v7511 = vsub.s32 %v7507, %v7510
      %vm7512 = vcmp.lt.s32.totalorder %v7511, 0
      %v7513 = vsub.s32 0, %v7511
      %v7514 = vsel %vm7512, %v7513, %v7511
      %v7515 = vclz %v7514
      %v7516 = vsub.s32 %v7515, 2
      %vm7517 = vcmp.gt.s32.totalorder 0, %v7516
      %v7518 = vsel %vm7517, 0, %v7516
      %v7519 = vsub.s32 32, %v7518
      %v7520 = vshll.u32 %v7511, %v7518
      %v7521 = vshrl.u32 %v7503, %v7519
      %v7522 = vor.u32 %v7520, %v7521
      %v7523 = vsub.s32 4294967266, %v7518
      %v7524 = vadd.s32 %v7523, 127
      %v7525 = vshll.u32 %v7524, 23
      %v7526 = vor.u32 4788187, %v7525
      %v7527 = vand.u32 2147483647, %v7526
      %v7529 = vcvt.s32.f32 %v7522
      %v7530 = vmul.f32 %v7529, %v7527
      %v7531 = vxor.u32 %v7530, 2147483648
      %v7532 = vsel %vm7449, %v7531, %v7530
      %v7533 = vsub.s32 4, %v7509
      %v7534 = vsel %vm7449, %v7533, %v7509
      %v7535 = vsel %vm7448, %v7130, %v7532
      %v7536 = vsel %vm7448, 0, %v7534
      %v7537 = vcosq.f32.pop %v7535
      %v7538 = vsinq.f32.pop %v7535
      %vm7539 = vweird.f32 %v7130
      %v7540 = vadd.s32 %v7536, 3
      %v7541 = vand.u32 %v7540, 3
      %vm7542 = vcmp.lt.s32.totalorder %v7541, 2
      %vm7543 = vcmp.eq.s32.totalorder %v7541, 0
      %v7544 = vxor.u32 %v7538, 2147483648
      %v7545 = vsel %vm7543, %v7537, %v7544
      %vm7546 = vcmp.eq.s32.totalorder %v7541, 2
      %v7547 = vxor.u32 %v7537, 2147483648
      %v7548 = vsel %vm7546, %v7547, %v7538
      %v7549 = vsel %vm7542, %v7545, %v7548
      %v7550 = vsel %vm7539, nan, %v7549
      %v7551 = vand.u32 2147483647, %v7131
      %vm7552 = vcmp.le.f32.partialorder %v7551, 0.7853982
      %vm7553 = vcmp.lt.s32.totalorder %v7131, 0
      %v7554 = vand.u32 %v7131, 2139095040
      %v7555 = vshrl.u32 %v7554, 23
      %v7556 = vsub.s32 %v7555, 127
      %v7557 = vand.u32 2147483647, %v7131
      %v7558 = vand.u32 %v7557, 8388607
      %v7559 = vor.u32 %v7558, 8388608
      %v7560 = vsub.s32 0, %v7559
      %v7561 = vadd.s32 %v7556, 1
      %vm7562 = vcmp.gt.s32.totalorder %v7561, 0
      %v7563 = vsel %vm7562, %v7561, 0
      %v7564 = vshrl.u32 %v7563, 5
      %v7565 = vand.u32 %v7563, 31
      %v7566 = vsub.s32 32, %v7565
      %v7567 = vshrl.u32 683565275, %v7566
      %v7568 = vshll.u32 683565275, %v7565
      %v7569 = vshrl.u32 2475754826, %v7566
      %v7570 = vor.u32 %v7568, %v7569
      %v7571 = vshll.u32 2475754826, %v7565
      %v7572 = vshrl.u32 2131351028, %v7566
      %v7573 = vor.u32 %v7571, %v7572
      %v7574 = vshll.u32 2131351028, %v7565
      %v7575 = vshrl.u32 2102212464, %v7566
      %v7576 = vor.u32 %v7574, %v7575
      %v7577 = vshll.u32 2102212464, %v7565
      %v7578 = vshrl.u32 920167782, %v7566
      %v7579 = vor.u32 %v7577, %v7578
      %v7580 = vshll.u32 920167782, %v7565
      %v7581 = vshrl.u32 1326507024, %v7566
      %v7582 = vor.u32 %v7580, %v7581
      %vm7583 = vcmp.lt.s32.totalorder %v7564, 1
      %vm7584 = vcmp.lt.s32.totalorder %v7564, 2
      %vm7585 = vcmp.lt.s32.totalorder %v7564, 3
      %vm7586 = vcmp.lt.s32.totalorder %v7564, 4
      %v7587 = vsel %vm7583, %v7567, %v7570
      %v7588 = vsel %vm7586, %v7576, 2102212464
      %v7589 = vsel %vm7585, %v7573, %v7588
      %v7590 = vsel %vm7584, %v7587, %v7589
      %v7591 = vsel %vm7583, %v7570, %v7573
      %v7592 = vsel %vm7586, %v7579, 920167782
      %v7593 = vsel %vm7585, %v7576, %v7592
      %v7594 = vsel %vm7584, %v7591, %v7593
      %v7595 = vsel %vm7583, %v7573, %v7576
      %v7596 = vsel %vm7586, %v7582, 1326507024
      %v7597 = vsel %vm7585, %v7579, %v7596
      %v7598 = vsel %vm7584, %v7595, %v7597
      %v7599 = vshll.u32 %v7559, 8
      %v7600 = vmul.u32.u64.compose %v7599, %v7598
      %v7601 = vextract.low.u32 %v7600
      %v7602 = vextract.high.u32 %v7600
      %v7603 = vmul.u32.u64.compose %v7599, %v7594
      %v7604 = vextract.low.u32 %v7603
      %v7605 = vextract.high.u32 %v7603
      %v7606 = vmul.u32 %v7599, %v7590
      %v7607 = vadd.s32 %v7602, %v7604
      %vm7608 = vc.u32 %v7602, %v7604
      %v7609 = vadd.s32 %v7605, 1
      %v7610 = vsel %vm7608, %v7609, %v7605
      %v7611 = vadd.s32 %v7606, %v7610
      %v7612 = vadd.s32 %v7611, 536870912
      %v7613 = vshrl.u32 %v7612, 30
      %v7614 = vshll.u32 %v7613, 30
      %v7615 = vsub.s32 %v7611, %v7614
      %vm7616 = vcmp.lt.s32.totalorder %v7615, 0
      %v7617 = vsub.s32 0, %v7615
      %v7618 = vsel %vm7616, %v7617, %v7615
      %v7619 = vclz %v7618
      %v7620 = vsub.s32 %v7619, 2
      %vm7621 = vcmp.gt.s32.totalorder 0, %v7620
      %v7622 = vsel %vm7621, 0, %v7620
      %v7623 = vsub.s32 32, %v7622
      %v7624 = vshll.u32 %v7615, %v7622
      %v7625 = vshrl.u32 %v7607, %v7623
      %v7626 = vor.u32 %v7624, %v7625
      %v7627 = vsub.s32 4294967266, %v7622
      %v7628 = vadd.s32 %v7627, 127
      %v7629 = vshll.u32 %v7628, 23
      %v7630 = vor.u32 4788187, %v7629
      %v7631 = vand.u32 2147483647, %v7630
      %v7633 = vcvt.s32.f32 %v7626
      %v7634 = vmul.f32 %v7633, %v7631
      %v7635 = vxor.u32 %v7634, 2147483648
      %v7636 = vsel %vm7553, %v7635, %v7634
      %v7637 = vsub.s32 4, %v7613
      %v7638 = vsel %vm7553, %v7637, %v7613
      %v7639 = vsel %vm7552, %v7131, %v7636
      %v7640 = vsel %vm7552, 0, %v7638
      %v7641 = vcosq.f32.pop %v7639
      %v7642 = vsinq.f32.pop %v7639
      %vm7643 = vweird.f32 %v7131
      %v7644 = vadd.s32 %v7640, 3
      %v7645 = vand.u32 %v7644, 3
      %vm7646 = vcmp.lt.s32.totalorder %v7645, 2
      %vm7647 = vcmp.eq.s32.totalorder %v7645, 0
      %v7648 = vxor.u32 %v7642, 2147483648
      %v7649 = vsel %vm7647, %v7641, %v7648
      %vm7650 = vcmp.eq.s32.totalorder %v7645, 2
      %v7651 = vxor.u32 %v7641, 2147483648
      %v7652 = vsel %vm7650, %v7651, %v7642
      %v7653 = vsel %vm7646, %v7649, %v7652
      %v7654 = vsel %vm7643, nan, %v7653
      %v7655 = vand.u32 2147483647, %v7132
      %vm7656 = vcmp.le.f32.partialorder %v7655, 0.7853982
      %vm7657 = vcmp.lt.s32.totalorder %v7132, 0
      %v7658 = vand.u32 %v7132, 2139095040
      %v7659 = vshrl.u32 %v7658, 23
      %v7660 = vsub.s32 %v7659, 127
      %v7661 = vand.u32 2147483647, %v7132
      %v7662 = vand.u32 %v7661, 8388607
      %v7663 = vor.u32 %v7662, 8388608
      %v7664 = vsub.s32 0, %v7663
      %v7665 = vadd.s32 %v7660, 1
      %vm7666 = vcmp.gt.s32.totalorder %v7665, 0
      %v7667 = vsel %vm7666, %v7665, 0
      %v7668 = vshrl.u32 %v7667, 5
      %v7669 = vand.u32 %v7667, 31
      %v7670 = vsub.s32 32, %v7669
      %v7671 = vshrl.u32 683565275, %v7670
      %v7672 = vshll.u32 683565275, %v7669
      %v7673 = vshrl.u32 2475754826, %v7670
      %v7674 = vor.u32 %v7672, %v7673
      %v7675 = vshll.u32 2475754826, %v7669
      %v7676 = vshrl.u32 2131351028, %v7670
      %v7677 = vor.u32 %v7675, %v7676
      %v7678 = vshll.u32 2131351028, %v7669
      %v7679 = vshrl.u32 2102212464, %v7670
      %v7680 = vor.u32 %v7678, %v7679
      %v7681 = vshll.u32 2102212464, %v7669
      %v7682 = vshrl.u32 920167782, %v7670
      %v7683 = vor.u32 %v7681, %v7682
      %v7684 = vshll.u32 920167782, %v7669
      %v7685 = vshrl.u32 1326507024, %v7670
      %v7686 = vor.u32 %v7684, %v7685
      %vm7687 = vcmp.lt.s32.totalorder %v7668, 1
      %vm7688 = vcmp.lt.s32.totalorder %v7668, 2
      %vm7689 = vcmp.lt.s32.totalorder %v7668, 3
      %vm7690 = vcmp.lt.s32.totalorder %v7668, 4
      %v7691 = vsel %vm7687, %v7671, %v7674
      %v7692 = vsel %vm7690, %v7680, 2102212464
      %v7693 = vsel %vm7689, %v7677, %v7692
      %v7694 = vsel %vm7688, %v7691, %v7693
      %v7695 = vsel %vm7687, %v7674, %v7677
      %v7696 = vsel %vm7690, %v7683, 920167782
      %v7697 = vsel %vm7689, %v7680, %v7696
      %v7698 = vsel %vm7688, %v7695, %v7697
      %v7699 = vsel %vm7687, %v7677, %v7680
      %v7700 = vsel %vm7690, %v7686, 1326507024
      %v7701 = vsel %vm7689, %v7683, %v7700
      %v7702 = vsel %vm7688, %v7699, %v7701
      %v7703 = vshll.u32 %v7663, 8
      %v7704 = vmul.u32.u64.compose %v7703, %v7702
      %v7705 = vextract.low.u32 %v7704
      %v7706 = vextract.high.u32 %v7704
      %v7707 = vmul.u32.u64.compose %v7703, %v7698
      %v7708 = vextract.low.u32 %v7707
      %v7709 = vextract.high.u32 %v7707
      %v7710 = vmul.u32 %v7703, %v7694
      %v7711 = vadd.s32 %v7706, %v7708
      %vm7712 = vc.u32 %v7706, %v7708
      %v7713 = vadd.s32 %v7709, 1
      %v7714 = vsel %vm7712, %v7713, %v7709
      %v7715 = vadd.s32 %v7710, %v7714
      %v7716 = vadd.s32 %v7715, 536870912
      %v7717 = vshrl.u32 %v7716, 30
      %v7718 = vshll.u32 %v7717, 30
      %v7719 = vsub.s32 %v7715, %v7718
      %vm7720 = vcmp.lt.s32.totalorder %v7719, 0
      %v7721 = vsub.s32 0, %v7719
      %v7722 = vsel %vm7720, %v7721, %v7719
      %v7723 = vclz %v7722
      %v7724 = vsub.s32 %v7723, 2
      %vm7725 = vcmp.gt.s32.totalorder 0, %v7724
      %v7726 = vsel %vm7725, 0, %v7724
      %v7727 = vsub.s32 32, %v7726
      %v7728 = vshll.u32 %v7719, %v7726
      %v7729 = vshrl.u32 %v7711, %v7727
      %v7730 = vor.u32 %v7728, %v7729
      %v7731 = vsub.s32 4294967266, %v7726
      %v7732 = vadd.s32 %v7731, 127
      %v7733 = vshll.u32 %v7732, 23
      %v7734 = vor.u32 4788187, %v7733
      %v7735 = vand.u32 2147483647, %v7734
      %v7737 = vcvt.s32.f32 %v7730
      %v7738 = vmul.f32 %v7737, %v7735
      %v7739 = vxor.u32 %v7738, 2147483648
      %v7740 = vsel %vm7657, %v7739, %v7738
      %v7741 = vsub.s32 4, %v7717
      %v7742 = vsel %vm7657, %v7741, %v7717
      %v7743 = vsel %vm7656, %v7132, %v7740
      %v7744 = vsel %vm7656, 0, %v7742
      %v7745 = vcosq.f32.pop %v7743
      %v7746 = vsinq.f32.pop %v7743
      %vm7747 = vweird.f32 %v7132
      %v7748 = vadd.s32 %v7744, 3
      %v7749 = vand.u32 %v7748, 3
      %vm7750 = vcmp.lt.s32.totalorder %v7749, 2
      %vm7751 = vcmp.eq.s32.totalorder %v7749, 0
      %v7752 = vxor.u32 %v7746, 2147483648
      %v7753 = vsel %vm7751, %v7745, %v7752
      %vm7754 = vcmp.eq.s32.totalorder %v7749, 2
      %v7755 = vxor.u32 %v7745, 2147483648
      %v7756 = vsel %vm7754, %v7755, %v7746
      %v7757 = vsel %vm7750, %v7753, %v7756
      %v7758 = vsel %vm7747, nan, %v7757
      %v7759 = vand.u32 2147483647, %v7133
      %vm7760 = vcmp.le.f32.partialorder %v7759, 0.7853982
      %vm7761 = vcmp.lt.s32.totalorder %v7133, 0
      %v7762 = vand.u32 %v7133, 2139095040
      %v7763 = vshrl.u32 %v7762, 23
      %v7764 = vsub.s32 %v7763, 127
      %v7765 = vand.u32 2147483647, %v7133
      %v7766 = vand.u32 %v7765, 8388607
      %v7767 = vor.u32 %v7766, 8388608
      %v7768 = vsub.s32 0, %v7767
      %v7769 = vadd.s32 %v7764, 1
      %vm7770 = vcmp.gt.s32.totalorder %v7769, 0
      %v7771 = vsel %vm7770, %v7769, 0
      %v7772 = vshrl.u32 %v7771, 5
      %v7773 = vand.u32 %v7771, 31
      %v7774 = vsub.s32 32, %v7773
      %v7775 = vshrl.u32 683565275, %v7774
      %v7776 = vshll.u32 683565275, %v7773
      %v7777 = vshrl.u32 2475754826, %v7774
      %v7778 = vor.u32 %v7776, %v7777
      %v7779 = vshll.u32 2475754826, %v7773
      %v7780 = vshrl.u32 2131351028, %v7774
      %v7781 = vor.u32 %v7779, %v7780
      %v7782 = vshll.u32 2131351028, %v7773
      %v7783 = vshrl.u32 2102212464, %v7774
      %v7784 = vor.u32 %v7782, %v7783
      %v7785 = vshll.u32 2102212464, %v7773
      %v7786 = vshrl.u32 920167782, %v7774
      %v7787 = vor.u32 %v7785, %v7786
      %v7788 = vshll.u32 920167782, %v7773
      %v7789 = vshrl.u32 1326507024, %v7774
      %v7790 = vor.u32 %v7788, %v7789
      %vm7791 = vcmp.lt.s32.totalorder %v7772, 1
      %vm7792 = vcmp.lt.s32.totalorder %v7772, 2
      %vm7793 = vcmp.lt.s32.totalorder %v7772, 3
      %vm7794 = vcmp.lt.s32.totalorder %v7772, 4
      %v7795 = vsel %vm7791, %v7775, %v7778
      %v7796 = vsel %vm7794, %v7784, 2102212464
      %v7797 = vsel %vm7793, %v7781, %v7796
      %v7798 = vsel %vm7792, %v7795, %v7797
      %v7799 = vsel %vm7791, %v7778, %v7781
      %v7800 = vsel %vm7794, %v7787, 920167782
      %v7801 = vsel %vm7793, %v7784, %v7800
      %v7802 = vsel %vm7792, %v7799, %v7801
      %v7803 = vsel %vm7791, %v7781, %v7784
      %v7804 = vsel %vm7794, %v7790, 1326507024
      %v7805 = vsel %vm7793, %v7787, %v7804
      %v7806 = vsel %vm7792, %v7803, %v7805
      %v7807 = vshll.u32 %v7767, 8
      %v7808 = vmul.u32.u64.compose %v7807, %v7806
      %v7809 = vextract.low.u32 %v7808
      %v7810 = vextract.high.u32 %v7808
      %v7811 = vmul.u32.u64.compose %v7807, %v7802
      %v7812 = vextract.low.u32 %v7811
      %v7813 = vextract.high.u32 %v7811
      %v7814 = vmul.u32 %v7807, %v7798
      %v7815 = vadd.s32 %v7810, %v7812
      %vm7816 = vc.u32 %v7810, %v7812
      %v7817 = vadd.s32 %v7813, 1
      %v7818 = vsel %vm7816, %v7817, %v7813
      %v7819 = vadd.s32 %v7814, %v7818
      %v7820 = vadd.s32 %v7819, 536870912
      %v7821 = vshrl.u32 %v7820, 30
      %v7822 = vshll.u32 %v7821, 30
      %v7823 = vsub.s32 %v7819, %v7822
      %vm7824 = vcmp.lt.s32.totalorder %v7823, 0
      %v7825 = vsub.s32 0, %v7823
      %v7826 = vsel %vm7824, %v7825, %v7823
      %v7827 = vclz %v7826
      %v7828 = vsub.s32 %v7827, 2
      %vm7829 = vcmp.gt.s32.totalorder 0, %v7828
      %v7830 = vsel %vm7829, 0, %v7828
      %v7831 = vsub.s32 32, %v7830
      %v7832 = vshll.u32 %v7823, %v7830
      %v7833 = vshrl.u32 %v7815, %v7831
      %v7834 = vor.u32 %v7832, %v7833
      %v7835 = vsub.s32 4294967266, %v7830
      %v7836 = vadd.s32 %v7835, 127
      %v7837 = vshll.u32 %v7836, 23
      %v7838 = vor.u32 4788187, %v7837
      %v7839 = vand.u32 2147483647, %v7838
      %v7841 = vcvt.s32.f32 %v7834
      %v7842 = vmul.f32 %v7841, %v7839
      %v7843 = vxor.u32 %v7842, 2147483648
      %v7844 = vsel %vm7761, %v7843, %v7842
      %v7845 = vsub.s32 4, %v7821
      %v7846 = vsel %vm7761, %v7845, %v7821
      %v7847 = vsel %vm7760, %v7133, %v7844
      %v7848 = vsel %vm7760, 0, %v7846
      %v7849 = vcosq.f32.pop %v7847
      %v7850 = vsinq.f32.pop %v7847
      %vm7851 = vweird.f32 %v7133
      %v7852 = vadd.s32 %v7848, 3
      %v7853 = vand.u32 %v7852, 3
      %vm7854 = vcmp.lt.s32.totalorder %v7853, 2
      %vm7855 = vcmp.eq.s32.totalorder %v7853, 0
      %v7856 = vxor.u32 %v7850, 2147483648
      %v7857 = vsel %vm7855, %v7849, %v7856
      %vm7858 = vcmp.eq.s32.totalorder %v7853, 2
      %v7859 = vxor.u32 %v7849, 2147483648
      %v7860 = vsel %vm7858, %v7859, %v7850
      %v7861 = vsel %vm7854, %v7857, %v7860
      %v7862 = vsel %vm7851, nan, %v7861
      %v7863 = vand.u32 2147483647, %v7134
      %vm7864 = vcmp.le.f32.partialorder %v7863, 0.7853982
      %vm7865 = vcmp.lt.s32.totalorder %v7134, 0
      %v7866 = vand.u32 %v7134, 2139095040
      %v7867 = vshrl.u32 %v7866, 23
      %v7868 = vsub.s32 %v7867, 127
      %v7869 = vand.u32 2147483647, %v7134
      %v7870 = vand.u32 %v7869, 8388607
      %v7871 = vor.u32 %v7870, 8388608
      %v7872 = vsub.s32 0, %v7871
      %v7873 = vadd.s32 %v7868, 1
      %vm7874 = vcmp.gt.s32.totalorder %v7873, 0
      %v7875 = vsel %vm7874, %v7873, 0
      %v7876 = vshrl.u32 %v7875, 5
      %v7877 = vand.u32 %v7875, 31
      %v7878 = vsub.s32 32, %v7877
      %v7879 = vshrl.u32 683565275, %v7878
      %v7880 = vshll.u32 683565275, %v7877
      %v7881 = vshrl.u32 2475754826, %v7878
      %v7882 = vor.u32 %v7880, %v7881
      %v7883 = vshll.u32 2475754826, %v7877
      %v7884 = vshrl.u32 2131351028, %v7878
      %v7885 = vor.u32 %v7883, %v7884
      %v7886 = vshll.u32 2131351028, %v7877
      %v7887 = vshrl.u32 2102212464, %v7878
      %v7888 = vor.u32 %v7886, %v7887
      %v7889 = vshll.u32 2102212464, %v7877
      %v7890 = vshrl.u32 920167782, %v7878
      %v7891 = vor.u32 %v7889, %v7890
      %v7892 = vshll.u32 920167782, %v7877
      %v7893 = vshrl.u32 1326507024, %v7878
      %v7894 = vor.u32 %v7892, %v7893
      %vm7895 = vcmp.lt.s32.totalorder %v7876, 1
      %vm7896 = vcmp.lt.s32.totalorder %v7876, 2
      %vm7897 = vcmp.lt.s32.totalorder %v7876, 3
      %vm7898 = vcmp.lt.s32.totalorder %v7876, 4
      %v7899 = vsel %vm7895, %v7879, %v7882
      %v7900 = vsel %vm7898, %v7888, 2102212464
      %v7901 = vsel %vm7897, %v7885, %v7900
      %v7902 = vsel %vm7896, %v7899, %v7901
      %v7903 = vsel %vm7895, %v7882, %v7885
      %v7904 = vsel %vm7898, %v7891, 920167782
      %v7905 = vsel %vm7897, %v7888, %v7904
      %v7906 = vsel %vm7896, %v7903, %v7905
      %v7907 = vsel %vm7895, %v7885, %v7888
      %v7908 = vsel %vm7898, %v7894, 1326507024
      %v7909 = vsel %vm7897, %v7891, %v7908
      %v7910 = vsel %vm7896, %v7907, %v7909
      %v7911 = vshll.u32 %v7871, 8
      %v7912 = vmul.u32.u64.compose %v7911, %v7910
      %v7913 = vextract.low.u32 %v7912
      %v7914 = vextract.high.u32 %v7912
      %v7915 = vmul.u32.u64.compose %v7911, %v7906
      %v7916 = vextract.low.u32 %v7915
      %v7917 = vextract.high.u32 %v7915
      %v7918 = vmul.u32 %v7911, %v7902
      %v7919 = vadd.s32 %v7914, %v7916
      %vm7920 = vc.u32 %v7914, %v7916
      %v7921 = vadd.s32 %v7917, 1
      %v7922 = vsel %vm7920, %v7921, %v7917
      %v7923 = vadd.s32 %v7918, %v7922
      %v7924 = vadd.s32 %v7923, 536870912
      %v7925 = vshrl.u32 %v7924, 30
      %v7926 = vshll.u32 %v7925, 30
      %v7927 = vsub.s32 %v7923, %v7926
      %vm7928 = vcmp.lt.s32.totalorder %v7927, 0
      %v7929 = vsub.s32 0, %v7927
      %v7930 = vsel %vm7928, %v7929, %v7927
      %v7931 = vclz %v7930
      %v7932 = vsub.s32 %v7931, 2
      %vm7933 = vcmp.gt.s32.totalorder 0, %v7932
      %v7934 = vsel %vm7933, 0, %v7932
      %v7935 = vsub.s32 32, %v7934
      %v7936 = vshll.u32 %v7927, %v7934
      %v7937 = vshrl.u32 %v7919, %v7935
      %v7938 = vor.u32 %v7936, %v7937
      %v7939 = vsub.s32 4294967266, %v7934
      %v7940 = vadd.s32 %v7939, 127
      %v7941 = vshll.u32 %v7940, 23
      %v7942 = vor.u32 4788187, %v7941
      %v7943 = vand.u32 2147483647, %v7942
      %v7945 = vcvt.s32.f32 %v7938
      %v7946 = vmul.f32 %v7945, %v7943
      %v7947 = vxor.u32 %v7946, 2147483648
      %v7948 = vsel %vm7865, %v7947, %v7946
      %v7949 = vsub.s32 4, %v7925
      %v7950 = vsel %vm7865, %v7949, %v7925
      %v7951 = vsel %vm7864, %v7134, %v7948
      %v7952 = vsel %vm7864, 0, %v7950
      %v7953 = vcosq.f32.pop %v7951
      %v7954 = vsinq.f32.pop %v7951
      %vm7955 = vweird.f32 %v7134
      %v7956 = vadd.s32 %v7952, 3
      %v7957 = vand.u32 %v7956, 3
      %vm7958 = vcmp.lt.s32.totalorder %v7957, 2
      %vm7959 = vcmp.eq.s32.totalorder %v7957, 0
      %v7960 = vxor.u32 %v7954, 2147483648
      %v7961 = vsel %vm7959, %v7953, %v7960
      %vm7962 = vcmp.eq.s32.totalorder %v7957, 2
      %v7963 = vxor.u32 %v7953, 2147483648
      %v7964 = vsel %vm7962, %v7963, %v7954
      %v7965 = vsel %vm7958, %v7961, %v7964
      %v7966 = vsel %vm7955, nan, %v7965
      %v7967 = vld [vmem:[#allocation4] sm:$0xff]
      %v7968 = vld [vmem:[#allocation4 + $0x8] sm:$0xff]
      %v7969 = vld [vmem:[#allocation4 + $0x10] sm:$0xff]
      %v7970 = vld [vmem:[#allocation4 + $0x18] sm:$0xff]
      %v7971 = vld [vmem:[#allocation4 + $0x20] sm:$0xff]
      %v7972 = vld [vmem:[#allocation4 + $0x28] sm:$0xff]
      %v7973 = vld [vmem:[#allocation4 + $0x30] sm:$0xff]
      %v7974 = vld [vmem:[#allocation4 + $0x38] sm:$0xff]
      %v7975 = vadd.f32 %v6369, %v7967
      %v7976 = vadd.f32 %v6371, %v7968
      %v7977 = vadd.f32 %v6373, %v7969
      %v7978 = vadd.f32 %v6375, %v7970
      %v7979 = vadd.f32 %v6379, %v7971
      %v7980 = vadd.f32 %v6381, %v7972
      %v7981 = vadd.f32 %v6383, %v7973
      %v7982 = vadd.f32 %v6385, %v7974
      %v7983 = vmul.f32 %v7975, %v7238
      %v7984 = vmul.f32 %v7976, %v7342
      %v7985 = vmul.f32 %v7977, %v7446
      %v7986 = vmul.f32 %v7978, %v7550
      %v7987 = vmul.f32 %v7979, %v7654
      %v7988 = vmul.f32 %v7980, %v7758
      %v7989 = vmul.f32 %v7981, %v7862
      %v7990 = vmul.f32 %v7982, %v7966
      %7991 = vst [vmem:[#allocation4] sm:$0xff] %v7983
      %7992 = vst [vmem:[#allocation4 + $0x8] sm:$0xff] %v7984
      %7993 = vst [vmem:[#allocation4 + $0x10] sm:$0xff] %v7985
      %7994 = vst [vmem:[#allocation4 + $0x18] sm:$0xff] %v7986
      %7995 = vst [vmem:[#allocation4 + $0x20] sm:$0xff] %v7987
      %7996 = vst [vmem:[#allocation4 + $0x28] sm:$0xff] %v7988
      %7997 = vst [vmem:[#allocation4 + $0x30] sm:$0xff] %v7989
      %7998 = vst [vmem:[#allocation4 + $0x38] sm:$0xff] %v7990
      %v7999 = vld [vmem:[%s9] sm:$0xff]
      %v8000 = vld [vmem:[%s9 + $0x8] sm:$0xff]
      %v8001 = vld [vmem:[%s9 + $0x10] sm:$0xff]
      %v8002 = vld [vmem:[%s9 + $0x18] sm:$0xff]
      %v8003 = vld [vmem:[#allocation4] sm:$0xff]
      %v8004 = vld [vmem:[#allocation4 + $0x8] sm:$0xff]
      %v8005 = vld [vmem:[#allocation4 + $0x10] sm:$0xff]
      %v8006 = vld [vmem:[#allocation4 + $0x18] sm:$0xff]
      %v8007 = vld [vmem:[#allocation4 + $0x20] sm:$0xff]
      %v8008 = vld [vmem:[#allocation4 + $0x28] sm:$0xff]
      %v8009 = vld [vmem:[#allocation4 + $0x30] sm:$0xff]
      %v8010 = vld [vmem:[#allocation4 + $0x38] sm:$0xff]
      %v8011 = vld [vmem:[%s10] sm:$0xff]
      %v8012 = vld [vmem:[%s10 + $0x8] sm:$0xff]
      %v8013 = vld [vmem:[%s10 + $0x10] sm:$0xff]
      %v8014 = vld [vmem:[%s10 + $0x18] sm:$0xff]
      %8016 = vset.pattern.permute.xlu0 0
      %8017 = vperm.xlu0 %8016, %v8011
      %v8018 = vpop.permute.xlu0 %8017
      %8021 = vset.pattern.permute.xlu0 0
      %8022 = vperm.xlu0 %8021, %v8012
      %v8023 = vpop.permute.xlu0 %8022
      %8026 = vset.pattern.permute.xlu0 0
      %8027 = vperm.xlu0 %8026, %v8013
      %v8028 = vpop.permute.xlu0 %8027
      %8031 = vset.pattern.permute.xlu0 0
      %8032 = vperm.xlu0 %8031, %v8014
      %v8033 = vpop.permute.xlu0 %8032
      %v8036 = vsel %vm2038, %v7999, 0
      %v8039 = vsel %vm2038, %v8000, 0
      %v8042 = vsel %vm2038, %v8001, 0
      %v8045 = vsel %vm2038, %v8002, 0
      %8047 = vmatprep.subr.mxu0 0.0
      %8048 = vmatpush1.msra.mxu0 0.0
      %8049 = vmatprep.subr.mxu0 0.0
      %8050 = vmatpush1.msra.mxu0 0.0
      %8051 = vmatprep.subr.mxu0 0.0
      %8052 = vmatpush1.msra.mxu0 0.0
      %8053 = vmatprep.subr.mxu0 0.0
      %8054 = vmatpush1.msra.mxu0 0.0
      %8055 = vmatprep.subr.mxu0 0.0
      %8056 = vmatpush1.msra.mxu0 0.0
      %8057 = vmatprep.subr.mxu0 0.0
      %8058 = vmatpush1.msra.mxu0 0.0
      %8059 = vmatprep.subr.mxu0 0.0
      %8060 = vmatpush1.msra.mxu0 0.0
      %8061 = vmatprep.subr.mxu0 0.0
      %8062 = vmatpush1.msra.mxu0 0.0
      %8063 = vmatprep.subr.mxu0 0.0
      %8064 = vmatpush1.msra.mxu0 0.0
      %8065 = vmatprep.subr.mxu0 0.0
      %8066 = vmatpush1.msra.mxu0 0.0
      %8067 = vmatprep.subr.mxu0 0.0
      %8068 = vmatpush1.msra.mxu0 0.0
      %8069 = vmatprep.subr.mxu0 0.0
      %8070 = vmatpush1.msra.mxu0 0.0
      %v8071 = vand.u32 %v8010, 4294901760
      %8072 = vmatprep.subr.mxu0 %v8071
      %v8073 = vand.u32 %v8009, 4294901760
      %8074 = vmatpush1.msra.mxu0 %v8073
      %v8075 = vand.u32 %v8008, 4294901760
      %8076 = vmatprep.subr.mxu0 %v8075
      %v8077 = vand.u32 %v8007, 4294901760
      %8078 = vmatpush1.msra.mxu0 %v8077
      %v8079 = vand.u32 %v8006, 4294901760
      %8080 = vmatprep.subr.mxu0 %v8079
      %v8081 = vand.u32 %v8005, 4294901760
      %8082 = vmatpush1.msra.mxu0 %v8081
      %v8083 = vand.u32 %v8004, 4294901760
      %8084 = vmatprep.subr.mxu0 %v8083
      %v8085 = vand.u32 %v8003, 4294901760
      %8086 = vmatpush1.msra.mxu0 %v8085
      %8087 = vmatprep.subr.mxu0 0.0
      %8088 = vmatpush2.msra.mxu0 0.0
      %8089 = vmatprep.subr.mxu0 0.0
      %8090 = vmatpush2.msra.mxu0 0.0
      %8091 = vmatprep.subr.mxu0 0.0
      %8092 = vmatpush2.msra.mxu0 0.0
      %8093 = vmatprep.subr.mxu0 0.0
      %8094 = vmatpush2.msra.mxu0 0.0
      %8095 = vmatprep.subr.mxu0 0.0
      %8096 = vmatpush2.msra.mxu0 0.0
      %8097 = vmatprep.subr.mxu0 0.0
      %8098 = vmatpush2.msra.mxu0 0.0
      %8099 = vmatprep.subr.mxu0 0.0
      %8100 = vmatpush2.msra.mxu0 0.0
      %8101 = vmatprep.subr.mxu0 0.0
      %8102 = vmatpush2.msra.mxu0 0.0
      %8103 = vmatprep.subr.mxu0 0.0
      %8104 = vmatpush2.msra.mxu0 0.0
      %8105 = vmatprep.subr.mxu0 0.0
      %8106 = vmatpush2.msra.mxu0 0.0
      %8107 = vmatprep.subr.mxu0 0.0
      %8108 = vmatpush2.msra.mxu0 0.0
      %8109 = vmatprep.subr.mxu0 0.0
      %8110 = vmatpush2.msra.mxu0 0.0
      %8111 = vmatprep.subr.mxu0 0.0
      %8112 = vmatpush2.msra.mxu0 0.0
      %8113 = vmatprep.subr.mxu0 0.0
      %8114 = vmatpush2.msra.mxu0 0.0
      %8115 = vmatprep.subr.mxu0 0.0
      %8116 = vmatpush2.msra.mxu0 0.0
      %8117 = vmatprep.subr.mxu0 0.0
      %8118 = vmatpush2.msra.mxu0 0.0
      %8119 = vmatprep.mubr.f32.mxu0 0.0
      %v8120 = vand.u32 %v8036, 4294901760
      %v8121 = vsub.f32 %v8036, %v8120
      %v8122 = vand.u32 %v8121, 4294901760
      %v8123 = vsub.f32 %v8121, %v8122
      %v8124 = vand.u32 %v8123, 4294901760
      %8125 = vmatmul.mubr.f32.gmra.mxu0 %v8124
      %v8126 = vpop.f32.mrf.mxu0
      %v8127 = vadd.f32 %v8018, %v8126
      %v8128 = vpop.f32.mrf.mxu0
      %v8129 = vadd.f32 %v8018, %v8128
      %8130 = vmatprep.mubr.f32.mxu0 0.0
      %v8131 = vand.u32 %v8039, 4294901760
      %v8132 = vsub.f32 %v8039, %v8131
      %v8133 = vand.u32 %v8132, 4294901760
      %v8134 = vsub.f32 %v8132, %v8133
      %v8135 = vand.u32 %v8134, 4294901760
      %8136 = vmatmul.mubr.f32.gmra.mxu0 %v8135
      %v8137 = vpop.f32.mrf.mxu0
      %v8138 = vadd.f32 %v8023, %v8137
      %v8139 = vpop.f32.mrf.mxu0
      %v8140 = vadd.f32 %v8023, %v8139
      %8141 = vmatprep.mubr.f32.mxu0 0.0
      %v8142 = vand.u32 %v8042, 4294901760
      %v8143 = vsub.f32 %v8042, %v8142
      %v8144 = vand.u32 %v8143, 4294901760
      %v8145 = vsub.f32 %v8143, %v8144
      %v8146 = vand.u32 %v8145, 4294901760
      %8147 = vmatmul.mubr.f32.gmra.mxu0 %v8146
      %v8148 = vpop.f32.mrf.mxu0
      %v8149 = vadd.f32 %v8028, %v8148
      %v8150 = vpop.f32.mrf.mxu0
      %v8151 = vadd.f32 %v8028, %v8150
      %8152 = vmatprep.mubr.f32.mxu0 0.0
      %v8153 = vand.u32 %v8045, 4294901760
      %v8154 = vsub.f32 %v8045, %v8153
      %v8155 = vand.u32 %v8154, 4294901760
      %v8156 = vsub.f32 %v8154, %v8155
      %v8157 = vand.u32 %v8156, 4294901760
      %8158 = vmatmul.mubr.f32.gmra.mxu0 %v8157
      %v8159 = vpop.f32.mrf.mxu0
      %v8160 = vadd.f32 %v8033, %v8159
      %v8161 = vpop.f32.mrf.mxu0
      %v8162 = vadd.f32 %v8033, %v8161
      %8163 = vdwg.mxu0
      %8164 = vmatprep.subr.mxu0 0.0
      %8165 = vmatpush1.msra.mxu0 0.0
      %8166 = vmatprep.subr.mxu0 0.0
      %8167 = vmatpush1.msra.mxu0 0.0
      %8168 = vmatprep.subr.mxu0 0.0
      %8169 = vmatpush1.msra.mxu0 0.0
      %8170 = vmatprep.subr.mxu0 0.0
      %8171 = vmatpush1.msra.mxu0 0.0
      %8172 = vmatprep.subr.mxu0 0.0
      %8173 = vmatpush1.msra.mxu0 0.0
      %8174 = vmatprep.subr.mxu0 0.0
      %8175 = vmatpush1.msra.mxu0 0.0
      %8176 = vmatprep.subr.mxu0 0.0
      %8177 = vmatpush1.msra.mxu0 0.0
      %8178 = vmatprep.subr.mxu0 0.0
      %8179 = vmatpush1.msra.mxu0 0.0
      %8180 = vmatprep.subr.mxu0 0.0
      %8181 = vmatpush1.msra.mxu0 0.0
      %8182 = vmatprep.subr.mxu0 0.0
      %8183 = vmatpush1.msra.mxu0 0.0
      %8184 = vmatprep.subr.mxu0 0.0
      %8185 = vmatpush1.msra.mxu0 0.0
      %8186 = vmatprep.subr.mxu0 0.0
      %8187 = vmatpush1.msra.mxu0 0.0
      %v8188 = vand.u32 %v8010, 4294901760
      %v8189 = vsub.f32 %v8010, %v8188
      %v8190 = vand.u32 %v8189, 4294901760
      %v8191 = vsub.f32 %v8189, %v8190
      %v8192 = vand.u32 %v8191, 4294901760
      %8193 = vmatprep.subr.mxu0 %v8192
      %v8194 = vand.u32 %v8009, 4294901760
      %v8195 = vsub.f32 %v8009, %v8194
      %v8196 = vand.u32 %v8195, 4294901760
      %v8197 = vsub.f32 %v8195, %v8196
      %v8198 = vand.u32 %v8197, 4294901760
      %8199 = vmatpush1.msra.mxu0 %v8198
      %v8200 = vand.u32 %v8008, 4294901760
      %v8201 = vsub.f32 %v8008, %v8200
      %v8202 = vand.u32 %v8201, 4294901760
      %v8203 = vsub.f32 %v8201, %v8202
      %v8204 = vand.u32 %v8203, 4294901760
      %8205 = vmatprep.subr.mxu0 %v8204
      %v8206 = vand.u32 %v8007, 4294901760
      %v8207 = vsub.f32 %v8007, %v8206
      %v8208 = vand.u32 %v8207, 4294901760
      %v8209 = vsub.f32 %v8207, %v8208
      %v8210 = vand.u32 %v8209, 4294901760
      %8211 = vmatpush1.msra.mxu0 %v8210
      %v8212 = vand.u32 %v8006, 4294901760
      %v8213 = vsub.f32 %v8006, %v8212
      %v8214 = vand.u32 %v8213, 4294901760
      %v8215 = vsub.f32 %v8213, %v8214
      %v8216 = vand.u32 %v8215, 4294901760
      %8217 = vmatprep.subr.mxu0 %v8216
      %v8218 = vand.u32 %v8005, 4294901760
      %v8219 = vsub.f32 %v8005, %v8218
      %v8220 = vand.u32 %v8219, 4294901760
      %v8221 = vsub.f32 %v8219, %v8220
      %v8222 = vand.u32 %v8221, 4294901760
      %8223 = vmatpush1.msra.mxu0 %v8222
      %v8224 = vand.u32 %v8004, 4294901760
      %v8225 = vsub.f32 %v8004, %v8224
      %v8226 = vand.u32 %v8225, 4294901760
      %v8227 = vsub.f32 %v8225, %v8226
      %v8228 = vand.u32 %v8227, 4294901760
      %8229 = vmatprep.subr.mxu0 %v8228
      %v8230 = vand.u32 %v8003, 4294901760
      %v8231 = vsub.f32 %v8003, %v8230
      %v8232 = vand.u32 %v8231, 4294901760
      %v8233 = vsub.f32 %v8231, %v8232
      %v8234 = vand.u32 %v8233, 4294901760
      %8235 = vmatpush1.msra.mxu0 %v8234
      %8236 = vmatprep.subr.mxu0 0.0
      %8237 = vmatpush2.msra.mxu0 0.0
      %8238 = vmatprep.subr.mxu0 0.0
      %8239 = vmatpush2.msra.mxu0 0.0
      %8240 = vmatprep.subr.mxu0 0.0
      %8241 = vmatpush2.msra.mxu0 0.0
      %8242 = vmatprep.subr.mxu0 0.0
      %8243 = vmatpush2.msra.mxu0 0.0
      %8244 = vmatprep.subr.mxu0 0.0
      %8245 = vmatpush2.msra.mxu0 0.0
      %8246 = vmatprep.subr.mxu0 0.0
      %8247 = vmatpush2.msra.mxu0 0.0
      %8248 = vmatprep.subr.mxu0 0.0
      %8249 = vmatpush2.msra.mxu0 0.0
      %8250 = vmatprep.subr.mxu0 0.0
      %8251 = vmatpush2.msra.mxu0 0.0
      %8252 = vmatprep.subr.mxu0 0.0
      %8253 = vmatpush2.msra.mxu0 0.0
      %8254 = vmatprep.subr.mxu0 0.0
      %8255 = vmatpush2.msra.mxu0 0.0
      %8256 = vmatprep.subr.mxu0 0.0
      %8257 = vmatpush2.msra.mxu0 0.0
      %8258 = vmatprep.subr.mxu0 0.0
      %8259 = vmatpush2.msra.mxu0 0.0
      %8260 = vmatprep.subr.mxu0 0.0
      %8261 = vmatpush2.msra.mxu0 0.0
      %8262 = vmatprep.subr.mxu0 0.0
      %8263 = vmatpush2.msra.mxu0 0.0
      %8264 = vmatprep.subr.mxu0 0.0
      %8265 = vmatpush2.msra.mxu0 0.0
      %8266 = vmatprep.subr.mxu0 0.0
      %8267 = vmatpush2.msra.mxu0 0.0
      %8268 = vmatprep.mubr.f32.mxu0 0.0
      %v8269 = vand.u32 %v8036, 4294901760
      %8270 = vmatmul.mubr.f32.gmra.mxu0 %v8269
      %v8271 = vpop.f32.mrf.mxu0
      %v8272 = vadd.f32 %v8127, %v8271
      %v8273 = vpop.f32.mrf.mxu0
      %v8274 = vadd.f32 %v8129, %v8273
      %8275 = vmatprep.mubr.f32.mxu0 0.0
      %v8276 = vand.u32 %v8039, 4294901760
      %8277 = vmatmul.mubr.f32.gmra.mxu0 %v8276
      %v8278 = vpop.f32.mrf.mxu0
      %v8279 = vadd.f32 %v8138, %v8278
      %v8280 = vpop.f32.mrf.mxu0
      %v8281 = vadd.f32 %v8140, %v8280
      %8282 = vmatprep.mubr.f32.mxu0 0.0
      %v8283 = vand.u32 %v8042, 4294901760
      %8284 = vmatmul.mubr.f32.gmra.mxu0 %v8283
      %v8285 = vpop.f32.mrf.mxu0
      %v8286 = vadd.f32 %v8149, %v8285
      %v8287 = vpop.f32.mrf.mxu0
      %v8288 = vadd.f32 %v8151, %v8287
      %8289 = vmatprep.mubr.f32.mxu0 0.0
      %v8290 = vand.u32 %v8045, 4294901760
      %8291 = vmatmul.mubr.f32.gmra.mxu0 %v8290
      %v8292 = vpop.f32.mrf.mxu0
      %v8293 = vadd.f32 %v8160, %v8292
      %v8294 = vpop.f32.mrf.mxu0
      %v8295 = vadd.f32 %v8162, %v8294
      %8296 = vdwg.mxu0
      %8297 = vmatprep.subr.mxu0 0.0
      %8298 = vmatpush1.msra.mxu0 0.0
      %8299 = vmatprep.subr.mxu0 0.0
      %8300 = vmatpush1.msra.mxu0 0.0
      %8301 = vmatprep.subr.mxu0 0.0
      %8302 = vmatpush1.msra.mxu0 0.0
      %8303 = vmatprep.subr.mxu0 0.0
      %8304 = vmatpush1.msra.mxu0 0.0
      %8305 = vmatprep.subr.mxu0 0.0
      %8306 = vmatpush1.msra.mxu0 0.0
      %8307 = vmatprep.subr.mxu0 0.0
      %8308 = vmatpush1.msra.mxu0 0.0
      %8309 = vmatprep.subr.mxu0 0.0
      %8310 = vmatpush1.msra.mxu0 0.0
      %8311 = vmatprep.subr.mxu0 0.0
      %8312 = vmatpush1.msra.mxu0 0.0
      %8313 = vmatprep.subr.mxu0 0.0
      %8314 = vmatpush1.msra.mxu0 0.0
      %8315 = vmatprep.subr.mxu0 0.0
      %8316 = vmatpush1.msra.mxu0 0.0
      %8317 = vmatprep.subr.mxu0 0.0
      %8318 = vmatpush1.msra.mxu0 0.0
      %8319 = vmatprep.subr.mxu0 0.0
      %8320 = vmatpush1.msra.mxu0 0.0
      %v8321 = vand.u32 %v8010, 4294901760
      %v8322 = vsub.f32 %v8010, %v8321
      %8323 = vmatprep.subr.mxu0 %v8322
      %v8324 = vand.u32 %v8009, 4294901760
      %v8325 = vsub.f32 %v8009, %v8324
      %8326 = vmatpush1.msra.mxu0 %v8325
      %v8327 = vand.u32 %v8008, 4294901760
      %v8328 = vsub.f32 %v8008, %v8327
      %8329 = vmatprep.subr.mxu0 %v8328
      %v8330 = vand.u32 %v8007, 4294901760
      %v8331 = vsub.f32 %v8007, %v8330
      %8332 = vmatpush1.msra.mxu0 %v8331
      %v8333 = vand.u32 %v8006, 4294901760
      %v8334 = vsub.f32 %v8006, %v8333
      %8335 = vmatprep.subr.mxu0 %v8334
      %v8336 = vand.u32 %v8005, 4294901760
      %v8337 = vsub.f32 %v8005, %v8336
      %8338 = vmatpush1.msra.mxu0 %v8337
      %v8339 = vand.u32 %v8004, 4294901760
      %v8340 = vsub.f32 %v8004, %v8339
      %8341 = vmatprep.subr.mxu0 %v8340
      %v8342 = vand.u32 %v8003, 4294901760
      %v8343 = vsub.f32 %v8003, %v8342
      %8344 = vmatpush1.msra.mxu0 %v8343
      %8345 = vmatprep.subr.mxu0 0.0
      %8346 = vmatpush2.msra.mxu0 0.0
      %8347 = vmatprep.subr.mxu0 0.0
      %8348 = vmatpush2.msra.mxu0 0.0
      %8349 = vmatprep.subr.mxu0 0.0
      %8350 = vmatpush2.msra.mxu0 0.0
      %8351 = vmatprep.subr.mxu0 0.0
      %8352 = vmatpush2.msra.mxu0 0.0
      %8353 = vmatprep.subr.mxu0 0.0
      %8354 = vmatpush2.msra.mxu0 0.0
      %8355 = vmatprep.subr.mxu0 0.0
      %8356 = vmatpush2.msra.mxu0 0.0
      %8357 = vmatprep.subr.mxu0 0.0
      %8358 = vmatpush2.msra.mxu0 0.0
      %8359 = vmatprep.subr.mxu0 0.0
      %8360 = vmatpush2.msra.mxu0 0.0
      %8361 = vmatprep.subr.mxu0 0.0
      %8362 = vmatpush2.msra.mxu0 0.0
      %8363 = vmatprep.subr.mxu0 0.0
      %8364 = vmatpush2.msra.mxu0 0.0
      %8365 = vmatprep.subr.mxu0 0.0
      %8366 = vmatpush2.msra.mxu0 0.0
      %8367 = vmatprep.subr.mxu0 0.0
      %8368 = vmatpush2.msra.mxu0 0.0
      %8369 = vmatprep.subr.mxu0 0.0
      %8370 = vmatpush2.msra.mxu0 0.0
      %8371 = vmatprep.subr.mxu0 0.0
      %8372 = vmatpush2.msra.mxu0 0.0
      %8373 = vmatprep.subr.mxu0 0.0
      %8374 = vmatpush2.msra.mxu0 0.0
      %8375 = vmatprep.subr.mxu0 0.0
      %8376 = vmatpush2.msra.mxu0 0.0
      %8377 = vmatprep.mubr.f32.mxu0 0.0
      %v8378 = vand.u32 %v8036, 4294901760
      %v8379 = vsub.f32 %v8036, %v8378
      %8380 = vmatmul.mubr.f32.gmra.mxu0 %v8379
      %v8381 = vpop.f32.mrf.mxu0
      %v8382 = vadd.f32 %v8272, %v8381
      %v8383 = vpop.f32.mrf.mxu0
      %v8384 = vadd.f32 %v8274, %v8383
      %8385 = vmatprep.mubr.f32.mxu0 0.0
      %v8386 = vand.u32 %v8039, 4294901760
      %v8387 = vsub.f32 %v8039, %v8386
      %8388 = vmatmul.mubr.f32.gmra.mxu0 %v8387
      %v8389 = vpop.f32.mrf.mxu0
      %v8390 = vadd.f32 %v8279, %v8389
      %v8391 = vpop.f32.mrf.mxu0
      %v8392 = vadd.f32 %v8281, %v8391
      %8393 = vmatprep.mubr.f32.mxu0 0.0
      %v8394 = vand.u32 %v8042, 4294901760
      %v8395 = vsub.f32 %v8042, %v8394
      %8396 = vmatmul.mubr.f32.gmra.mxu0 %v8395
      %v8397 = vpop.f32.mrf.mxu0
      %v8398 = vadd.f32 %v8286, %v8397
      %v8399 = vpop.f32.mrf.mxu0
      %v8400 = vadd.f32 %v8288, %v8399
      %8401 = vmatprep.mubr.f32.mxu0 0.0
      %v8402 = vand.u32 %v8045, 4294901760
      %v8403 = vsub.f32 %v8045, %v8402
      %8404 = vmatmul.mubr.f32.gmra.mxu0 %v8403
      %v8405 = vpop.f32.mrf.mxu0
      %v8406 = vadd.f32 %v8293, %v8405
      %v8407 = vpop.f32.mrf.mxu0
      %v8408 = vadd.f32 %v8295, %v8407
      %8409 = vdwg.mxu0
      %8410 = vmatprep.subr.mxu0 0.0
      %8411 = vmatpush1.msra.mxu0 0.0
      %8412 = vmatprep.subr.mxu0 0.0
      %8413 = vmatpush1.msra.mxu0 0.0
      %8414 = vmatprep.subr.mxu0 0.0
      %8415 = vmatpush1.msra.mxu0 0.0
      %8416 = vmatprep.subr.mxu0 0.0
      %8417 = vmatpush1.msra.mxu0 0.0
      %8418 = vmatprep.subr.mxu0 0.0
      %8419 = vmatpush1.msra.mxu0 0.0
      %8420 = vmatprep.subr.mxu0 0.0
      %8421 = vmatpush1.msra.mxu0 0.0
      %8422 = vmatprep.subr.mxu0 0.0
      %8423 = vmatpush1.msra.mxu0 0.0
      %8424 = vmatprep.subr.mxu0 0.0
      %8425 = vmatpush1.msra.mxu0 0.0
      %8426 = vmatprep.subr.mxu0 0.0
      %8427 = vmatpush1.msra.mxu0 0.0
      %8428 = vmatprep.subr.mxu0 0.0
      %8429 = vmatpush1.msra.mxu0 0.0
      %8430 = vmatprep.subr.mxu0 0.0
      %8431 = vmatpush1.msra.mxu0 0.0
      %8432 = vmatprep.subr.mxu0 0.0
      %8433 = vmatpush1.msra.mxu0 0.0
      %v8434 = vand.u32 %v8010, 4294901760
      %8435 = vmatprep.subr.mxu0 %v8434
      %v8436 = vand.u32 %v8009, 4294901760
      %8437 = vmatpush1.msra.mxu0 %v8436
      %v8438 = vand.u32 %v8008, 4294901760
      %8439 = vmatprep.subr.mxu0 %v8438
      %v8440 = vand.u32 %v8007, 4294901760
      %8441 = vmatpush1.msra.mxu0 %v8440
      %v8442 = vand.u32 %v8006, 4294901760
      %8443 = vmatprep.subr.mxu0 %v8442
      %v8444 = vand.u32 %v8005, 4294901760
      %8445 = vmatpush1.msra.mxu0 %v8444
      %v8446 = vand.u32 %v8004, 4294901760
      %8447 = vmatprep.subr.mxu0 %v8446
      %v8448 = vand.u32 %v8003, 4294901760
      %8449 = vmatpush1.msra.mxu0 %v8448
      %8450 = vmatprep.subr.mxu0 0.0
      %8451 = vmatpush2.msra.mxu0 0.0
      %8452 = vmatprep.subr.mxu0 0.0
      %8453 = vmatpush2.msra.mxu0 0.0
      %8454 = vmatprep.subr.mxu0 0.0
      %8455 = vmatpush2.msra.mxu0 0.0
      %8456 = vmatprep.subr.mxu0 0.0
      %8457 = vmatpush2.msra.mxu0 0.0
      %8458 = vmatprep.subr.mxu0 0.0
      %8459 = vmatpush2.msra.mxu0 0.0
      %8460 = vmatprep.subr.mxu0 0.0
      %8461 = vmatpush2.msra.mxu0 0.0
      %8462 = vmatprep.subr.mxu0 0.0
      %8463 = vmatpush2.msra.mxu0 0.0
      %8464 = vmatprep.subr.mxu0 0.0
      %8465 = vmatpush2.msra.mxu0 0.0
      %8466 = vmatprep.subr.mxu0 0.0
      %8467 = vmatpush2.msra.mxu0 0.0
      %8468 = vmatprep.subr.mxu0 0.0
      %8469 = vmatpush2.msra.mxu0 0.0
      %8470 = vmatprep.subr.mxu0 0.0
      %8471 = vmatpush2.msra.mxu0 0.0
      %8472 = vmatprep.subr.mxu0 0.0
      %8473 = vmatpush2.msra.mxu0 0.0
      %8474 = vmatprep.subr.mxu0 0.0
      %8475 = vmatpush2.msra.mxu0 0.0
      %8476 = vmatprep.subr.mxu0 0.0
      %8477 = vmatpush2.msra.mxu0 0.0
      %8478 = vmatprep.subr.mxu0 0.0
      %8479 = vmatpush2.msra.mxu0 0.0
      %8480 = vmatprep.subr.mxu0 0.0
      %8481 = vmatpush2.msra.mxu0 0.0
      %8482 = vmatprep.mubr.f32.mxu0 0.0
      %v8483 = vand.u32 %v8036, 4294901760
      %v8484 = vsub.f32 %v8036, %v8483
      %v8485 = vand.u32 %v8484, 4294901760
      %8486 = vmatmul.mubr.f32.gmra.mxu0 %v8485
      %v8487 = vpop.f32.mrf.mxu0
      %v8488 = vadd.f32 %v8382, %v8487
      %v8489 = vpop.f32.mrf.mxu0
      %v8490 = vadd.f32 %v8384, %v8489
      %8491 = vmatprep.mubr.f32.mxu0 0.0
      %v8492 = vand.u32 %v8039, 4294901760
      %v8493 = vsub.f32 %v8039, %v8492
      %v8494 = vand.u32 %v8493, 4294901760
      %8495 = vmatmul.mubr.f32.gmra.mxu0 %v8494
      %v8496 = vpop.f32.mrf.mxu0
      %v8497 = vadd.f32 %v8390, %v8496
      %v8498 = vpop.f32.mrf.mxu0
      %v8499 = vadd.f32 %v8392, %v8498
      %8500 = vmatprep.mubr.f32.mxu0 0.0
      %v8501 = vand.u32 %v8042, 4294901760
      %v8502 = vsub.f32 %v8042, %v8501
      %v8503 = vand.u32 %v8502, 4294901760
      %8504 = vmatmul.mubr.f32.gmra.mxu0 %v8503
      %v8505 = vpop.f32.mrf.mxu0
      %v8506 = vadd.f32 %v8398, %v8505
      %v8507 = vpop.f32.mrf.mxu0
      %v8508 = vadd.f32 %v8400, %v8507
      %8509 = vmatprep.mubr.f32.mxu0 0.0
      %v8510 = vand.u32 %v8045, 4294901760
      %v8511 = vsub.f32 %v8045, %v8510
      %v8512 = vand.u32 %v8511, 4294901760
      %8513 = vmatmul.mubr.f32.gmra.mxu0 %v8512
      %v8514 = vpop.f32.mrf.mxu0
      %v8515 = vadd.f32 %v8406, %v8514
      %v8516 = vpop.f32.mrf.mxu0
      %v8517 = vadd.f32 %v8408, %v8516
      %8518 = vdwg.mxu0
      %8519 = vmatprep.subr.mxu0 0.0
      %8520 = vmatpush1.msra.mxu0 0.0
      %8521 = vmatprep.subr.mxu0 0.0
      %8522 = vmatpush1.msra.mxu0 0.0
      %8523 = vmatprep.subr.mxu0 0.0
      %8524 = vmatpush1.msra.mxu0 0.0
      %8525 = vmatprep.subr.mxu0 0.0
      %8526 = vmatpush1.msra.mxu0 0.0
      %8527 = vmatprep.subr.mxu0 0.0
      %8528 = vmatpush1.msra.mxu0 0.0
      %8529 = vmatprep.subr.mxu0 0.0
      %8530 = vmatpush1.msra.mxu0 0.0
      %8531 = vmatprep.subr.mxu0 0.0
      %8532 = vmatpush1.msra.mxu0 0.0
      %8533 = vmatprep.subr.mxu0 0.0
      %8534 = vmatpush1.msra.mxu0 0.0
      %8535 = vmatprep.subr.mxu0 0.0
      %8536 = vmatpush1.msra.mxu0 0.0
      %8537 = vmatprep.subr.mxu0 0.0
      %8538 = vmatpush1.msra.mxu0 0.0
      %8539 = vmatprep.subr.mxu0 0.0
      %8540 = vmatpush1.msra.mxu0 0.0
      %8541 = vmatprep.subr.mxu0 0.0
      %8542 = vmatpush1.msra.mxu0 0.0
      %v8543 = vand.u32 %v8010, 4294901760
      %v8544 = vsub.f32 %v8010, %v8543
      %v8545 = vand.u32 %v8544, 4294901760
      %8546 = vmatprep.subr.mxu0 %v8545
      %v8547 = vand.u32 %v8009, 4294901760
      %v8548 = vsub.f32 %v8009, %v8547
      %v8549 = vand.u32 %v8548, 4294901760
      %8550 = vmatpush1.msra.mxu0 %v8549
      %v8551 = vand.u32 %v8008, 4294901760
      %v8552 = vsub.f32 %v8008, %v8551
      %v8553 = vand.u32 %v8552, 4294901760
      %8554 = vmatprep.subr.mxu0 %v8553
      %v8555 = vand.u32 %v8007, 4294901760
      %v8556 = vsub.f32 %v8007, %v8555
      %v8557 = vand.u32 %v8556, 4294901760
      %8558 = vmatpush1.msra.mxu0 %v8557
      %v8559 = vand.u32 %v8006, 4294901760
      %v8560 = vsub.f32 %v8006, %v8559
      %v8561 = vand.u32 %v8560, 4294901760
      %8562 = vmatprep.subr.mxu0 %v8561
      %v8563 = vand.u32 %v8005, 4294901760
      %v8564 = vsub.f32 %v8005, %v8563
      %v8565 = vand.u32 %v8564, 4294901760
      %8566 = vmatpush1.msra.mxu0 %v8565
      %v8567 = vand.u32 %v8004, 4294901760
      %v8568 = vsub.f32 %v8004, %v8567
      %v8569 = vand.u32 %v8568, 4294901760
      %8570 = vmatprep.subr.mxu0 %v8569
      %v8571 = vand.u32 %v8003, 4294901760
      %v8572 = vsub.f32 %v8003, %v8571
      %v8573 = vand.u32 %v8572, 4294901760
      %8574 = vmatpush1.msra.mxu0 %v8573
      %8575 = vmatprep.subr.mxu0 0.0
      %8576 = vmatpush2.msra.mxu0 0.0
      %8577 = vmatprep.subr.mxu0 0.0
      %8578 = vmatpush2.msra.mxu0 0.0
      %8579 = vmatprep.subr.mxu0 0.0
      %8580 = vmatpush2.msra.mxu0 0.0
      %8581 = vmatprep.subr.mxu0 0.0
      %8582 = vmatpush2.msra.mxu0 0.0
      %8583 = vmatprep.subr.mxu0 0.0
      %8584 = vmatpush2.msra.mxu0 0.0
      %8585 = vmatprep.subr.mxu0 0.0
      %8586 = vmatpush2.msra.mxu0 0.0
      %8587 = vmatprep.subr.mxu0 0.0
      %8588 = vmatpush2.msra.mxu0 0.0
      %8589 = vmatprep.subr.mxu0 0.0
      %8590 = vmatpush2.msra.mxu0 0.0
      %8591 = vmatprep.subr.mxu0 0.0
      %8592 = vmatpush2.msra.mxu0 0.0
      %8593 = vmatprep.subr.mxu0 0.0
      %8594 = vmatpush2.msra.mxu0 0.0
      %8595 = vmatprep.subr.mxu0 0.0
      %8596 = vmatpush2.msra.mxu0 0.0
      %8597 = vmatprep.subr.mxu0 0.0
      %8598 = vmatpush2.msra.mxu0 0.0
      %8599 = vmatprep.subr.mxu0 0.0
      %8600 = vmatpush2.msra.mxu0 0.0
      %8601 = vmatprep.subr.mxu0 0.0
      %8602 = vmatpush2.msra.mxu0 0.0
      %8603 = vmatprep.subr.mxu0 0.0
      %8604 = vmatpush2.msra.mxu0 0.0
      %8605 = vmatprep.subr.mxu0 0.0
      %8606 = vmatpush2.msra.mxu0 0.0
      %8607 = vmatprep.mubr.f32.mxu0 0.0
      %v8608 = vand.u32 %v8036, 4294901760
      %8609 = vmatmul.mubr.f32.gmra.mxu0 %v8608
      %v8610 = vpop.f32.mrf.mxu0
      %v8611 = vadd.f32 %v8488, %v8610
      %v8612 = vpop.f32.mrf.mxu0
      %v8613 = vadd.f32 %v8490, %v8612
      %8614 = vmatprep.mubr.f32.mxu0 0.0
      %v8615 = vand.u32 %v8039, 4294901760
      %8616 = vmatmul.mubr.f32.gmra.mxu0 %v8615
      %v8617 = vpop.f32.mrf.mxu0
      %v8618 = vadd.f32 %v8497, %v8617
      %v8619 = vpop.f32.mrf.mxu0
      %v8620 = vadd.f32 %v8499, %v8619
      %8621 = vmatprep.mubr.f32.mxu0 0.0
      %v8622 = vand.u32 %v8042, 4294901760
      %8623 = vmatmul.mubr.f32.gmra.mxu0 %v8622
      %v8624 = vpop.f32.mrf.mxu0
      %v8625 = vadd.f32 %v8506, %v8624
      %v8626 = vpop.f32.mrf.mxu0
      %v8627 = vadd.f32 %v8508, %v8626
      %8628 = vmatprep.mubr.f32.mxu0 0.0
      %v8629 = vand.u32 %v8045, 4294901760
      %8630 = vmatmul.mubr.f32.gmra.mxu0 %v8629
      %v8631 = vpop.f32.mrf.mxu0
      %v8632 = vadd.f32 %v8515, %v8631
      %v8633 = vpop.f32.mrf.mxu0
      %v8634 = vadd.f32 %v8517, %v8633
      %8635 = vdwg.mxu0
      %8636 = vmatprep.subr.mxu0 0.0
      %8637 = vmatpush1.msra.mxu0 0.0
      %8638 = vmatprep.subr.mxu0 0.0
      %8639 = vmatpush1.msra.mxu0 0.0
      %8640 = vmatprep.subr.mxu0 0.0
      %8641 = vmatpush1.msra.mxu0 0.0
      %8642 = vmatprep.subr.mxu0 0.0
      %8643 = vmatpush1.msra.mxu0 0.0
      %8644 = vmatprep.subr.mxu0 0.0
      %8645 = vmatpush1.msra.mxu0 0.0
      %8646 = vmatprep.subr.mxu0 0.0
      %8647 = vmatpush1.msra.mxu0 0.0
      %8648 = vmatprep.subr.mxu0 0.0
      %8649 = vmatpush1.msra.mxu0 0.0
      %8650 = vmatprep.subr.mxu0 0.0
      %8651 = vmatpush1.msra.mxu0 0.0
      %8652 = vmatprep.subr.mxu0 0.0
      %8653 = vmatpush1.msra.mxu0 0.0
      %8654 = vmatprep.subr.mxu0 0.0
      %8655 = vmatpush1.msra.mxu0 0.0
      %8656 = vmatprep.subr.mxu0 0.0
      %8657 = vmatpush1.msra.mxu0 0.0
      %8658 = vmatprep.subr.mxu0 0.0
      %8659 = vmatpush1.msra.mxu0 0.0
      %v8660 = vand.u32 %v8010, 4294901760
      %8661 = vmatprep.subr.mxu0 %v8660
      %v8662 = vand.u32 %v8009, 4294901760
      %8663 = vmatpush1.msra.mxu0 %v8662
      %v8664 = vand.u32 %v8008, 4294901760
      %8665 = vmatprep.subr.mxu0 %v8664
      %v8666 = vand.u32 %v8007, 4294901760
      %8667 = vmatpush1.msra.mxu0 %v8666
      %v8668 = vand.u32 %v8006, 4294901760
      %8669 = vmatprep.subr.mxu0 %v8668
      %v8670 = vand.u32 %v8005, 4294901760
      %8671 = vmatpush1.msra.mxu0 %v8670
      %v8672 = vand.u32 %v8004, 4294901760
      %8673 = vmatprep.subr.mxu0 %v8672
      %v8674 = vand.u32 %v8003, 4294901760
      %8675 = vmatpush1.msra.mxu0 %v8674
      %8676 = vmatprep.subr.mxu0 0.0
      %8677 = vmatpush2.msra.mxu0 0.0
      %8678 = vmatprep.subr.mxu0 0.0
      %8679 = vmatpush2.msra.mxu0 0.0
      %8680 = vmatprep.subr.mxu0 0.0
      %8681 = vmatpush2.msra.mxu0 0.0
      %8682 = vmatprep.subr.mxu0 0.0
      %8683 = vmatpush2.msra.mxu0 0.0
      %8684 = vmatprep.subr.mxu0 0.0
      %8685 = vmatpush2.msra.mxu0 0.0
      %8686 = vmatprep.subr.mxu0 0.0
      %8687 = vmatpush2.msra.mxu0 0.0
      %8688 = vmatprep.subr.mxu0 0.0
      %8689 = vmatpush2.msra.mxu0 0.0
      %8690 = vmatprep.subr.mxu0 0.0
      %8691 = vmatpush2.msra.mxu0 0.0
      %8692 = vmatprep.subr.mxu0 0.0
      %8693 = vmatpush2.msra.mxu0 0.0
      %8694 = vmatprep.subr.mxu0 0.0
      %8695 = vmatpush2.msra.mxu0 0.0
      %8696 = vmatprep.subr.mxu0 0.0
      %8697 = vmatpush2.msra.mxu0 0.0
      %8698 = vmatprep.subr.mxu0 0.0
      %8699 = vmatpush2.msra.mxu0 0.0
      %8700 = vmatprep.subr.mxu0 0.0
      %8701 = vmatpush2.msra.mxu0 0.0
      %8702 = vmatprep.subr.mxu0 0.0
      %8703 = vmatpush2.msra.mxu0 0.0
      %8704 = vmatprep.subr.mxu0 0.0
      %8705 = vmatpush2.msra.mxu0 0.0
      %8706 = vmatprep.subr.mxu0 0.0
      %8707 = vmatpush2.msra.mxu0 0.0
      %8708 = vmatprep.mubr.f32.mxu0 0.0
      %v8709 = vand.u32 %v8036, 4294901760
      %8710 = vmatmul.mubr.f32.gmra.mxu0 %v8709
      %v8711 = vpop.f32.mrf.mxu0
      %v8712 = vadd.f32 %v8611, %v8711
      %v8713 = vpop.f32.mrf.mxu0
      %v8714 = vadd.f32 %v8613, %v8713
      %8715 = vmatprep.mubr.f32.mxu0 0.0
      %v8716 = vand.u32 %v8039, 4294901760
      %8717 = vmatmul.mubr.f32.gmra.mxu0 %v8716
      %v8718 = vpop.f32.mrf.mxu0
      %v8719 = vadd.f32 %v8618, %v8718
      %v8720 = vpop.f32.mrf.mxu0
      %v8721 = vadd.f32 %v8620, %v8720
      %8722 = vmatprep.mubr.f32.mxu0 0.0
      %v8723 = vand.u32 %v8042, 4294901760
      %8724 = vmatmul.mubr.f32.gmra.mxu0 %v8723
      %v8725 = vpop.f32.mrf.mxu0
      %v8726 = vadd.f32 %v8625, %v8725
      %v8727 = vpop.f32.mrf.mxu0
      %v8728 = vadd.f32 %v8627, %v8727
      %8729 = vmatprep.mubr.f32.mxu0 0.0
      %v8730 = vand.u32 %v8045, 4294901760
      %8731 = vmatmul.mubr.f32.gmra.mxu0 %v8730
      %v8732 = vpop.f32.mrf.mxu0
      %v8733 = vadd.f32 %v8632, %v8732
      %v8734 = vpop.f32.mrf.mxu0
      %v8735 = vadd.f32 %v8634, %v8734
      %8736 = vdwg.mxu0
      %v8737 = vld [vmem:[#allocation5] sm:$0xff]
      %v8738 = vld [vmem:[#allocation5 + $0x8] sm:$0xff]
      %v8739 = vld [vmem:[#allocation5 + $0x10] sm:$0xff]
      %v8740 = vld [vmem:[#allocation5 + $0x18] sm:$0xff]
      %v8741 = vld [vmem:[#allocation5 + $0x20] sm:$0xff]
      %v8742 = vld [vmem:[#allocation5 + $0x28] sm:$0xff]
      %v8743 = vld [vmem:[#allocation5 + $0x30] sm:$0xff]
      %v8744 = vld [vmem:[#allocation5 + $0x38] sm:$0xff]
      %v8745 = vadd.f32 %v8712, %v8737
      %v8746 = vadd.f32 %v8714, %v8738
      %v8747 = vadd.f32 %v8719, %v8739
      %v8748 = vadd.f32 %v8721, %v8740
      %v8749 = vadd.f32 %v8726, %v8741
      %v8750 = vadd.f32 %v8728, %v8742
      %v8751 = vadd.f32 %v8733, %v8743
      %v8752 = vadd.f32 %v8735, %v8744
      %8753 = vst [vmem:[%s494] sm:$0xff] %v8745
      %8754 = vst [vmem:[%s494 + $0x8] sm:$0xff] %v8746
      %8755 = vst [vmem:[%s494 + $0x10] sm:$0xff] %v8747
      %8756 = vst [vmem:[%s494 + $0x18] sm:$0xff] %v8748
      %8757 = vst [vmem:[%s494 + $0x20] sm:$0xff] %v8749
      %8758 = vst [vmem:[%s494 + $0x28] sm:$0xff] %v8750
      %8759 = vst [vmem:[%s494 + $0x30] sm:$0xff] %v8751
      %8760 = vst [vmem:[%s494 + $0x38] sm:$0xff] %v8752
      %p8761 = scmp.lt.s32.totalorder %s26, 1
      %s8762 = scalar_select %p8761, %s26, 1
      %s8763 = smul.addr %s8762, 8
      %s8764 = smul.addr %s8763, 8
      %s8765 = scalar_lea.vmem %s15, %s8764
      // Predicated region
      $region81: #{edsr_forward.1} parent=79 // pred_check
        %p8766 = pneg %p364
      $region82: #{edsr_forward.1} parent=79 // pred_check_branch
        %8768 = sbr.rel (%p8766) target = $region84
      $region83: #{edsr_forward.1} parent=79 // pred_region
        _
      $region84: #{edsr_forward.1} parent=79 // pred_fallthru
        _
    $region80: #{edsr_forward.1} parent=5 // pred_fallthru
      _
    %p8769 = scmp.le.s32.totalorder 2, %s21
    // Predicated region
    $region85: #{edsr_forward.1} parent=5 // pred_check
      %p8770 = pneg %p8769
    $region86: #{edsr_forward.1} parent=5 // pred_check_branch
      %8772 = sbr.rel (%p8770) target = $region88
    $region87: #{edsr_forward.1} parent=5 // pred_region
      %s8773 = ssub.s32 %s21, 2
      // Predicated region
      $region89: #{edsr_forward.1} parent=87 // pred_check
        %p8774 = pneg %p370
      $region90: #{edsr_forward.1} parent=87 // pred_check_branch
        %8776 = sbr.rel (%p8774) target = $region92
      $region91: #{edsr_forward.1} parent=87 // pred_region
        %p8777 = scmp.lt.s32.totalorder %s27, 1
        %s8778 = scalar_select %p8777, %s27, 1
        %s8779 = smul.addr %s8778, 8
        %s8780 = smul.addr %s8779, 8
        %s8781 = scalar_lea.vmem %s15, %s8780
      $region92: #{edsr_forward.1} parent=87 // pred_fallthru
        _
    $region88: #{edsr_forward.1} parent=5 // pred_fallthru
      _
  $region6: #{edsr_forward.1} parent=0 // loop_footer
    %s25 = sadd.s32 1, %s21
  $region7: #{edsr_forward.1} parent=0 // loop_footer_branch
    %20 = sbr.rel target = $region3
  $region8: #{edsr_forward.1} parent=0 // loop_exit
    _

</llo_original>
